<compile_context>
chip_gen: v7x
topology: tpu7x:2x2x1
jax: 0.10.0
libtpu: 0.0.40
codegen_flags: <defaults>
</compile_context>

<pallas_src>
import functools

import jax
import jax.numpy as jnp
from jax import lax
from jax.experimental import pallas as pl
from jax.experimental.pallas import tpu as pltpu

LANES = 128          # lane-dense channel padding for conv / fc tensors
WP1 = 32             # conv1 padded row stride (28 + 2 pad, rounded up to 32)
ROWS1 = 28 * WP1     # 896 flat conv1-output rows per image (junk cols 28..31)
CHUNK1 = 224         # conv1 GEMM M-chunk (896 = 4 * 224)
WP2 = 16             # conv2 zero-padded grid width (14 + 2)
ACT2_ROWS = WP2 * WP2 + 8   # 264: 16x16 grid + 8 extra zero rows (alignment)
M2 = 224             # conv2 GEMM rows (valid rows are 0..221)
K2 = 9 * LANES       # 1152 im2col K for conv2


# ---------------------------------------------------------------------------
# Kernels
# ---------------------------------------------------------------------------
def _conv_stack_kernel(patch_ref, w1_ref, b1_ref, w2_ref, b2_ref, feat_ref,
                       s1_ref, act2_ref, slab_ref, s2_ref, pool1_ref, pool2_ref,
                       *, nb):
    """conv1+ReLU+pool+pad -> conv2+ReLU+pool for `nb` images, all in VMEM.

    patch_ref: (nb, 896, 16) bf16  conv1 im2col patches (taps on lanes)
    w1_ref:    (16, 128)     bf16  conv1 weight (tap-major, cout lane-padded)
    w2_ref:    (1152, 128)   bf16  conv2 weight ((tap,cin)-major, cout padded)
    b*_ref:    (1, 128)      f32   biases (lane-padded)
    feat_ref:  (nb, 49, 128) f32   pooled conv2 features per image
    """
    for i in range(nb):
        # -- conv1: single K=16 GEMM per 224-row chunk, + bias + ReLU --------
        for c in range(ROWS1 // CHUNK1):
            lhs = patch_ref[i, pl.ds(c * CHUNK1, CHUNK1), :]
            acc = jnp.dot(lhs, w1_ref[...], preferred_element_type=jnp.float32)
            s1_ref[pl.ds(c * CHUNK1, CHUNK1), :] = jnp.maximum(
                acc + b1_ref[...], 0.0)

        # -- 2x2/2 max-pool + zero-pad into the conv2 input grid (VMEM only) -
        act2_ref[...] = jnp.zeros_like(act2_ref)      # border / spare rows = 0
        for ho in range(14):
            r0 = 2 * ho * WP1                         # 8-aligned (64*ho)
            v = jnp.maximum(s1_ref[pl.ds(r0, WP1), :],
                            s1_ref[pl.ds(r0 + WP1, WP1), :])   # vertical max
            pool1_ref[...] = v
            row = jnp.maximum(pool1_ref[pl.ds(0, 14, stride=2), :],
                              pool1_ref[pl.ds(1, 14, stride=2), :])
            act2_ref[pl.ds((ho + 1) * WP2 + 1, 14), :] = row

        # -- conv2: build (224,1152) bf16 im2col slab, ONE K=1152 GEMM --------
        for t in range(9):
            off = (t // 3) * WP2 + (t % 3)
            slab_ref[:, pl.ds(t * LANES, LANES)] = (
                act2_ref[pl.ds(off, M2), :].astype(jnp.bfloat16))
        acc2 = jnp.dot(slab_ref[...], w2_ref[...],
                       preferred_element_type=jnp.float32)
        s2_ref[...] = jnp.maximum(acc2 + b2_ref[...], 0.0)

        # -- 2x2/2 max-pool conv2 -> (49, 128) features for this image --------
        for ho in range(7):
            r0 = 2 * ho * WP2
            v = jnp.maximum(s2_ref[pl.ds(r0, WP2), :],
                            s2_ref[pl.ds(r0 + WP2, WP2), :])
            pool2_ref[...] = v
            feat_ref[i, pl.ds(ho * 7, 7), :] = jnp.maximum(
                pool2_ref[pl.ds(0, 7, stride=2), :],
                pool2_ref[pl.ds(1, 7, stride=2), :])


def _mlp_kernel(f_ref, w1_ref, b1_ref, w2_ref, b2_ref, o_ref):
    """Fused fc1 + ReLU + fc2 (bf16 matmuls, f32 accumulation/bias)."""
    h = jnp.dot(f_ref[...].astype(jnp.bfloat16), w1_ref[...],
                preferred_element_type=jnp.float32)
    h = jnp.maximum(h + b1_ref[...], 0.0)
    y = jnp.dot(h.astype(jnp.bfloat16), w2_ref[...],
                preferred_element_type=jnp.float32)
    o_ref[...] = y + b2_ref[...]


# ---------------------------------------------------------------------------
# pallas_call wrappers
# ---------------------------------------------------------------------------
def _pick_batch_block(batch):
    """Largest block in {8,4,2,1} dividing B, preferring an even step count."""
    cands = [nb for nb in (8, 4, 2, 1) if batch % nb == 0]
    even = [nb for nb in cands if (batch // nb) % 2 == 0]
    return (even or cands)[0]


def conv_stack(patches, w1, b1, w2, b2, *, nb):
    """patches: (B, 896, 16) bf16 -> features (B, 49, 128) f32."""
    B = patches.shape[0]
    kernel = functools.partial(_conv_stack_kernel, nb=nb)
    return pl.pallas_call(
        kernel,
        out_shape=jax.ShapeDtypeStruct((B, 49, LANES), jnp.float32),
        grid=(B // nb,),
        in_specs=[
            pl.BlockSpec((nb, ROWS1, 16), lambda b: (b, 0, 0)),
            pl.BlockSpec((16, LANES), lambda b: (0, 0)),     # weights resident
            pl.BlockSpec((1, LANES), lambda b: (0, 0)),
            pl.BlockSpec((K2, LANES), lambda b: (0, 0)),
            pl.BlockSpec((1, LANES), lambda b: (0, 0)),
        ],
        out_specs=pl.BlockSpec((nb, 49, LANES), lambda b: (b, 0, 0)),
        scratch_shapes=[
            pltpu.VMEM((ROWS1, LANES), jnp.float32),      # conv1 activation
            pltpu.VMEM((ACT2_ROWS, LANES), jnp.float32),  # padded conv2 input
            pltpu.VMEM((M2, K2), jnp.bfloat16),           # conv2 im2col slab
            pltpu.VMEM((M2, LANES), jnp.float32),         # conv2 activation
            pltpu.VMEM((WP1, LANES), jnp.float32),        # pool row scratch 1
            pltpu.VMEM((WP2, LANES), jnp.float32),        # pool row scratch 2
        ],
        compiler_params=pltpu.CompilerParams(
            dimension_semantics=("parallel",)),
    )(patches, w1, b1, w2, b2)


def mlp_fused(feat, w1, b1, w2, b2):
    """feat: (B, 6272) f32 -> (B, 128) f32 (fc2 lanes pre-padded to 128)."""
    B, K = feat.shape
    N1 = w1.shape[1]
    N2 = w2.shape[1]
    # TODO(synk): tile the batch dim with a "parallel" grid for very large B.
    return pl.pallas_call(
        _mlp_kernel,
        out_shape=jax.ShapeDtypeStruct((B, N2), jnp.float32),
        grid=(1,),
        in_specs=[
            pl.BlockSpec((B, K), lambda i: (0, 0)),
            pl.BlockSpec((K, N1), lambda i: (0, 0)),
            pl.BlockSpec((1, N1), lambda i: (0, 0)),
            pl.BlockSpec((N1, N2), lambda i: (0, 0)),
            pl.BlockSpec((1, N2), lambda i: (0, 0)),
        ],
        out_specs=pl.BlockSpec((B, N2), lambda i: (0, 0)),
        compiler_params=pltpu.CompilerParams(
            dimension_semantics=("arbitrary",)),
    )(feat, w1, b1, w2, b2)


# ---------------------------------------------------------------------------
# Parameters: init (PyTorch-style) + one-time re-layout (hoisted, bf16)
# ---------------------------------------------------------------------------
def init_params(key, num_classes=3):
    ks = jax.random.split(key, 8)

    def uinit(k, shape, fan_in):
        bound = 1.0 / jnp.sqrt(fan_in)
        return jax.random.uniform(k, shape, jnp.float32, -bound, bound)

    return {
        "conv1_w": uinit(ks[0], (32, 1, 3, 3), 1 * 9),
        "conv1_b": uinit(ks[1], (32,), 1 * 9),
        "conv2_w": uinit(ks[2], (64, 32, 3, 3), 32 * 9),
        "conv2_b": uinit(ks[3], (64,), 32 * 9),
        "fc1_w": uinit(ks[4], (128, 64 * 7 * 7), 64 * 7 * 7),
        "fc1_b": uinit(ks[5], (128,), 64 * 7 * 7),
        "fc2_w": uinit(ks[6], (num_classes, 128), 128),
        "fc2_b": uinit(ks[7], (num_classes,), 128),
    }


def prepare_params(params, num_classes=3):
    """One-time weight re-layout + bf16 cast (outside the hot path)."""
    c1, c2 = 32, 64
    # conv1: (32,1,3,3) -> (tap=ky*3+kx, cout) -> pad -> (16, 128) bf16
    w1 = jnp.transpose(params["conv1_w"], (2, 3, 1, 0)).reshape(9, c1)
    w1 = jnp.pad(w1, ((0, 16 - 9), (0, LANES - c1))).astype(jnp.bfloat16)
    b1 = jnp.pad(params["conv1_b"], (0, LANES - c1)).reshape(1, LANES)
    # conv2: (64,32,3,3) -> (ky,kx,cin_pad128,cout_pad128) -> (1152,128) bf16
    w2 = jnp.transpose(params["conv2_w"], (2, 3, 1, 0))
    w2 = jnp.pad(w2, ((0, 0), (0, 0), (0, LANES - c1), (0, LANES - c2)))
    w2 = w2.reshape(9 * LANES, LANES).astype(jnp.bfloat16)
    b2 = jnp.pad(params["conv2_b"], (0, LANES - c2)).reshape(1, LANES)
    # fc1: permute K from PyTorch NCHW-flatten (c*49+h*7+w) to the kernel's
    # NHWC(+channel-pad) flatten ((h*7+w)*128 + c); K = 49*128 = 6272.
    f1 = params["fc1_w"].reshape(128, c2, 7, 7)         # (n, c, h, w)
    f1 = jnp.transpose(f1, (2, 3, 1, 0))                # (h, w, c, n)
    f1 = jnp.pad(f1, ((0, 0), (0, 0), (0, LANES - c2), (0, 0)))
    w_fc1 = f1.reshape(7 * 7 * LANES, 128).astype(jnp.bfloat16)
    b_fc1 = params["fc1_b"].reshape(1, 128)
    # fc2: (num_classes,128) -> (128, 128) lane-dense bf16 (zero-padded cols)
    w_fc2 = jnp.pad(params["fc2_w"].T,
                    ((0, 0), (0, LANES - num_classes))).astype(jnp.bfloat16)
    b_fc2 = jnp.pad(params["fc2_b"], (0, LANES - num_classes)).reshape(1, LANES)
    return {"w1": w1, "b1": b1, "w2": w2, "b2": b2,
            "w_fc1": w_fc1, "b_fc1": b_fc1, "w_fc2": w_fc2, "b_fc2": b_fc2}


# ---------------------------------------------------------------------------
# Forward
# ---------------------------------------------------------------------------
@functools.partial(jax.jit, static_argnames=("num_classes",))
def model_forward(prepped, x_nchw, num_classes=3):
    B = x_nchw.shape[0]
    nb = _pick_batch_block(B)
    # conv1 im2col patches, built once in XLA (~25 KB/img bf16):
    #   patches[b, h*32+w, ky*3+kx] = padded_input[b, h+ky, w+kx]
    xp = jnp.pad(x_nchw[:, 0], ((0, 0), (1, 1), (1, 5)))          # (B, 30, 34)
    taps = [xp[:, ky:ky + 28, kx:kx + 32]
            for ky in range(3) for kx in range(3)]
    patches = jnp.stack(taps, axis=-1)                            # (B,28,32,9)
    patches = jnp.pad(patches, ((0, 0), (0, 0), (0, 0), (0, 7)))  # K pad -> 16
    patches = patches.reshape(B, ROWS1, 16).astype(jnp.bfloat16)

    feats = conv_stack(patches, prepped["w1"], prepped["b1"],
                       prepped["w2"], prepped["b2"], nb=nb)       # (B,49,128)
    feats = feats.reshape(B, 49 * LANES)        # free reshape (contiguous)
    logits = mlp_fused(feats, prepped["w_fc1"], prepped["b_fc1"],
                       prepped["w_fc2"], prepped["b_fc2"])        # (B,128)
    return logits[:, :num_classes]


# ---------------------------------------------------------------------------
# Pure-JAX f32 reference (verification only)
# ---------------------------------------------------------------------------
def reference_forward(params, x_nchw):
    dn = lax.conv_dimension_numbers(x_nchw.shape, params["conv1_w"].shape,
                                    ("NCHW", "OIHW", "NCHW"))
    x = lax.conv_general_dilated(x_nchw, params["conv1_w"], (1, 1),
                                 ((1, 1), (1, 1)), dimension_numbers=dn)
    x = jax.nn.relu(x + params["conv1_b"][None, :, None, None])
    x = lax.reduce_window(x, -jnp.inf, lax.max, (1, 1, 2, 2), (1, 1, 2, 2),
                          "VALID")
    dn2 = lax.conv_dimension_numbers(x.shape, params["conv2_w"].shape,
                                     ("NCHW", "OIHW", "NCHW"))
    x = lax.conv_general_dilated(x, params["conv2_w"], (1, 1),
                                 ((1, 1), (1, 1)), dimension_numbers=dn2)
    x = jax.nn.relu(x + params["conv2_b"][None, :, None, None])
    x = lax.reduce_window(x, -jnp.inf, lax.max, (1, 1, 2, 2), (1, 1, 2, 2),
                          "VALID")
    x = x.reshape(x.shape[0], -1)
    x = jax.nn.relu(x @ params["fc1_w"].T + params["fc1_b"])
    x = x @ params["fc2_w"].T + params["fc2_b"]
    return x


if __name__ == "__main__":
    key = jax.random.PRNGKey(0)
    pkey, xkey = jax.random.split(key)
    params = init_params(pkey, num_classes=3)
    prepped = prepare_params(params, num_classes=3)

    # Classifier expects 64*7*7 features => 28x28 single-channel input.
    x = jax.random.normal(xkey, (2, 1, 28, 28), jnp.float32)

    out = jax.block_until_ready(model_forward(prepped, x, num_classes=3))
    ref = jax.block_until_ready(reference_forward(params, x))

    assert out.shape == (2, 3), out.shape
    max_err = float(jnp.max(jnp.abs(out - ref)))
    # bf16 MXU operands (f32 accumulation) => loosened tolerance vs f32 ref.
    assert jnp.allclose(out, ref, atol=2e-2, rtol=2e-2), (
        f"mismatch vs reference: max abs err {max_err}")
    print("KERNEL_OK")
</pallas_src>

<mosaic_0001>
module attributes {stable_mosaic.version = 11 : i64} {
  func.func @_mlp_kernel(%arg0: i32, %arg1: memref<2x6272xf32, #tpu.memory_space<vmem>>, %arg2: memref<6272x128xbf16, #tpu.memory_space<vmem>>, %arg3: memref<1x128xf32, #tpu.memory_space<vmem>>, %arg4: memref<128x128xbf16, #tpu.memory_space<vmem>>, %arg5: memref<1x128xf32, #tpu.memory_space<vmem>>, %arg6: memref<2x128xf32, #tpu.memory_space<vmem>>) attributes {dimension_semantics = [#tpu.dimension_semantics<arbitrary>], iteration_bounds = array<i64: 1>, scalar_prefetch = 0 : i64, scratch_operands = 0 : i64, tpu.core_type = #tpu.core_type<tc>, window_params = [{pipeline_mode = #tpu.pipeline_mode<synchronous>, transform_indices = @transform_0, window_bounds = array<i64: 2, 6272>}, {pipeline_mode = #tpu.pipeline_mode<synchronous>, transform_indices = @transform_1, window_bounds = array<i64: 6272, 128>}, {pipeline_mode = #tpu.pipeline_mode<synchronous>, transform_indices = @transform_2, window_bounds = array<i64: 1, 128>}, {pipeline_mode = #tpu.pipeline_mode<synchronous>, transform_indices = @transform_3, window_bounds = array<i64: 128, 128>}, {pipeline_mode = #tpu.pipeline_mode<synchronous>, transform_indices = @transform_4, window_bounds = array<i64: 1, 128>}, {pipeline_mode = #tpu.pipeline_mode<synchronous>, transform_indices = @transform_5, window_bounds = array<i64: 2, 128>}]} {
    %c0 = arith.constant 0 : index
    %c0_0 = arith.constant 0 : index
    %0 = vector.load %arg1[%c0, %c0_0] : memref<2x6272xf32, #tpu.memory_space<vmem>>, vector<2x6272xf32>
    %1 = arith.truncf %0 : vector<2x6272xf32> to vector<2x6272xbf16>
    %c0_1 = arith.constant 0 : index
    %c0_2 = arith.constant 0 : index
    %2 = vector.load %arg2[%c0_1, %c0_2] : memref<6272x128xbf16, #tpu.memory_space<vmem>>, vector<6272x128xbf16>
    %cst = arith.constant dense<0.000000e+00> : vector<2x128xf32>
    %3 = tpu.matmul %1, %2, %cst {dimension_numbers = #tpu.dot_dimension_numbers<[1], [0], [0], [1], [0, 0, 1, 1], [], []>} : vector<2x6272xbf16>, vector<6272x128xbf16>, vector<2x128xf32> -> vector<2x128xf32>
    %c0_3 = arith.constant 0 : index
    %c0_4 = arith.constant 0 : index
    %4 = vector.load %arg3[%c0_3, %c0_4] : memref<1x128xf32, #tpu.memory_space<vmem>>, vector<1x128xf32>
    %5 = vector.broadcast %4 : vector<1x128xf32> to vector<2x128xf32>
    %6 = arith.addf %3, %5 : vector<2x128xf32>
    %cst_5 = arith.constant 0.000000e+00 : f32
    %7 = vector.broadcast %cst_5 : f32 to vector<2x128xf32>
    %8 = arith.maximumf %6, %7 : vector<2x128xf32>
    %9 = arith.truncf %8 : vector<2x128xf32> to vector<2x128xbf16>
    %c0_6 = arith.constant 0 : index
    %c0_7 = arith.constant 0 : index
    %10 = vector.load %arg4[%c0_6, %c0_7] : memref<128x128xbf16, #tpu.memory_space<vmem>>, vector<128x128xbf16>
    %cst_8 = arith.constant dense<0.000000e+00> : vector<2x128xf32>
    %11 = tpu.matmul %9, %10, %cst_8 {dimension_numbers = #tpu.dot_dimension_numbers<[1], [0], [0], [1], [0, 0, 1, 1], [], []>} : vector<2x128xbf16>, vector<128x128xbf16>, vector<2x128xf32> -> vector<2x128xf32>
    %c0_9 = arith.constant 0 : index
    %c0_10 = arith.constant 0 : index
    %12 = vector.load %arg5[%c0_9, %c0_10] : memref<1x128xf32, #tpu.memory_space<vmem>>, vector<1x128xf32>
    %13 = vector.broadcast %12 : vector<1x128xf32> to vector<2x128xf32>
    %14 = arith.addf %11, %13 : vector<2x128xf32>
    %c0_11 = arith.constant 0 : index
    %c0_12 = arith.constant 0 : index
    %15 = vector.load %arg6[%c0_11, %c0_12] : memref<2x128xf32, #tpu.memory_space<vmem>>, vector<2x128xf32>
    tpu.vector_store %arg6[%c0_11, %c0_12], %14 {strides = array<i32>} : memref<2x128xf32, #tpu.memory_space<vmem>>, vector<2x128xf32>,
    return
  }
  func.func @transform_0(%arg0: i32) -> (i32, i32) {
    %c0_i32 = arith.constant 0 : i32
    %c0_i32_0 = arith.constant 0 : i32
    %c0_i32_1 = arith.constant 0 : i32
    return %c0_i32, %c0_i32_0 : i32, i32
  }
  func.func @transform_1(%arg0: i32) -> (i32, i32) {
    %c0_i32 = arith.constant 0 : i32
    %c0_i32_0 = arith.constant 0 : i32
    %c0_i32_1 = arith.constant 0 : i32
    return %c0_i32, %c0_i32_0 : i32, i32
  }
  func.func @transform_2(%arg0: i32) -> (i32, i32) {
    %c0_i32 = arith.constant 0 : i32
    %c0_i32_0 = arith.constant 0 : i32
    %c0_i32_1 = arith.constant 0 : i32
    return %c0_i32, %c0_i32_0 : i32, i32
  }
  func.func @transform_3(%arg0: i32) -> (i32, i32) {
    %c0_i32 = arith.constant 0 : i32
    %c0_i32_0 = arith.constant 0 : i32
    %c0_i32_1 = arith.constant 0 : i32
    return %c0_i32, %c0_i32_0 : i32, i32
  }
  func.func @transform_4(%arg0: i32) -> (i32, i32) {
    %c0_i32 = arith.constant 0 : i32
    %c0_i32_0 = arith.constant 0 : i32
    %c0_i32_1 = arith.constant 0 : i32
    return %c0_i32, %c0_i32_0 : i32, i32
  }
  func.func @transform_5(%arg0: i32) -> (i32, i32) {
    %c0_i32 = arith.constant 0 : i32
    %c0_i32_0 = arith.constant 0 : i32
    %c0_i32_1 = arith.constant 0 : i32
    return %c0_i32, %c0_i32_0 : i32, i32
  }
}

module attributes {stable_mosaic.version = 11 : i64} {
  func.func @_conv_stack_kernel(%arg0: i32, %arg1: memref<1x896x16xbf16, #tpu.memory_space<vmem>>, %arg2: memref<16x128xbf16, #tpu.memory_space<vmem>>, %arg3: memref<1x128xf32, #tpu.memory_space<vmem>>, %arg4: memref<1152x128xbf16, #tpu.memory_space<vmem>>, %arg5: memref<1x128xf32, #tpu.memory_space<vmem>>, %arg6: memref<1x49x128xf32, #tpu.memory_space<vmem>>, %arg7: memref<896x128xf32, #tpu.memory_space<vmem>>, %arg8: memref<264x128xf32, #tpu.memory_space<vmem>>, %arg9: memref<224x1152xbf16, #tpu.memory_space<vmem>>, %arg10: memref<224x128xf32, #tpu.memory_space<vmem>>, %arg11: memref<32x128xf32, #tpu.memory_space<vmem>>, %arg12: memref<16x128xf32, #tpu.memory_space<vmem>>) attributes {dimension_semantics = [#tpu.dimension_semantics<parallel>], iteration_bounds = array<i64: 2>, scalar_prefetch = 0 : i64, scratch_operands = 6 : i64, tpu.core_type = #tpu.core_type<tc>, window_params = [{transform_indices = @transform_0, window_bounds = array<i64: 1, 896, 16>}, {pipeline_mode = #tpu.pipeline_mode<synchronous>, transform_indices = @transform_1, window_bounds = array<i64: 16, 128>}, {pipeline_mode = #tpu.pipeline_mode<synchronous>, transform_indices = @transform_2, window_bounds = array<i64: 1, 128>}, {pipeline_mode = #tpu.pipeline_mode<synchronous>, transform_indices = @transform_3, window_bounds = array<i64: 1152, 128>}, {pipeline_mode = #tpu.pipeline_mode<synchronous>, transform_indices = @transform_4, window_bounds = array<i64: 1, 128>}, {transform_indices = @transform_5, window_bounds = array<i64: 1, 49, 128>}]} {
    %c0 = arith.constant 0 : index
    %c0_0 = arith.constant 0 : index
    %c0_1 = arith.constant 0 : index
    %0 = vector.load %arg1[%c0, %c0_0, %c0_1] : memref<1x896x16xbf16, #tpu.memory_space<vmem>>, vector<1x224x16xbf16>
    %1 = vector.shape_cast %0 : vector<1x224x16xbf16> to vector<224x16xbf16>
    %c0_2 = arith.constant 0 : index
    %c0_3 = arith.constant 0 : index
    %2 = vector.load %arg2[%c0_2, %c0_3] : memref<16x128xbf16, #tpu.memory_space<vmem>>, vector<16x128xbf16>
    %cst = arith.constant dense<0.000000e+00> : vector<224x128xf32>
    %3 = tpu.matmul %1, %2, %cst {dimension_numbers = #tpu.dot_dimension_numbers<[1], [0], [0], [1], [0, 0, 1, 1], [], []>} : vector<224x16xbf16>, vector<16x128xbf16>, vector<224x128xf32> -> vector<224x128xf32>
    %c0_4 = arith.constant 0 : index
    %c0_5 = arith.constant 0 : index
    %4 = vector.load %arg3[%c0_4, %c0_5] : memref<1x128xf32, #tpu.memory_space<vmem>>, vector<1x128xf32>
    %5 = vector.broadcast %4 : vector<1x128xf32> to vector<224x128xf32>
    %6 = arith.addf %3, %5 : vector<224x128xf32>
    %cst_6 = arith.constant 0.000000e+00 : f32
    %7 = vector.broadcast %cst_6 : f32 to vector<224x128xf32>
    %8 = arith.maximumf %6, %7 : vector<224x128xf32>
    %c0_7 = arith.constant 0 : index
    %c0_8 = arith.constant 0 : index
    %9 = vector.load %arg7[%c0_7, %c0_8] : memref<896x128xf32, #tpu.memory_space<vmem>>, vector<224x128xf32>
    tpu.vector_store %arg7[%c0_7, %c0_8], %8 {strides = array<i32>} : memref<896x128xf32, #tpu.memory_space<vmem>>, vector<224x128xf32>,
    %c0_9 = arith.constant 0 : index
    %c224 = arith.constant 224 : index
    %c0_10 = arith.constant 0 : index
    %10 = vector.load %arg1[%c0_9, %c224, %c0_10] : memref<1x896x16xbf16, #tpu.memory_space<vmem>>, vector<1x224x16xbf16>
    %11 = vector.shape_cast %10 : vector<1x224x16xbf16> to vector<224x16xbf16>
    %c0_11 = arith.constant 0 : index
    %c0_12 = arith.constant 0 : index
    %12 = vector.load %arg2[%c0_11, %c0_12] : memref<16x128xbf16, #tpu.memory_space<vmem>>, vector<16x128xbf16>
    %cst_13 = arith.constant dense<0.000000e+00> : vector<224x128xf32>
    %13 = tpu.matmul %11, %12, %cst_13 {dimension_numbers = #tpu.dot_dimension_numbers<[1], [0], [0], [1], [0, 0, 1, 1], [], []>} : vector<224x16xbf16>, vector<16x128xbf16>, vector<224x128xf32> -> vector<224x128xf32>
    %c0_14 = arith.constant 0 : index
    %c0_15 = arith.constant 0 : index
    %14 = vector.load %arg3[%c0_14, %c0_15] : memref<1x128xf32, #tpu.memory_space<vmem>>, vector<1x128xf32>
    %15 = vector.broadcast %14 : vector<1x128xf32> to vector<224x128xf32>
    %16 = arith.addf %13, %15 : vector<224x128xf32>
    %cst_16 = arith.constant 0.000000e+00 : f32
    %17 = vector.broadcast %cst_16 : f32 to vector<224x128xf32>
    %18 = arith.maximumf %16, %17 : vector<224x128xf32>
    %c224_17 = arith.constant 224 : index
    %c0_18 = arith.constant 0 : index
    %19 = vector.load %arg7[%c224_17, %c0_18] : memref<896x128xf32, #tpu.memory_space<vmem>>, vector<224x128xf32>
    tpu.vector_store %arg7[%c224_17, %c0_18], %18 {strides = array<i32>} : memref<896x128xf32, #tpu.memory_space<vmem>>, vector<224x128xf32>,
    %c0_19 = arith.constant 0 : index
    %c448 = arith.constant 448 : index
    %c0_20 = arith.constant 0 : index
    %20 = vector.load %arg1[%c0_19, %c448, %c0_20] : memref<1x896x16xbf16, #tpu.memory_space<vmem>>, vector<1x224x16xbf16>
    %21 = vector.shape_cast %20 : vector<1x224x16xbf16> to vector<224x16xbf16>
    %c0_21 = arith.constant 0 : index
    %c0_22 = arith.constant 0 : index
    %22 = vector.load %arg2[%c0_21, %c0_22] : memref<16x128xbf16, #tpu.memory_space<vmem>>, vector<16x128xbf16>
    %cst_23 = arith.constant dense<0.000000e+00> : vector<224x128xf32>
    %23 = tpu.matmul %21, %22, %cst_23 {dimension_numbers = #tpu.dot_dimension_numbers<[1], [0], [0], [1], [0, 0, 1, 1], [], []>} : vector<224x16xbf16>, vector<16x128xbf16>, vector<224x128xf32> -> vector<224x128xf32>
    %c0_24 = arith.constant 0 : index
    %c0_25 = arith.constant 0 : index
    %24 = vector.load %arg3[%c0_24, %c0_25] : memref<1x128xf32, #tpu.memory_space<vmem>>, vector<1x128xf32>
    %25 = vector.broadcast %24 : vector<1x128xf32> to vector<224x128xf32>
    %26 = arith.addf %23, %25 : vector<224x128xf32>
    %cst_26 = arith.constant 0.000000e+00 : f32
    %27 = vector.broadcast %cst_26 : f32 to vector<224x128xf32>
    %28 = arith.maximumf %26, %27 : vector<224x128xf32>
    %c448_27 = arith.constant 448 : index
    %c0_28 = arith.constant 0 : index
    %29 = vector.load %arg7[%c448_27, %c0_28] : memref<896x128xf32, #tpu.memory_space<vmem>>, vector<224x128xf32>
    tpu.vector_store %arg7[%c448_27, %c0_28], %28 {strides = array<i32>} : memref<896x128xf32, #tpu.memory_space<vmem>>, vector<224x128xf32>,
    %c0_29 = arith.constant 0 : index
    %c672 = arith.constant 672 : index
    %c0_30 = arith.constant 0 : index
    %30 = vector.load %arg1[%c0_29, %c672, %c0_30] : memref<1x896x16xbf16, #tpu.memory_space<vmem>>, vector<1x224x16xbf16>
    %31 = vector.shape_cast %30 : vector<1x224x16xbf16> to vector<224x16xbf16>
    %c0_31 = arith.constant 0 : index
    %c0_32 = arith.constant 0 : index
    %32 = vector.load %arg2[%c0_31, %c0_32] : memref<16x128xbf16, #tpu.memory_space<vmem>>, vector<16x128xbf16>
    %cst_33 = arith.constant dense<0.000000e+00> : vector<224x128xf32>
    %33 = tpu.matmul %31, %32, %cst_33 {dimension_numbers = #tpu.dot_dimension_numbers<[1], [0], [0], [1], [0, 0, 1, 1], [], []>} : vector<224x16xbf16>, vector<16x128xbf16>, vector<224x128xf32> -> vector<224x128xf32>
    %c0_34 = arith.constant 0 : index
    %c0_35 = arith.constant 0 : index
    %34 = vector.load %arg3[%c0_34, %c0_35] : memref<1x128xf32, #tpu.memory_space<vmem>>, vector<1x128xf32>
    %35 = vector.broadcast %34 : vector<1x128xf32> to vector<224x128xf32>
    %36 = arith.addf %33, %35 : vector<224x128xf32>
    %cst_36 = arith.constant 0.000000e+00 : f32
    %37 = vector.broadcast %cst_36 : f32 to vector<224x128xf32>
    %38 = arith.maximumf %36, %37 : vector<224x128xf32>
    %c672_37 = arith.constant 672 : index
    %c0_38 = arith.constant 0 : index
    %39 = vector.load %arg7[%c672_37, %c0_38] : memref<896x128xf32, #tpu.memory_space<vmem>>, vector<224x128xf32>
    tpu.vector_store %arg7[%c672_37, %c0_38], %38 {strides = array<i32>} : memref<896x128xf32, #tpu.memory_space<vmem>>, vector<224x128xf32>,
    %cst_39 = arith.constant 0.000000e+00 : f32
    %40 = vector.broadcast %cst_39 : f32 to vector<264x128xf32>
    %c0_40 = arith.constant 0 : index
    %c0_41 = arith.constant 0 : index
    %41 = vector.load %arg8[%c0_40, %c0_41] : memref<264x128xf32, #tpu.memory_space<vmem>>, vector<264x128xf32>
    tpu.vector_store %arg8[%c0_40, %c0_41], %40 {strides = array<i32>} : memref<264x128xf32, #tpu.memory_space<vmem>>, vector<264x128xf32>,
    %c0_42 = arith.constant 0 : index
    %c0_43 = arith.constant 0 : index
    %42 = vector.load %arg7[%c0_42, %c0_43] : memref<896x128xf32, #tpu.memory_space<vmem>>, vector<32x128xf32>
    %c32 = arith.constant 32 : index
    %c0_44 = arith.constant 0 : index
    %43 = vector.load %arg7[%c32, %c0_44] : memref<896x128xf32, #tpu.memory_space<vmem>>, vector<32x128xf32>
    %44 = arith.maximumf %42, %43 : vector<32x128xf32>
    %c0_45 = arith.constant 0 : index
    %c0_46 = arith.constant 0 : index
    %45 = vector.load %arg11[%c0_45, %c0_46] : memref<32x128xf32, #tpu.memory_space<vmem>>, vector<32x128xf32>
    tpu.vector_store %arg11[%c0_45, %c0_46], %44 {strides = array<i32>} : memref<32x128xf32, #tpu.memory_space<vmem>>, vector<32x128xf32>,
    %c0_47 = arith.constant 0 : index
    %c0_48 = arith.constant 0 : index
    %46 = tpu.strided_load %arg11[%c0_47, %c0_48] {strides = array<i32: 2, 1>} : memref<32x128xf32, #tpu.memory_space<vmem>>, vector<14x128xf32>
    %c1 = arith.constant 1 : index
    %c0_49 = arith.constant 0 : index
    %47 = tpu.strided_load %arg11[%c1, %c0_49] {strides = array<i32: 2, 1>} : memref<32x128xf32, #tpu.memory_space<vmem>>, vector<14x128xf32>
    %48 = arith.maximumf %46, %47 : vector<14x128xf32>
    %c17 = arith.constant 17 : index
    %c0_50 = arith.constant 0 : index
    %49 = vector.load %arg8[%c17, %c0_50] : memref<264x128xf32, #tpu.memory_space<vmem>>, vector<14x128xf32>
    tpu.vector_store %arg8[%c17, %c0_50], %48 {strides = array<i32>} : memref<264x128xf32, #tpu.memory_space<vmem>>, vector<14x128xf32>,
    %c64 = arith.constant 64 : index
    %c0_51 = arith.constant 0 : index
    %50 = vector.load %arg7[%c64, %c0_51] : memref<896x128xf32, #tpu.memory_space<vmem>>, vector<32x128xf32>
    %c96 = arith.constant 96 : index
    %c0_52 = arith.constant 0 : index
    %51 = vector.load %arg7[%c96, %c0_52] : memref<896x128xf32, #tpu.memory_space<vmem>>, vector<32x128xf32>
    %52 = arith.maximumf %50, %51 : vector<32x128xf32>
    %c0_53 = arith.constant 0 : index
    %c0_54 = arith.constant 0 : index
    %53 = vector.load %arg11[%c0_53, %c0_54] : memref<32x128xf32, #tpu.memory_space<vmem>>, vector<32x128xf32>
    tpu.vector_store %arg11[%c0_53, %c0_54], %52 {strides = array<i32>} : memref<32x128xf32, #tpu.memory_space<vmem>>, vector<32x128xf32>,
    %c0_55 = arith.constant 0 : index
    %c0_56 = arith.constant 0 : index
    %54 = tpu.strided_load %arg11[%c0_55, %c0_56] {strides = array<i32: 2, 1>} : memref<32x128xf32, #tpu.memory_space<vmem>>, vector<14x128xf32>
    %c1_57 = arith.constant 1 : index
    %c0_58 = arith.constant 0 : index
    %55 = tpu.strided_load %arg11[%c1_57, %c0_58] {strides = array<i32: 2, 1>} : memref<32x128xf32, #tpu.memory_space<vmem>>, vector<14x128xf32>
    %56 = arith.maximumf %54, %55 : vector<14x128xf32>
    %c33 = arith.constant 33 : index
    %c0_59 = arith.constant 0 : index
    %57 = vector.load %arg8[%c33, %c0_59] : memref<264x128xf32, #tpu.memory_space<vmem>>, vector<14x128xf32>
    tpu.vector_store %arg8[%c33, %c0_59], %56 {strides = array<i32>} : memref<264x128xf32, #tpu.memory_space<vmem>>, vector<14x128xf32>,
    %c128 = arith.constant 128 : index
    %c0_60 = arith.constant 0 : index
    %58 = vector.load %arg7[%c128, %c0_60] : memref<896x128xf32, #tpu.memory_space<vmem>>, vector<32x128xf32>
    %c160 = arith.constant 160 : index
    %c0_61 = arith.constant 0 : index
    %59 = vector.load %arg7[%c160, %c0_61] : memref<896x128xf32, #tpu.memory_space<vmem>>, vector<32x128xf32>
    %60 = arith.maximumf %58, %59 : vector<32x128xf32>
    %c0_62 = arith.constant 0 : index
    %c0_63 = arith.constant 0 : index
    %61 = vector.load %arg11[%c0_62, %c0_63] : memref<32x128xf32, #tpu.memory_space<vmem>>, vector<32x128xf32>
    tpu.vector_store %arg11[%c0_62, %c0_63], %60 {strides = array<i32>} : memref<32x128xf32, #tpu.memory_space<vmem>>, vector<32x128xf32>,
    %c0_64 = arith.constant 0 : index
    %c0_65 = arith.constant 0 : index
    %62 = tpu.strided_load %arg11[%c0_64, %c0_65] {strides = array<i32: 2, 1>} : memref<32x128xf32, #tpu.memory_space<vmem>>, vector<14x128xf32>
    %c1_66 = arith.constant 1 : index
    %c0_67 = arith.constant 0 : index
    %63 = tpu.strided_load %arg11[%c1_66, %c0_67] {strides = array<i32: 2, 1>} : memref<32x128xf32, #tpu.memory_space<vmem>>, vector<14x128xf32>
    %64 = arith.maximumf %62, %63 : vector<14x128xf32>
    %c49 = arith.constant 49 : index
    %c0_68 = arith.constant 0 : index
    %65 = vector.load %arg8[%c49, %c0_68] : memref<264x128xf32, #tpu.memory_space<vmem>>, vector<14x128xf32>
    tpu.vector_store %arg8[%c49, %c0_68], %64 {strides = array<i32>} : memref<264x128xf32, #tpu.memory_space<vmem>>, vector<14x128xf32>,
    %c192 = arith.constant 192 : index
    %c0_69 = arith.constant 0 : index
    %66 = vector.load %arg7[%c192, %c0_69] : memref<896x128xf32, #tpu.memory_space<vmem>>, vector<32x128xf32>
    %c224_70 = arith.constant 224 : index
    %c0_71 = arith.constant 0 : index
    %67 = vector.load %arg7[%c224_70, %c0_71] : memref<896x128xf32, #tpu.memory_space<vmem>>, vector<32x128xf32>
    %68 = arith.maximumf %66, %67 : vector<32x128xf32>
    %c0_72 = arith.constant 0 : index
    %c0_73 = arith.constant 0 : index
    %69 = vector.load %arg11[%c0_72, %c0_73] : memref<32x128xf32, #tpu.memory_space<vmem>>, vector<32x128xf32>
    tpu.vector_store %arg11[%c0_72, %c0_73], %68 {strides = array<i32>} : memref<32x128xf32, #tpu.memory_space<vmem>>, vector<32x128xf32>,
    %c0_74 = arith.constant 0 : index
    %c0_75 = arith.constant 0 : index
    %70 = tpu.strided_load %arg11[%c0_74, %c0_75] {strides = array<i32: 2, 1>} : memref<32x128xf32, #tpu.memory_space<vmem>>, vector<14x128xf32>
    %c1_76 = arith.constant 1 : index
    %c0_77 = arith.constant 0 : index
    %71 = tpu.strided_load %arg11[%c1_76, %c0_77] {strides = array<i32: 2, 1>} : memref<32x128xf32, #tpu.memory_space<vmem>>, vector<14x128xf32>
    %72 = arith.maximumf %70, %71 : vector<14x128xf32>
    %c65 = arith.constant 65 : index
    %c0_78 = arith.constant 0 : index
    %73 = vector.load %arg8[%c65, %c0_78] : memref<264x128xf32, #tpu.memory_space<vmem>>, vector<14x128xf32>
    tpu.vector_store %arg8[%c65, %c0_78], %72 {strides = array<i32>} : memref<264x128xf32, #tpu.memory_space<vmem>>, vector<14x128xf32>,
    %c256 = arith.constant 256 : index
    %c0_79 = arith.constant 0 : index
    %74 = vector.load %arg7[%c256, %c0_79] : memref<896x128xf32, #tpu.memory_space<vmem>>, vector<32x128xf32>
    %c288 = arith.constant 288 : index
    %c0_80 = arith.constant 0 : index
    %75 = vector.load %arg7[%c288, %c0_80] : memref<896x128xf32, #tpu.memory_space<vmem>>, vector<32x128xf32>
    %76 = arith.maximumf %74, %75 : vector<32x128xf32>
    %c0_81 = arith.constant 0 : index
    %c0_82 = arith.constant 0 : index
    %77 = vector.load %arg11[%c0_81, %c0_82] : memref<32x128xf32, #tpu.memory_space<vmem>>, vector<32x128xf32>
    tpu.vector_store %arg11[%c0_81, %c0_82], %76 {strides = array<i32>} : memref<32x128xf32, #tpu.memory_space<vmem>>, vector<32x128xf32>,
    %c0_83 = arith.constant 0 : index
    %c0_84 = arith.constant 0 : index
    %78 = tpu.strided_load %arg11[%c0_83, %c0_84] {strides = array<i32: 2, 1>} : memref<32x128xf32, #tpu.memory_space<vmem>>, vector<14x128xf32>
    %c1_85 = arith.constant 1 : index
    %c0_86 = arith.constant 0 : index
    %79 = tpu.strided_load %arg11[%c1_85, %c0_86] {strides = array<i32: 2, 1>} : memref<32x128xf32, #tpu.memory_space<vmem>>, vector<14x128xf32>
    %80 = arith.maximumf %78, %79 : vector<14x128xf32>
    %c81 = arith.constant 81 : index
    %c0_87 = arith.constant 0 : index
    %81 = vector.load %arg8[%c81, %c0_87] : memref<264x128xf32, #tpu.memory_space<vmem>>, vector<14x128xf32>
    tpu.vector_store %arg8[%c81, %c0_87], %80 {strides = array<i32>} : memref<264x128xf32, #tpu.memory_space<vmem>>, vector<14x128xf32>,
    %c320 = arith.constant 320 : index
    %c0_88 = arith.constant 0 : index
    %82 = vector.load %arg7[%c320, %c0_88] : memref<896x128xf32, #tpu.memory_space<vmem>>, vector<32x128xf32>
    %c352 = arith.constant 352 : index
    %c0_89 = arith.constant 0 : index
    %83 = vector.load %arg7[%c352, %c0_89] : memref<896x128xf32, #tpu.memory_space<vmem>>, vector<32x128xf32>
    %84 = arith.maximumf %82, %83 : vector<32x128xf32>
    %c0_90 = arith.constant 0 : index
    %c0_91 = arith.constant 0 : index
    %85 = vector.load %arg11[%c0_90, %c0_91] : memref<32x128xf32, #tpu.memory_space<vmem>>, vector<32x128xf32>
    tpu.vector_store %arg11[%c0_90, %c0_91], %84 {strides = array<i32>} : memref<32x128xf32, #tpu.memory_space<vmem>>, vector<32x128xf32>,
    %c0_92 = arith.constant 0 : index
    %c0_93 = arith.constant 0 : index
    %86 = tpu.strided_load %arg11[%c0_92, %c0_93] {strides = array<i32: 2, 1>} : memref<32x128xf32, #tpu.memory_space<vmem>>, vector<14x128xf32>
    %c1_94 = arith.constant 1 : index
    %c0_95 = arith.constant 0 : index
    %87 = tpu.strided_load %arg11[%c1_94, %c0_95] {strides = array<i32: 2, 1>} : memref<32x128xf32, #tpu.memory_space<vmem>>, vector<14x128xf32>
    %88 = arith.maximumf %86, %87 : vector<14x128xf32>
    %c97 = arith.constant 97 : index
    %c0_96 = arith.constant 0 : index
    %89 = vector.load %arg8[%c97, %c0_96] : memref<264x128xf32, #tpu.memory_space<vmem>>, vector<14x128xf32>
    tpu.vector_store %arg8[%c97, %c0_96], %88 {strides = array<i32>} : memref<264x128xf32, #tpu.memory_space<vmem>>, vector<14x128xf32>,
    %c384 = arith.constant 384 : index
    %c0_97 = arith.constant 0 : index
    %90 = vector.load %arg7[%c384, %c0_97] : memref<896x128xf32, #tpu.memory_space<vmem>>, vector<32x128xf32>
    %c416 = arith.constant 416 : index
    %c0_98 = arith.constant 0 : index
    %91 = vector.load %arg7[%c416, %c0_98] : memref<896x128xf32, #tpu.memory_space<vmem>>, vector<32x128xf32>
    %92 = arith.maximumf %90, %91 : vector<32x128xf32>
    %c0_99 = arith.constant 0 : index
    %c0_100 = arith.constant 0 : index
    %93 = vector.load %arg11[%c0_99, %c0_100] : memref<32x128xf32, #tpu.memory_space<vmem>>, vector<32x128xf32>
    tpu.vector_store %arg11[%c0_99, %c0_100], %92 {strides = array<i32>} : memref<32x128xf32, #tpu.memory_space<vmem>>, vector<32x128xf32>,
    %c0_101 = arith.constant 0 : index
    %c0_102 = arith.constant 0 : index
    %94 = tpu.strided_load %arg11[%c0_101, %c0_102] {strides = array<i32: 2, 1>} : memref<32x128xf32, #tpu.memory_space<vmem>>, vector<14x128xf32>
    %c1_103 = arith.constant 1 : index
    %c0_104 = arith.constant 0 : index
    %95 = tpu.strided_load %arg11[%c1_103, %c0_104] {strides = array<i32: 2, 1>} : memref<32x128xf32, #tpu.memory_space<vmem>>, vector<14x128xf32>
    %96 = arith.maximumf %94, %95 : vector<14x128xf32>
    %c113 = arith.constant 113 : index
    %c0_105 = arith.constant 0 : index
    %97 = vector.load %arg8[%c113, %c0_105] : memref<264x128xf32, #tpu.memory_space<vmem>>, vector<14x128xf32>
    tpu.vector_store %arg8[%c113, %c0_105], %96 {strides = array<i32>} : memref<264x128xf32, #tpu.memory_space<vmem>>, vector<14x128xf32>,
    %c448_106 = arith.constant 448 : index
    %c0_107 = arith.constant 0 : index
    %98 = vector.load %arg7[%c448_106, %c0_107] : memref<896x128xf32, #tpu.memory_space<vmem>>, vector<32x128xf32>
    %c480 = arith.constant 480 : index
    %c0_108 = arith.constant 0 : index
    %99 = vector.load %arg7[%c480, %c0_108] : memref<896x128xf32, #tpu.memory_space<vmem>>, vector<32x128xf32>
    %100 = arith.maximumf %98, %99 : vector<32x128xf32>
    %c0_109 = arith.constant 0 : index
    %c0_110 = arith.constant 0 : index
    %101 = vector.load %arg11[%c0_109, %c0_110] : memref<32x128xf32, #tpu.memory_space<vmem>>, vector<32x128xf32>
    tpu.vector_store %arg11[%c0_109, %c0_110], %100 {strides = array<i32>} : memref<32x128xf32, #tpu.memory_space<vmem>>, vector<32x128xf32>,
    %c0_111 = arith.constant 0 : index
    %c0_112 = arith.constant 0 : index
    %102 = tpu.strided_load %arg11[%c0_111, %c0_112] {strides = array<i32: 2, 1>} : memref<32x128xf32, #tpu.memory_space<vmem>>, vector<14x128xf32>
    %c1_113 = arith.constant 1 : index
    %c0_114 = arith.constant 0 : index
    %103 = tpu.strided_load %arg11[%c1_113, %c0_114] {strides = array<i32: 2, 1>} : memref<32x128xf32, #tpu.memory_space<vmem>>, vector<14x128xf32>
    %104 = arith.maximumf %102, %103 : vector<14x128xf32>
    %c129 = arith.constant 129 : index
    %c0_115 = arith.constant 0 : index
    %105 = vector.load %arg8[%c129, %c0_115] : memref<264x128xf32, #tpu.memory_space<vmem>>, vector<14x128xf32>
    tpu.vector_store %arg8[%c129, %c0_115], %104 {strides = array<i32>} : memref<264x128xf32, #tpu.memory_space<vmem>>, vector<14x128xf32>,
    %c512 = arith.constant 512 : index
    %c0_116 = arith.constant 0 : index
    %106 = vector.load %arg7[%c512, %c0_116] : memref<896x128xf32, #tpu.memory_space<vmem>>, vector<32x128xf32>
    %c544 = arith.constant 544 : index
    %c0_117 = arith.constant 0 : index
    %107 = vector.load %arg7[%c544, %c0_117] : memref<896x128xf32, #tpu.memory_space<vmem>>, vector<32x128xf32>
    %108 = arith.maximumf %106, %107 : vector<32x128xf32>
    %c0_118 = arith.constant 0 : index
    %c0_119 = arith.constant 0 : index
    %109 = vector.load %arg11[%c0_118, %c0_119] : memref<32x128xf32, #tpu.memory_space<vmem>>, vector<32x128xf32>
    tpu.vector_store %arg11[%c0_118, %c0_119], %108 {strides = array<i32>} : memref<32x128xf32, #tpu.memory_space<vmem>>, vector<32x128xf32>,
    %c0_120 = arith.constant 0 : index
    %c0_121 = arith.constant 0 : index
    %110 = tpu.strided_load %arg11[%c0_120, %c0_121] {strides = array<i32: 2, 1>} : memref<32x128xf32, #tpu.memory_space<vmem>>, vector<14x128xf32>
    %c1_122 = arith.constant 1 : index
    %c0_123 = arith.constant 0 : index
    %111 = tpu.strided_load %arg11[%c1_122, %c0_123] {strides = array<i32: 2, 1>} : memref<32x128xf32, #tpu.memory_space<vmem>>, vector<14x128xf32>
    %112 = arith.maximumf %110, %111 : vector<14x128xf32>
    %c145 = arith.constant 145 : index
    %c0_124 = arith.constant 0 : index
    %113 = vector.load %arg8[%c145, %c0_124] : memref<264x128xf32, #tpu.memory_space<vmem>>, vector<14x128xf32>
    tpu.vector_store %arg8[%c145, %c0_124], %112 {strides = array<i32>} : memref<264x128xf32, #tpu.memory_space<vmem>>, vector<14x128xf32>,
    %c576 = arith.constant 576 : index
    %c0_125 = arith.constant 0 : index
    %114 = vector.load %arg7[%c576, %c0_125] : memref<896x128xf32, #tpu.memory_space<vmem>>, vector<32x128xf32>
    %c608 = arith.constant 608 : index
    %c0_126 = arith.constant 0 : index
    %115 = vector.load %arg7[%c608, %c0_126] : memref<896x128xf32, #tpu.memory_space<vmem>>, vector<32x128xf32>
    %116 = arith.maximumf %114, %115 : vector<32x128xf32>
    %c0_127 = arith.constant 0 : index
    %c0_128 = arith.constant 0 : index
    %117 = vector.load %arg11[%c0_127, %c0_128] : memref<32x128xf32, #tpu.memory_space<vmem>>, vector<32x128xf32>
    tpu.vector_store %arg11[%c0_127, %c0_128], %116 {strides = array<i32>} : memref<32x128xf32, #tpu.memory_space<vmem>>, vector<32x128xf32>,
    %c0_129 = arith.constant 0 : index
    %c0_130 = arith.constant 0 : index
    %118 = tpu.strided_load %arg11[%c0_129, %c0_130] {strides = array<i32: 2, 1>} : memref<32x128xf32, #tpu.memory_space<vmem>>, vector<14x128xf32>
    %c1_131 = arith.constant 1 : index
    %c0_132 = arith.constant 0 : index
    %119 = tpu.strided_load %arg11[%c1_131, %c0_132] {strides = array<i32: 2, 1>} : memref<32x128xf32, #tpu.memory_space<vmem>>, vector<14x128xf32>
    %120 = arith.maximumf %118, %119 : vector<14x128xf32>
    %c161 = arith.constant 161 : index
    %c0_133 = arith.constant 0 : index
    %121 = vector.load %arg8[%c161, %c0_133] : memref<264x128xf32, #tpu.memory_space<vmem>>, vector<14x128xf32>
    tpu.vector_store %arg8[%c161, %c0_133], %120 {strides = array<i32>} : memref<264x128xf32, #tpu.memory_space<vmem>>, vector<14x128xf32>,
    %c640 = arith.constant 640 : index
    %c0_134 = arith.constant 0 : index
    %122 = vector.load %arg7[%c640, %c0_134] : memref<896x128xf32, #tpu.memory_space<vmem>>, vector<32x128xf32>
    %c672_135 = arith.constant 672 : index
    %c0_136 = arith.constant 0 : index
    %123 = vector.load %arg7[%c672_135, %c0_136] : memref<896x128xf32, #tpu.memory_space<vmem>>, vector<32x128xf32>
    %124 = arith.maximumf %122, %123 : vector<32x128xf32>
    %c0_137 = arith.constant 0 : index
    %c0_138 = arith.constant 0 : index
    %125 = vector.load %arg11[%c0_137, %c0_138] : memref<32x128xf32, #tpu.memory_space<vmem>>, vector<32x128xf32>
    tpu.vector_store %arg11[%c0_137, %c0_138], %124 {strides = array<i32>} : memref<32x128xf32, #tpu.memory_space<vmem>>, vector<32x128xf32>,
    %c0_139 = arith.constant 0 : index
    %c0_140 = arith.constant 0 : index
    %126 = tpu.strided_load %arg11[%c0_139, %c0_140] {strides = array<i32: 2, 1>} : memref<32x128xf32, #tpu.memory_space<vmem>>, vector<14x128xf32>
    %c1_141 = arith.constant 1 : index
    %c0_142 = arith.constant 0 : index
    %127 = tpu.strided_load %arg11[%c1_141, %c0_142] {strides = array<i32: 2, 1>} : memref<32x128xf32, #tpu.memory_space<vmem>>, vector<14x128xf32>
    %128 = arith.maximumf %126, %127 : vector<14x128xf32>
    %c177 = arith.constant 177 : index
    %c0_143 = arith.constant 0 : index
    %129 = vector.load %arg8[%c177, %c0_143] : memref<264x128xf32, #tpu.memory_space<vmem>>, vector<14x128xf32>
    tpu.vector_store %arg8[%c177, %c0_143], %128 {strides = array<i32>} : memref<264x128xf32, #tpu.memory_space<vmem>>, vector<14x128xf32>,
    %c704 = arith.constant 704 : index
    %c0_144 = arith.constant 0 : index
    %130 = vector.load %arg7[%c704, %c0_144] : memref<896x128xf32, #tpu.memory_space<vmem>>, vector<32x128xf32>
    %c736 = arith.constant 736 : index
    %c0_145 = arith.constant 0 : index
    %131 = vector.load %arg7[%c736, %c0_145] : memref<896x128xf32, #tpu.memory_space<vmem>>, vector<32x128xf32>
    %132 = arith.maximumf %130, %131 : vector<32x128xf32>
    %c0_146 = arith.constant 0 : index
    %c0_147 = arith.constant 0 : index
    %133 = vector.load %arg11[%c0_146, %c0_147] : memref<32x128xf32, #tpu.memory_space<vmem>>, vector<32x128xf32>
    tpu.vector_store %arg11[%c0_146, %c0_147], %132 {strides = array<i32>} : memref<32x128xf32, #tpu.memory_space<vmem>>, vector<32x128xf32>,
    %c0_148 = arith.constant 0 : index
    %c0_149 = arith.constant 0 : index
    %134 = tpu.strided_load %arg11[%c0_148, %c0_149] {strides = array<i32: 2, 1>} : memref<32x128xf32, #tpu.memory_space<vmem>>, vector<14x128xf32>
    %c1_150 = arith.constant 1 : index
    %c0_151 = arith.constant 0 : index
    %135 = tpu.strided_load %arg11[%c1_150, %c0_151] {strides = array<i32: 2, 1>} : memref<32x128xf32, #tpu.memory_space<vmem>>, vector<14x128xf32>
    %136 = arith.maximumf %134, %135 : vector<14x128xf32>
    %c193 = arith.constant 193 : index
    %c0_152 = arith.constant 0 : index
    %137 = vector.load %arg8[%c193, %c0_152] : memref<264x128xf32, #tpu.memory_space<vmem>>, vector<14x128xf32>
    tpu.vector_store %arg8[%c193, %c0_152], %136 {strides = array<i32>} : memref<264x128xf32, #tpu.memory_space<vmem>>, vector<14x128xf32>,
    %c768 = arith.constant 768 : index
    %c0_153 = arith.constant 0 : index
    %138 = vector.load %arg7[%c768, %c0_153] : memref<896x128xf32, #tpu.memory_space<vmem>>, vector<32x128xf32>
    %c800 = arith.constant 800 : index
    %c0_154 = arith.constant 0 : index
    %139 = vector.load %arg7[%c800, %c0_154] : memref<896x128xf32, #tpu.memory_space<vmem>>, vector<32x128xf32>
    %140 = arith.maximumf %138, %139 : vector<32x128xf32>
    %c0_155 = arith.constant 0 : index
    %c0_156 = arith.constant 0 : index
    %141 = vector.load %arg11[%c0_155, %c0_156] : memref<32x128xf32, #tpu.memory_space<vmem>>, vector<32x128xf32>
    tpu.vector_store %arg11[%c0_155, %c0_156], %140 {strides = array<i32>} : memref<32x128xf32, #tpu.memory_space<vmem>>, vector<32x128xf32>,
    %c0_157 = arith.constant 0 : index
    %c0_158 = arith.constant 0 : index
    %142 = tpu.strided_load %arg11[%c0_157, %c0_158] {strides = array<i32: 2, 1>} : memref<32x128xf32, #tpu.memory_space<vmem>>, vector<14x128xf32>
    %c1_159 = arith.constant 1 : index
    %c0_160 = arith.constant 0 : index
    %143 = tpu.strided_load %arg11[%c1_159, %c0_160] {strides = array<i32: 2, 1>} : memref<32x128xf32, #tpu.memory_space<vmem>>, vector<14x128xf32>
    %144 = arith.maximumf %142, %143 : vector<14x128xf32>
    %c209 = arith.constant 209 : index
    %c0_161 = arith.constant 0 : index
    %145 = vector.load %arg8[%c209, %c0_161] : memref<264x128xf32, #tpu.memory_space<vmem>>, vector<14x128xf32>
    tpu.vector_store %arg8[%c209, %c0_161], %144 {strides = array<i32>} : memref<264x128xf32, #tpu.memory_space<vmem>>, vector<14x128xf32>,
    %c832 = arith.constant 832 : index
    %c0_162 = arith.constant 0 : index
    %146 = vector.load %arg7[%c832, %c0_162] : memref<896x128xf32, #tpu.memory_space<vmem>>, vector<32x128xf32>
    %c864 = arith.constant 864 : index
    %c0_163 = arith.constant 0 : index
    %147 = vector.load %arg7[%c864, %c0_163] : memref<896x128xf32, #tpu.memory_space<vmem>>, vector<32x128xf32>
    %148 = arith.maximumf %146, %147 : vector<32x128xf32>
    %c0_164 = arith.constant 0 : index
    %c0_165 = arith.constant 0 : index
    %149 = vector.load %arg11[%c0_164, %c0_165] : memref<32x128xf32, #tpu.memory_space<vmem>>, vector<32x128xf32>
    tpu.vector_store %arg11[%c0_164, %c0_165], %148 {strides = array<i32>} : memref<32x128xf32, #tpu.memory_space<vmem>>, vector<32x128xf32>,
    %c0_166 = arith.constant 0 : index
    %c0_167 = arith.constant 0 : index
    %150 = tpu.strided_load %arg11[%c0_166, %c0_167] {strides = array<i32: 2, 1>} : memref<32x128xf32, #tpu.memory_space<vmem>>, vector<14x128xf32>
    %c1_168 = arith.constant 1 : index
    %c0_169 = arith.constant 0 : index
    %151 = tpu.strided_load %arg11[%c1_168, %c0_169] {strides = array<i32: 2, 1>} : memref<32x128xf32, #tpu.memory_space<vmem>>, vector<14x128xf32>
    %152 = arith.maximumf %150, %151 : vector<14x128xf32>
    %c225 = arith.constant 225 : index
    %c0_170 = arith.constant 0 : index
    %153 = vector.load %arg8[%c225, %c0_170] : memref<264x128xf32, #tpu.memory_space<vmem>>, vector<14x128xf32>
    tpu.vector_store %arg8[%c225, %c0_170], %152 {strides = array<i32>} : memref<264x128xf32, #tpu.memory_space<vmem>>, vector<14x128xf32>,
    %c0_171 = arith.constant 0 : index
    %c0_172 = arith.constant 0 : index
    %154 = vector.load %arg8[%c0_171, %c0_172] : memref<264x128xf32, #tpu.memory_space<vmem>>, vector<224x128xf32>
    %155 = arith.truncf %154 : vector<224x128xf32> to vector<224x128xbf16>
    %c0_173 = arith.constant 0 : index
    %c0_174 = arith.constant 0 : index
    %156 = vector.load %arg9[%c0_173, %c0_174] : memref<224x1152xbf16, #tpu.memory_space<vmem>>, vector<224x128xbf16>
    tpu.vector_store %arg9[%c0_173, %c0_174], %155 {strides = array<i32>} : memref<224x1152xbf16, #tpu.memory_space<vmem>>, vector<224x128xbf16>,
    %c1_175 = arith.constant 1 : index
    %c0_176 = arith.constant 0 : index
    %157 = vector.load %arg8[%c1_175, %c0_176] : memref<264x128xf32, #tpu.memory_space<vmem>>, vector<224x128xf32>
    %158 = arith.truncf %157 : vector<224x128xf32> to vector<224x128xbf16>
    %c0_177 = arith.constant 0 : index
    %c128_178 = arith.constant 128 : index
    %159 = vector.load %arg9[%c0_177, %c128_178] : memref<224x1152xbf16, #tpu.memory_space<vmem>>, vector<224x128xbf16>
    tpu.vector_store %arg9[%c0_177, %c128_178], %158 {strides = array<i32>} : memref<224x1152xbf16, #tpu.memory_space<vmem>>, vector<224x128xbf16>,
    %c2 = arith.constant 2 : index
    %c0_179 = arith.constant 0 : index
    %160 = vector.load %arg8[%c2, %c0_179] : memref<264x128xf32, #tpu.memory_space<vmem>>, vector<224x128xf32>
    %161 = arith.truncf %160 : vector<224x128xf32> to vector<224x128xbf16>
    %c0_180 = arith.constant 0 : index
    %c256_181 = arith.constant 256 : index
    %162 = vector.load %arg9[%c0_180, %c256_181] : memref<224x1152xbf16, #tpu.memory_space<vmem>>, vector<224x128xbf16>
    tpu.vector_store %arg9[%c0_180, %c256_181], %161 {strides = array<i32>} : memref<224x1152xbf16, #tpu.memory_space<vmem>>, vector<224x128xbf16>,
    %c16 = arith.constant 16 : index
    %c0_182 = arith.constant 0 : index
    %163 = vector.load %arg8[%c16, %c0_182] : memref<264x128xf32, #tpu.memory_space<vmem>>, vector<224x128xf32>
    %164 = arith.truncf %163 : vector<224x128xf32> to vector<224x128xbf16>
    %c0_183 = arith.constant 0 : index
    %c384_184 = arith.constant 384 : index
    %165 = vector.load %arg9[%c0_183, %c384_184] : memref<224x1152xbf16, #tpu.memory_space<vmem>>, vector<224x128xbf16>
    tpu.vector_store %arg9[%c0_183, %c384_184], %164 {strides = array<i32>} : memref<224x1152xbf16, #tpu.memory_space<vmem>>, vector<224x128xbf16>,
    %c17_185 = arith.constant 17 : index
    %c0_186 = arith.constant 0 : index
    %166 = vector.load %arg8[%c17_185, %c0_186] : memref<264x128xf32, #tpu.memory_space<vmem>>, vector<224x128xf32>
    %167 = arith.truncf %166 : vector<224x128xf32> to vector<224x128xbf16>
    %c0_187 = arith.constant 0 : index
    %c512_188 = arith.constant 512 : index
    %168 = vector.load %arg9[%c0_187, %c512_188] : memref<224x1152xbf16, #tpu.memory_space<vmem>>, vector<224x128xbf16>
    tpu.vector_store %arg9[%c0_187, %c512_188], %167 {strides = array<i32>} : memref<224x1152xbf16, #tpu.memory_space<vmem>>, vector<224x128xbf16>,
    %c18 = arith.constant 18 : index
    %c0_189 = arith.constant 0 : index
    %169 = vector.load %arg8[%c18, %c0_189] : memref<264x128xf32, #tpu.memory_space<vmem>>, vector<224x128xf32>
    %170 = arith.truncf %169 : vector<224x128xf32> to vector<224x128xbf16>
    %c0_190 = arith.constant 0 : index
    %c640_191 = arith.constant 640 : index
    %171 = vector.load %arg9[%c0_190, %c640_191] : memref<224x1152xbf16, #tpu.memory_space<vmem>>, vector<224x128xbf16>
    tpu.vector_store %arg9[%c0_190, %c640_191], %170 {strides = array<i32>} : memref<224x1152xbf16, #tpu.memory_space<vmem>>, vector<224x128xbf16>,
    %c32_192 = arith.constant 32 : index
    %c0_193 = arith.constant 0 : index
    %172 = vector.load %arg8[%c32_192, %c0_193] : memref<264x128xf32, #tpu.memory_space<vmem>>, vector<224x128xf32>
    %173 = arith.truncf %172 : vector<224x128xf32> to vector<224x128xbf16>
    %c0_194 = arith.constant 0 : index
    %c768_195 = arith.constant 768 : index
    %174 = vector.load %arg9[%c0_194, %c768_195] : memref<224x1152xbf16, #tpu.memory_space<vmem>>, vector<224x128xbf16>
    tpu.vector_store %arg9[%c0_194, %c768_195], %173 {strides = array<i32>} : memref<224x1152xbf16, #tpu.memory_space<vmem>>, vector<224x128xbf16>,
    %c33_196 = arith.constant 33 : index
    %c0_197 = arith.constant 0 : index
    %175 = vector.load %arg8[%c33_196, %c0_197] : memref<264x128xf32, #tpu.memory_space<vmem>>, vector<224x128xf32>
    %176 = arith.truncf %175 : vector<224x128xf32> to vector<224x128xbf16>
    %c0_198 = arith.constant 0 : index
    %c896 = arith.constant 896 : index
    %177 = vector.load %arg9[%c0_198, %c896] : memref<224x1152xbf16, #tpu.memory_space<vmem>>, vector<224x128xbf16>
    tpu.vector_store %arg9[%c0_198, %c896], %176 {strides = array<i32>} : memref<224x1152xbf16, #tpu.memory_space<vmem>>, vector<224x128xbf16>,
    %c34 = arith.constant 34 : index
    %c0_199 = arith.constant 0 : index
    %178 = vector.load %arg8[%c34, %c0_199] : memref<264x128xf32, #tpu.memory_space<vmem>>, vector<224x128xf32>
    %179 = arith.truncf %178 : vector<224x128xf32> to vector<224x128xbf16>
    %c0_200 = arith.constant 0 : index
    %c1024 = arith.constant 1024 : index
    %180 = vector.load %arg9[%c0_200, %c1024] : memref<224x1152xbf16, #tpu.memory_space<vmem>>, vector<224x128xbf16>
    tpu.vector_store %arg9[%c0_200, %c1024], %179 {strides = array<i32>} : memref<224x1152xbf16, #tpu.memory_space<vmem>>, vector<224x128xbf16>,
    %c0_201 = arith.constant 0 : index
    %c0_202 = arith.constant 0 : index
    %181 = vector.load %arg9[%c0_201, %c0_202] : memref<224x1152xbf16, #tpu.memory_space<vmem>>, vector<224x1152xbf16>
    %c0_203 = arith.constant 0 : index
    %c0_204 = arith.constant 0 : index
    %182 = vector.load %arg4[%c0_203, %c0_204] : memref<1152x128xbf16, #tpu.memory_space<vmem>>, vector<1152x128xbf16>
    %cst_205 = arith.constant dense<0.000000e+00> : vector<224x128xf32>
    %183 = tpu.matmul %181, %182, %cst_205 {dimension_numbers = #tpu.dot_dimension_numbers<[1], [0], [0], [1], [0, 0, 1, 1], [], []>} : vector<224x1152xbf16>, vector<1152x128xbf16>, vector<224x128xf32> -> vector<224x128xf32>
    %c0_206 = arith.constant 0 : index
    %c0_207 = arith.constant 0 : index
    %184 = vector.load %arg5[%c0_206, %c0_207] : memref<1x128xf32, #tpu.memory_space<vmem>>, vector<1x128xf32>
    %185 = vector.broadcast %184 : vector<1x128xf32> to vector<224x128xf32>
    %186 = arith.addf %183, %185 : vector<224x128xf32>
    %cst_208 = arith.constant 0.000000e+00 : f32
    %187 = vector.broadcast %cst_208 : f32 to vector<224x128xf32>
    %188 = arith.maximumf %186, %187 : vector<224x128xf32>
    %c0_209 = arith.constant 0 : index
    %c0_210 = arith.constant 0 : index
    %189 = vector.load %arg10[%c0_209, %c0_210] : memref<224x128xf32, #tpu.memory_space<vmem>>, vector<224x128xf32>
    tpu.vector_store %arg10[%c0_209, %c0_210], %188 {strides = array<i32>} : memref<224x128xf32, #tpu.memory_space<vmem>>, vector<224x128xf32>,
    %c0_211 = arith.constant 0 : index
    %c0_212 = arith.constant 0 : index
    %190 = vector.load %arg10[%c0_211, %c0_212] : memref<224x128xf32, #tpu.memory_space<vmem>>, vector<16x128xf32>
    %c16_213 = arith.constant 16 : index
    %c0_214 = arith.constant 0 : index
    %191 = vector.load %arg10[%c16_213, %c0_214] : memref<224x128xf32, #tpu.memory_space<vmem>>, vector<16x128xf32>
    %192 = arith.maximumf %190, %191 : vector<16x128xf32>
    %c0_215 = arith.constant 0 : index
    %c0_216 = arith.constant 0 : index
    %193 = vector.load %arg12[%c0_215, %c0_216] : memref<16x128xf32, #tpu.memory_space<vmem>>, vector<16x128xf32>
    tpu.vector_store %arg12[%c0_215, %c0_216], %192 {strides = array<i32>} : memref<16x128xf32, #tpu.memory_space<vmem>>, vector<16x128xf32>,
    %c0_217 = arith.constant 0 : index
    %c0_218 = arith.constant 0 : index
    %194 = tpu.strided_load %arg12[%c0_217, %c0_218] {strides = array<i32: 2, 1>} : memref<16x128xf32, #tpu.memory_space<vmem>>, vector<7x128xf32>
    %c1_219 = arith.constant 1 : index
    %c0_220 = arith.constant 0 : index
    %195 = tpu.strided_load %arg12[%c1_219, %c0_220] {strides = array<i32: 2, 1>} : memref<16x128xf32, #tpu.memory_space<vmem>>, vector<7x128xf32>
    %196 = arith.maximumf %194, %195 : vector<7x128xf32>
    %c0_221 = arith.constant 0 : index
    %c0_222 = arith.constant 0 : index
    %c0_223 = arith.constant 0 : index
    %197 = vector.load %arg6[%c0_221, %c0_222, %c0_223] : memref<1x49x128xf32, #tpu.memory_space<vmem>>, vector<1x7x128xf32>
    %198 = vector.shape_cast %197 : vector<1x7x128xf32> to vector<7x128xf32>
    %199 = vector.shape_cast %196 : vector<7x128xf32> to vector<1x7x128xf32>
    tpu.vector_store %arg6[%c0_221, %c0_222, %c0_223], %199 {strides = array<i32>} : memref<1x49x128xf32, #tpu.memory_space<vmem>>, vector<1x7x128xf32>,
    %c32_224 = arith.constant 32 : index
    %c0_225 = arith.constant 0 : index
    %200 = vector.load %arg10[%c32_224, %c0_225] : memref<224x128xf32, #tpu.memory_space<vmem>>, vector<16x128xf32>
    %c48 = arith.constant 48 : index
    %c0_226 = arith.constant 0 : index
    %201 = vector.load %arg10[%c48, %c0_226] : memref<224x128xf32, #tpu.memory_space<vmem>>, vector<16x128xf32>
    %202 = arith.maximumf %200, %201 : vector<16x128xf32>
    %c0_227 = arith.constant 0 : index
    %c0_228 = arith.constant 0 : index
    %203 = vector.load %arg12[%c0_227, %c0_228] : memref<16x128xf32, #tpu.memory_space<vmem>>, vector<16x128xf32>
    tpu.vector_store %arg12[%c0_227, %c0_228], %202 {strides = array<i32>} : memref<16x128xf32, #tpu.memory_space<vmem>>, vector<16x128xf32>,
    %c0_229 = arith.constant 0 : index
    %c0_230 = arith.constant 0 : index
    %204 = tpu.strided_load %arg12[%c0_229, %c0_230] {strides = array<i32: 2, 1>} : memref<16x128xf32, #tpu.memory_space<vmem>>, vector<7x128xf32>
    %c1_231 = arith.constant 1 : index
    %c0_232 = arith.constant 0 : index
    %205 = tpu.strided_load %arg12[%c1_231, %c0_232] {strides = array<i32: 2, 1>} : memref<16x128xf32, #tpu.memory_space<vmem>>, vector<7x128xf32>
    %206 = arith.maximumf %204, %205 : vector<7x128xf32>
    %c0_233 = arith.constant 0 : index
    %c7 = arith.constant 7 : index
    %c0_234 = arith.constant 0 : index
    %207 = vector.load %arg6[%c0_233, %c7, %c0_234] : memref<1x49x128xf32, #tpu.memory_space<vmem>>, vector<1x7x128xf32>
    %208 = vector.shape_cast %207 : vector<1x7x128xf32> to vector<7x128xf32>
    %209 = vector.shape_cast %206 : vector<7x128xf32> to vector<1x7x128xf32>
    tpu.vector_store %arg6[%c0_233, %c7, %c0_234], %209 {strides = array<i32>} : memref<1x49x128xf32, #tpu.memory_space<vmem>>, vector<1x7x128xf32>,
    %c64_235 = arith.constant 64 : index
    %c0_236 = arith.constant 0 : index
    %210 = vector.load %arg10[%c64_235, %c0_236] : memref<224x128xf32, #tpu.memory_space<vmem>>, vector<16x128xf32>
    %c80 = arith.constant 80 : index
    %c0_237 = arith.constant 0 : index
    %211 = vector.load %arg10[%c80, %c0_237] : memref<224x128xf32, #tpu.memory_space<vmem>>, vector<16x128xf32>
    %212 = arith.maximumf %210, %211 : vector<16x128xf32>
    %c0_238 = arith.constant 0 : index
    %c0_239 = arith.constant 0 : index
    %213 = vector.load %arg12[%c0_238, %c0_239] : memref<16x128xf32, #tpu.memory_space<vmem>>, vector<16x128xf32>
    tpu.vector_store %arg12[%c0_238, %c0_239], %212 {strides = array<i32>} : memref<16x128xf32, #tpu.memory_space<vmem>>, vector<16x128xf32>,
    %c0_240 = arith.constant 0 : index
    %c0_241 = arith.constant 0 : index
    %214 = tpu.strided_load %arg12[%c0_240, %c0_241] {strides = array<i32: 2, 1>} : memref<16x128xf32, #tpu.memory_space<vmem>>, vector<7x128xf32>
    %c1_242 = arith.constant 1 : index
    %c0_243 = arith.constant 0 : index
    %215 = tpu.strided_load %arg12[%c1_242, %c0_243] {strides = array<i32: 2, 1>} : memref<16x128xf32, #tpu.memory_space<vmem>>, vector<7x128xf32>
    %216 = arith.maximumf %214, %215 : vector<7x128xf32>
    %c0_244 = arith.constant 0 : index
    %c14 = arith.constant 14 : index
    %c0_245 = arith.constant 0 : index
    %217 = vector.load %arg6[%c0_244, %c14, %c0_245] : memref<1x49x128xf32, #tpu.memory_space<vmem>>, vector<1x7x128xf32>
    %218 = vector.shape_cast %217 : vector<1x7x128xf32> to vector<7x128xf32>
    %219 = vector.shape_cast %216 : vector<7x128xf32> to vector<1x7x128xf32>
    tpu.vector_store %arg6[%c0_244, %c14, %c0_245], %219 {strides = array<i32>} : memref<1x49x128xf32, #tpu.memory_space<vmem>>, vector<1x7x128xf32>,
    %c96_246 = arith.constant 96 : index
    %c0_247 = arith.constant 0 : index
    %220 = vector.load %arg10[%c96_246, %c0_247] : memref<224x128xf32, #tpu.memory_space<vmem>>, vector<16x128xf32>
    %c112 = arith.constant 112 : index
    %c0_248 = arith.constant 0 : index
    %221 = vector.load %arg10[%c112, %c0_248] : memref<224x128xf32, #tpu.memory_space<vmem>>, vector<16x128xf32>
    %222 = arith.maximumf %220, %221 : vector<16x128xf32>
    %c0_249 = arith.constant 0 : index
    %c0_250 = arith.constant 0 : index
    %223 = vector.load %arg12[%c0_249, %c0_250] : memref<16x128xf32, #tpu.memory_space<vmem>>, vector<16x128xf32>
    tpu.vector_store %arg12[%c0_249, %c0_250], %222 {strides = array<i32>} : memref<16x128xf32, #tpu.memory_space<vmem>>, vector<16x128xf32>,
    %c0_251 = arith.constant 0 : index
    %c0_252 = arith.constant 0 : index
    %224 = tpu.strided_load %arg12[%c0_251, %c0_252] {strides = array<i32: 2, 1>} : memref<16x128xf32, #tpu.memory_space<vmem>>, vector<7x128xf32>
    %c1_253 = arith.constant 1 : index
    %c0_254 = arith.constant 0 : index
    %225 = tpu.strided_load %arg12[%c1_253, %c0_254] {strides = array<i32: 2, 1>} : memref<16x128xf32, #tpu.memory_space<vmem>>, vector<7x128xf32>
    %226 = arith.maximumf %224, %225 : vector<7x128xf32>
    %c0_255 = arith.constant 0 : index
    %c21 = arith.constant 21 : index
    %c0_256 = arith.constant 0 : index
    %227 = vector.load %arg6[%c0_255, %c21, %c0_256] : memref<1x49x128xf32, #tpu.memory_space<vmem>>, vector<1x7x128xf32>
    %228 = vector.shape_cast %227 : vector<1x7x128xf32> to vector<7x128xf32>
    %229 = vector.shape_cast %226 : vector<7x128xf32> to vector<1x7x128xf32>
    tpu.vector_store %arg6[%c0_255, %c21, %c0_256], %229 {strides = array<i32>} : memref<1x49x128xf32, #tpu.memory_space<vmem>>, vector<1x7x128xf32>,
    %c128_257 = arith.constant 128 : index
    %c0_258 = arith.constant 0 : index
    %230 = vector.load %arg10[%c128_257, %c0_258] : memref<224x128xf32, #tpu.memory_space<vmem>>, vector<16x128xf32>
    %c144 = arith.constant 144 : index
    %c0_259 = arith.constant 0 : index
    %231 = vector.load %arg10[%c144, %c0_259] : memref<224x128xf32, #tpu.memory_space<vmem>>, vector<16x128xf32>
    %232 = arith.maximumf %230, %231 : vector<16x128xf32>
    %c0_260 = arith.constant 0 : index
    %c0_261 = arith.constant 0 : index
    %233 = vector.load %arg12[%c0_260, %c0_261] : memref<16x128xf32, #tpu.memory_space<vmem>>, vector<16x128xf32>
    tpu.vector_store %arg12[%c0_260, %c0_261], %232 {strides = array<i32>} : memref<16x128xf32, #tpu.memory_space<vmem>>, vector<16x128xf32>,
    %c0_262 = arith.constant 0 : index
    %c0_263 = arith.constant 0 : index
    %234 = tpu.strided_load %arg12[%c0_262, %c0_263] {strides = array<i32: 2, 1>} : memref<16x128xf32, #tpu.memory_space<vmem>>, vector<7x128xf32>
    %c1_264 = arith.constant 1 : index
    %c0_265 = arith.constant 0 : index
    %235 = tpu.strided_load %arg12[%c1_264, %c0_265] {strides = array<i32: 2, 1>} : memref<16x128xf32, #tpu.memory_space<vmem>>, vector<7x128xf32>
    %236 = arith.maximumf %234, %235 : vector<7x128xf32>
    %c0_266 = arith.constant 0 : index
    %c28 = arith.constant 28 : index
    %c0_267 = arith.constant 0 : index
    %237 = vector.load %arg6[%c0_266, %c28, %c0_267] : memref<1x49x128xf32, #tpu.memory_space<vmem>>, vector<1x7x128xf32>
    %238 = vector.shape_cast %237 : vector<1x7x128xf32> to vector<7x128xf32>
    %239 = vector.shape_cast %236 : vector<7x128xf32> to vector<1x7x128xf32>
    tpu.vector_store %arg6[%c0_266, %c28, %c0_267], %239 {strides = array<i32>} : memref<1x49x128xf32, #tpu.memory_space<vmem>>, vector<1x7x128xf32>,
    %c160_268 = arith.constant 160 : index
    %c0_269 = arith.constant 0 : index
    %240 = vector.load %arg10[%c160_268, %c0_269] : memref<224x128xf32, #tpu.memory_space<vmem>>, vector<16x128xf32>
    %c176 = arith.constant 176 : index
    %c0_270 = arith.constant 0 : index
    %241 = vector.load %arg10[%c176, %c0_270] : memref<224x128xf32, #tpu.memory_space<vmem>>, vector<16x128xf32>
    %242 = arith.maximumf %240, %241 : vector<16x128xf32>
    %c0_271 = arith.constant 0 : index
    %c0_272 = arith.constant 0 : index
    %243 = vector.load %arg12[%c0_271, %c0_272] : memref<16x128xf32, #tpu.memory_space<vmem>>, vector<16x128xf32>
    tpu.vector_store %arg12[%c0_271, %c0_272], %242 {strides = array<i32>} : memref<16x128xf32, #tpu.memory_space<vmem>>, vector<16x128xf32>,
    %c0_273 = arith.constant 0 : index
    %c0_274 = arith.constant 0 : index
    %244 = tpu.strided_load %arg12[%c0_273, %c0_274] {strides = array<i32: 2, 1>} : memref<16x128xf32, #tpu.memory_space<vmem>>, vector<7x128xf32>
    %c1_275 = arith.constant 1 : index
    %c0_276 = arith.constant 0 : index
    %245 = tpu.strided_load %arg12[%c1_275, %c0_276] {strides = array<i32: 2, 1>} : memref<16x128xf32, #tpu.memory_space<vmem>>, vector<7x128xf32>
    %246 = arith.maximumf %244, %245 : vector<7x128xf32>
    %c0_277 = arith.constant 0 : index
    %c35 = arith.constant 35 : index
    %c0_278 = arith.constant 0 : index
    %247 = vector.load %arg6[%c0_277, %c35, %c0_278] : memref<1x49x128xf32, #tpu.memory_space<vmem>>, vector<1x7x128xf32>
    %248 = vector.shape_cast %247 : vector<1x7x128xf32> to vector<7x128xf32>
    %249 = vector.shape_cast %246 : vector<7x128xf32> to vector<1x7x128xf32>
    tpu.vector_store %arg6[%c0_277, %c35, %c0_278], %249 {strides = array<i32>} : memref<1x49x128xf32, #tpu.memory_space<vmem>>, vector<1x7x128xf32>,
    %c192_279 = arith.constant 192 : index
    %c0_280 = arith.constant 0 : index
    %250 = vector.load %arg10[%c192_279, %c0_280] : memref<224x128xf32, #tpu.memory_space<vmem>>, vector<16x128xf32>
    %c208 = arith.constant 208 : index
    %c0_281 = arith.constant 0 : index
    %251 = vector.load %arg10[%c208, %c0_281] : memref<224x128xf32, #tpu.memory_space<vmem>>, vector<16x128xf32>
    %252 = arith.maximumf %250, %251 : vector<16x128xf32>
    %c0_282 = arith.constant 0 : index
    %c0_283 = arith.constant 0 : index
    %253 = vector.load %arg12[%c0_282, %c0_283] : memref<16x128xf32, #tpu.memory_space<vmem>>, vector<16x128xf32>
    tpu.vector_store %arg12[%c0_282, %c0_283], %252 {strides = array<i32>} : memref<16x128xf32, #tpu.memory_space<vmem>>, vector<16x128xf32>,
    %c0_284 = arith.constant 0 : index
    %c0_285 = arith.constant 0 : index
    %254 = tpu.strided_load %arg12[%c0_284, %c0_285] {strides = array<i32: 2, 1>} : memref<16x128xf32, #tpu.memory_space<vmem>>, vector<7x128xf32>
    %c1_286 = arith.constant 1 : index
    %c0_287 = arith.constant 0 : index
    %255 = tpu.strided_load %arg12[%c1_286, %c0_287] {strides = array<i32: 2, 1>} : memref<16x128xf32, #tpu.memory_space<vmem>>, vector<7x128xf32>
    %256 = arith.maximumf %254, %255 : vector<7x128xf32>
    %c0_288 = arith.constant 0 : index
    %c42 = arith.constant 42 : index
    %c0_289 = arith.constant 0 : index
    %257 = vector.load %arg6[%c0_288, %c42, %c0_289] : memref<1x49x128xf32, #tpu.memory_space<vmem>>, vector<1x7x128xf32>
    %258 = vector.shape_cast %257 : vector<1x7x128xf32> to vector<7x128xf32>
    %259 = vector.shape_cast %256 : vector<7x128xf32> to vector<1x7x128xf32>
    tpu.vector_store %arg6[%c0_288, %c42, %c0_289], %259 {strides = array<i32>} : memref<1x49x128xf32, #tpu.memory_space<vmem>>, vector<1x7x128xf32>,
    return
  }
  func.func @transform_0(%arg0: i32) -> (i32, i32, i32) {
    %c0_i32 = arith.constant 0 : i32
    %c0_i32_0 = arith.constant 0 : i32
    %c0_i32_1 = arith.constant 0 : i32
    return %arg0, %c0_i32, %c0_i32_0 : i32, i32, i32
  }
  func.func @transform_1(%arg0: i32) -> (i32, i32) {
    %c0_i32 = arith.constant 0 : i32
    %c0_i32_0 = arith.constant 0 : i32
    %c0_i32_1 = arith.constant 0 : i32
    return %c0_i32, %c0_i32_0 : i32, i32
  }
  func.func @transform_2(%arg0: i32) -> (i32, i32) {
    %c0_i32 = arith.constant 0 : i32
    %c0_i32_0 = arith.constant 0 : i32
    %c0_i32_1 = arith.constant 0 : i32
    return %c0_i32, %c0_i32_0 : i32, i32
  }
  func.func @transform_3(%arg0: i32) -> (i32, i32) {
    %c0_i32 = arith.constant 0 : i32
    %c0_i32_0 = arith.constant 0 : i32
    %c0_i32_1 = arith.constant 0 : i32
    return %c0_i32, %c0_i32_0 : i32, i32
  }
  func.func @transform_4(%arg0: i32) -> (i32, i32) {
    %c0_i32 = arith.constant 0 : i32
    %c0_i32_0 = arith.constant 0 : i32
    %c0_i32_1 = arith.constant 0 : i32
    return %c0_i32, %c0_i32_0 : i32, i32
  }
  func.func @transform_5(%arg0: i32) -> (i32, i32, i32) {
    %c0_i32 = arith.constant 0 : i32
    %c0_i32_0 = arith.constant 0 : i32
    %c0_i32_1 = arith.constant 0 : i32
    return %arg0, %c0_i32, %c0_i32_0 : i32, i32, i32
  }
}

</mosaic_0001>

<llo_original>
// kernel: model_forward.2
$region0: #{model_forward.2}
  #allocation0 [shape = 'u32[]', space=smem, size = 0x4, offset = 0x4, fixed_abs, tag = 'smem constant byte address 0x4 - core index']
  #allocation1 [shape = 'u32[144,128]{1,0:T(1,128)}', space=vmem, size = 0x12000, scoped, tag = 'internal scratch']
  #allocation2 [shape = 'f32[896,128]{1,0:T(8,128)}', space=vmem, size = 0x70000, scoped, tag = 'scratch operand']
  #allocation3 [shape = 'f32[264,128]{1,0:T(8,128)}', space=vmem, size = 0x21000, scoped, tag = 'scratch operand']
  #allocation4 [shape = 'bf16[224,1152]{1,0:T(16,128)(2,1)}', space=vmem, size = 0x7e000, scoped, tag = 'scratch operand']
  #allocation5 [shape = 'f32[224,128]{1,0:T(8,128)}', space=vmem, size = 0x1c000, scoped, tag = 'scratch operand']
  #allocation6 [shape = 'f32[32,128]{1,0:T(8,128)}', space=vmem, size = 0x4000, scoped, tag = 'scratch operand']
  #allocation7 [shape = 'f32[16,128]{1,0:T(8,128)}', space=vmem, size = 0x2000, scoped, tag = 'scratch operand']
  %s0 = inlined_call_operand.vmem [shape: bf16[2,896,16], index: 0, kind: input, shape index: {}]
  %s1 = inlined_call_operand.vmem [shape: bf16[16,128], index: 1, kind: input, shape index: {}]
  %s2 = inlined_call_operand.vmem [shape: f32[1,128], index: 2, kind: input, shape index: {}]
  %s3 = inlined_call_operand.hbm [shape: bf16[1152,128], index: 3, kind: input, shape index: {}]
  %s4 = inlined_call_operand.vmem [shape: f32[1,128], index: 4, kind: input, shape index: {}]
  %s5 = inlined_call_operand.vmem [shape: f32[2,49,128], index: 5, kind: output, shape index: {}]
  %s6 = sld [smem:[#allocation0]]
  $region57: #{model_forward.2} parent=0
    _
  %s8 = ssub.s32 1, %s6
  %s9 = scalar_select 0, %s8, %s6
  $region1: #{model_forward.2} parent=0
    #allocation8 [shape = 'u8[294912]{0}', space=vmem, size = 0x48000, scoped, tag = 'input window, operand 3, single buffered']
    #allocation9 [shape = 's32[2]{0}', space=sflag, size = 0x8, scoped, tag = 'scoped memory for model_forward.2']
    %10 = vsyncpa [#allocation9], 0
    loop: start=0, step=1, limit=4
    $region2: #{model_forward.2} parent=1 // loop_pre_header
      _
    $region3: #{model_forward.2} parent=1 // loop_header
      %s12 = sphi 0, %s16
      %p13 = scmp.ge.s32.totalorder %s12, 4
      %s22 = sphi 0, %s24
      %s25 = sphi 0, %s22
      %s26 = sphi 0, %s25
      %s42 = sphi 0, %s26
      %s46 = sphi 0, %s46
      %s48 = sphi 0, %s46
      %s49 = sphi 0, %s48
      %s63 = sphi 0, %s49
      %s67 = sphi 0, %s67
      %s69 = sphi 0, %s67
      %s70 = sphi 0, %s69
      %s84 = sphi 0, %s70
      %s88 = sphi 0, %s88
      %s90 = sphi 0, %s88
      %s91 = sphi 0, %s90
      %s105 = sphi 0, %s91
      %s109 = sphi 0, %s109
      %s111 = sphi 0, %s109
      %s112 = sphi 0, %s111
      %s126 = sphi 0, %s112
      %s132 = sphi 0, %s134
      %s135 = sphi 0, %s132
      %s136 = sphi 0, %s135
      %s152 = sphi 0, %s136
    $region4: #{model_forward.2} parent=1 // loop_header_branch
      %15 = sbr.rel (%p13) target = $region8
    $region5: #{model_forward.2} parent=1 // loop_body
      %s17 = ssub.s32 %s12, 1
      %s18 = ssub.s32 %s12, 2
      %s19 = sadd.s32 %s12, 1
      %s20 = ssub.s32 %s12, %s19
      %p21 = scmp.eq.s32.totalorder %s20, 0
      %s23 = sadd.s32 %s22, 1
      %s24 = scalar_select %p21, %s22, %s23
      %p27 = pneg %p21
      %p28 = scmp.eq.s32.totalorder %s12, 1
      %p29 = por %p27, %p28
      %p30 = scmp.ne.s32.totalorder %s22, %s25
      %p31 = scmp.eq.s32.totalorder %s12, 0
      %p32 = por %p30, %p31
      %p33 = scmp.ne.s32.totalorder %s22, %s25
      %p34 = scmp.eq.s32.totalorder %s17, 1
      %p35 = por %p33, %p34
      %p36 = scmp.ne.s32.totalorder %s25, %s26
      %p37 = scmp.eq.s32.totalorder %s17, 0
      %p38 = por %p36, %p37
      %p39 = scmp.ne.s32.totalorder %s25, %s26
      %p40 = scmp.eq.s32.totalorder %s18, 1
      %p41 = por %p39, %p40
      %p43 = scmp.ne.s32.totalorder %s26, %s42
      %p44 = scmp.eq.s32.totalorder %s18, 0
      %p45 = por %p43, %p44
      %s47 = sadd.s32 %s46, 1
      %p50 = scmp.eq.s32.totalorder %s12, 1
      %p51 = scmp.ne.s32.totalorder %s46, %s48
      %p52 = scmp.eq.s32.totalorder %s12, 0
      %p53 = por %p51, %p52
      %p54 = scmp.ne.s32.totalorder %s46, %s48
      %p55 = scmp.eq.s32.totalorder %s17, 1
      %p56 = por %p54, %p55
      %p57 = scmp.ne.s32.totalorder %s48, %s49
      %p58 = scmp.eq.s32.totalorder %s17, 0
      %p59 = por %p57, %p58
      %p60 = scmp.ne.s32.totalorder %s48, %s49
      %p61 = scmp.eq.s32.totalorder %s18, 1
      %p62 = por %p60, %p61
      %p64 = scmp.ne.s32.totalorder %s49, %s63
      %p65 = scmp.eq.s32.totalorder %s18, 0
      %p66 = por %p64, %p65
      %s68 = sadd.s32 %s67, 1
      %p71 = scmp.eq.s32.totalorder %s12, 1
      %p72 = scmp.ne.s32.totalorder %s67, %s69
      %p73 = scmp.eq.s32.totalorder %s12, 0
      %p74 = por %p72, %p73
      %p75 = scmp.ne.s32.totalorder %s67, %s69
      %p76 = scmp.eq.s32.totalorder %s17, 1
      %p77 = por %p75, %p76
      %p78 = scmp.ne.s32.totalorder %s69, %s70
      %p79 = scmp.eq.s32.totalorder %s17, 0
      %p80 = por %p78, %p79
      %p81 = scmp.ne.s32.totalorder %s69, %s70
      %p82 = scmp.eq.s32.totalorder %s18, 1
      %p83 = por %p81, %p82
      %p85 = scmp.ne.s32.totalorder %s70, %s84
      %p86 = scmp.eq.s32.totalorder %s18, 0
      %p87 = por %p85, %p86
      %s89 = sadd.s32 %s88, 1
      %p92 = scmp.eq.s32.totalorder %s12, 1
      %p93 = scmp.ne.s32.totalorder %s88, %s90
      %p94 = scmp.eq.s32.totalorder %s12, 0
      %p95 = por %p93, %p94
      %p96 = scmp.ne.s32.totalorder %s88, %s90
      %p97 = scmp.eq.s32.totalorder %s17, 1
      %p98 = por %p96, %p97
      %p99 = scmp.ne.s32.totalorder %s90, %s91
      %p100 = scmp.eq.s32.totalorder %s17, 0
      %p101 = por %p99, %p100
      %p102 = scmp.ne.s32.totalorder %s90, %s91
      %p103 = scmp.eq.s32.totalorder %s18, 1
      %p104 = por %p102, %p103
      %p106 = scmp.ne.s32.totalorder %s91, %s105
      %p107 = scmp.eq.s32.totalorder %s18, 0
      %p108 = por %p106, %p107
      %s110 = sadd.s32 %s109, 1
      %p113 = scmp.eq.s32.totalorder %s12, 1
      %p114 = scmp.ne.s32.totalorder %s109, %s111
      %p115 = scmp.eq.s32.totalorder %s12, 0
      %p116 = por %p114, %p115
      %p117 = scmp.ne.s32.totalorder %s109, %s111
      %p118 = scmp.eq.s32.totalorder %s17, 1
      %p119 = por %p117, %p118
      %p120 = scmp.ne.s32.totalorder %s111, %s112
      %p121 = scmp.eq.s32.totalorder %s17, 0
      %p122 = por %p120, %p121
      %p123 = scmp.ne.s32.totalorder %s111, %s112
      %p124 = scmp.eq.s32.totalorder %s18, 1
      %p125 = por %p123, %p124
      %p127 = scmp.ne.s32.totalorder %s112, %s126
      %p128 = scmp.eq.s32.totalorder %s18, 0
      %p129 = por %p127, %p128
      %s130 = ssub.s32 %s12, %s19
      %p131 = scmp.eq.s32.totalorder %s130, 0
      %s133 = sadd.s32 %s132, 1
      %s134 = scalar_select %p131, %s132, %s133
      %p137 = pneg %p131
      %p138 = scmp.eq.s32.totalorder %s12, 1
      %p139 = por %p137, %p138
      %p140 = scmp.ne.s32.totalorder %s132, %s135
      %p141 = scmp.eq.s32.totalorder %s12, 0
      %p142 = por %p140, %p141
      %p143 = scmp.ne.s32.totalorder %s132, %s135
      %p144 = scmp.eq.s32.totalorder %s17, 1
      %p145 = por %p143, %p144
      %p146 = scmp.ne.s32.totalorder %s135, %s136
      %p147 = scmp.eq.s32.totalorder %s17, 0
      %p148 = por %p146, %p147
      %p149 = scmp.ne.s32.totalorder %s135, %s136
      %p150 = scmp.eq.s32.totalorder %s18, 1
      %p151 = por %p149, %p150
      %p153 = scmp.ne.s32.totalorder %s136, %s152
      %p154 = scmp.eq.s32.totalorder %s18, 0
      %p155 = por %p153, %p154
      %p156 = scmp.le.s32.totalorder 1, %s12
      %p157 = scmp.lt.s32.totalorder %s12, 3
      %p158 = pnand %p156, %p157
      %p159 = pneg %p158
      // Predicated region
      $region9: #{model_forward.2} parent=5 // pred_check
        _
      $region10: #{model_forward.2} parent=5 // pred_check_branch
        %161 = sbr.rel (%p158) target = $region12
      $region11: #{model_forward.2} parent=5 // pred_region
        %s162 = ssub.s32 %s12, 1
        // Predicated region
        $region13: #{model_forward.2} parent=11 // pred_check
          %p163 = pneg %p59
        $region14: #{model_forward.2} parent=11 // pred_check_branch
          %165 = sbr.rel (%p163) target = $region16
        $region15: #{model_forward.2} parent=11 // pred_region
          _
        $region16: #{model_forward.2} parent=11 // pred_fallthru
          _
        // Predicated region
        $region17: #{model_forward.2} parent=11 // pred_check
          %p166 = pneg %p80
        $region18: #{model_forward.2} parent=11 // pred_check_branch
          %168 = sbr.rel (%p166) target = $region20
        $region19: #{model_forward.2} parent=11 // pred_region
          _
        $region20: #{model_forward.2} parent=11 // pred_fallthru
          _
        // Predicated region
        $region21: #{model_forward.2} parent=11 // pred_check
          %p169 = pneg %p101
        $region22: #{model_forward.2} parent=11 // pred_check_branch
          %171 = sbr.rel (%p169) target = $region24
        $region23: #{model_forward.2} parent=11 // pred_region
          %s173 = ssub.s32 9216, 9216
          %174 = vsyncadd [#allocation9], %s173
          %s175 = sshll.u32 [#allocation8], 4
          %s176 = int_to_ptr.vmem [resolvable:$true] %s175
          %181 = dma.hbm_to_vmem [thread:$0]  %s3, 9216, %s176, [#allocation9], 64, 64, 4
        $region24: #{model_forward.2} parent=11 // pred_fallthru
          _
        // Predicated region
        $region25: #{model_forward.2} parent=11 // pred_check
          %p182 = pneg %p122
        $region26: #{model_forward.2} parent=11 // pred_check_branch
          %184 = sbr.rel (%p182) target = $region28
        $region27: #{model_forward.2} parent=11 // pred_region
          _
        $region28: #{model_forward.2} parent=11 // pred_fallthru
          _
      $region12: #{model_forward.2} parent=5 // pred_fallthru
        _
      %p185 = scmp.lt.s32.totalorder %s12, 2
      // Predicated region
      $region29: #{model_forward.2} parent=5 // pred_check
        %p186 = pneg %p185
      $region30: #{model_forward.2} parent=5 // pred_check_branch
        %188 = sbr.rel (%p186) target = $region32
      $region31: #{model_forward.2} parent=5 // pred_region
        // Predicated region
        $region33: #{model_forward.2} parent=31 // pred_check
          %p189 = pneg %p32
        $region34: #{model_forward.2} parent=31 // pred_check_branch
          %191 = sbr.rel (%p189) target = $region36
        $region35: #{model_forward.2} parent=31 // pred_region
          %p192 = scmp.lt.s32.totalorder %s12, 1
          %s193 = scalar_select %p192, %s12, 1
          %s194 = smul.addr %s193, 112
          %s195 = smul.addr %s194, 4
          %s196 = scalar_lea.vmem %s0, %s195
        $region36: #{model_forward.2} parent=31 // pred_fallthru
          _
      $region32: #{model_forward.2} parent=5 // pred_fallthru
        _
      %p197 = scmp.le.s32.totalorder 1, %s12
      %p198 = scmp.lt.s32.totalorder %s12, 3
      %p199 = pnand %p197, %p198
      %p200 = pneg %p199
      // Predicated region
      $region37: #{model_forward.2} parent=5 // pred_check
        _
      $region38: #{model_forward.2} parent=5 // pred_check_branch
        %202 = sbr.rel (%p199) target = $region40
      $region39: #{model_forward.2} parent=5 // pred_region
        %s203 = ssub.s32 %s12, 1
        // Predicated region
        $region41: #{model_forward.2} parent=39 // pred_check
          %p204 = pneg %p101
        $region42: #{model_forward.2} parent=39 // pred_check_branch
          %206 = sbr.rel (%p204) target = $region44
        $region43: #{model_forward.2} parent=39 // pred_region
          %207 = dma.done [#allocation9], 9216
        $region44: #{model_forward.2} parent=39 // pred_fallthru
          _
        %p208 = scmp.lt.s32.totalorder %s17, 1
        %s209 = scalar_select %p208, %s17, 1
        %s210 = smul.addr %s209, 112
        %s211 = smul.addr %s210, 4
        %s212 = scalar_lea.vmem %s0, %s211
        %p213 = pneg %p38
        %p214 = pneg %p35
        %p215 = pneg %p59
        %p216 = pneg %p56
        %p217 = pneg %p80
        %p218 = pneg %p77
        %p219 = pneg %p101
        %p220 = pneg %p98
        %p221 = pneg %p122
        %p222 = pneg %p119
        %p223 = pneg %p148
        %p224 = pneg %p145
        %p225 = scmp.lt.s32.totalorder %s17, 1
        %s226 = scalar_select %p225, %s17, 1
        %s227 = smul.addr %s226, 7
        %s228 = smul.addr %s227, 8
        %s229 = scalar_lea.vmem %s5, %s228
        %p230 = scmp.lt.s32.totalorder %s17, 1
        %s231 = scalar_select %p230, %s17, 1
        %s232 = smul.addr %s231, 112
        %s233 = smul.addr %s232, 4
        %s234 = scalar_lea.vmem %s0, %s233
        %p235 = scmp.lt.s32.totalorder %s17, 1
        %s236 = scalar_select %p235, %s17, 1
        %s237 = smul.addr %s236, 7
        %s238 = smul.addr %s237, 8
        %s239 = scalar_lea.vmem %s5, %s238
        %v241 = vld [vmem:[%s234] sm:$0xf]
        %v242 = vld [vmem:[%s234 + $0x4] sm:$0xf]
        %v243 = vld [vmem:[%s234 + $0x8] sm:$0xf]
        %v244 = vld [vmem:[%s234 + $0xc] sm:$0xf]
        %v245 = vld [vmem:[%s234 + $0x10] sm:$0xf]
        %v246 = vld [vmem:[%s234 + $0x14] sm:$0xf]
        %v247 = vld [vmem:[%s234 + $0x18] sm:$0xf]
        %v248 = vld [vmem:[%s234 + $0x1c] sm:$0xf]
        %v249 = vld [vmem:[%s234 + $0x20] sm:$0xf]
        %v250 = vld [vmem:[%s234 + $0x24] sm:$0xf]
        %v251 = vld [vmem:[%s234 + $0x28] sm:$0xf]
        %v252 = vld [vmem:[%s234 + $0x2c] sm:$0xf]
        %v253 = vld [vmem:[%s234 + $0x30] sm:$0xf]
        %v254 = vld [vmem:[%s234 + $0x34] sm:$0xf]
        %v255 = vld [vmem:[%s234 + $0x38] sm:$0xf]
        %v256 = vld [vmem:[%s234 + $0x3c] sm:$0xf]
        %v257 = vld [vmem:[%s234 + $0x40] sm:$0xf]
        %v258 = vld [vmem:[%s234 + $0x44] sm:$0xf]
        %v259 = vld [vmem:[%s234 + $0x48] sm:$0xf]
        %v260 = vld [vmem:[%s234 + $0x4c] sm:$0xf]
        %v261 = vld [vmem:[%s234 + $0x50] sm:$0xf]
        %v262 = vld [vmem:[%s234 + $0x54] sm:$0xf]
        %v263 = vld [vmem:[%s234 + $0x58] sm:$0xf]
        %v264 = vld [vmem:[%s234 + $0x5c] sm:$0xf]
        %v265 = vld [vmem:[%s234 + $0x60] sm:$0xf]
        %v266 = vld [vmem:[%s234 + $0x64] sm:$0xf]
        %v267 = vld [vmem:[%s234 + $0x68] sm:$0xf]
        %v268 = vld [vmem:[%s234 + $0x6c] sm:$0xf]
        %v269 = vld [vmem:[%s1] sm:$0xf]
        %v270 = vld [vmem:[%s1 + $0x4] sm:$0xf]
        %v271 = vld [vmem:[%s2] sm:$0x1]
        %v273 = vlaneseq
        %v274 = vshrl.u32 %v273, 7
        %v275 = vsub.s32 0, %v274
        %v276 = vrot.slane %v271, %v275
        %v306 = vunpack.c.l.b16 %v241
        %v307 = vunpack.c.l.b16 %v242
        %v308 = vunpack.c.l.b16 %v243
        %v309 = vunpack.c.l.b16 %v244
        %v310 = vunpack.c.l.b16 %v245
        %v311 = vunpack.c.l.b16 %v246
        %v312 = vunpack.c.l.b16 %v247
        %v313 = vunpack.c.l.b16 %v248
        %v314 = vunpack.c.l.b16 %v249
        %v315 = vunpack.c.l.b16 %v250
        %v316 = vunpack.c.l.b16 %v251
        %v317 = vunpack.c.l.b16 %v252
        %v318 = vunpack.c.l.b16 %v253
        %v319 = vunpack.c.l.b16 %v254
        %v320 = vunpack.c.l.b16 %v255
        %v321 = vunpack.c.l.b16 %v256
        %v322 = vunpack.c.l.b16 %v257
        %v323 = vunpack.c.l.b16 %v258
        %v324 = vunpack.c.l.b16 %v259
        %v325 = vunpack.c.l.b16 %v260
        %v326 = vunpack.c.l.b16 %v261
        %v327 = vunpack.c.l.b16 %v262
        %v328 = vunpack.c.l.b16 %v263
        %v329 = vunpack.c.l.b16 %v264
        %v330 = vunpack.c.l.b16 %v265
        %v331 = vunpack.c.l.b16 %v266
        %v332 = vunpack.c.l.b16 %v267
        %v333 = vunpack.c.l.b16 %v268
        %v334 = vpack.c.b16 %v307, %v306
        %v335 = vpack.c.b16 %v309, %v308
        %v336 = vpack.c.b16 %v311, %v310
        %v337 = vpack.c.b16 %v313, %v312
        %v338 = vpack.c.b16 %v315, %v314
        %v339 = vpack.c.b16 %v317, %v316
        %v340 = vpack.c.b16 %v319, %v318
        %v341 = vpack.c.b16 %v321, %v320
        %v342 = vpack.c.b16 %v323, %v322
        %v343 = vpack.c.b16 %v325, %v324
        %v344 = vpack.c.b16 %v327, %v326
        %v345 = vpack.c.b16 %v329, %v328
        %v346 = vpack.c.b16 %v331, %v330
        %v347 = vpack.c.b16 %v333, %v332
        %v350 = vunpack.c.l.b16 %v269
        %v351 = vunpack.c.l.b16 %v270
        %v352 = vpack.c.b16 %v351, %v350
        %vm354 = vcmask 130048
        %v356 = vsel %vm354, %v334, 0
        %v359 = vsel %vm354, %v335, 0
        %v362 = vsel %vm354, %v336, 0
        %v365 = vsel %vm354, %v337, 0
        %v368 = vsel %vm354, %v338, 0
        %v371 = vsel %vm354, %v339, 0
        %v374 = vsel %vm354, %v340, 0
        %v377 = vsel %vm354, %v341, 0
        %v380 = vsel %vm354, %v342, 0
        %v383 = vsel %vm354, %v343, 0
        %v386 = vsel %vm354, %v344, 0
        %v389 = vsel %vm354, %v345, 0
        %v392 = vsel %vm354, %v346, 0
        %v395 = vsel %vm354, %v347, 0
        %397 = vmatprep.subr.bf16.mxu0 0
        %398 = vmatpush1.bf16.msra.mxu0 %v352
        %399 = vmatprep.subr.bf16.mxu0 0
        %400 = vmatpush1.bf16.msra.mxu0 0
        %401 = vmatprep.subr.bf16.mxu0 0
        %402 = vmatpush1.bf16.msra.mxu0 0
        %403 = vmatprep.subr.bf16.mxu0 0
        %404 = vmatpush1.bf16.msra.mxu0 0
        %405 = vmatprep.subr.bf16.mxu0 0
        %406 = vmatpush1.bf16.msra.mxu0 0
        %407 = vmatprep.subr.bf16.mxu0 0
        %408 = vmatpush1.bf16.msra.mxu0 0
        %409 = vmatprep.subr.bf16.mxu0 0
        %410 = vmatpush1.bf16.msra.mxu0 0
        %411 = vmatprep.subr.bf16.mxu0 0
        %412 = vmatpush1.bf16.msra.mxu0 0
        %413 = vmatprep.subr.bf16.mxu0 0
        %414 = vmatpush1.bf16.msra.mxu0 0
        %415 = vmatprep.subr.bf16.mxu0 0
        %416 = vmatpush1.bf16.msra.mxu0 0
        %417 = vmatprep.subr.bf16.mxu0 0
        %418 = vmatpush1.bf16.msra.mxu0 0
        %419 = vmatprep.subr.bf16.mxu0 0
        %420 = vmatpush1.bf16.msra.mxu0 0
        %421 = vmatprep.subr.bf16.mxu0 0
        %422 = vmatpush1.bf16.msra.mxu0 0
        %423 = vmatprep.subr.bf16.mxu0 0
        %424 = vmatpush1.bf16.msra.mxu0 0
        %425 = vmatprep.subr.bf16.mxu0 0
        %426 = vmatpush1.bf16.msra.mxu0 0
        %427 = vmatprep.subr.bf16.mxu0 0
        %428 = vmatpush1.bf16.msra.mxu0 0
        %429 = vmatprep.mubr.bf16.mxu0 0
        %430 = vmatmul.mubr.bf16.gmra.mrb[0].mxu0 %v356
        %v431 = vpop.f32.mrb[0].mxu0
        %v432 = vadd.f32 %v276, %v431
        %v433 = vpop.f32.mrb[0].mxu0
        %v434 = vpop.f32.mrb[0].mxu0
        %v435 = vadd.f32 %v276, %v434
        %v436 = vpop.f32.mrb[0].mxu0
        %437 = vmatprep.mubr.bf16.mxu0 0
        %438 = vmatmul.mubr.bf16.gmra.mrb[0].mxu0 %v359
        %v439 = vpop.f32.mrb[0].mxu0
        %v440 = vadd.f32 %v276, %v439
        %v441 = vpop.f32.mrb[0].mxu0
        %v442 = vpop.f32.mrb[0].mxu0
        %v443 = vadd.f32 %v276, %v442
        %v444 = vpop.f32.mrb[0].mxu0
        %445 = vmatprep.mubr.bf16.mxu0 0
        %446 = vmatmul.mubr.bf16.gmra.mrb[0].mxu0 %v362
        %v447 = vpop.f32.mrb[0].mxu0
        %v448 = vadd.f32 %v276, %v447
        %v449 = vpop.f32.mrb[0].mxu0
        %v450 = vpop.f32.mrb[0].mxu0
        %v451 = vadd.f32 %v276, %v450
        %v452 = vpop.f32.mrb[0].mxu0
        %453 = vmatprep.mubr.bf16.mxu0 0
        %454 = vmatmul.mubr.bf16.gmra.mrb[0].mxu0 %v365
        %v455 = vpop.f32.mrb[0].mxu0
        %v456 = vadd.f32 %v276, %v455
        %v457 = vpop.f32.mrb[0].mxu0
        %v458 = vpop.f32.mrb[0].mxu0
        %v459 = vadd.f32 %v276, %v458
        %v460 = vpop.f32.mrb[0].mxu0
        %461 = vmatprep.mubr.bf16.mxu0 0
        %462 = vmatmul.mubr.bf16.gmra.mrb[0].mxu0 %v368
        %v463 = vpop.f32.mrb[0].mxu0
        %v464 = vadd.f32 %v276, %v463
        %v465 = vpop.f32.mrb[0].mxu0
        %v466 = vpop.f32.mrb[0].mxu0
        %v467 = vadd.f32 %v276, %v466
        %v468 = vpop.f32.mrb[0].mxu0
        %469 = vmatprep.mubr.bf16.mxu0 0
        %470 = vmatmul.mubr.bf16.gmra.mrb[0].mxu0 %v371
        %v471 = vpop.f32.mrb[0].mxu0
        %v472 = vadd.f32 %v276, %v471
        %v473 = vpop.f32.mrb[0].mxu0
        %v474 = vpop.f32.mrb[0].mxu0
        %v475 = vadd.f32 %v276, %v474
        %v476 = vpop.f32.mrb[0].mxu0
        %477 = vmatprep.mubr.bf16.mxu0 0
        %478 = vmatmul.mubr.bf16.gmra.mrb[0].mxu0 %v374
        %v479 = vpop.f32.mrb[0].mxu0
        %v480 = vadd.f32 %v276, %v479
        %v481 = vpop.f32.mrb[0].mxu0
        %v482 = vpop.f32.mrb[0].mxu0
        %v483 = vadd.f32 %v276, %v482
        %v484 = vpop.f32.mrb[0].mxu0
        %485 = vmatprep.mubr.bf16.mxu0 0
        %486 = vmatmul.mubr.bf16.gmra.mrb[0].mxu0 %v377
        %v487 = vpop.f32.mrb[0].mxu0
        %v488 = vadd.f32 %v276, %v487
        %v489 = vpop.f32.mrb[0].mxu0
        %v490 = vpop.f32.mrb[0].mxu0
        %v491 = vadd.f32 %v276, %v490
        %v492 = vpop.f32.mrb[0].mxu0
        %493 = vmatprep.mubr.bf16.mxu0 0
        %494 = vmatmul.mubr.bf16.gmra.mrb[0].mxu0 %v380
        %v495 = vpop.f32.mrb[0].mxu0
        %v496 = vadd.f32 %v276, %v495
        %v497 = vpop.f32.mrb[0].mxu0
        %v498 = vpop.f32.mrb[0].mxu0
        %v499 = vadd.f32 %v276, %v498
        %v500 = vpop.f32.mrb[0].mxu0
        %501 = vmatprep.mubr.bf16.mxu0 0
        %502 = vmatmul.mubr.bf16.gmra.mrb[0].mxu0 %v383
        %v503 = vpop.f32.mrb[0].mxu0
        %v504 = vadd.f32 %v276, %v503
        %v505 = vpop.f32.mrb[0].mxu0
        %v506 = vpop.f32.mrb[0].mxu0
        %v507 = vadd.f32 %v276, %v506
        %v508 = vpop.f32.mrb[0].mxu0
        %509 = vmatprep.mubr.bf16.mxu0 0
        %510 = vmatmul.mubr.bf16.gmra.mrb[0].mxu0 %v386
        %v511 = vpop.f32.mrb[0].mxu0
        %v512 = vadd.f32 %v276, %v511
        %v513 = vpop.f32.mrb[0].mxu0
        %v514 = vpop.f32.mrb[0].mxu0
        %v515 = vadd.f32 %v276, %v514
        %v516 = vpop.f32.mrb[0].mxu0
        %517 = vmatprep.mubr.bf16.mxu0 0
        %518 = vmatmul.mubr.bf16.gmra.mrb[0].mxu0 %v389
        %v519 = vpop.f32.mrb[0].mxu0
        %v520 = vadd.f32 %v276, %v519
        %v521 = vpop.f32.mrb[0].mxu0
        %v522 = vpop.f32.mrb[0].mxu0
        %v523 = vadd.f32 %v276, %v522
        %v524 = vpop.f32.mrb[0].mxu0
        %525 = vmatprep.mubr.bf16.mxu0 0
        %526 = vmatmul.mubr.bf16.gmra.mrb[0].mxu0 %v392
        %v527 = vpop.f32.mrb[0].mxu0
        %v528 = vadd.f32 %v276, %v527
        %v529 = vpop.f32.mrb[0].mxu0
        %v530 = vpop.f32.mrb[0].mxu0
        %v531 = vadd.f32 %v276, %v530
        %v532 = vpop.f32.mrb[0].mxu0
        %533 = vmatprep.mubr.bf16.mxu0 0
        %534 = vmatmul.mubr.bf16.gmra.mrb[0].mxu0 %v395
        %v535 = vpop.f32.mrb[0].mxu0
        %v536 = vadd.f32 %v276, %v535
        %v537 = vpop.f32.mrb[0].mxu0
        %v538 = vpop.f32.mrb[0].mxu0
        %v539 = vadd.f32 %v276, %v538
        %v540 = vpop.f32.mrb[0].mxu0
        %541 = vdwg.mxu0
        %v542 = vmax.f32 %v432, 0.0
        %v543 = vmax.f32 %v435, 0.0
        %v544 = vmax.f32 %v440, 0.0
        %v545 = vmax.f32 %v443, 0.0
        %v546 = vmax.f32 %v448, 0.0
        %v547 = vmax.f32 %v451, 0.0
        %v548 = vmax.f32 %v456, 0.0
        %v549 = vmax.f32 %v459, 0.0
        %v550 = vmax.f32 %v464, 0.0
        %v551 = vmax.f32 %v467, 0.0
        %v552 = vmax.f32 %v472, 0.0
        %v553 = vmax.f32 %v475, 0.0
        %v554 = vmax.f32 %v480, 0.0
        %v555 = vmax.f32 %v483, 0.0
        %v556 = vmax.f32 %v488, 0.0
        %v557 = vmax.f32 %v491, 0.0
        %v558 = vmax.f32 %v496, 0.0
        %v559 = vmax.f32 %v499, 0.0
        %v560 = vmax.f32 %v504, 0.0
        %v561 = vmax.f32 %v507, 0.0
        %v562 = vmax.f32 %v512, 0.0
        %v563 = vmax.f32 %v515, 0.0
        %v564 = vmax.f32 %v520, 0.0
        %v565 = vmax.f32 %v523, 0.0
        %v566 = vmax.f32 %v528, 0.0
        %v567 = vmax.f32 %v531, 0.0
        %v568 = vmax.f32 %v536, 0.0
        %v569 = vmax.f32 %v539, 0.0
        %570 = vst [vmem:[#allocation2] sm:$0xff] %v542
        %571 = vst [vmem:[#allocation2 + $0x8] sm:$0xff] %v543
        %572 = vst [vmem:[#allocation2 + $0x10] sm:$0xff] %v544
        %573 = vst [vmem:[#allocation2 + $0x18] sm:$0xff] %v545
        %574 = vst [vmem:[#allocation2 + $0x20] sm:$0xff] %v546
        %575 = vst [vmem:[#allocation2 + $0x28] sm:$0xff] %v547
        %576 = vst [vmem:[#allocation2 + $0x30] sm:$0xff] %v548
        %577 = vst [vmem:[#allocation2 + $0x38] sm:$0xff] %v549
        %578 = vst [vmem:[#allocation2 + $0x40] sm:$0xff] %v550
        %579 = vst [vmem:[#allocation2 + $0x48] sm:$0xff] %v551
        %580 = vst [vmem:[#allocation2 + $0x50] sm:$0xff] %v552
        %581 = vst [vmem:[#allocation2 + $0x58] sm:$0xff] %v553
        %582 = vst [vmem:[#allocation2 + $0x60] sm:$0xff] %v554
        %583 = vst [vmem:[#allocation2 + $0x68] sm:$0xff] %v555
        %584 = vst [vmem:[#allocation2 + $0x70] sm:$0xff] %v556
        %585 = vst [vmem:[#allocation2 + $0x78] sm:$0xff] %v557
        %586 = vst [vmem:[#allocation2 + $0x80] sm:$0xff] %v558
        %587 = vst [vmem:[#allocation2 + $0x88] sm:$0xff] %v559
        %588 = vst [vmem:[#allocation2 + $0x90] sm:$0xff] %v560
        %589 = vst [vmem:[#allocation2 + $0x98] sm:$0xff] %v561
        %590 = vst [vmem:[#allocation2 + $0xa0] sm:$0xff] %v562
        %591 = vst [vmem:[#allocation2 + $0xa8] sm:$0xff] %v563
        %592 = vst [vmem:[#allocation2 + $0xb0] sm:$0xff] %v564
        %593 = vst [vmem:[#allocation2 + $0xb8] sm:$0xff] %v565
        %594 = vst [vmem:[#allocation2 + $0xc0] sm:$0xff] %v566
        %595 = vst [vmem:[#allocation2 + $0xc8] sm:$0xff] %v567
        %596 = vst [vmem:[#allocation2 + $0xd0] sm:$0xff] %v568
        %597 = vst [vmem:[#allocation2 + $0xd8] sm:$0xff] %v569
        %v598 = vld [vmem:[%s234 + $0x70] sm:$0xf]
        %v599 = vld [vmem:[%s234 + $0x74] sm:$0xf]
        %v600 = vld [vmem:[%s234 + $0x78] sm:$0xf]
        %v601 = vld [vmem:[%s234 + $0x7c] sm:$0xf]
        %v602 = vld [vmem:[%s234 + $0x80] sm:$0xf]
        %v603 = vld [vmem:[%s234 + $0x84] sm:$0xf]
        %v604 = vld [vmem:[%s234 + $0x88] sm:$0xf]
        %v605 = vld [vmem:[%s234 + $0x8c] sm:$0xf]
        %v606 = vld [vmem:[%s234 + $0x90] sm:$0xf]
        %v607 = vld [vmem:[%s234 + $0x94] sm:$0xf]
        %v608 = vld [vmem:[%s234 + $0x98] sm:$0xf]
        %v609 = vld [vmem:[%s234 + $0x9c] sm:$0xf]
        %v610 = vld [vmem:[%s234 + $0xa0] sm:$0xf]
        %v611 = vld [vmem:[%s234 + $0xa4] sm:$0xf]
        %v612 = vld [vmem:[%s234 + $0xa8] sm:$0xf]
        %v613 = vld [vmem:[%s234 + $0xac] sm:$0xf]
        %v614 = vld [vmem:[%s234 + $0xb0] sm:$0xf]
        %v615 = vld [vmem:[%s234 + $0xb4] sm:$0xf]
        %v616 = vld [vmem:[%s234 + $0xb8] sm:$0xf]
        %v617 = vld [vmem:[%s234 + $0xbc] sm:$0xf]
        %v618 = vld [vmem:[%s234 + $0xc0] sm:$0xf]
        %v619 = vld [vmem:[%s234 + $0xc4] sm:$0xf]
        %v620 = vld [vmem:[%s234 + $0xc8] sm:$0xf]
        %v621 = vld [vmem:[%s234 + $0xcc] sm:$0xf]
        %v622 = vld [vmem:[%s234 + $0xd0] sm:$0xf]
        %v623 = vld [vmem:[%s234 + $0xd4] sm:$0xf]
        %v624 = vld [vmem:[%s234 + $0xd8] sm:$0xf]
        %v625 = vld [vmem:[%s234 + $0xdc] sm:$0xf]
        %v626 = vld [vmem:[%s1] sm:$0xf]
        %v627 = vld [vmem:[%s1 + $0x4] sm:$0xf]
        %v628 = vld [vmem:[%s2] sm:$0x1]
        %v630 = vlaneseq
        %v631 = vshrl.u32 %v630, 7
        %v632 = vsub.s32 0, %v631
        %v633 = vrot.slane %v628, %v632
        %v663 = vunpack.c.l.b16 %v598
        %v664 = vunpack.c.l.b16 %v599
        %v665 = vunpack.c.l.b16 %v600
        %v666 = vunpack.c.l.b16 %v601
        %v667 = vunpack.c.l.b16 %v602
        %v668 = vunpack.c.l.b16 %v603
        %v669 = vunpack.c.l.b16 %v604
        %v670 = vunpack.c.l.b16 %v605
        %v671 = vunpack.c.l.b16 %v606
        %v672 = vunpack.c.l.b16 %v607
        %v673 = vunpack.c.l.b16 %v608
        %v674 = vunpack.c.l.b16 %v609
        %v675 = vunpack.c.l.b16 %v610
        %v676 = vunpack.c.l.b16 %v611
        %v677 = vunpack.c.l.b16 %v612
        %v678 = vunpack.c.l.b16 %v613
        %v679 = vunpack.c.l.b16 %v614
        %v680 = vunpack.c.l.b16 %v615
        %v681 = vunpack.c.l.b16 %v616
        %v682 = vunpack.c.l.b16 %v617
        %v683 = vunpack.c.l.b16 %v618
        %v684 = vunpack.c.l.b16 %v619
        %v685 = vunpack.c.l.b16 %v620
        %v686 = vunpack.c.l.b16 %v621
        %v687 = vunpack.c.l.b16 %v622
        %v688 = vunpack.c.l.b16 %v623
        %v689 = vunpack.c.l.b16 %v624
        %v690 = vunpack.c.l.b16 %v625
        %v691 = vpack.c.b16 %v664, %v663
        %v692 = vpack.c.b16 %v666, %v665
        %v693 = vpack.c.b16 %v668, %v667
        %v694 = vpack.c.b16 %v670, %v669
        %v695 = vpack.c.b16 %v672, %v671
        %v696 = vpack.c.b16 %v674, %v673
        %v697 = vpack.c.b16 %v676, %v675
        %v698 = vpack.c.b16 %v678, %v677
        %v699 = vpack.c.b16 %v680, %v679
        %v700 = vpack.c.b16 %v682, %v681
        %v701 = vpack.c.b16 %v684, %v683
        %v702 = vpack.c.b16 %v686, %v685
        %v703 = vpack.c.b16 %v688, %v687
        %v704 = vpack.c.b16 %v690, %v689
        %v707 = vunpack.c.l.b16 %v626
        %v708 = vunpack.c.l.b16 %v627
        %v709 = vpack.c.b16 %v708, %v707
        %v712 = vsel %vm354, %v691, 0
        %v715 = vsel %vm354, %v692, 0
        %v718 = vsel %vm354, %v693, 0
        %v721 = vsel %vm354, %v694, 0
        %v724 = vsel %vm354, %v695, 0
        %v727 = vsel %vm354, %v696, 0
        %v730 = vsel %vm354, %v697, 0
        %v733 = vsel %vm354, %v698, 0
        %v736 = vsel %vm354, %v699, 0
        %v739 = vsel %vm354, %v700, 0
        %v742 = vsel %vm354, %v701, 0
        %v745 = vsel %vm354, %v702, 0
        %v748 = vsel %vm354, %v703, 0
        %v751 = vsel %vm354, %v704, 0
        %753 = vmatprep.subr.bf16.mxu0 0
        %754 = vmatpush1.bf16.msra.mxu0 %v709
        %755 = vmatprep.subr.bf16.mxu0 0
        %756 = vmatpush1.bf16.msra.mxu0 0
        %757 = vmatprep.subr.bf16.mxu0 0
        %758 = vmatpush1.bf16.msra.mxu0 0
        %759 = vmatprep.subr.bf16.mxu0 0
        %760 = vmatpush1.bf16.msra.mxu0 0
        %761 = vmatprep.subr.bf16.mxu0 0
        %762 = vmatpush1.bf16.msra.mxu0 0
        %763 = vmatprep.subr.bf16.mxu0 0
        %764 = vmatpush1.bf16.msra.mxu0 0
        %765 = vmatprep.subr.bf16.mxu0 0
        %766 = vmatpush1.bf16.msra.mxu0 0
        %767 = vmatprep.subr.bf16.mxu0 0
        %768 = vmatpush1.bf16.msra.mxu0 0
        %769 = vmatprep.subr.bf16.mxu0 0
        %770 = vmatpush1.bf16.msra.mxu0 0
        %771 = vmatprep.subr.bf16.mxu0 0
        %772 = vmatpush1.bf16.msra.mxu0 0
        %773 = vmatprep.subr.bf16.mxu0 0
        %774 = vmatpush1.bf16.msra.mxu0 0
        %775 = vmatprep.subr.bf16.mxu0 0
        %776 = vmatpush1.bf16.msra.mxu0 0
        %777 = vmatprep.subr.bf16.mxu0 0
        %778 = vmatpush1.bf16.msra.mxu0 0
        %779 = vmatprep.subr.bf16.mxu0 0
        %780 = vmatpush1.bf16.msra.mxu0 0
        %781 = vmatprep.subr.bf16.mxu0 0
        %782 = vmatpush1.bf16.msra.mxu0 0
        %783 = vmatprep.subr.bf16.mxu0 0
        %784 = vmatpush1.bf16.msra.mxu0 0
        %785 = vmatprep.mubr.bf16.mxu0 0
        %786 = vmatmul.mubr.bf16.gmra.mrb[0].mxu0 %v712
        %v787 = vpop.f32.mrb[0].mxu0
        %v788 = vadd.f32 %v633, %v787
        %v789 = vpop.f32.mrb[0].mxu0
        %v790 = vpop.f32.mrb[0].mxu0
        %v791 = vadd.f32 %v633, %v790
        %v792 = vpop.f32.mrb[0].mxu0
        %793 = vmatprep.mubr.bf16.mxu0 0
        %794 = vmatmul.mubr.bf16.gmra.mrb[0].mxu0 %v715
        %v795 = vpop.f32.mrb[0].mxu0
        %v796 = vadd.f32 %v633, %v795
        %v797 = vpop.f32.mrb[0].mxu0
        %v798 = vpop.f32.mrb[0].mxu0
        %v799 = vadd.f32 %v633, %v798
        %v800 = vpop.f32.mrb[0].mxu0
        %801 = vmatprep.mubr.bf16.mxu0 0
        %802 = vmatmul.mubr.bf16.gmra.mrb[0].mxu0 %v718
        %v803 = vpop.f32.mrb[0].mxu0
        %v804 = vadd.f32 %v633, %v803
        %v805 = vpop.f32.mrb[0].mxu0
        %v806 = vpop.f32.mrb[0].mxu0
        %v807 = vadd.f32 %v633, %v806
        %v808 = vpop.f32.mrb[0].mxu0
        %809 = vmatprep.mubr.bf16.mxu0 0
        %810 = vmatmul.mubr.bf16.gmra.mrb[0].mxu0 %v721
        %v811 = vpop.f32.mrb[0].mxu0
        %v812 = vadd.f32 %v633, %v811
        %v813 = vpop.f32.mrb[0].mxu0
        %v814 = vpop.f32.mrb[0].mxu0
        %v815 = vadd.f32 %v633, %v814
        %v816 = vpop.f32.mrb[0].mxu0
        %817 = vmatprep.mubr.bf16.mxu0 0
        %818 = vmatmul.mubr.bf16.gmra.mrb[0].mxu0 %v724
        %v819 = vpop.f32.mrb[0].mxu0
        %v820 = vadd.f32 %v633, %v819
        %v821 = vpop.f32.mrb[0].mxu0
        %v822 = vpop.f32.mrb[0].mxu0
        %v823 = vadd.f32 %v633, %v822
        %v824 = vpop.f32.mrb[0].mxu0
        %825 = vmatprep.mubr.bf16.mxu0 0
        %826 = vmatmul.mubr.bf16.gmra.mrb[0].mxu0 %v727
        %v827 = vpop.f32.mrb[0].mxu0
        %v828 = vadd.f32 %v633, %v827
        %v829 = vpop.f32.mrb[0].mxu0
        %v830 = vpop.f32.mrb[0].mxu0
        %v831 = vadd.f32 %v633, %v830
        %v832 = vpop.f32.mrb[0].mxu0
        %833 = vmatprep.mubr.bf16.mxu0 0
        %834 = vmatmul.mubr.bf16.gmra.mrb[0].mxu0 %v730
        %v835 = vpop.f32.mrb[0].mxu0
        %v836 = vadd.f32 %v633, %v835
        %v837 = vpop.f32.mrb[0].mxu0
        %v838 = vpop.f32.mrb[0].mxu0
        %v839 = vadd.f32 %v633, %v838
        %v840 = vpop.f32.mrb[0].mxu0
        %841 = vmatprep.mubr.bf16.mxu0 0
        %842 = vmatmul.mubr.bf16.gmra.mrb[0].mxu0 %v733
        %v843 = vpop.f32.mrb[0].mxu0
        %v844 = vadd.f32 %v633, %v843
        %v845 = vpop.f32.mrb[0].mxu0
        %v846 = vpop.f32.mrb[0].mxu0
        %v847 = vadd.f32 %v633, %v846
        %v848 = vpop.f32.mrb[0].mxu0
        %849 = vmatprep.mubr.bf16.mxu0 0
        %850 = vmatmul.mubr.bf16.gmra.mrb[0].mxu0 %v736
        %v851 = vpop.f32.mrb[0].mxu0
        %v852 = vadd.f32 %v633, %v851
        %v853 = vpop.f32.mrb[0].mxu0
        %v854 = vpop.f32.mrb[0].mxu0
        %v855 = vadd.f32 %v633, %v854
        %v856 = vpop.f32.mrb[0].mxu0
        %857 = vmatprep.mubr.bf16.mxu0 0
        %858 = vmatmul.mubr.bf16.gmra.mrb[0].mxu0 %v739
        %v859 = vpop.f32.mrb[0].mxu0
        %v860 = vadd.f32 %v633, %v859
        %v861 = vpop.f32.mrb[0].mxu0
        %v862 = vpop.f32.mrb[0].mxu0
        %v863 = vadd.f32 %v633, %v862
        %v864 = vpop.f32.mrb[0].mxu0
        %865 = vmatprep.mubr.bf16.mxu0 0
        %866 = vmatmul.mubr.bf16.gmra.mrb[0].mxu0 %v742
        %v867 = vpop.f32.mrb[0].mxu0
        %v868 = vadd.f32 %v633, %v867
        %v869 = vpop.f32.mrb[0].mxu0
        %v870 = vpop.f32.mrb[0].mxu0
        %v871 = vadd.f32 %v633, %v870
        %v872 = vpop.f32.mrb[0].mxu0
        %873 = vmatprep.mubr.bf16.mxu0 0
        %874 = vmatmul.mubr.bf16.gmra.mrb[0].mxu0 %v745
        %v875 = vpop.f32.mrb[0].mxu0
        %v876 = vadd.f32 %v633, %v875
        %v877 = vpop.f32.mrb[0].mxu0
        %v878 = vpop.f32.mrb[0].mxu0
        %v879 = vadd.f32 %v633, %v878
        %v880 = vpop.f32.mrb[0].mxu0
        %881 = vmatprep.mubr.bf16.mxu0 0
        %882 = vmatmul.mubr.bf16.gmra.mrb[0].mxu0 %v748
        %v883 = vpop.f32.mrb[0].mxu0
        %v884 = vadd.f32 %v633, %v883
        %v885 = vpop.f32.mrb[0].mxu0
        %v886 = vpop.f32.mrb[0].mxu0
        %v887 = vadd.f32 %v633, %v886
        %v888 = vpop.f32.mrb[0].mxu0
        %889 = vmatprep.mubr.bf16.mxu0 0
        %890 = vmatmul.mubr.bf16.gmra.mrb[0].mxu0 %v751
        %v891 = vpop.f32.mrb[0].mxu0
        %v892 = vadd.f32 %v633, %v891
        %v893 = vpop.f32.mrb[0].mxu0
        %v894 = vpop.f32.mrb[0].mxu0
        %v895 = vadd.f32 %v633, %v894
        %v896 = vpop.f32.mrb[0].mxu0
        %897 = vdwg.mxu0
        %v898 = vmax.f32 %v788, 0.0
        %v899 = vmax.f32 %v791, 0.0
        %v900 = vmax.f32 %v796, 0.0
        %v901 = vmax.f32 %v799, 0.0
        %v902 = vmax.f32 %v804, 0.0
        %v903 = vmax.f32 %v807, 0.0
        %v904 = vmax.f32 %v812, 0.0
        %v905 = vmax.f32 %v815, 0.0
        %v906 = vmax.f32 %v820, 0.0
        %v907 = vmax.f32 %v823, 0.0
        %v908 = vmax.f32 %v828, 0.0
        %v909 = vmax.f32 %v831, 0.0
        %v910 = vmax.f32 %v836, 0.0
        %v911 = vmax.f32 %v839, 0.0
        %v912 = vmax.f32 %v844, 0.0
        %v913 = vmax.f32 %v847, 0.0
        %v914 = vmax.f32 %v852, 0.0
        %v915 = vmax.f32 %v855, 0.0
        %v916 = vmax.f32 %v860, 0.0
        %v917 = vmax.f32 %v863, 0.0
        %v918 = vmax.f32 %v868, 0.0
        %v919 = vmax.f32 %v871, 0.0
        %v920 = vmax.f32 %v876, 0.0
        %v921 = vmax.f32 %v879, 0.0
        %v922 = vmax.f32 %v884, 0.0
        %v923 = vmax.f32 %v887, 0.0
        %v924 = vmax.f32 %v892, 0.0
        %v925 = vmax.f32 %v895, 0.0
        %926 = vst [vmem:[#allocation2 + $0xe0] sm:$0xff] %v898
        %927 = vst [vmem:[#allocation2 + $0xe8] sm:$0xff] %v899
        %928 = vst [vmem:[#allocation2 + $0xf0] sm:$0xff] %v900
        %929 = vst [vmem:[#allocation2 + $0xf8] sm:$0xff] %v901
        %930 = vst [vmem:[#allocation2 + $0x100] sm:$0xff] %v902
        %931 = vst [vmem:[#allocation2 + $0x108] sm:$0xff] %v903
        %932 = vst [vmem:[#allocation2 + $0x110] sm:$0xff] %v904
        %933 = vst [vmem:[#allocation2 + $0x118] sm:$0xff] %v905
        %934 = vst [vmem:[#allocation2 + $0x120] sm:$0xff] %v906
        %935 = vst [vmem:[#allocation2 + $0x128] sm:$0xff] %v907
        %936 = vst [vmem:[#allocation2 + $0x130] sm:$0xff] %v908
        %937 = vst [vmem:[#allocation2 + $0x138] sm:$0xff] %v909
        %938 = vst [vmem:[#allocation2 + $0x140] sm:$0xff] %v910
        %939 = vst [vmem:[#allocation2 + $0x148] sm:$0xff] %v911
        %940 = vst [vmem:[#allocation2 + $0x150] sm:$0xff] %v912
        %941 = vst [vmem:[#allocation2 + $0x158] sm:$0xff] %v913
        %942 = vst [vmem:[#allocation2 + $0x160] sm:$0xff] %v914
        %943 = vst [vmem:[#allocation2 + $0x168] sm:$0xff] %v915
        %944 = vst [vmem:[#allocation2 + $0x170] sm:$0xff] %v916
        %945 = vst [vmem:[#allocation2 + $0x178] sm:$0xff] %v917
        %946 = vst [vmem:[#allocation2 + $0x180] sm:$0xff] %v918
        %947 = vst [vmem:[#allocation2 + $0x188] sm:$0xff] %v919
        %948 = vst [vmem:[#allocation2 + $0x190] sm:$0xff] %v920
        %949 = vst [vmem:[#allocation2 + $0x198] sm:$0xff] %v921
        %950 = vst [vmem:[#allocation2 + $0x1a0] sm:$0xff] %v922
        %951 = vst [vmem:[#allocation2 + $0x1a8] sm:$0xff] %v923
        %952 = vst [vmem:[#allocation2 + $0x1b0] sm:$0xff] %v924
        %953 = vst [vmem:[#allocation2 + $0x1b8] sm:$0xff] %v925
        %v954 = vld [vmem:[%s234 + $0xe0] sm:$0xf]
        %v955 = vld [vmem:[%s234 + $0xe4] sm:$0xf]
        %v956 = vld [vmem:[%s234 + $0xe8] sm:$0xf]
        %v957 = vld [vmem:[%s234 + $0xec] sm:$0xf]
        %v958 = vld [vmem:[%s234 + $0xf0] sm:$0xf]
        %v959 = vld [vmem:[%s234 + $0xf4] sm:$0xf]
        %v960 = vld [vmem:[%s234 + $0xf8] sm:$0xf]
        %v961 = vld [vmem:[%s234 + $0xfc] sm:$0xf]
        %v962 = vld [vmem:[%s234 + $0x100] sm:$0xf]
        %v963 = vld [vmem:[%s234 + $0x104] sm:$0xf]
        %v964 = vld [vmem:[%s234 + $0x108] sm:$0xf]
        %v965 = vld [vmem:[%s234 + $0x10c] sm:$0xf]
        %v966 = vld [vmem:[%s234 + $0x110] sm:$0xf]
        %v967 = vld [vmem:[%s234 + $0x114] sm:$0xf]
        %v968 = vld [vmem:[%s234 + $0x118] sm:$0xf]
        %v969 = vld [vmem:[%s234 + $0x11c] sm:$0xf]
        %v970 = vld [vmem:[%s234 + $0x120] sm:$0xf]
        %v971 = vld [vmem:[%s234 + $0x124] sm:$0xf]
        %v972 = vld [vmem:[%s234 + $0x128] sm:$0xf]
        %v973 = vld [vmem:[%s234 + $0x12c] sm:$0xf]
        %v974 = vld [vmem:[%s234 + $0x130] sm:$0xf]
        %v975 = vld [vmem:[%s234 + $0x134] sm:$0xf]
        %v976 = vld [vmem:[%s234 + $0x138] sm:$0xf]
        %v977 = vld [vmem:[%s234 + $0x13c] sm:$0xf]
        %v978 = vld [vmem:[%s234 + $0x140] sm:$0xf]
        %v979 = vld [vmem:[%s234 + $0x144] sm:$0xf]
        %v980 = vld [vmem:[%s234 + $0x148] sm:$0xf]
        %v981 = vld [vmem:[%s234 + $0x14c] sm:$0xf]
        %v982 = vld [vmem:[%s1] sm:$0xf]
        %v983 = vld [vmem:[%s1 + $0x4] sm:$0xf]
        %v984 = vld [vmem:[%s2] sm:$0x1]
        %v986 = vlaneseq
        %v987 = vshrl.u32 %v986, 7
        %v988 = vsub.s32 0, %v987
        %v989 = vrot.slane %v984, %v988
        %v1019 = vunpack.c.l.b16 %v954
        %v1020 = vunpack.c.l.b16 %v955
        %v1021 = vunpack.c.l.b16 %v956
        %v1022 = vunpack.c.l.b16 %v957
        %v1023 = vunpack.c.l.b16 %v958
        %v1024 = vunpack.c.l.b16 %v959
        %v1025 = vunpack.c.l.b16 %v960
        %v1026 = vunpack.c.l.b16 %v961
        %v1027 = vunpack.c.l.b16 %v962
        %v1028 = vunpack.c.l.b16 %v963
        %v1029 = vunpack.c.l.b16 %v964
        %v1030 = vunpack.c.l.b16 %v965
        %v1031 = vunpack.c.l.b16 %v966
        %v1032 = vunpack.c.l.b16 %v967
        %v1033 = vunpack.c.l.b16 %v968
        %v1034 = vunpack.c.l.b16 %v969
        %v1035 = vunpack.c.l.b16 %v970
        %v1036 = vunpack.c.l.b16 %v971
        %v1037 = vunpack.c.l.b16 %v972
        %v1038 = vunpack.c.l.b16 %v973
        %v1039 = vunpack.c.l.b16 %v974
        %v1040 = vunpack.c.l.b16 %v975
        %v1041 = vunpack.c.l.b16 %v976
        %v1042 = vunpack.c.l.b16 %v977
        %v1043 = vunpack.c.l.b16 %v978
        %v1044 = vunpack.c.l.b16 %v979
        %v1045 = vunpack.c.l.b16 %v980
        %v1046 = vunpack.c.l.b16 %v981
        %v1047 = vpack.c.b16 %v1020, %v1019
        %v1048 = vpack.c.b16 %v1022, %v1021
        %v1049 = vpack.c.b16 %v1024, %v1023
        %v1050 = vpack.c.b16 %v1026, %v1025
        %v1051 = vpack.c.b16 %v1028, %v1027
        %v1052 = vpack.c.b16 %v1030, %v1029
        %v1053 = vpack.c.b16 %v1032, %v1031
        %v1054 = vpack.c.b16 %v1034, %v1033
        %v1055 = vpack.c.b16 %v1036, %v1035
        %v1056 = vpack.c.b16 %v1038, %v1037
        %v1057 = vpack.c.b16 %v1040, %v1039
        %v1058 = vpack.c.b16 %v1042, %v1041
        %v1059 = vpack.c.b16 %v1044, %v1043
        %v1060 = vpack.c.b16 %v1046, %v1045
        %v1063 = vunpack.c.l.b16 %v982
        %v1064 = vunpack.c.l.b16 %v983
        %v1065 = vpack.c.b16 %v1064, %v1063
        %v1068 = vsel %vm354, %v1047, 0
        %v1071 = vsel %vm354, %v1048, 0
        %v1074 = vsel %vm354, %v1049, 0
        %v1077 = vsel %vm354, %v1050, 0
        %v1080 = vsel %vm354, %v1051, 0
        %v1083 = vsel %vm354, %v1052, 0
        %v1086 = vsel %vm354, %v1053, 0
        %v1089 = vsel %vm354, %v1054, 0
        %v1092 = vsel %vm354, %v1055, 0
        %v1095 = vsel %vm354, %v1056, 0
        %v1098 = vsel %vm354, %v1057, 0
        %v1101 = vsel %vm354, %v1058, 0
        %v1104 = vsel %vm354, %v1059, 0
        %v1107 = vsel %vm354, %v1060, 0
        %1109 = vmatprep.subr.bf16.mxu0 0
        %1110 = vmatpush1.bf16.msra.mxu0 %v1065
        %1111 = vmatprep.subr.bf16.mxu0 0
        %1112 = vmatpush1.bf16.msra.mxu0 0
        %1113 = vmatprep.subr.bf16.mxu0 0
        %1114 = vmatpush1.bf16.msra.mxu0 0
        %1115 = vmatprep.subr.bf16.mxu0 0
        %1116 = vmatpush1.bf16.msra.mxu0 0
        %1117 = vmatprep.subr.bf16.mxu0 0
        %1118 = vmatpush1.bf16.msra.mxu0 0
        %1119 = vmatprep.subr.bf16.mxu0 0
        %1120 = vmatpush1.bf16.msra.mxu0 0
        %1121 = vmatprep.subr.bf16.mxu0 0
        %1122 = vmatpush1.bf16.msra.mxu0 0
        %1123 = vmatprep.subr.bf16.mxu0 0
        %1124 = vmatpush1.bf16.msra.mxu0 0
        %1125 = vmatprep.subr.bf16.mxu0 0
        %1126 = vmatpush1.bf16.msra.mxu0 0
        %1127 = vmatprep.subr.bf16.mxu0 0
        %1128 = vmatpush1.bf16.msra.mxu0 0
        %1129 = vmatprep.subr.bf16.mxu0 0
        %1130 = vmatpush1.bf16.msra.mxu0 0
        %1131 = vmatprep.subr.bf16.mxu0 0
        %1132 = vmatpush1.bf16.msra.mxu0 0
        %1133 = vmatprep.subr.bf16.mxu0 0
        %1134 = vmatpush1.bf16.msra.mxu0 0
        %1135 = vmatprep.subr.bf16.mxu0 0
        %1136 = vmatpush1.bf16.msra.mxu0 0
        %1137 = vmatprep.subr.bf16.mxu0 0
        %1138 = vmatpush1.bf16.msra.mxu0 0
        %1139 = vmatprep.subr.bf16.mxu0 0
        %1140 = vmatpush1.bf16.msra.mxu0 0
        %1141 = vmatprep.mubr.bf16.mxu0 0
        %1142 = vmatmul.mubr.bf16.gmra.mrb[0].mxu0 %v1068
        %v1143 = vpop.f32.mrb[0].mxu0
        %v1144 = vadd.f32 %v989, %v1143
        %v1145 = vpop.f32.mrb[0].mxu0
        %v1146 = vpop.f32.mrb[0].mxu0
        %v1147 = vadd.f32 %v989, %v1146
        %v1148 = vpop.f32.mrb[0].mxu0
        %1149 = vmatprep.mubr.bf16.mxu0 0
        %1150 = vmatmul.mubr.bf16.gmra.mrb[0].mxu0 %v1071
        %v1151 = vpop.f32.mrb[0].mxu0
        %v1152 = vadd.f32 %v989, %v1151
        %v1153 = vpop.f32.mrb[0].mxu0
        %v1154 = vpop.f32.mrb[0].mxu0
        %v1155 = vadd.f32 %v989, %v1154
        %v1156 = vpop.f32.mrb[0].mxu0
        %1157 = vmatprep.mubr.bf16.mxu0 0
        %1158 = vmatmul.mubr.bf16.gmra.mrb[0].mxu0 %v1074
        %v1159 = vpop.f32.mrb[0].mxu0
        %v1160 = vadd.f32 %v989, %v1159
        %v1161 = vpop.f32.mrb[0].mxu0
        %v1162 = vpop.f32.mrb[0].mxu0
        %v1163 = vadd.f32 %v989, %v1162
        %v1164 = vpop.f32.mrb[0].mxu0
        %1165 = vmatprep.mubr.bf16.mxu0 0
        %1166 = vmatmul.mubr.bf16.gmra.mrb[0].mxu0 %v1077
        %v1167 = vpop.f32.mrb[0].mxu0
        %v1168 = vadd.f32 %v989, %v1167
        %v1169 = vpop.f32.mrb[0].mxu0
        %v1170 = vpop.f32.mrb[0].mxu0
        %v1171 = vadd.f32 %v989, %v1170
        %v1172 = vpop.f32.mrb[0].mxu0
        %1173 = vmatprep.mubr.bf16.mxu0 0
        %1174 = vmatmul.mubr.bf16.gmra.mrb[0].mxu0 %v1080
        %v1175 = vpop.f32.mrb[0].mxu0
        %v1176 = vadd.f32 %v989, %v1175
        %v1177 = vpop.f32.mrb[0].mxu0
        %v1178 = vpop.f32.mrb[0].mxu0
        %v1179 = vadd.f32 %v989, %v1178
        %v1180 = vpop.f32.mrb[0].mxu0
        %1181 = vmatprep.mubr.bf16.mxu0 0
        %1182 = vmatmul.mubr.bf16.gmra.mrb[0].mxu0 %v1083
        %v1183 = vpop.f32.mrb[0].mxu0
        %v1184 = vadd.f32 %v989, %v1183
        %v1185 = vpop.f32.mrb[0].mxu0
        %v1186 = vpop.f32.mrb[0].mxu0
        %v1187 = vadd.f32 %v989, %v1186
        %v1188 = vpop.f32.mrb[0].mxu0
        %1189 = vmatprep.mubr.bf16.mxu0 0
        %1190 = vmatmul.mubr.bf16.gmra.mrb[0].mxu0 %v1086
        %v1191 = vpop.f32.mrb[0].mxu0
        %v1192 = vadd.f32 %v989, %v1191
        %v1193 = vpop.f32.mrb[0].mxu0
        %v1194 = vpop.f32.mrb[0].mxu0
        %v1195 = vadd.f32 %v989, %v1194
        %v1196 = vpop.f32.mrb[0].mxu0
        %1197 = vmatprep.mubr.bf16.mxu0 0
        %1198 = vmatmul.mubr.bf16.gmra.mrb[0].mxu0 %v1089
        %v1199 = vpop.f32.mrb[0].mxu0
        %v1200 = vadd.f32 %v989, %v1199
        %v1201 = vpop.f32.mrb[0].mxu0
        %v1202 = vpop.f32.mrb[0].mxu0
        %v1203 = vadd.f32 %v989, %v1202
        %v1204 = vpop.f32.mrb[0].mxu0
        %1205 = vmatprep.mubr.bf16.mxu0 0
        %1206 = vmatmul.mubr.bf16.gmra.mrb[0].mxu0 %v1092
        %v1207 = vpop.f32.mrb[0].mxu0
        %v1208 = vadd.f32 %v989, %v1207
        %v1209 = vpop.f32.mrb[0].mxu0
        %v1210 = vpop.f32.mrb[0].mxu0
        %v1211 = vadd.f32 %v989, %v1210
        %v1212 = vpop.f32.mrb[0].mxu0
        %1213 = vmatprep.mubr.bf16.mxu0 0
        %1214 = vmatmul.mubr.bf16.gmra.mrb[0].mxu0 %v1095
        %v1215 = vpop.f32.mrb[0].mxu0
        %v1216 = vadd.f32 %v989, %v1215
        %v1217 = vpop.f32.mrb[0].mxu0
        %v1218 = vpop.f32.mrb[0].mxu0
        %v1219 = vadd.f32 %v989, %v1218
        %v1220 = vpop.f32.mrb[0].mxu0
        %1221 = vmatprep.mubr.bf16.mxu0 0
        %1222 = vmatmul.mubr.bf16.gmra.mrb[0].mxu0 %v1098
        %v1223 = vpop.f32.mrb[0].mxu0
        %v1224 = vadd.f32 %v989, %v1223
        %v1225 = vpop.f32.mrb[0].mxu0
        %v1226 = vpop.f32.mrb[0].mxu0
        %v1227 = vadd.f32 %v989, %v1226
        %v1228 = vpop.f32.mrb[0].mxu0
        %1229 = vmatprep.mubr.bf16.mxu0 0
        %1230 = vmatmul.mubr.bf16.gmra.mrb[0].mxu0 %v1101
        %v1231 = vpop.f32.mrb[0].mxu0
        %v1232 = vadd.f32 %v989, %v1231
        %v1233 = vpop.f32.mrb[0].mxu0
        %v1234 = vpop.f32.mrb[0].mxu0
        %v1235 = vadd.f32 %v989, %v1234
        %v1236 = vpop.f32.mrb[0].mxu0
        %1237 = vmatprep.mubr.bf16.mxu0 0
        %1238 = vmatmul.mubr.bf16.gmra.mrb[0].mxu0 %v1104
        %v1239 = vpop.f32.mrb[0].mxu0
        %v1240 = vadd.f32 %v989, %v1239
        %v1241 = vpop.f32.mrb[0].mxu0
        %v1242 = vpop.f32.mrb[0].mxu0
        %v1243 = vadd.f32 %v989, %v1242
        %v1244 = vpop.f32.mrb[0].mxu0
        %1245 = vmatprep.mubr.bf16.mxu0 0
        %1246 = vmatmul.mubr.bf16.gmra.mrb[0].mxu0 %v1107
        %v1247 = vpop.f32.mrb[0].mxu0
        %v1248 = vadd.f32 %v989, %v1247
        %v1249 = vpop.f32.mrb[0].mxu0
        %v1250 = vpop.f32.mrb[0].mxu0
        %v1251 = vadd.f32 %v989, %v1250
        %v1252 = vpop.f32.mrb[0].mxu0
        %1253 = vdwg.mxu0
        %v1254 = vmax.f32 %v1144, 0.0
        %v1255 = vmax.f32 %v1147, 0.0
        %v1256 = vmax.f32 %v1152, 0.0
        %v1257 = vmax.f32 %v1155, 0.0
        %v1258 = vmax.f32 %v1160, 0.0
        %v1259 = vmax.f32 %v1163, 0.0
        %v1260 = vmax.f32 %v1168, 0.0
        %v1261 = vmax.f32 %v1171, 0.0
        %v1262 = vmax.f32 %v1176, 0.0
        %v1263 = vmax.f32 %v1179, 0.0
        %v1264 = vmax.f32 %v1184, 0.0
        %v1265 = vmax.f32 %v1187, 0.0
        %v1266 = vmax.f32 %v1192, 0.0
        %v1267 = vmax.f32 %v1195, 0.0
        %v1268 = vmax.f32 %v1200, 0.0
        %v1269 = vmax.f32 %v1203, 0.0
        %v1270 = vmax.f32 %v1208, 0.0
        %v1271 = vmax.f32 %v1211, 0.0
        %v1272 = vmax.f32 %v1216, 0.0
        %v1273 = vmax.f32 %v1219, 0.0
        %v1274 = vmax.f32 %v1224, 0.0
        %v1275 = vmax.f32 %v1227, 0.0
        %v1276 = vmax.f32 %v1232, 0.0
        %v1277 = vmax.f32 %v1235, 0.0
        %v1278 = vmax.f32 %v1240, 0.0
        %v1279 = vmax.f32 %v1243, 0.0
        %v1280 = vmax.f32 %v1248, 0.0
        %v1281 = vmax.f32 %v1251, 0.0
        %1282 = vst [vmem:[#allocation2 + $0x1c0] sm:$0xff] %v1254
        %1283 = vst [vmem:[#allocation2 + $0x1c8] sm:$0xff] %v1255
        %1284 = vst [vmem:[#allocation2 + $0x1d0] sm:$0xff] %v1256
        %1285 = vst [vmem:[#allocation2 + $0x1d8] sm:$0xff] %v1257
        %1286 = vst [vmem:[#allocation2 + $0x1e0] sm:$0xff] %v1258
        %1287 = vst [vmem:[#allocation2 + $0x1e8] sm:$0xff] %v1259
        %1288 = vst [vmem:[#allocation2 + $0x1f0] sm:$0xff] %v1260
        %1289 = vst [vmem:[#allocation2 + $0x1f8] sm:$0xff] %v1261
        %1290 = vst [vmem:[#allocation2 + $0x200] sm:$0xff] %v1262
        %1291 = vst [vmem:[#allocation2 + $0x208] sm:$0xff] %v1263
        %1292 = vst [vmem:[#allocation2 + $0x210] sm:$0xff] %v1264
        %1293 = vst [vmem:[#allocation2 + $0x218] sm:$0xff] %v1265
        %1294 = vst [vmem:[#allocation2 + $0x220] sm:$0xff] %v1266
        %1295 = vst [vmem:[#allocation2 + $0x228] sm:$0xff] %v1267
        %1296 = vst [vmem:[#allocation2 + $0x230] sm:$0xff] %v1268
        %1297 = vst [vmem:[#allocation2 + $0x238] sm:$0xff] %v1269
        %1298 = vst [vmem:[#allocation2 + $0x240] sm:$0xff] %v1270
        %1299 = vst [vmem:[#allocation2 + $0x248] sm:$0xff] %v1271
        %1300 = vst [vmem:[#allocation2 + $0x250] sm:$0xff] %v1272
        %1301 = vst [vmem:[#allocation2 + $0x258] sm:$0xff] %v1273
        %1302 = vst [vmem:[#allocation2 + $0x260] sm:$0xff] %v1274
        %1303 = vst [vmem:[#allocation2 + $0x268] sm:$0xff] %v1275
        %1304 = vst [vmem:[#allocation2 + $0x270] sm:$0xff] %v1276
        %1305 = vst [vmem:[#allocation2 + $0x278] sm:$0xff] %v1277
        %1306 = vst [vmem:[#allocation2 + $0x280] sm:$0xff] %v1278
        %1307 = vst [vmem:[#allocation2 + $0x288] sm:$0xff] %v1279
        %1308 = vst [vmem:[#allocation2 + $0x290] sm:$0xff] %v1280
        %1309 = vst [vmem:[#allocation2 + $0x298] sm:$0xff] %v1281
        %v1310 = vld [vmem:[%s234 + $0x150] sm:$0xf]
        %v1311 = vld [vmem:[%s234 + $0x154] sm:$0xf]
        %v1312 = vld [vmem:[%s234 + $0x158] sm:$0xf]
        %v1313 = vld [vmem:[%s234 + $0x15c] sm:$0xf]
        %v1314 = vld [vmem:[%s234 + $0x160] sm:$0xf]
        %v1315 = vld [vmem:[%s234 + $0x164] sm:$0xf]
        %v1316 = vld [vmem:[%s234 + $0x168] sm:$0xf]
        %v1317 = vld [vmem:[%s234 + $0x16c] sm:$0xf]
        %v1318 = vld [vmem:[%s234 + $0x170] sm:$0xf]
        %v1319 = vld [vmem:[%s234 + $0x174] sm:$0xf]
        %v1320 = vld [vmem:[%s234 + $0x178] sm:$0xf]
        %v1321 = vld [vmem:[%s234 + $0x17c] sm:$0xf]
        %v1322 = vld [vmem:[%s234 + $0x180] sm:$0xf]
        %v1323 = vld [vmem:[%s234 + $0x184] sm:$0xf]
        %v1324 = vld [vmem:[%s234 + $0x188] sm:$0xf]
        %v1325 = vld [vmem:[%s234 + $0x18c] sm:$0xf]
        %v1326 = vld [vmem:[%s234 + $0x190] sm:$0xf]
        %v1327 = vld [vmem:[%s234 + $0x194] sm:$0xf]
        %v1328 = vld [vmem:[%s234 + $0x198] sm:$0xf]
        %v1329 = vld [vmem:[%s234 + $0x19c] sm:$0xf]
        %v1330 = vld [vmem:[%s234 + $0x1a0] sm:$0xf]
        %v1331 = vld [vmem:[%s234 + $0x1a4] sm:$0xf]
        %v1332 = vld [vmem:[%s234 + $0x1a8] sm:$0xf]
        %v1333 = vld [vmem:[%s234 + $0x1ac] sm:$0xf]
        %v1334 = vld [vmem:[%s234 + $0x1b0] sm:$0xf]
        %v1335 = vld [vmem:[%s234 + $0x1b4] sm:$0xf]
        %v1336 = vld [vmem:[%s234 + $0x1b8] sm:$0xf]
        %v1337 = vld [vmem:[%s234 + $0x1bc] sm:$0xf]
        %v1338 = vld [vmem:[%s1] sm:$0xf]
        %v1339 = vld [vmem:[%s1 + $0x4] sm:$0xf]
        %v1340 = vld [vmem:[%s2] sm:$0x1]
        %v1342 = vlaneseq
        %v1343 = vshrl.u32 %v1342, 7
        %v1344 = vsub.s32 0, %v1343
        %v1345 = vrot.slane %v1340, %v1344
        %v1375 = vunpack.c.l.b16 %v1310
        %v1376 = vunpack.c.l.b16 %v1311
        %v1377 = vunpack.c.l.b16 %v1312
        %v1378 = vunpack.c.l.b16 %v1313
        %v1379 = vunpack.c.l.b16 %v1314
        %v1380 = vunpack.c.l.b16 %v1315
        %v1381 = vunpack.c.l.b16 %v1316
        %v1382 = vunpack.c.l.b16 %v1317
        %v1383 = vunpack.c.l.b16 %v1318
        %v1384 = vunpack.c.l.b16 %v1319
        %v1385 = vunpack.c.l.b16 %v1320
        %v1386 = vunpack.c.l.b16 %v1321
        %v1387 = vunpack.c.l.b16 %v1322
        %v1388 = vunpack.c.l.b16 %v1323
        %v1389 = vunpack.c.l.b16 %v1324
        %v1390 = vunpack.c.l.b16 %v1325
        %v1391 = vunpack.c.l.b16 %v1326
        %v1392 = vunpack.c.l.b16 %v1327
        %v1393 = vunpack.c.l.b16 %v1328
        %v1394 = vunpack.c.l.b16 %v1329
        %v1395 = vunpack.c.l.b16 %v1330
        %v1396 = vunpack.c.l.b16 %v1331
        %v1397 = vunpack.c.l.b16 %v1332
        %v1398 = vunpack.c.l.b16 %v1333
        %v1399 = vunpack.c.l.b16 %v1334
        %v1400 = vunpack.c.l.b16 %v1335
        %v1401 = vunpack.c.l.b16 %v1336
        %v1402 = vunpack.c.l.b16 %v1337
        %v1403 = vpack.c.b16 %v1376, %v1375
        %v1404 = vpack.c.b16 %v1378, %v1377
        %v1405 = vpack.c.b16 %v1380, %v1379
        %v1406 = vpack.c.b16 %v1382, %v1381
        %v1407 = vpack.c.b16 %v1384, %v1383
        %v1408 = vpack.c.b16 %v1386, %v1385
        %v1409 = vpack.c.b16 %v1388, %v1387
        %v1410 = vpack.c.b16 %v1390, %v1389
        %v1411 = vpack.c.b16 %v1392, %v1391
        %v1412 = vpack.c.b16 %v1394, %v1393
        %v1413 = vpack.c.b16 %v1396, %v1395
        %v1414 = vpack.c.b16 %v1398, %v1397
        %v1415 = vpack.c.b16 %v1400, %v1399
        %v1416 = vpack.c.b16 %v1402, %v1401
        %v1419 = vunpack.c.l.b16 %v1338
        %v1420 = vunpack.c.l.b16 %v1339
        %v1421 = vpack.c.b16 %v1420, %v1419
        %v1424 = vsel %vm354, %v1403, 0
        %v1427 = vsel %vm354, %v1404, 0
        %v1430 = vsel %vm354, %v1405, 0
        %v1433 = vsel %vm354, %v1406, 0
        %v1436 = vsel %vm354, %v1407, 0
        %v1439 = vsel %vm354, %v1408, 0
        %v1442 = vsel %vm354, %v1409, 0
        %v1445 = vsel %vm354, %v1410, 0
        %v1448 = vsel %vm354, %v1411, 0
        %v1451 = vsel %vm354, %v1412, 0
        %v1454 = vsel %vm354, %v1413, 0
        %v1457 = vsel %vm354, %v1414, 0
        %v1460 = vsel %vm354, %v1415, 0
        %v1463 = vsel %vm354, %v1416, 0
        %1465 = vmatprep.subr.bf16.mxu0 0
        %1466 = vmatpush1.bf16.msra.mxu0 %v1421
        %1467 = vmatprep.subr.bf16.mxu0 0
        %1468 = vmatpush1.bf16.msra.mxu0 0
        %1469 = vmatprep.subr.bf16.mxu0 0
        %1470 = vmatpush1.bf16.msra.mxu0 0
        %1471 = vmatprep.subr.bf16.mxu0 0
        %1472 = vmatpush1.bf16.msra.mxu0 0
        %1473 = vmatprep.subr.bf16.mxu0 0
        %1474 = vmatpush1.bf16.msra.mxu0 0
        %1475 = vmatprep.subr.bf16.mxu0 0
        %1476 = vmatpush1.bf16.msra.mxu0 0
        %1477 = vmatprep.subr.bf16.mxu0 0
        %1478 = vmatpush1.bf16.msra.mxu0 0
        %1479 = vmatprep.subr.bf16.mxu0 0
        %1480 = vmatpush1.bf16.msra.mxu0 0
        %1481 = vmatprep.subr.bf16.mxu0 0
        %1482 = vmatpush1.bf16.msra.mxu0 0
        %1483 = vmatprep.subr.bf16.mxu0 0
        %1484 = vmatpush1.bf16.msra.mxu0 0
        %1485 = vmatprep.subr.bf16.mxu0 0
        %1486 = vmatpush1.bf16.msra.mxu0 0
        %1487 = vmatprep.subr.bf16.mxu0 0
        %1488 = vmatpush1.bf16.msra.mxu0 0
        %1489 = vmatprep.subr.bf16.mxu0 0
        %1490 = vmatpush1.bf16.msra.mxu0 0
        %1491 = vmatprep.subr.bf16.mxu0 0
        %1492 = vmatpush1.bf16.msra.mxu0 0
        %1493 = vmatprep.subr.bf16.mxu0 0
        %1494 = vmatpush1.bf16.msra.mxu0 0
        %1495 = vmatprep.subr.bf16.mxu0 0
        %1496 = vmatpush1.bf16.msra.mxu0 0
        %1497 = vmatprep.mubr.bf16.mxu0 0
        %1498 = vmatmul.mubr.bf16.gmra.mrb[0].mxu0 %v1424
        %v1499 = vpop.f32.mrb[0].mxu0
        %v1500 = vadd.f32 %v1345, %v1499
        %v1501 = vpop.f32.mrb[0].mxu0
        %v1502 = vpop.f32.mrb[0].mxu0
        %v1503 = vadd.f32 %v1345, %v1502
        %v1504 = vpop.f32.mrb[0].mxu0
        %1505 = vmatprep.mubr.bf16.mxu0 0
        %1506 = vmatmul.mubr.bf16.gmra.mrb[0].mxu0 %v1427
        %v1507 = vpop.f32.mrb[0].mxu0
        %v1508 = vadd.f32 %v1345, %v1507
        %v1509 = vpop.f32.mrb[0].mxu0
        %v1510 = vpop.f32.mrb[0].mxu0
        %v1511 = vadd.f32 %v1345, %v1510
        %v1512 = vpop.f32.mrb[0].mxu0
        %1513 = vmatprep.mubr.bf16.mxu0 0
        %1514 = vmatmul.mubr.bf16.gmra.mrb[0].mxu0 %v1430
        %v1515 = vpop.f32.mrb[0].mxu0
        %v1516 = vadd.f32 %v1345, %v1515
        %v1517 = vpop.f32.mrb[0].mxu0
        %v1518 = vpop.f32.mrb[0].mxu0
        %v1519 = vadd.f32 %v1345, %v1518
        %v1520 = vpop.f32.mrb[0].mxu0
        %1521 = vmatprep.mubr.bf16.mxu0 0
        %1522 = vmatmul.mubr.bf16.gmra.mrb[0].mxu0 %v1433
        %v1523 = vpop.f32.mrb[0].mxu0
        %v1524 = vadd.f32 %v1345, %v1523
        %v1525 = vpop.f32.mrb[0].mxu0
        %v1526 = vpop.f32.mrb[0].mxu0
        %v1527 = vadd.f32 %v1345, %v1526
        %v1528 = vpop.f32.mrb[0].mxu0
        %1529 = vmatprep.mubr.bf16.mxu0 0
        %1530 = vmatmul.mubr.bf16.gmra.mrb[0].mxu0 %v1436
        %v1531 = vpop.f32.mrb[0].mxu0
        %v1532 = vadd.f32 %v1345, %v1531
        %v1533 = vpop.f32.mrb[0].mxu0
        %v1534 = vpop.f32.mrb[0].mxu0
        %v1535 = vadd.f32 %v1345, %v1534
        %v1536 = vpop.f32.mrb[0].mxu0
        %1537 = vmatprep.mubr.bf16.mxu0 0
        %1538 = vmatmul.mubr.bf16.gmra.mrb[0].mxu0 %v1439
        %v1539 = vpop.f32.mrb[0].mxu0
        %v1540 = vadd.f32 %v1345, %v1539
        %v1541 = vpop.f32.mrb[0].mxu0
        %v1542 = vpop.f32.mrb[0].mxu0
        %v1543 = vadd.f32 %v1345, %v1542
        %v1544 = vpop.f32.mrb[0].mxu0
        %1545 = vmatprep.mubr.bf16.mxu0 0
        %1546 = vmatmul.mubr.bf16.gmra.mrb[0].mxu0 %v1442
        %v1547 = vpop.f32.mrb[0].mxu0
        %v1548 = vadd.f32 %v1345, %v1547
        %v1549 = vpop.f32.mrb[0].mxu0
        %v1550 = vpop.f32.mrb[0].mxu0
        %v1551 = vadd.f32 %v1345, %v1550
        %v1552 = vpop.f32.mrb[0].mxu0
        %1553 = vmatprep.mubr.bf16.mxu0 0
        %1554 = vmatmul.mubr.bf16.gmra.mrb[0].mxu0 %v1445
        %v1555 = vpop.f32.mrb[0].mxu0
        %v1556 = vadd.f32 %v1345, %v1555
        %v1557 = vpop.f32.mrb[0].mxu0
        %v1558 = vpop.f32.mrb[0].mxu0
        %v1559 = vadd.f32 %v1345, %v1558
        %v1560 = vpop.f32.mrb[0].mxu0
        %1561 = vmatprep.mubr.bf16.mxu0 0
        %1562 = vmatmul.mubr.bf16.gmra.mrb[0].mxu0 %v1448
        %v1563 = vpop.f32.mrb[0].mxu0
        %v1564 = vadd.f32 %v1345, %v1563
        %v1565 = vpop.f32.mrb[0].mxu0
        %v1566 = vpop.f32.mrb[0].mxu0
        %v1567 = vadd.f32 %v1345, %v1566
        %v1568 = vpop.f32.mrb[0].mxu0
        %1569 = vmatprep.mubr.bf16.mxu0 0
        %1570 = vmatmul.mubr.bf16.gmra.mrb[0].mxu0 %v1451
        %v1571 = vpop.f32.mrb[0].mxu0
        %v1572 = vadd.f32 %v1345, %v1571
        %v1573 = vpop.f32.mrb[0].mxu0
        %v1574 = vpop.f32.mrb[0].mxu0
        %v1575 = vadd.f32 %v1345, %v1574
        %v1576 = vpop.f32.mrb[0].mxu0
        %1577 = vmatprep.mubr.bf16.mxu0 0
        %1578 = vmatmul.mubr.bf16.gmra.mrb[0].mxu0 %v1454
        %v1579 = vpop.f32.mrb[0].mxu0
        %v1580 = vadd.f32 %v1345, %v1579
        %v1581 = vpop.f32.mrb[0].mxu0
        %v1582 = vpop.f32.mrb[0].mxu0
        %v1583 = vadd.f32 %v1345, %v1582
        %v1584 = vpop.f32.mrb[0].mxu0
        %1585 = vmatprep.mubr.bf16.mxu0 0
        %1586 = vmatmul.mubr.bf16.gmra.mrb[0].mxu0 %v1457
        %v1587 = vpop.f32.mrb[0].mxu0
        %v1588 = vadd.f32 %v1345, %v1587
        %v1589 = vpop.f32.mrb[0].mxu0
        %v1590 = vpop.f32.mrb[0].mxu0
        %v1591 = vadd.f32 %v1345, %v1590
        %v1592 = vpop.f32.mrb[0].mxu0
        %1593 = vmatprep.mubr.bf16.mxu0 0
        %1594 = vmatmul.mubr.bf16.gmra.mrb[0].mxu0 %v1460
        %v1595 = vpop.f32.mrb[0].mxu0
        %v1596 = vadd.f32 %v1345, %v1595
        %v1597 = vpop.f32.mrb[0].mxu0
        %v1598 = vpop.f32.mrb[0].mxu0
        %v1599 = vadd.f32 %v1345, %v1598
        %v1600 = vpop.f32.mrb[0].mxu0
        %1601 = vmatprep.mubr.bf16.mxu0 0
        %1602 = vmatmul.mubr.bf16.gmra.mrb[0].mxu0 %v1463
        %v1603 = vpop.f32.mrb[0].mxu0
        %v1604 = vadd.f32 %v1345, %v1603
        %v1605 = vpop.f32.mrb[0].mxu0
        %v1606 = vpop.f32.mrb[0].mxu0
        %v1607 = vadd.f32 %v1345, %v1606
        %v1608 = vpop.f32.mrb[0].mxu0
        %1609 = vdwg.mxu0
        %v1610 = vmax.f32 %v1500, 0.0
        %v1611 = vmax.f32 %v1503, 0.0
        %v1612 = vmax.f32 %v1508, 0.0
        %v1613 = vmax.f32 %v1511, 0.0
        %v1614 = vmax.f32 %v1516, 0.0
        %v1615 = vmax.f32 %v1519, 0.0
        %v1616 = vmax.f32 %v1524, 0.0
        %v1617 = vmax.f32 %v1527, 0.0
        %v1618 = vmax.f32 %v1532, 0.0
        %v1619 = vmax.f32 %v1535, 0.0
        %v1620 = vmax.f32 %v1540, 0.0
        %v1621 = vmax.f32 %v1543, 0.0
        %v1622 = vmax.f32 %v1548, 0.0
        %v1623 = vmax.f32 %v1551, 0.0
        %v1624 = vmax.f32 %v1556, 0.0
        %v1625 = vmax.f32 %v1559, 0.0
        %v1626 = vmax.f32 %v1564, 0.0
        %v1627 = vmax.f32 %v1567, 0.0
        %v1628 = vmax.f32 %v1572, 0.0
        %v1629 = vmax.f32 %v1575, 0.0
        %v1630 = vmax.f32 %v1580, 0.0
        %v1631 = vmax.f32 %v1583, 0.0
        %v1632 = vmax.f32 %v1588, 0.0
        %v1633 = vmax.f32 %v1591, 0.0
        %v1634 = vmax.f32 %v1596, 0.0
        %v1635 = vmax.f32 %v1599, 0.0
        %v1636 = vmax.f32 %v1604, 0.0
        %v1637 = vmax.f32 %v1607, 0.0
        %1638 = vst [vmem:[#allocation2 + $0x2a0] sm:$0xff] %v1610
        %1639 = vst [vmem:[#allocation2 + $0x2a8] sm:$0xff] %v1611
        %1640 = vst [vmem:[#allocation2 + $0x2b0] sm:$0xff] %v1612
        %1641 = vst [vmem:[#allocation2 + $0x2b8] sm:$0xff] %v1613
        %1642 = vst [vmem:[#allocation2 + $0x2c0] sm:$0xff] %v1614
        %1643 = vst [vmem:[#allocation2 + $0x2c8] sm:$0xff] %v1615
        %1644 = vst [vmem:[#allocation2 + $0x2d0] sm:$0xff] %v1616
        %1645 = vst [vmem:[#allocation2 + $0x2d8] sm:$0xff] %v1617
        %1646 = vst [vmem:[#allocation2 + $0x2e0] sm:$0xff] %v1618
        %1647 = vst [vmem:[#allocation2 + $0x2e8] sm:$0xff] %v1619
        %1648 = vst [vmem:[#allocation2 + $0x2f0] sm:$0xff] %v1620
        %1649 = vst [vmem:[#allocation2 + $0x2f8] sm:$0xff] %v1621
        %1650 = vst [vmem:[#allocation2 + $0x300] sm:$0xff] %v1622
        %1651 = vst [vmem:[#allocation2 + $0x308] sm:$0xff] %v1623
        %1652 = vst [vmem:[#allocation2 + $0x310] sm:$0xff] %v1624
        %1653 = vst [vmem:[#allocation2 + $0x318] sm:$0xff] %v1625
        %1654 = vst [vmem:[#allocation2 + $0x320] sm:$0xff] %v1626
        %1655 = vst [vmem:[#allocation2 + $0x328] sm:$0xff] %v1627
        %1656 = vst [vmem:[#allocation2 + $0x330] sm:$0xff] %v1628
        %1657 = vst [vmem:[#allocation2 + $0x338] sm:$0xff] %v1629
        %1658 = vst [vmem:[#allocation2 + $0x340] sm:$0xff] %v1630
        %1659 = vst [vmem:[#allocation2 + $0x348] sm:$0xff] %v1631
        %1660 = vst [vmem:[#allocation2 + $0x350] sm:$0xff] %v1632
        %1661 = vst [vmem:[#allocation2 + $0x358] sm:$0xff] %v1633
        %1662 = vst [vmem:[#allocation2 + $0x360] sm:$0xff] %v1634
        %1663 = vst [vmem:[#allocation2 + $0x368] sm:$0xff] %v1635
        %1664 = vst [vmem:[#allocation2 + $0x370] sm:$0xff] %v1636
        %1665 = vst [vmem:[#allocation2 + $0x378] sm:$0xff] %v1637
        %1666 = vst [vmem:[#allocation3] sm:$0xff] 0.0
        %1667 = vst [vmem:[#allocation3 + $0x8] sm:$0xff] 0.0
        %1668 = vst [vmem:[#allocation3 + $0x10] sm:$0xff] 0.0
        %1669 = vst [vmem:[#allocation3 + $0x18] sm:$0xff] 0.0
        %1670 = vst [vmem:[#allocation3 + $0x20] sm:$0xff] 0.0
        %1671 = vst [vmem:[#allocation3 + $0x28] sm:$0xff] 0.0
        %1672 = vst [vmem:[#allocation3 + $0x30] sm:$0xff] 0.0
        %1673 = vst [vmem:[#allocation3 + $0x38] sm:$0xff] 0.0
        %1674 = vst [vmem:[#allocation3 + $0x40] sm:$0xff] 0.0
        %1675 = vst [vmem:[#allocation3 + $0x48] sm:$0xff] 0.0
        %1676 = vst [vmem:[#allocation3 + $0x50] sm:$0xff] 0.0
        %1677 = vst [vmem:[#allocation3 + $0x58] sm:$0xff] 0.0
        %1678 = vst [vmem:[#allocation3 + $0x60] sm:$0xff] 0.0
        %1679 = vst [vmem:[#allocation3 + $0x68] sm:$0xff] 0.0
        %1680 = vst [vmem:[#allocation3 + $0x70] sm:$0xff] 0.0
        %1681 = vst [vmem:[#allocation3 + $0x78] sm:$0xff] 0.0
        %1682 = vst [vmem:[#allocation3 + $0x80] sm:$0xff] 0.0
        %1683 = vst [vmem:[#allocation3 + $0x88] sm:$0xff] 0.0
        %1684 = vst [vmem:[#allocation3 + $0x90] sm:$0xff] 0.0
        %1685 = vst [vmem:[#allocation3 + $0x98] sm:$0xff] 0.0
        %1686 = vst [vmem:[#allocation3 + $0xa0] sm:$0xff] 0.0
        %1687 = vst [vmem:[#allocation3 + $0xa8] sm:$0xff] 0.0
        %1688 = vst [vmem:[#allocation3 + $0xb0] sm:$0xff] 0.0
        %1689 = vst [vmem:[#allocation3 + $0xb8] sm:$0xff] 0.0
        %1690 = vst [vmem:[#allocation3 + $0xc0] sm:$0xff] 0.0
        %1691 = vst [vmem:[#allocation3 + $0xc8] sm:$0xff] 0.0
        %1692 = vst [vmem:[#allocation3 + $0xd0] sm:$0xff] 0.0
        %1693 = vst [vmem:[#allocation3 + $0xd8] sm:$0xff] 0.0
        %1694 = vst [vmem:[#allocation3 + $0xe0] sm:$0xff] 0.0
        %1695 = vst [vmem:[#allocation3 + $0xe8] sm:$0xff] 0.0
        %1696 = vst [vmem:[#allocation3 + $0xf0] sm:$0xff] 0.0
        %1697 = vst [vmem:[#allocation3 + $0xf8] sm:$0xff] 0.0
        %1698 = vst [vmem:[#allocation3 + $0x100] sm:$0xff] 0.0
        %v1699 = vld [vmem:[#allocation2] sm:$0xff]
        %v1700 = vld [vmem:[#allocation2 + $0x8] sm:$0xff]
        %v1701 = vld [vmem:[#allocation2 + $0x10] sm:$0xff]
        %v1702 = vld [vmem:[#allocation2 + $0x18] sm:$0xff]
        %v1703 = vld [vmem:[#allocation2 + $0x20] sm:$0xff]
        %v1704 = vld [vmem:[#allocation2 + $0x28] sm:$0xff]
        %v1705 = vld [vmem:[#allocation2 + $0x30] sm:$0xff]
        %v1706 = vld [vmem:[#allocation2 + $0x38] sm:$0xff]
        %v1707 = vmax.f32 %v1699, %v1703
        %v1708 = vmax.f32 %v1700, %v1704
        %v1709 = vmax.f32 %v1701, %v1705
        %v1710 = vmax.f32 %v1702, %v1706
        %1711 = vst [vmem:[#allocation6] sm:$0xff] %v1707
        %1712 = vst [vmem:[#allocation6 + $0x8] sm:$0xff] %v1708
        %1713 = vst [vmem:[#allocation6 + $0x10] sm:$0xff] %v1709
        %1714 = vst [vmem:[#allocation6 + $0x18] sm:$0xff] %v1710
        %v1715 = vld [vmem:[#allocation6] ss:$2 sm:$0xff]
        %s1716 = scalar_lea.vmem [#allocation6], 16
        %v1717 = vld [vmem:[%s1716] ss:$2 sm:$0x3f]
        %s1718 = scalar_lea.vmem [#allocation6], 1
        %v1719 = vld [vmem:[%s1718] ss:$2 sm:$0xff]
        %s1720 = scalar_lea.vmem [#allocation6], 17
        %v1721 = vld [vmem:[%s1720] ss:$2 sm:$0x3f]
        %v1722 = vmax.f32 %v1715, %v1719
        %v1723 = vmax.f32 %v1717, %v1721
        %1724 = vst [vmem:[#allocation3 + $0x11] sm:$0xff] %v1722
        %1725 = vst [vmem:[#allocation3 + $0x19] sm:$0x3f] %v1723
        %v1726 = vld [vmem:[#allocation2 + $0x40] sm:$0xff]
        %v1727 = vld [vmem:[#allocation2 + $0x48] sm:$0xff]
        %v1728 = vld [vmem:[#allocation2 + $0x50] sm:$0xff]
        %v1729 = vld [vmem:[#allocation2 + $0x58] sm:$0xff]
        %v1730 = vld [vmem:[#allocation2 + $0x60] sm:$0xff]
        %v1731 = vld [vmem:[#allocation2 + $0x68] sm:$0xff]
        %v1732 = vld [vmem:[#allocation2 + $0x70] sm:$0xff]
        %v1733 = vld [vmem:[#allocation2 + $0x78] sm:$0xff]
        %v1734 = vmax.f32 %v1726, %v1730
        %v1735 = vmax.f32 %v1727, %v1731
        %v1736 = vmax.f32 %v1728, %v1732
        %v1737 = vmax.f32 %v1729, %v1733
        %1738 = vst [vmem:[#allocation6] sm:$0xff] %v1734
        %1739 = vst [vmem:[#allocation6 + $0x8] sm:$0xff] %v1735
        %1740 = vst [vmem:[#allocation6 + $0x10] sm:$0xff] %v1736
        %1741 = vst [vmem:[#allocation6 + $0x18] sm:$0xff] %v1737
        %v1742 = vld [vmem:[#allocation6] ss:$2 sm:$0xff]
        %v1743 = vld [vmem:[%s1716] ss:$2 sm:$0x3f]
        %v1744 = vld [vmem:[%s1718] ss:$2 sm:$0xff]
        %v1745 = vld [vmem:[%s1720] ss:$2 sm:$0x3f]
        %v1746 = vmax.f32 %v1742, %v1744
        %v1747 = vmax.f32 %v1743, %v1745
        %1748 = vst [vmem:[#allocation3 + $0x21] sm:$0xff] %v1746
        %1749 = vst [vmem:[#allocation3 + $0x29] sm:$0x3f] %v1747
        %v1750 = vld [vmem:[#allocation2 + $0x80] sm:$0xff]
        %v1751 = vld [vmem:[#allocation2 + $0x88] sm:$0xff]
        %v1752 = vld [vmem:[#allocation2 + $0x90] sm:$0xff]
        %v1753 = vld [vmem:[#allocation2 + $0x98] sm:$0xff]
        %v1754 = vld [vmem:[#allocation2 + $0xa0] sm:$0xff]
        %v1755 = vld [vmem:[#allocation2 + $0xa8] sm:$0xff]
        %v1756 = vld [vmem:[#allocation2 + $0xb0] sm:$0xff]
        %v1757 = vld [vmem:[#allocation2 + $0xb8] sm:$0xff]
        %v1758 = vmax.f32 %v1750, %v1754
        %v1759 = vmax.f32 %v1751, %v1755
        %v1760 = vmax.f32 %v1752, %v1756
        %v1761 = vmax.f32 %v1753, %v1757
        %1762 = vst [vmem:[#allocation6] sm:$0xff] %v1758
        %1763 = vst [vmem:[#allocation6 + $0x8] sm:$0xff] %v1759
        %1764 = vst [vmem:[#allocation6 + $0x10] sm:$0xff] %v1760
        %1765 = vst [vmem:[#allocation6 + $0x18] sm:$0xff] %v1761
        %v1766 = vld [vmem:[#allocation6] ss:$2 sm:$0xff]
        %v1767 = vld [vmem:[%s1716] ss:$2 sm:$0x3f]
        %v1768 = vld [vmem:[%s1718] ss:$2 sm:$0xff]
        %v1769 = vld [vmem:[%s1720] ss:$2 sm:$0x3f]
        %v1770 = vmax.f32 %v1766, %v1768
        %v1771 = vmax.f32 %v1767, %v1769
        %1772 = vst [vmem:[#allocation3 + $0x31] sm:$0xff] %v1770
        %1773 = vst [vmem:[#allocation3 + $0x39] sm:$0x3f] %v1771
        %v1774 = vld [vmem:[#allocation2 + $0xc0] sm:$0xff]
        %v1775 = vld [vmem:[#allocation2 + $0xc8] sm:$0xff]
        %v1776 = vld [vmem:[#allocation2 + $0xd0] sm:$0xff]
        %v1777 = vld [vmem:[#allocation2 + $0xd8] sm:$0xff]
        %v1778 = vld [vmem:[#allocation2 + $0xe0] sm:$0xff]
        %v1779 = vld [vmem:[#allocation2 + $0xe8] sm:$0xff]
        %v1780 = vld [vmem:[#allocation2 + $0xf0] sm:$0xff]
        %v1781 = vld [vmem:[#allocation2 + $0xf8] sm:$0xff]
        %v1782 = vmax.f32 %v1774, %v1778
        %v1783 = vmax.f32 %v1775, %v1779
        %v1784 = vmax.f32 %v1776, %v1780
        %v1785 = vmax.f32 %v1777, %v1781
        %1786 = vst [vmem:[#allocation6] sm:$0xff] %v1782
        %1787 = vst [vmem:[#allocation6 + $0x8] sm:$0xff] %v1783
        %1788 = vst [vmem:[#allocation6 + $0x10] sm:$0xff] %v1784
        %1789 = vst [vmem:[#allocation6 + $0x18] sm:$0xff] %v1785
        %v1790 = vld [vmem:[#allocation6] ss:$2 sm:$0xff]
        %v1791 = vld [vmem:[%s1716] ss:$2 sm:$0x3f]
        %v1792 = vld [vmem:[%s1718] ss:$2 sm:$0xff]
        %v1793 = vld [vmem:[%s1720] ss:$2 sm:$0x3f]
        %v1794 = vmax.f32 %v1790, %v1792
        %v1795 = vmax.f32 %v1791, %v1793
        %1796 = vst [vmem:[#allocation3 + $0x41] sm:$0xff] %v1794
        %1797 = vst [vmem:[#allocation3 + $0x49] sm:$0x3f] %v1795
        %v1798 = vld [vmem:[#allocation2 + $0x100] sm:$0xff]
        %v1799 = vld [vmem:[#allocation2 + $0x108] sm:$0xff]
        %v1800 = vld [vmem:[#allocation2 + $0x110] sm:$0xff]
        %v1801 = vld [vmem:[#allocation2 + $0x118] sm:$0xff]
        %v1802 = vld [vmem:[#allocation2 + $0x120] sm:$0xff]
        %v1803 = vld [vmem:[#allocation2 + $0x128] sm:$0xff]
        %v1804 = vld [vmem:[#allocation2 + $0x130] sm:$0xff]
        %v1805 = vld [vmem:[#allocation2 + $0x138] sm:$0xff]
        %v1806 = vmax.f32 %v1798, %v1802
        %v1807 = vmax.f32 %v1799, %v1803
        %v1808 = vmax.f32 %v1800, %v1804
        %v1809 = vmax.f32 %v1801, %v1805
        %1810 = vst [vmem:[#allocation6] sm:$0xff] %v1806
        %1811 = vst [vmem:[#allocation6 + $0x8] sm:$0xff] %v1807
        %1812 = vst [vmem:[#allocation6 + $0x10] sm:$0xff] %v1808
        %1813 = vst [vmem:[#allocation6 + $0x18] sm:$0xff] %v1809
        %v1814 = vld [vmem:[#allocation6] ss:$2 sm:$0xff]
        %v1815 = vld [vmem:[%s1716] ss:$2 sm:$0x3f]
        %v1816 = vld [vmem:[%s1718] ss:$2 sm:$0xff]
        %v1817 = vld [vmem:[%s1720] ss:$2 sm:$0x3f]
        %v1818 = vmax.f32 %v1814, %v1816
        %v1819 = vmax.f32 %v1815, %v1817
        %1820 = vst [vmem:[#allocation3 + $0x51] sm:$0xff] %v1818
        %1821 = vst [vmem:[#allocation3 + $0x59] sm:$0x3f] %v1819
        %v1822 = vld [vmem:[#allocation2 + $0x140] sm:$0xff]
        %v1823 = vld [vmem:[#allocation2 + $0x148] sm:$0xff]
        %v1824 = vld [vmem:[#allocation2 + $0x150] sm:$0xff]
        %v1825 = vld [vmem:[#allocation2 + $0x158] sm:$0xff]
        %v1826 = vld [vmem:[#allocation2 + $0x160] sm:$0xff]
        %v1827 = vld [vmem:[#allocation2 + $0x168] sm:$0xff]
        %v1828 = vld [vmem:[#allocation2 + $0x170] sm:$0xff]
        %v1829 = vld [vmem:[#allocation2 + $0x178] sm:$0xff]
        %v1830 = vmax.f32 %v1822, %v1826
        %v1831 = vmax.f32 %v1823, %v1827
        %v1832 = vmax.f32 %v1824, %v1828
        %v1833 = vmax.f32 %v1825, %v1829
        %1834 = vst [vmem:[#allocation6] sm:$0xff] %v1830
        %1835 = vst [vmem:[#allocation6 + $0x8] sm:$0xff] %v1831
        %1836 = vst [vmem:[#allocation6 + $0x10] sm:$0xff] %v1832
        %1837 = vst [vmem:[#allocation6 + $0x18] sm:$0xff] %v1833
        %v1838 = vld [vmem:[#allocation6] ss:$2 sm:$0xff]
        %v1839 = vld [vmem:[%s1716] ss:$2 sm:$0x3f]
        %v1840 = vld [vmem:[%s1718] ss:$2 sm:$0xff]
        %v1841 = vld [vmem:[%s1720] ss:$2 sm:$0x3f]
        %v1842 = vmax.f32 %v1838, %v1840
        %v1843 = vmax.f32 %v1839, %v1841
        %1844 = vst [vmem:[#allocation3 + $0x61] sm:$0xff] %v1842
        %1845 = vst [vmem:[#allocation3 + $0x69] sm:$0x3f] %v1843
        %v1846 = vld [vmem:[#allocation2 + $0x180] sm:$0xff]
        %v1847 = vld [vmem:[#allocation2 + $0x188] sm:$0xff]
        %v1848 = vld [vmem:[#allocation2 + $0x190] sm:$0xff]
        %v1849 = vld [vmem:[#allocation2 + $0x198] sm:$0xff]
        %v1850 = vld [vmem:[#allocation2 + $0x1a0] sm:$0xff]
        %v1851 = vld [vmem:[#allocation2 + $0x1a8] sm:$0xff]
        %v1852 = vld [vmem:[#allocation2 + $0x1b0] sm:$0xff]
        %v1853 = vld [vmem:[#allocation2 + $0x1b8] sm:$0xff]
        %v1854 = vmax.f32 %v1846, %v1850
        %v1855 = vmax.f32 %v1847, %v1851
        %v1856 = vmax.f32 %v1848, %v1852
        %v1857 = vmax.f32 %v1849, %v1853
        %1858 = vst [vmem:[#allocation6] sm:$0xff] %v1854
        %1859 = vst [vmem:[#allocation6 + $0x8] sm:$0xff] %v1855
        %1860 = vst [vmem:[#allocation6 + $0x10] sm:$0xff] %v1856
        %1861 = vst [vmem:[#allocation6 + $0x18] sm:$0xff] %v1857
        %v1862 = vld [vmem:[#allocation6] ss:$2 sm:$0xff]
        %v1863 = vld [vmem:[%s1716] ss:$2 sm:$0x3f]
        %v1864 = vld [vmem:[%s1718] ss:$2 sm:$0xff]
        %v1865 = vld [vmem:[%s1720] ss:$2 sm:$0x3f]
        %v1866 = vmax.f32 %v1862, %v1864
        %v1867 = vmax.f32 %v1863, %v1865
        %1868 = vst [vmem:[#allocation3 + $0x71] sm:$0xff] %v1866
        %1869 = vst [vmem:[#allocation3 + $0x79] sm:$0x3f] %v1867
        %v1870 = vld [vmem:[#allocation2 + $0x1c0] sm:$0xff]
        %v1871 = vld [vmem:[#allocation2 + $0x1c8] sm:$0xff]
        %v1872 = vld [vmem:[#allocation2 + $0x1d0] sm:$0xff]
        %v1873 = vld [vmem:[#allocation2 + $0x1d8] sm:$0xff]
        %v1874 = vld [vmem:[#allocation2 + $0x1e0] sm:$0xff]
        %v1875 = vld [vmem:[#allocation2 + $0x1e8] sm:$0xff]
        %v1876 = vld [vmem:[#allocation2 + $0x1f0] sm:$0xff]
        %v1877 = vld [vmem:[#allocation2 + $0x1f8] sm:$0xff]
        %v1878 = vmax.f32 %v1870, %v1874
        %v1879 = vmax.f32 %v1871, %v1875
        %v1880 = vmax.f32 %v1872, %v1876
        %v1881 = vmax.f32 %v1873, %v1877
        %1882 = vst [vmem:[#allocation6] sm:$0xff] %v1878
        %1883 = vst [vmem:[#allocation6 + $0x8] sm:$0xff] %v1879
        %1884 = vst [vmem:[#allocation6 + $0x10] sm:$0xff] %v1880
        %1885 = vst [vmem:[#allocation6 + $0x18] sm:$0xff] %v1881
        %v1886 = vld [vmem:[#allocation6] ss:$2 sm:$0xff]
        %v1887 = vld [vmem:[%s1716] ss:$2 sm:$0x3f]
        %v1888 = vld [vmem:[%s1718] ss:$2 sm:$0xff]
        %v1889 = vld [vmem:[%s1720] ss:$2 sm:$0x3f]
        %v1890 = vmax.f32 %v1886, %v1888
        %v1891 = vmax.f32 %v1887, %v1889
        %1892 = vst [vmem:[#allocation3 + $0x81] sm:$0xff] %v1890
        %1893 = vst [vmem:[#allocation3 + $0x89] sm:$0x3f] %v1891
        %v1894 = vld [vmem:[#allocation2 + $0x200] sm:$0xff]
        %v1895 = vld [vmem:[#allocation2 + $0x208] sm:$0xff]
        %v1896 = vld [vmem:[#allocation2 + $0x210] sm:$0xff]
        %v1897 = vld [vmem:[#allocation2 + $0x218] sm:$0xff]
        %v1898 = vld [vmem:[#allocation2 + $0x220] sm:$0xff]
        %v1899 = vld [vmem:[#allocation2 + $0x228] sm:$0xff]
        %v1900 = vld [vmem:[#allocation2 + $0x230] sm:$0xff]
        %v1901 = vld [vmem:[#allocation2 + $0x238] sm:$0xff]
        %v1902 = vmax.f32 %v1894, %v1898
        %v1903 = vmax.f32 %v1895, %v1899
        %v1904 = vmax.f32 %v1896, %v1900
        %v1905 = vmax.f32 %v1897, %v1901
        %1906 = vst [vmem:[#allocation6] sm:$0xff] %v1902
        %1907 = vst [vmem:[#allocation6 + $0x8] sm:$0xff] %v1903
        %1908 = vst [vmem:[#allocation6 + $0x10] sm:$0xff] %v1904
        %1909 = vst [vmem:[#allocation6 + $0x18] sm:$0xff] %v1905
        %v1910 = vld [vmem:[#allocation6] ss:$2 sm:$0xff]
        %v1911 = vld [vmem:[%s1716] ss:$2 sm:$0x3f]
        %v1912 = vld [vmem:[%s1718] ss:$2 sm:$0xff]
        %v1913 = vld [vmem:[%s1720] ss:$2 sm:$0x3f]
        %v1914 = vmax.f32 %v1910, %v1912
        %v1915 = vmax.f32 %v1911, %v1913
        %1916 = vst [vmem:[#allocation3 + $0x91] sm:$0xff] %v1914
        %1917 = vst [vmem:[#allocation3 + $0x99] sm:$0x3f] %v1915
        %v1918 = vld [vmem:[#allocation2 + $0x240] sm:$0xff]
        %v1919 = vld [vmem:[#allocation2 + $0x248] sm:$0xff]
        %v1920 = vld [vmem:[#allocation2 + $0x250] sm:$0xff]
        %v1921 = vld [vmem:[#allocation2 + $0x258] sm:$0xff]
        %v1922 = vld [vmem:[#allocation2 + $0x260] sm:$0xff]
        %v1923 = vld [vmem:[#allocation2 + $0x268] sm:$0xff]
        %v1924 = vld [vmem:[#allocation2 + $0x270] sm:$0xff]
        %v1925 = vld [vmem:[#allocation2 + $0x278] sm:$0xff]
        %v1926 = vmax.f32 %v1918, %v1922
        %v1927 = vmax.f32 %v1919, %v1923
        %v1928 = vmax.f32 %v1920, %v1924
        %v1929 = vmax.f32 %v1921, %v1925
        %1930 = vst [vmem:[#allocation6] sm:$0xff] %v1926
        %1931 = vst [vmem:[#allocation6 + $0x8] sm:$0xff] %v1927
        %1932 = vst [vmem:[#allocation6 + $0x10] sm:$0xff] %v1928
        %1933 = vst [vmem:[#allocation6 + $0x18] sm:$0xff] %v1929
        %v1934 = vld [vmem:[#allocation6] ss:$2 sm:$0xff]
        %v1935 = vld [vmem:[%s1716] ss:$2 sm:$0x3f]
        %v1936 = vld [vmem:[%s1718] ss:$2 sm:$0xff]
        %v1937 = vld [vmem:[%s1720] ss:$2 sm:$0x3f]
        %v1938 = vmax.f32 %v1934, %v1936
        %v1939 = vmax.f32 %v1935, %v1937
        %1940 = vst [vmem:[#allocation3 + $0xa1] sm:$0xff] %v1938
        %1941 = vst [vmem:[#allocation3 + $0xa9] sm:$0x3f] %v1939
        %v1942 = vld [vmem:[#allocation2 + $0x280] sm:$0xff]
        %v1943 = vld [vmem:[#allocation2 + $0x288] sm:$0xff]
        %v1944 = vld [vmem:[#allocation2 + $0x290] sm:$0xff]
        %v1945 = vld [vmem:[#allocation2 + $0x298] sm:$0xff]
        %v1946 = vld [vmem:[#allocation2 + $0x2a0] sm:$0xff]
        %v1947 = vld [vmem:[#allocation2 + $0x2a8] sm:$0xff]
        %v1948 = vld [vmem:[#allocation2 + $0x2b0] sm:$0xff]
        %v1949 = vld [vmem:[#allocation2 + $0x2b8] sm:$0xff]
        %v1950 = vmax.f32 %v1942, %v1946
        %v1951 = vmax.f32 %v1943, %v1947
        %v1952 = vmax.f32 %v1944, %v1948
        %v1953 = vmax.f32 %v1945, %v1949
        %1954 = vst [vmem:[#allocation6] sm:$0xff] %v1950
        %1955 = vst [vmem:[#allocation6 + $0x8] sm:$0xff] %v1951
        %1956 = vst [vmem:[#allocation6 + $0x10] sm:$0xff] %v1952
        %1957 = vst [vmem:[#allocation6 + $0x18] sm:$0xff] %v1953
        %v1958 = vld [vmem:[#allocation6] ss:$2 sm:$0xff]
        %v1959 = vld [vmem:[%s1716] ss:$2 sm:$0x3f]
        %v1960 = vld [vmem:[%s1718] ss:$2 sm:$0xff]
        %v1961 = vld [vmem:[%s1720] ss:$2 sm:$0x3f]
        %v1962 = vmax.f32 %v1958, %v1960
        %v1963 = vmax.f32 %v1959, %v1961
        %1964 = vst [vmem:[#allocation3 + $0xb1] sm:$0xff] %v1962
        %1965 = vst [vmem:[#allocation3 + $0xb9] sm:$0x3f] %v1963
        %v1966 = vld [vmem:[#allocation2 + $0x2c0] sm:$0xff]
        %v1967 = vld [vmem:[#allocation2 + $0x2c8] sm:$0xff]
        %v1968 = vld [vmem:[#allocation2 + $0x2d0] sm:$0xff]
        %v1969 = vld [vmem:[#allocation2 + $0x2d8] sm:$0xff]
        %v1970 = vld [vmem:[#allocation2 + $0x2e0] sm:$0xff]
        %v1971 = vld [vmem:[#allocation2 + $0x2e8] sm:$0xff]
        %v1972 = vld [vmem:[#allocation2 + $0x2f0] sm:$0xff]
        %v1973 = vld [vmem:[#allocation2 + $0x2f8] sm:$0xff]
        %v1974 = vmax.f32 %v1966, %v1970
        %v1975 = vmax.f32 %v1967, %v1971
        %v1976 = vmax.f32 %v1968, %v1972
        %v1977 = vmax.f32 %v1969, %v1973
        %1978 = vst [vmem:[#allocation6] sm:$0xff] %v1974
        %1979 = vst [vmem:[#allocation6 + $0x8] sm:$0xff] %v1975
        %1980 = vst [vmem:[#allocation6 + $0x10] sm:$0xff] %v1976
        %1981 = vst [vmem:[#allocation6 + $0x18] sm:$0xff] %v1977
        %v1982 = vld [vmem:[#allocation6] ss:$2 sm:$0xff]
        %v1983 = vld [vmem:[%s1716] ss:$2 sm:$0x3f]
        %v1984 = vld [vmem:[%s1718] ss:$2 sm:$0xff]
        %v1985 = vld [vmem:[%s1720] ss:$2 sm:$0x3f]
        %v1986 = vmax.f32 %v1982, %v1984
        %v1987 = vmax.f32 %v1983, %v1985
        %1988 = vst [vmem:[#allocation3 + $0xc1] sm:$0xff] %v1986
        %1989 = vst [vmem:[#allocation3 + $0xc9] sm:$0x3f] %v1987
        %v1990 = vld [vmem:[#allocation2 + $0x300] sm:$0xff]
        %v1991 = vld [vmem:[#allocation2 + $0x308] sm:$0xff]
        %v1992 = vld [vmem:[#allocation2 + $0x310] sm:$0xff]
        %v1993 = vld [vmem:[#allocation2 + $0x318] sm:$0xff]
        %v1994 = vld [vmem:[#allocation2 + $0x320] sm:$0xff]
        %v1995 = vld [vmem:[#allocation2 + $0x328] sm:$0xff]
        %v1996 = vld [vmem:[#allocation2 + $0x330] sm:$0xff]
        %v1997 = vld [vmem:[#allocation2 + $0x338] sm:$0xff]
        %v1998 = vmax.f32 %v1990, %v1994
        %v1999 = vmax.f32 %v1991, %v1995
        %v2000 = vmax.f32 %v1992, %v1996
        %v2001 = vmax.f32 %v1993, %v1997
        %2002 = vst [vmem:[#allocation6] sm:$0xff] %v1998
        %2003 = vst [vmem:[#allocation6 + $0x8] sm:$0xff] %v1999
        %2004 = vst [vmem:[#allocation6 + $0x10] sm:$0xff] %v2000
        %2005 = vst [vmem:[#allocation6 + $0x18] sm:$0xff] %v2001
        %v2006 = vld [vmem:[#allocation6] ss:$2 sm:$0xff]
        %v2007 = vld [vmem:[%s1716] ss:$2 sm:$0x3f]
        %v2008 = vld [vmem:[%s1718] ss:$2 sm:$0xff]
        %v2009 = vld [vmem:[%s1720] ss:$2 sm:$0x3f]
        %v2010 = vmax.f32 %v2006, %v2008
        %v2011 = vmax.f32 %v2007, %v2009
        %2012 = vst [vmem:[#allocation3 + $0xd1] sm:$0xff] %v2010
        %2013 = vst [vmem:[#allocation3 + $0xd9] sm:$0x3f] %v2011
        %v2014 = vld [vmem:[#allocation2 + $0x340] sm:$0xff]
        %v2015 = vld [vmem:[#allocation2 + $0x348] sm:$0xff]
        %v2016 = vld [vmem:[#allocation2 + $0x350] sm:$0xff]
        %v2017 = vld [vmem:[#allocation2 + $0x358] sm:$0xff]
        %v2018 = vld [vmem:[#allocation2 + $0x360] sm:$0xff]
        %v2019 = vld [vmem:[#allocation2 + $0x368] sm:$0xff]
        %v2020 = vld [vmem:[#allocation2 + $0x370] sm:$0xff]
        %v2021 = vld [vmem:[#allocation2 + $0x378] sm:$0xff]
        %v2022 = vmax.f32 %v2014, %v2018
        %v2023 = vmax.f32 %v2015, %v2019
        %v2024 = vmax.f32 %v2016, %v2020
        %v2025 = vmax.f32 %v2017, %v2021
        %2026 = vst [vmem:[#allocation6] sm:$0xff] %v2022
        %2027 = vst [vmem:[#allocation6 + $0x8] sm:$0xff] %v2023
        %2028 = vst [vmem:[#allocation6 + $0x10] sm:$0xff] %v2024
        %2029 = vst [vmem:[#allocation6 + $0x18] sm:$0xff] %v2025
        %v2030 = vld [vmem:[#allocation6] ss:$2 sm:$0xff]
        %v2031 = vld [vmem:[%s1716] ss:$2 sm:$0x3f]
        %v2032 = vld [vmem:[%s1718] ss:$2 sm:$0xff]
        %v2033 = vld [vmem:[%s1720] ss:$2 sm:$0x3f]
        %v2034 = vmax.f32 %v2030, %v2032
        %v2035 = vmax.f32 %v2031, %v2033
        %2036 = vst [vmem:[#allocation3 + $0xe1] sm:$0xff] %v2034
        %2037 = vst [vmem:[#allocation3 + $0xe9] sm:$0x3f] %v2035
        %v2038 = vld [vmem:[#allocation3] sm:$0xff]
        %v2039 = vld [vmem:[#allocation3 + $0x8] sm:$0xff]
        %v2040 = vld [vmem:[#allocation3 + $0x10] sm:$0xff]
        %v2041 = vld [vmem:[#allocation3 + $0x18] sm:$0xff]
        %v2042 = vld [vmem:[#allocation3 + $0x20] sm:$0xff]
        %v2043 = vld [vmem:[#allocation3 + $0x28] sm:$0xff]
        %v2044 = vld [vmem:[#allocation3 + $0x30] sm:$0xff]
        %v2045 = vld [vmem:[#allocation3 + $0x38] sm:$0xff]
        %v2046 = vld [vmem:[#allocation3 + $0x40] sm:$0xff]
        %v2047 = vld [vmem:[#allocation3 + $0x48] sm:$0xff]
        %v2048 = vld [vmem:[#allocation3 + $0x50] sm:$0xff]
        %v2049 = vld [vmem:[#allocation3 + $0x58] sm:$0xff]
        %v2050 = vld [vmem:[#allocation3 + $0x60] sm:$0xff]
        %v2051 = vld [vmem:[#allocation3 + $0x68] sm:$0xff]
        %v2052 = vld [vmem:[#allocation3 + $0x70] sm:$0xff]
        %v2053 = vld [vmem:[#allocation3 + $0x78] sm:$0xff]
        %v2054 = vld [vmem:[#allocation3 + $0x80] sm:$0xff]
        %v2055 = vld [vmem:[#allocation3 + $0x88] sm:$0xff]
        %v2056 = vld [vmem:[#allocation3 + $0x90] sm:$0xff]
        %v2057 = vld [vmem:[#allocation3 + $0x98] sm:$0xff]
        %v2058 = vld [vmem:[#allocation3 + $0xa0] sm:$0xff]
        %v2059 = vld [vmem:[#allocation3 + $0xa8] sm:$0xff]
        %v2060 = vld [vmem:[#allocation3 + $0xb0] sm:$0xff]
        %v2061 = vld [vmem:[#allocation3 + $0xb8] sm:$0xff]
        %v2062 = vld [vmem:[#allocation3 + $0xc0] sm:$0xff]
        %v2063 = vld [vmem:[#allocation3 + $0xc8] sm:$0xff]
        %v2064 = vld [vmem:[#allocation3 + $0xd0] sm:$0xff]
        %v2065 = vld [vmem:[#allocation3 + $0xd8] sm:$0xff]
        %v2066 = vpack.c.bf16 %v2039, %v2038
        %v2067 = vpack.c.bf16 %v2041, %v2040
        %v2068 = vpack.c.bf16 %v2043, %v2042
        %v2069 = vpack.c.bf16 %v2045, %v2044
        %v2070 = vpack.c.bf16 %v2047, %v2046
        %v2071 = vpack.c.bf16 %v2049, %v2048
        %v2072 = vpack.c.bf16 %v2051, %v2050
        %v2073 = vpack.c.bf16 %v2053, %v2052
        %v2074 = vpack.c.bf16 %v2055, %v2054
        %v2075 = vpack.c.bf16 %v2057, %v2056
        %v2076 = vpack.c.bf16 %v2059, %v2058
        %v2077 = vpack.c.bf16 %v2061, %v2060
        %v2078 = vpack.c.bf16 %v2063, %v2062
        %v2079 = vpack.c.bf16 %v2065, %v2064
        %2080 = vst [vmem:[#allocation4] sm:$0xff] %v2066
        %2081 = vst [vmem:[#allocation4 + $0x48] sm:$0xff] %v2067
        %2082 = vst [vmem:[#allocation4 + $0x90] sm:$0xff] %v2068
        %2083 = vst [vmem:[#allocation4 + $0xd8] sm:$0xff] %v2069
        %2084 = vst [vmem:[#allocation4 + $0x120] sm:$0xff] %v2070
        %2085 = vst [vmem:[#allocation4 + $0x168] sm:$0xff] %v2071
        %2086 = vst [vmem:[#allocation4 + $0x1b0] sm:$0xff] %v2072
        %2087 = vst [vmem:[#allocation4 + $0x1f8] sm:$0xff] %v2073
        %2088 = vst [vmem:[#allocation4 + $0x240] sm:$0xff] %v2074
        %2089 = vst [vmem:[#allocation4 + $0x288] sm:$0xff] %v2075
        %2090 = vst [vmem:[#allocation4 + $0x2d0] sm:$0xff] %v2076
        %2091 = vst [vmem:[#allocation4 + $0x318] sm:$0xff] %v2077
        %2092 = vst [vmem:[#allocation4 + $0x360] sm:$0xff] %v2078
        %2093 = vst [vmem:[#allocation4 + $0x3a8] sm:$0xff] %v2079
        %v2094 = vld [vmem:[#allocation3 + $0x1] sm:$0xff]
        %v2095 = vld [vmem:[#allocation3 + $0x9] sm:$0xff]
        %v2096 = vld [vmem:[#allocation3 + $0x11] sm:$0xff]
        %v2097 = vld [vmem:[#allocation3 + $0x19] sm:$0xff]
        %v2098 = vld [vmem:[#allocation3 + $0x21] sm:$0xff]
        %v2099 = vld [vmem:[#allocation3 + $0x29] sm:$0xff]
        %v2100 = vld [vmem:[#allocation3 + $0x31] sm:$0xff]
        %v2101 = vld [vmem:[#allocation3 + $0x39] sm:$0xff]
        %v2102 = vld [vmem:[#allocation3 + $0x41] sm:$0xff]
        %v2103 = vld [vmem:[#allocation3 + $0x49] sm:$0xff]
        %v2104 = vld [vmem:[#allocation3 + $0x51] sm:$0xff]
        %v2105 = vld [vmem:[#allocation3 + $0x59] sm:$0xff]
        %v2106 = vld [vmem:[#allocation3 + $0x61] sm:$0xff]
        %v2107 = vld [vmem:[#allocation3 + $0x69] sm:$0xff]
        %v2108 = vld [vmem:[#allocation3 + $0x71] sm:$0xff]
        %v2109 = vld [vmem:[#allocation3 + $0x79] sm:$0xff]
        %v2110 = vld [vmem:[#allocation3 + $0x81] sm:$0xff]
        %v2111 = vld [vmem:[#allocation3 + $0x89] sm:$0xff]
        %v2112 = vld [vmem:[#allocation3 + $0x91] sm:$0xff]
        %v2113 = vld [vmem:[#allocation3 + $0x99] sm:$0xff]
        %v2114 = vld [vmem:[#allocation3 + $0xa1] sm:$0xff]
        %v2115 = vld [vmem:[#allocation3 + $0xa9] sm:$0xff]
        %v2116 = vld [vmem:[#allocation3 + $0xb1] sm:$0xff]
        %v2117 = vld [vmem:[#allocation3 + $0xb9] sm:$0xff]
        %v2118 = vld [vmem:[#allocation3 + $0xc1] sm:$0xff]
        %v2119 = vld [vmem:[#allocation3 + $0xc9] sm:$0xff]
        %v2120 = vld [vmem:[#allocation3 + $0xd1] sm:$0xff]
        %v2121 = vld [vmem:[#allocation3 + $0xd9] sm:$0xff]
        %v2122 = vpack.c.bf16 %v2095, %v2094
        %v2123 = vpack.c.bf16 %v2097, %v2096
        %v2124 = vpack.c.bf16 %v2099, %v2098
        %v2125 = vpack.c.bf16 %v2101, %v2100
        %v2126 = vpack.c.bf16 %v2103, %v2102
        %v2127 = vpack.c.bf16 %v2105, %v2104
        %v2128 = vpack.c.bf16 %v2107, %v2106
        %v2129 = vpack.c.bf16 %v2109, %v2108
        %v2130 = vpack.c.bf16 %v2111, %v2110
        %v2131 = vpack.c.bf16 %v2113, %v2112
        %v2132 = vpack.c.bf16 %v2115, %v2114
        %v2133 = vpack.c.bf16 %v2117, %v2116
        %v2134 = vpack.c.bf16 %v2119, %v2118
        %v2135 = vpack.c.bf16 %v2121, %v2120
        %2136 = vst [vmem:[#allocation4 + $0x8] sm:$0xff] %v2122
        %2137 = vst [vmem:[#allocation4 + $0x50] sm:$0xff] %v2123
        %2138 = vst [vmem:[#allocation4 + $0x98] sm:$0xff] %v2124
        %2139 = vst [vmem:[#allocation4 + $0xe0] sm:$0xff] %v2125
        %2140 = vst [vmem:[#allocation4 + $0x128] sm:$0xff] %v2126
        %2141 = vst [vmem:[#allocation4 + $0x170] sm:$0xff] %v2127
        %2142 = vst [vmem:[#allocation4 + $0x1b8] sm:$0xff] %v2128
        %2143 = vst [vmem:[#allocation4 + $0x200] sm:$0xff] %v2129
        %2144 = vst [vmem:[#allocation4 + $0x248] sm:$0xff] %v2130
        %2145 = vst [vmem:[#allocation4 + $0x290] sm:$0xff] %v2131
        %2146 = vst [vmem:[#allocation4 + $0x2d8] sm:$0xff] %v2132
        %2147 = vst [vmem:[#allocation4 + $0x320] sm:$0xff] %v2133
        %2148 = vst [vmem:[#allocation4 + $0x368] sm:$0xff] %v2134
        %2149 = vst [vmem:[#allocation4 + $0x3b0] sm:$0xff] %v2135
        %v2150 = vld [vmem:[#allocation3 + $0x2] sm:$0xff]
        %v2151 = vld [vmem:[#allocation3 + $0xa] sm:$0xff]
        %v2152 = vld [vmem:[#allocation3 + $0x12] sm:$0xff]
        %v2153 = vld [vmem:[#allocation3 + $0x1a] sm:$0xff]
        %v2154 = vld [vmem:[#allocation3 + $0x22] sm:$0xff]
        %v2155 = vld [vmem:[#allocation3 + $0x2a] sm:$0xff]
        %v2156 = vld [vmem:[#allocation3 + $0x32] sm:$0xff]
        %v2157 = vld [vmem:[#allocation3 + $0x3a] sm:$0xff]
        %v2158 = vld [vmem:[#allocation3 + $0x42] sm:$0xff]
        %v2159 = vld [vmem:[#allocation3 + $0x4a] sm:$0xff]
        %v2160 = vld [vmem:[#allocation3 + $0x52] sm:$0xff]
        %v2161 = vld [vmem:[#allocation3 + $0x5a] sm:$0xff]
        %v2162 = vld [vmem:[#allocation3 + $0x62] sm:$0xff]
        %v2163 = vld [vmem:[#allocation3 + $0x6a] sm:$0xff]
        %v2164 = vld [vmem:[#allocation3 + $0x72] sm:$0xff]
        %v2165 = vld [vmem:[#allocation3 + $0x7a] sm:$0xff]
        %v2166 = vld [vmem:[#allocation3 + $0x82] sm:$0xff]
        %v2167 = vld [vmem:[#allocation3 + $0x8a] sm:$0xff]
        %v2168 = vld [vmem:[#allocation3 + $0x92] sm:$0xff]
        %v2169 = vld [vmem:[#allocation3 + $0x9a] sm:$0xff]
        %v2170 = vld [vmem:[#allocation3 + $0xa2] sm:$0xff]
        %v2171 = vld [vmem:[#allocation3 + $0xaa] sm:$0xff]
        %v2172 = vld [vmem:[#allocation3 + $0xb2] sm:$0xff]
        %v2173 = vld [vmem:[#allocation3 + $0xba] sm:$0xff]
        %v2174 = vld [vmem:[#allocation3 + $0xc2] sm:$0xff]
        %v2175 = vld [vmem:[#allocation3 + $0xca] sm:$0xff]
        %v2176 = vld [vmem:[#allocation3 + $0xd2] sm:$0xff]
        %v2177 = vld [vmem:[#allocation3 + $0xda] sm:$0xff]
        %v2178 = vpack.c.bf16 %v2151, %v2150
        %v2179 = vpack.c.bf16 %v2153, %v2152
        %v2180 = vpack.c.bf16 %v2155, %v2154
        %v2181 = vpack.c.bf16 %v2157, %v2156
        %v2182 = vpack.c.bf16 %v2159, %v2158
        %v2183 = vpack.c.bf16 %v2161, %v2160
        %v2184 = vpack.c.bf16 %v2163, %v2162
        %v2185 = vpack.c.bf16 %v2165, %v2164
        %v2186 = vpack.c.bf16 %v2167, %v2166
        %v2187 = vpack.c.bf16 %v2169, %v2168
        %v2188 = vpack.c.bf16 %v2171, %v2170
        %v2189 = vpack.c.bf16 %v2173, %v2172
        %v2190 = vpack.c.bf16 %v2175, %v2174
        %v2191 = vpack.c.bf16 %v2177, %v2176
        %2192 = vst [vmem:[#allocation4 + $0x10] sm:$0xff] %v2178
        %2193 = vst [vmem:[#allocation4 + $0x58] sm:$0xff] %v2179
        %2194 = vst [vmem:[#allocation4 + $0xa0] sm:$0xff] %v2180
        %2195 = vst [vmem:[#allocation4 + $0xe8] sm:$0xff] %v2181
        %2196 = vst [vmem:[#allocation4 + $0x130] sm:$0xff] %v2182
        %2197 = vst [vmem:[#allocation4 + $0x178] sm:$0xff] %v2183
        %2198 = vst [vmem:[#allocation4 + $0x1c0] sm:$0xff] %v2184
        %2199 = vst [vmem:[#allocation4 + $0x208] sm:$0xff] %v2185
        %2200 = vst [vmem:[#allocation4 + $0x250] sm:$0xff] %v2186
        %2201 = vst [vmem:[#allocation4 + $0x298] sm:$0xff] %v2187
        %2202 = vst [vmem:[#allocation4 + $0x2e0] sm:$0xff] %v2188
        %2203 = vst [vmem:[#allocation4 + $0x328] sm:$0xff] %v2189
        %2204 = vst [vmem:[#allocation4 + $0x370] sm:$0xff] %v2190
        %2205 = vst [vmem:[#allocation4 + $0x3b8] sm:$0xff] %v2191
        %v2206 = vld [vmem:[#allocation3 + $0x10] sm:$0xff]
        %v2207 = vld [vmem:[#allocation3 + $0x18] sm:$0xff]
        %v2208 = vld [vmem:[#allocation3 + $0x20] sm:$0xff]
        %v2209 = vld [vmem:[#allocation3 + $0x28] sm:$0xff]
        %v2210 = vld [vmem:[#allocation3 + $0x30] sm:$0xff]
        %v2211 = vld [vmem:[#allocation3 + $0x38] sm:$0xff]
        %v2212 = vld [vmem:[#allocation3 + $0x40] sm:$0xff]
        %v2213 = vld [vmem:[#allocation3 + $0x48] sm:$0xff]
        %v2214 = vld [vmem:[#allocation3 + $0x50] sm:$0xff]
        %v2215 = vld [vmem:[#allocation3 + $0x58] sm:$0xff]
        %v2216 = vld [vmem:[#allocation3 + $0x60] sm:$0xff]
        %v2217 = vld [vmem:[#allocation3 + $0x68] sm:$0xff]
        %v2218 = vld [vmem:[#allocation3 + $0x70] sm:$0xff]
        %v2219 = vld [vmem:[#allocation3 + $0x78] sm:$0xff]
        %v2220 = vld [vmem:[#allocation3 + $0x80] sm:$0xff]
        %v2221 = vld [vmem:[#allocation3 + $0x88] sm:$0xff]
        %v2222 = vld [vmem:[#allocation3 + $0x90] sm:$0xff]
        %v2223 = vld [vmem:[#allocation3 + $0x98] sm:$0xff]
        %v2224 = vld [vmem:[#allocation3 + $0xa0] sm:$0xff]
        %v2225 = vld [vmem:[#allocation3 + $0xa8] sm:$0xff]
        %v2226 = vld [vmem:[#allocation3 + $0xb0] sm:$0xff]
        %v2227 = vld [vmem:[#allocation3 + $0xb8] sm:$0xff]
        %v2228 = vld [vmem:[#allocation3 + $0xc0] sm:$0xff]
        %v2229 = vld [vmem:[#allocation3 + $0xc8] sm:$0xff]
        %v2230 = vld [vmem:[#allocation3 + $0xd0] sm:$0xff]
        %v2231 = vld [vmem:[#allocation3 + $0xd8] sm:$0xff]
        %v2232 = vld [vmem:[#allocation3 + $0xe0] sm:$0xff]
        %v2233 = vld [vmem:[#allocation3 + $0xe8] sm:$0xff]
        %v2234 = vpack.c.bf16 %v2207, %v2206
        %v2235 = vpack.c.bf16 %v2209, %v2208
        %v2236 = vpack.c.bf16 %v2211, %v2210
        %v2237 = vpack.c.bf16 %v2213, %v2212
        %v2238 = vpack.c.bf16 %v2215, %v2214
        %v2239 = vpack.c.bf16 %v2217, %v2216
        %v2240 = vpack.c.bf16 %v2219, %v2218
        %v2241 = vpack.c.bf16 %v2221, %v2220
        %v2242 = vpack.c.bf16 %v2223, %v2222
        %v2243 = vpack.c.bf16 %v2225, %v2224
        %v2244 = vpack.c.bf16 %v2227, %v2226
        %v2245 = vpack.c.bf16 %v2229, %v2228
        %v2246 = vpack.c.bf16 %v2231, %v2230
        %v2247 = vpack.c.bf16 %v2233, %v2232
        %2248 = vst [vmem:[#allocation4 + $0x18] sm:$0xff] %v2234
        %2249 = vst [vmem:[#allocation4 + $0x60] sm:$0xff] %v2235
        %2250 = vst [vmem:[#allocation4 + $0xa8] sm:$0xff] %v2236
        %2251 = vst [vmem:[#allocation4 + $0xf0] sm:$0xff] %v2237
        %2252 = vst [vmem:[#allocation4 + $0x138] sm:$0xff] %v2238
        %2253 = vst [vmem:[#allocation4 + $0x180] sm:$0xff] %v2239
        %2254 = vst [vmem:[#allocation4 + $0x1c8] sm:$0xff] %v2240
        %2255 = vst [vmem:[#allocation4 + $0x210] sm:$0xff] %v2241
        %2256 = vst [vmem:[#allocation4 + $0x258] sm:$0xff] %v2242
        %2257 = vst [vmem:[#allocation4 + $0x2a0] sm:$0xff] %v2243
        %2258 = vst [vmem:[#allocation4 + $0x2e8] sm:$0xff] %v2244
        %2259 = vst [vmem:[#allocation4 + $0x330] sm:$0xff] %v2245
        %2260 = vst [vmem:[#allocation4 + $0x378] sm:$0xff] %v2246
        %2261 = vst [vmem:[#allocation4 + $0x3c0] sm:$0xff] %v2247
        %v2262 = vld [vmem:[#allocation3 + $0x11] sm:$0xff]
        %v2263 = vld [vmem:[#allocation3 + $0x19] sm:$0xff]
        %v2264 = vld [vmem:[#allocation3 + $0x21] sm:$0xff]
        %v2265 = vld [vmem:[#allocation3 + $0x29] sm:$0xff]
        %v2266 = vld [vmem:[#allocation3 + $0x31] sm:$0xff]
        %v2267 = vld [vmem:[#allocation3 + $0x39] sm:$0xff]
        %v2268 = vld [vmem:[#allocation3 + $0x41] sm:$0xff]
        %v2269 = vld [vmem:[#allocation3 + $0x49] sm:$0xff]
        %v2270 = vld [vmem:[#allocation3 + $0x51] sm:$0xff]
        %v2271 = vld [vmem:[#allocation3 + $0x59] sm:$0xff]
        %v2272 = vld [vmem:[#allocation3 + $0x61] sm:$0xff]
        %v2273 = vld [vmem:[#allocation3 + $0x69] sm:$0xff]
        %v2274 = vld [vmem:[#allocation3 + $0x71] sm:$0xff]
        %v2275 = vld [vmem:[#allocation3 + $0x79] sm:$0xff]
        %v2276 = vld [vmem:[#allocation3 + $0x81] sm:$0xff]
        %v2277 = vld [vmem:[#allocation3 + $0x89] sm:$0xff]
        %v2278 = vld [vmem:[#allocation3 + $0x91] sm:$0xff]
        %v2279 = vld [vmem:[#allocation3 + $0x99] sm:$0xff]
        %v2280 = vld [vmem:[#allocation3 + $0xa1] sm:$0xff]
        %v2281 = vld [vmem:[#allocation3 + $0xa9] sm:$0xff]
        %v2282 = vld [vmem:[#allocation3 + $0xb1] sm:$0xff]
        %v2283 = vld [vmem:[#allocation3 + $0xb9] sm:$0xff]
        %v2284 = vld [vmem:[#allocation3 + $0xc1] sm:$0xff]
        %v2285 = vld [vmem:[#allocation3 + $0xc9] sm:$0xff]
        %v2286 = vld [vmem:[#allocation3 + $0xd1] sm:$0xff]
        %v2287 = vld [vmem:[#allocation3 + $0xd9] sm:$0xff]
        %v2288 = vld [vmem:[#allocation3 + $0xe1] sm:$0xff]
        %v2289 = vld [vmem:[#allocation3 + $0xe9] sm:$0xff]
        %v2290 = vpack.c.bf16 %v2263, %v2262
        %v2291 = vpack.c.bf16 %v2265, %v2264
        %v2292 = vpack.c.bf16 %v2267, %v2266
        %v2293 = vpack.c.bf16 %v2269, %v2268
        %v2294 = vpack.c.bf16 %v2271, %v2270
        %v2295 = vpack.c.bf16 %v2273, %v2272
        %v2296 = vpack.c.bf16 %v2275, %v2274
        %v2297 = vpack.c.bf16 %v2277, %v2276
        %v2298 = vpack.c.bf16 %v2279, %v2278
        %v2299 = vpack.c.bf16 %v2281, %v2280
        %v2300 = vpack.c.bf16 %v2283, %v2282
        %v2301 = vpack.c.bf16 %v2285, %v2284
        %v2302 = vpack.c.bf16 %v2287, %v2286
        %v2303 = vpack.c.bf16 %v2289, %v2288
        %2304 = vst [vmem:[#allocation4 + $0x20] sm:$0xff] %v2290
        %2305 = vst [vmem:[#allocation4 + $0x68] sm:$0xff] %v2291
        %2306 = vst [vmem:[#allocation4 + $0xb0] sm:$0xff] %v2292
        %2307 = vst [vmem:[#allocation4 + $0xf8] sm:$0xff] %v2293
        %2308 = vst [vmem:[#allocation4 + $0x140] sm:$0xff] %v2294
        %2309 = vst [vmem:[#allocation4 + $0x188] sm:$0xff] %v2295
        %2310 = vst [vmem:[#allocation4 + $0x1d0] sm:$0xff] %v2296
        %2311 = vst [vmem:[#allocation4 + $0x218] sm:$0xff] %v2297
        %2312 = vst [vmem:[#allocation4 + $0x260] sm:$0xff] %v2298
        %2313 = vst [vmem:[#allocation4 + $0x2a8] sm:$0xff] %v2299
        %2314 = vst [vmem:[#allocation4 + $0x2f0] sm:$0xff] %v2300
        %2315 = vst [vmem:[#allocation4 + $0x338] sm:$0xff] %v2301
        %2316 = vst [vmem:[#allocation4 + $0x380] sm:$0xff] %v2302
        %2317 = vst [vmem:[#allocation4 + $0x3c8] sm:$0xff] %v2303
        %v2318 = vld [vmem:[#allocation3 + $0x12] sm:$0xff]
        %v2319 = vld [vmem:[#allocation3 + $0x1a] sm:$0xff]
        %v2320 = vld [vmem:[#allocation3 + $0x22] sm:$0xff]
        %v2321 = vld [vmem:[#allocation3 + $0x2a] sm:$0xff]
        %v2322 = vld [vmem:[#allocation3 + $0x32] sm:$0xff]
        %v2323 = vld [vmem:[#allocation3 + $0x3a] sm:$0xff]
        %v2324 = vld [vmem:[#allocation3 + $0x42] sm:$0xff]
        %v2325 = vld [vmem:[#allocation3 + $0x4a] sm:$0xff]
        %v2326 = vld [vmem:[#allocation3 + $0x52] sm:$0xff]
        %v2327 = vld [vmem:[#allocation3 + $0x5a] sm:$0xff]
        %v2328 = vld [vmem:[#allocation3 + $0x62] sm:$0xff]
        %v2329 = vld [vmem:[#allocation3 + $0x6a] sm:$0xff]
        %v2330 = vld [vmem:[#allocation3 + $0x72] sm:$0xff]
        %v2331 = vld [vmem:[#allocation3 + $0x7a] sm:$0xff]
        %v2332 = vld [vmem:[#allocation3 + $0x82] sm:$0xff]
        %v2333 = vld [vmem:[#allocation3 + $0x8a] sm:$0xff]
        %v2334 = vld [vmem:[#allocation3 + $0x92] sm:$0xff]
        %v2335 = vld [vmem:[#allocation3 + $0x9a] sm:$0xff]
        %v2336 = vld [vmem:[#allocation3 + $0xa2] sm:$0xff]
        %v2337 = vld [vmem:[#allocation3 + $0xaa] sm:$0xff]
        %v2338 = vld [vmem:[#allocation3 + $0xb2] sm:$0xff]
        %v2339 = vld [vmem:[#allocation3 + $0xba] sm:$0xff]
        %v2340 = vld [vmem:[#allocation3 + $0xc2] sm:$0xff]
        %v2341 = vld [vmem:[#allocation3 + $0xca] sm:$0xff]
        %v2342 = vld [vmem:[#allocation3 + $0xd2] sm:$0xff]
        %v2343 = vld [vmem:[#allocation3 + $0xda] sm:$0xff]
        %v2344 = vld [vmem:[#allocation3 + $0xe2] sm:$0xff]
        %v2345 = vld [vmem:[#allocation3 + $0xea] sm:$0xff]
        %v2346 = vpack.c.bf16 %v2319, %v2318
        %v2347 = vpack.c.bf16 %v2321, %v2320
        %v2348 = vpack.c.bf16 %v2323, %v2322
        %v2349 = vpack.c.bf16 %v2325, %v2324
        %v2350 = vpack.c.bf16 %v2327, %v2326
        %v2351 = vpack.c.bf16 %v2329, %v2328
        %v2352 = vpack.c.bf16 %v2331, %v2330
        %v2353 = vpack.c.bf16 %v2333, %v2332
        %v2354 = vpack.c.bf16 %v2335, %v2334
        %v2355 = vpack.c.bf16 %v2337, %v2336
        %v2356 = vpack.c.bf16 %v2339, %v2338
        %v2357 = vpack.c.bf16 %v2341, %v2340
        %v2358 = vpack.c.bf16 %v2343, %v2342
        %v2359 = vpack.c.bf16 %v2345, %v2344
        %2360 = vst [vmem:[#allocation4 + $0x28] sm:$0xff] %v2346
        %2361 = vst [vmem:[#allocation4 + $0x70] sm:$0xff] %v2347
        %2362 = vst [vmem:[#allocation4 + $0xb8] sm:$0xff] %v2348
        %2363 = vst [vmem:[#allocation4 + $0x100] sm:$0xff] %v2349
        %2364 = vst [vmem:[#allocation4 + $0x148] sm:$0xff] %v2350
        %2365 = vst [vmem:[#allocation4 + $0x190] sm:$0xff] %v2351
        %2366 = vst [vmem:[#allocation4 + $0x1d8] sm:$0xff] %v2352
        %2367 = vst [vmem:[#allocation4 + $0x220] sm:$0xff] %v2353
        %2368 = vst [vmem:[#allocation4 + $0x268] sm:$0xff] %v2354
        %2369 = vst [vmem:[#allocation4 + $0x2b0] sm:$0xff] %v2355
        %2370 = vst [vmem:[#allocation4 + $0x2f8] sm:$0xff] %v2356
        %2371 = vst [vmem:[#allocation4 + $0x340] sm:$0xff] %v2357
        %2372 = vst [vmem:[#allocation4 + $0x388] sm:$0xff] %v2358
        %2373 = vst [vmem:[#allocation4 + $0x3d0] sm:$0xff] %v2359
        %v2374 = vld [vmem:[#allocation3 + $0x20] sm:$0xff]
        %v2375 = vld [vmem:[#allocation3 + $0x28] sm:$0xff]
        %v2376 = vld [vmem:[#allocation3 + $0x30] sm:$0xff]
        %v2377 = vld [vmem:[#allocation3 + $0x38] sm:$0xff]
        %v2378 = vld [vmem:[#allocation3 + $0x40] sm:$0xff]
        %v2379 = vld [vmem:[#allocation3 + $0x48] sm:$0xff]
        %v2380 = vld [vmem:[#allocation3 + $0x50] sm:$0xff]
        %v2381 = vld [vmem:[#allocation3 + $0x58] sm:$0xff]
        %v2382 = vld [vmem:[#allocation3 + $0x60] sm:$0xff]
        %v2383 = vld [vmem:[#allocation3 + $0x68] sm:$0xff]
        %v2384 = vld [vmem:[#allocation3 + $0x70] sm:$0xff]
        %v2385 = vld [vmem:[#allocation3 + $0x78] sm:$0xff]
        %v2386 = vld [vmem:[#allocation3 + $0x80] sm:$0xff]
        %v2387 = vld [vmem:[#allocation3 + $0x88] sm:$0xff]
        %v2388 = vld [vmem:[#allocation3 + $0x90] sm:$0xff]
        %v2389 = vld [vmem:[#allocation3 + $0x98] sm:$0xff]
        %v2390 = vld [vmem:[#allocation3 + $0xa0] sm:$0xff]
        %v2391 = vld [vmem:[#allocation3 + $0xa8] sm:$0xff]
        %v2392 = vld [vmem:[#allocation3 + $0xb0] sm:$0xff]
        %v2393 = vld [vmem:[#allocation3 + $0xb8] sm:$0xff]
        %v2394 = vld [vmem:[#allocation3 + $0xc0] sm:$0xff]
        %v2395 = vld [vmem:[#allocation3 + $0xc8] sm:$0xff]
        %v2396 = vld [vmem:[#allocation3 + $0xd0] sm:$0xff]
        %v2397 = vld [vmem:[#allocation3 + $0xd8] sm:$0xff]
        %v2398 = vld [vmem:[#allocation3 + $0xe0] sm:$0xff]
        %v2399 = vld [vmem:[#allocation3 + $0xe8] sm:$0xff]
        %v2400 = vld [vmem:[#allocation3 + $0xf0] sm:$0xff]
        %v2401 = vld [vmem:[#allocation3 + $0xf8] sm:$0xff]
        %v2402 = vpack.c.bf16 %v2375, %v2374
        %v2403 = vpack.c.bf16 %v2377, %v2376
        %v2404 = vpack.c.bf16 %v2379, %v2378
        %v2405 = vpack.c.bf16 %v2381, %v2380
        %v2406 = vpack.c.bf16 %v2383, %v2382
        %v2407 = vpack.c.bf16 %v2385, %v2384
        %v2408 = vpack.c.bf16 %v2387, %v2386
        %v2409 = vpack.c.bf16 %v2389, %v2388
        %v2410 = vpack.c.bf16 %v2391, %v2390
        %v2411 = vpack.c.bf16 %v2393, %v2392
        %v2412 = vpack.c.bf16 %v2395, %v2394
        %v2413 = vpack.c.bf16 %v2397, %v2396
        %v2414 = vpack.c.bf16 %v2399, %v2398
        %v2415 = vpack.c.bf16 %v2401, %v2400
        %2416 = vst [vmem:[#allocation4 + $0x30] sm:$0xff] %v2402
        %2417 = vst [vmem:[#allocation4 + $0x78] sm:$0xff] %v2403
        %2418 = vst [vmem:[#allocation4 + $0xc0] sm:$0xff] %v2404
        %2419 = vst [vmem:[#allocation4 + $0x108] sm:$0xff] %v2405
        %2420 = vst [vmem:[#allocation4 + $0x150] sm:$0xff] %v2406
        %2421 = vst [vmem:[#allocation4 + $0x198] sm:$0xff] %v2407
        %2422 = vst [vmem:[#allocation4 + $0x1e0] sm:$0xff] %v2408
        %2423 = vst [vmem:[#allocation4 + $0x228] sm:$0xff] %v2409
        %2424 = vst [vmem:[#allocation4 + $0x270] sm:$0xff] %v2410
        %2425 = vst [vmem:[#allocation4 + $0x2b8] sm:$0xff] %v2411
        %2426 = vst [vmem:[#allocation4 + $0x300] sm:$0xff] %v2412
        %2427 = vst [vmem:[#allocation4 + $0x348] sm:$0xff] %v2413
        %2428 = vst [vmem:[#allocation4 + $0x390] sm:$0xff] %v2414
        %2429 = vst [vmem:[#allocation4 + $0x3d8] sm:$0xff] %v2415
        %v2430 = vld [vmem:[#allocation3 + $0x21] sm:$0xff]
        %v2431 = vld [vmem:[#allocation3 + $0x29] sm:$0xff]
        %v2432 = vld [vmem:[#allocation3 + $0x31] sm:$0xff]
        %v2433 = vld [vmem:[#allocation3 + $0x39] sm:$0xff]
        %v2434 = vld [vmem:[#allocation3 + $0x41] sm:$0xff]
        %v2435 = vld [vmem:[#allocation3 + $0x49] sm:$0xff]
        %v2436 = vld [vmem:[#allocation3 + $0x51] sm:$0xff]
        %v2437 = vld [vmem:[#allocation3 + $0x59] sm:$0xff]
        %v2438 = vld [vmem:[#allocation3 + $0x61] sm:$0xff]
        %v2439 = vld [vmem:[#allocation3 + $0x69] sm:$0xff]
        %v2440 = vld [vmem:[#allocation3 + $0x71] sm:$0xff]
        %v2441 = vld [vmem:[#allocation3 + $0x79] sm:$0xff]
        %v2442 = vld [vmem:[#allocation3 + $0x81] sm:$0xff]
        %v2443 = vld [vmem:[#allocation3 + $0x89] sm:$0xff]
        %v2444 = vld [vmem:[#allocation3 + $0x91] sm:$0xff]
        %v2445 = vld [vmem:[#allocation3 + $0x99] sm:$0xff]
        %v2446 = vld [vmem:[#allocation3 + $0xa1] sm:$0xff]
        %v2447 = vld [vmem:[#allocation3 + $0xa9] sm:$0xff]
        %v2448 = vld [vmem:[#allocation3 + $0xb1] sm:$0xff]
        %v2449 = vld [vmem:[#allocation3 + $0xb9] sm:$0xff]
        %v2450 = vld [vmem:[#allocation3 + $0xc1] sm:$0xff]
        %v2451 = vld [vmem:[#allocation3 + $0xc9] sm:$0xff]
        %v2452 = vld [vmem:[#allocation3 + $0xd1] sm:$0xff]
        %v2453 = vld [vmem:[#allocation3 + $0xd9] sm:$0xff]
        %v2454 = vld [vmem:[#allocation3 + $0xe1] sm:$0xff]
        %v2455 = vld [vmem:[#allocation3 + $0xe9] sm:$0xff]
        %v2456 = vld [vmem:[#allocation3 + $0xf1] sm:$0xff]
        %v2457 = vld [vmem:[#allocation3 + $0xf9] sm:$0xff]
        %v2458 = vpack.c.bf16 %v2431, %v2430
        %v2459 = vpack.c.bf16 %v2433, %v2432
        %v2460 = vpack.c.bf16 %v2435, %v2434
        %v2461 = vpack.c.bf16 %v2437, %v2436
        %v2462 = vpack.c.bf16 %v2439, %v2438
        %v2463 = vpack.c.bf16 %v2441, %v2440
        %v2464 = vpack.c.bf16 %v2443, %v2442
        %v2465 = vpack.c.bf16 %v2445, %v2444
        %v2466 = vpack.c.bf16 %v2447, %v2446
        %v2467 = vpack.c.bf16 %v2449, %v2448
        %v2468 = vpack.c.bf16 %v2451, %v2450
        %v2469 = vpack.c.bf16 %v2453, %v2452
        %v2470 = vpack.c.bf16 %v2455, %v2454
        %v2471 = vpack.c.bf16 %v2457, %v2456
        %2472 = vst [vmem:[#allocation4 + $0x38] sm:$0xff] %v2458
        %2473 = vst [vmem:[#allocation4 + $0x80] sm:$0xff] %v2459
        %2474 = vst [vmem:[#allocation4 + $0xc8] sm:$0xff] %v2460
        %2475 = vst [vmem:[#allocation4 + $0x110] sm:$0xff] %v2461
        %2476 = vst [vmem:[#allocation4 + $0x158] sm:$0xff] %v2462
        %2477 = vst [vmem:[#allocation4 + $0x1a0] sm:$0xff] %v2463
        %2478 = vst [vmem:[#allocation4 + $0x1e8] sm:$0xff] %v2464
        %2479 = vst [vmem:[#allocation4 + $0x230] sm:$0xff] %v2465
        %2480 = vst [vmem:[#allocation4 + $0x278] sm:$0xff] %v2466
        %2481 = vst [vmem:[#allocation4 + $0x2c0] sm:$0xff] %v2467
        %2482 = vst [vmem:[#allocation4 + $0x308] sm:$0xff] %v2468
        %2483 = vst [vmem:[#allocation4 + $0x350] sm:$0xff] %v2469
        %2484 = vst [vmem:[#allocation4 + $0x398] sm:$0xff] %v2470
        %2485 = vst [vmem:[#allocation4 + $0x3e0] sm:$0xff] %v2471
        %v2486 = vld [vmem:[#allocation3 + $0x22] sm:$0xff]
        %v2487 = vld [vmem:[#allocation3 + $0x2a] sm:$0xff]
        %v2488 = vld [vmem:[#allocation3 + $0x32] sm:$0xff]
        %v2489 = vld [vmem:[#allocation3 + $0x3a] sm:$0xff]
        %v2490 = vld [vmem:[#allocation3 + $0x42] sm:$0xff]
        %v2491 = vld [vmem:[#allocation3 + $0x4a] sm:$0xff]
        %v2492 = vld [vmem:[#allocation3 + $0x52] sm:$0xff]
        %v2493 = vld [vmem:[#allocation3 + $0x5a] sm:$0xff]
        %v2494 = vld [vmem:[#allocation3 + $0x62] sm:$0xff]
        %v2495 = vld [vmem:[#allocation3 + $0x6a] sm:$0xff]
        %v2496 = vld [vmem:[#allocation3 + $0x72] sm:$0xff]
        %v2497 = vld [vmem:[#allocation3 + $0x7a] sm:$0xff]
        %v2498 = vld [vmem:[#allocation3 + $0x82] sm:$0xff]
        %v2499 = vld [vmem:[#allocation3 + $0x8a] sm:$0xff]
        %v2500 = vld [vmem:[#allocation3 + $0x92] sm:$0xff]
        %v2501 = vld [vmem:[#allocation3 + $0x9a] sm:$0xff]
        %v2502 = vld [vmem:[#allocation3 + $0xa2] sm:$0xff]
        %v2503 = vld [vmem:[#allocation3 + $0xaa] sm:$0xff]
        %v2504 = vld [vmem:[#allocation3 + $0xb2] sm:$0xff]
        %v2505 = vld [vmem:[#allocation3 + $0xba] sm:$0xff]
        %v2506 = vld [vmem:[#allocation3 + $0xc2] sm:$0xff]
        %v2507 = vld [vmem:[#allocation3 + $0xca] sm:$0xff]
        %v2508 = vld [vmem:[#allocation3 + $0xd2] sm:$0xff]
        %v2509 = vld [vmem:[#allocation3 + $0xda] sm:$0xff]
        %v2510 = vld [vmem:[#allocation3 + $0xe2] sm:$0xff]
        %v2511 = vld [vmem:[#allocation3 + $0xea] sm:$0xff]
        %v2512 = vld [vmem:[#allocation3 + $0xf2] sm:$0xff]
        %v2513 = vld [vmem:[#allocation3 + $0xfa] sm:$0xff]
        %v2514 = vpack.c.bf16 %v2487, %v2486
        %v2515 = vpack.c.bf16 %v2489, %v2488
        %v2516 = vpack.c.bf16 %v2491, %v2490
        %v2517 = vpack.c.bf16 %v2493, %v2492
        %v2518 = vpack.c.bf16 %v2495, %v2494
        %v2519 = vpack.c.bf16 %v2497, %v2496
        %v2520 = vpack.c.bf16 %v2499, %v2498
        %v2521 = vpack.c.bf16 %v2501, %v2500
        %v2522 = vpack.c.bf16 %v2503, %v2502
        %v2523 = vpack.c.bf16 %v2505, %v2504
        %v2524 = vpack.c.bf16 %v2507, %v2506
        %v2525 = vpack.c.bf16 %v2509, %v2508
        %v2526 = vpack.c.bf16 %v2511, %v2510
        %v2527 = vpack.c.bf16 %v2513, %v2512
        %2528 = vst [vmem:[#allocation4 + $0x40] sm:$0xff] %v2514
        %2529 = vst [vmem:[#allocation4 + $0x88] sm:$0xff] %v2515
        %2530 = vst [vmem:[#allocation4 + $0xd0] sm:$0xff] %v2516
        %2531 = vst [vmem:[#allocation4 + $0x118] sm:$0xff] %v2517
        %2532 = vst [vmem:[#allocation4 + $0x160] sm:$0xff] %v2518
        %2533 = vst [vmem:[#allocation4 + $0x1a8] sm:$0xff] %v2519
        %2534 = vst [vmem:[#allocation4 + $0x1f0] sm:$0xff] %v2520
        %2535 = vst [vmem:[#allocation4 + $0x238] sm:$0xff] %v2521
        %2536 = vst [vmem:[#allocation4 + $0x280] sm:$0xff] %v2522
        %2537 = vst [vmem:[#allocation4 + $0x2c8] sm:$0xff] %v2523
        %2538 = vst [vmem:[#allocation4 + $0x310] sm:$0xff] %v2524
        %2539 = vst [vmem:[#allocation4 + $0x358] sm:$0xff] %v2525
        %2540 = vst [vmem:[#allocation4 + $0x3a0] sm:$0xff] %v2526
        %2541 = vst [vmem:[#allocation4 + $0x3e8] sm:$0xff] %v2527
        %v2542 = vld [vmem:[#allocation4] sm:$0xff]
        %v2543 = vld [vmem:[#allocation4 + $0x8] sm:$0xff]
        %v2544 = vld [vmem:[#allocation4 + $0x10] sm:$0xff]
        %v2545 = vld [vmem:[#allocation4 + $0x18] sm:$0xff]
        %v2546 = vld [vmem:[#allocation4 + $0x20] sm:$0xff]
        %v2547 = vld [vmem:[#allocation4 + $0x28] sm:$0xff]
        %v2548 = vld [vmem:[#allocation4 + $0x30] sm:$0xff]
        %v2549 = vld [vmem:[#allocation4 + $0x38] sm:$0xff]
        %v2550 = vld [vmem:[#allocation4 + $0x40] sm:$0xff]
        %v2551 = vld [vmem:[#allocation4 + $0x48] sm:$0xff]
        %v2552 = vld [vmem:[#allocation4 + $0x50] sm:$0xff]
        %v2553 = vld [vmem:[#allocation4 + $0x58] sm:$0xff]
        %v2554 = vld [vmem:[#allocation4 + $0x60] sm:$0xff]
        %v2555 = vld [vmem:[#allocation4 + $0x68] sm:$0xff]
        %v2556 = vld [vmem:[#allocation4 + $0x70] sm:$0xff]
        %v2557 = vld [vmem:[#allocation4 + $0x78] sm:$0xff]
        %v2558 = vld [vmem:[#allocation4 + $0x80] sm:$0xff]
        %v2559 = vld [vmem:[#allocation4 + $0x88] sm:$0xff]
        %v2560 = vld [vmem:[#allocation4 + $0x90] sm:$0xff]
        %v2561 = vld [vmem:[#allocation4 + $0x98] sm:$0xff]
        %v2562 = vld [vmem:[#allocation4 + $0xa0] sm:$0xff]
        %v2563 = vld [vmem:[#allocation4 + $0xa8] sm:$0xff]
        %v2564 = vld [vmem:[#allocation4 + $0xb0] sm:$0xff]
        %v2565 = vld [vmem:[#allocation4 + $0xb8] sm:$0xff]
        %v2566 = vld [vmem:[#allocation4 + $0xc0] sm:$0xff]
        %v2567 = vld [vmem:[#allocation4 + $0xc8] sm:$0xff]
        %v2568 = vld [vmem:[#allocation4 + $0xd0] sm:$0xff]
        %v2569 = vld [vmem:[#allocation4 + $0xd8] sm:$0xff]
        %v2570 = vld [vmem:[#allocation4 + $0xe0] sm:$0xff]
        %v2571 = vld [vmem:[#allocation4 + $0xe8] sm:$0xff]
        %v2572 = vld [vmem:[#allocation4 + $0xf0] sm:$0xff]
        %v2573 = vld [vmem:[#allocation4 + $0xf8] sm:$0xff]
        %v2574 = vld [vmem:[#allocation4 + $0x100] sm:$0xff]
        %v2575 = vld [vmem:[#allocation4 + $0x108] sm:$0xff]
        %v2576 = vld [vmem:[#allocation4 + $0x110] sm:$0xff]
        %v2577 = vld [vmem:[#allocation4 + $0x118] sm:$0xff]
        %v2578 = vld [vmem:[#allocation4 + $0x120] sm:$0xff]
        %v2579 = vld [vmem:[#allocation4 + $0x128] sm:$0xff]
        %v2580 = vld [vmem:[#allocation4 + $0x130] sm:$0xff]
        %v2581 = vld [vmem:[#allocation4 + $0x138] sm:$0xff]
        %v2582 = vld [vmem:[#allocation4 + $0x140] sm:$0xff]
        %v2583 = vld [vmem:[#allocation4 + $0x148] sm:$0xff]
        %v2584 = vld [vmem:[#allocation4 + $0x150] sm:$0xff]
        %v2585 = vld [vmem:[#allocation4 + $0x158] sm:$0xff]
        %v2586 = vld [vmem:[#allocation4 + $0x160] sm:$0xff]
        %v2587 = vld [vmem:[#allocation4 + $0x168] sm:$0xff]
        %v2588 = vld [vmem:[#allocation4 + $0x170] sm:$0xff]
        %v2589 = vld [vmem:[#allocation4 + $0x178] sm:$0xff]
        %v2590 = vld [vmem:[#allocation4 + $0x180] sm:$0xff]
        %v2591 = vld [vmem:[#allocation4 + $0x188] sm:$0xff]
        %v2592 = vld [vmem:[#allocation4 + $0x190] sm:$0xff]
        %v2593 = vld [vmem:[#allocation4 + $0x198] sm:$0xff]
        %v2594 = vld [vmem:[#allocation4 + $0x1a0] sm:$0xff]
        %v2595 = vld [vmem:[#allocation4 + $0x1a8] sm:$0xff]
        %v2596 = vld [vmem:[#allocation4 + $0x1b0] sm:$0xff]
        %v2597 = vld [vmem:[#allocation4 + $0x1b8] sm:$0xff]
        %v2598 = vld [vmem:[#allocation4 + $0x1c0] sm:$0xff]
        %v2599 = vld [vmem:[#allocation4 + $0x1c8] sm:$0xff]
        %v2600 = vld [vmem:[#allocation4 + $0x1d0] sm:$0xff]
        %v2601 = vld [vmem:[#allocation4 + $0x1d8] sm:$0xff]
        %v2602 = vld [vmem:[#allocation4 + $0x1e0] sm:$0xff]
        %v2603 = vld [vmem:[#allocation4 + $0x1e8] sm:$0xff]
        %v2604 = vld [vmem:[#allocation4 + $0x1f0] sm:$0xff]
        %v2605 = vld [vmem:[#allocation4 + $0x1f8] sm:$0xff]
        %v2606 = vld [vmem:[#allocation4 + $0x200] sm:$0xff]
        %v2607 = vld [vmem:[#allocation4 + $0x208] sm:$0xff]
        %v2608 = vld [vmem:[#allocation4 + $0x210] sm:$0xff]
        %v2609 = vld [vmem:[#allocation4 + $0x218] sm:$0xff]
        %v2610 = vld [vmem:[#allocation4 + $0x220] sm:$0xff]
        %v2611 = vld [vmem:[#allocation4 + $0x228] sm:$0xff]
        %v2612 = vld [vmem:[#allocation4 + $0x230] sm:$0xff]
        %v2613 = vld [vmem:[#allocation4 + $0x238] sm:$0xff]
        %v2614 = vld [vmem:[#allocation4 + $0x240] sm:$0xff]
        %v2615 = vld [vmem:[#allocation4 + $0x248] sm:$0xff]
        %v2616 = vld [vmem:[#allocation4 + $0x250] sm:$0xff]
        %v2617 = vld [vmem:[#allocation4 + $0x258] sm:$0xff]
        %v2618 = vld [vmem:[#allocation4 + $0x260] sm:$0xff]
        %v2619 = vld [vmem:[#allocation4 + $0x268] sm:$0xff]
        %v2620 = vld [vmem:[#allocation4 + $0x270] sm:$0xff]
        %v2621 = vld [vmem:[#allocation4 + $0x278] sm:$0xff]
        %v2622 = vld [vmem:[#allocation4 + $0x280] sm:$0xff]
        %v2623 = vld [vmem:[#allocation4 + $0x288] sm:$0xff]
        %v2624 = vld [vmem:[#allocation4 + $0x290] sm:$0xff]
        %v2625 = vld [vmem:[#allocation4 + $0x298] sm:$0xff]
        %v2626 = vld [vmem:[#allocation4 + $0x2a0] sm:$0xff]
        %v2627 = vld [vmem:[#allocation4 + $0x2a8] sm:$0xff]
        %v2628 = vld [vmem:[#allocation4 + $0x2b0] sm:$0xff]
        %v2629 = vld [vmem:[#allocation4 + $0x2b8] sm:$0xff]
        %v2630 = vld [vmem:[#allocation4 + $0x2c0] sm:$0xff]
        %v2631 = vld [vmem:[#allocation4 + $0x2c8] sm:$0xff]
        %v2632 = vld [vmem:[#allocation4 + $0x2d0] sm:$0xff]
        %v2633 = vld [vmem:[#allocation4 + $0x2d8] sm:$0xff]
        %v2634 = vld [vmem:[#allocation4 + $0x2e0] sm:$0xff]
        %v2635 = vld [vmem:[#allocation4 + $0x2e8] sm:$0xff]
        %v2636 = vld [vmem:[#allocation4 + $0x2f0] sm:$0xff]
        %v2637 = vld [vmem:[#allocation4 + $0x2f8] sm:$0xff]
        %v2638 = vld [vmem:[#allocation4 + $0x300] sm:$0xff]
        %v2639 = vld [vmem:[#allocation4 + $0x308] sm:$0xff]
        %v2640 = vld [vmem:[#allocation4 + $0x310] sm:$0xff]
        %v2641 = vld [vmem:[#allocation4 + $0x318] sm:$0xff]
        %v2642 = vld [vmem:[#allocation4 + $0x320] sm:$0xff]
        %v2643 = vld [vmem:[#allocation4 + $0x328] sm:$0xff]
        %v2644 = vld [vmem:[#allocation4 + $0x330] sm:$0xff]
        %v2645 = vld [vmem:[#allocation4 + $0x338] sm:$0xff]
        %v2646 = vld [vmem:[#allocation4 + $0x340] sm:$0xff]
        %v2647 = vld [vmem:[#allocation4 + $0x348] sm:$0xff]
        %v2648 = vld [vmem:[#allocation4 + $0x350] sm:$0xff]
        %v2649 = vld [vmem:[#allocation4 + $0x358] sm:$0xff]
        %v2650 = vld [vmem:[#allocation4 + $0x360] sm:$0xff]
        %v2651 = vld [vmem:[#allocation4 + $0x368] sm:$0xff]
        %v2652 = vld [vmem:[#allocation4 + $0x370] sm:$0xff]
        %v2653 = vld [vmem:[#allocation4 + $0x378] sm:$0xff]
        %v2654 = vld [vmem:[#allocation4 + $0x380] sm:$0xff]
        %v2655 = vld [vmem:[#allocation4 + $0x388] sm:$0xff]
        %v2656 = vld [vmem:[#allocation4 + $0x390] sm:$0xff]
        %v2657 = vld [vmem:[#allocation4 + $0x398] sm:$0xff]
        %v2658 = vld [vmem:[#allocation4 + $0x3a0] sm:$0xff]
        %v2659 = vld [vmem:[#allocation4 + $0x3a8] sm:$0xff]
        %v2660 = vld [vmem:[#allocation4 + $0x3b0] sm:$0xff]
        %v2661 = vld [vmem:[#allocation4 + $0x3b8] sm:$0xff]
        %v2662 = vld [vmem:[#allocation4 + $0x3c0] sm:$0xff]
        %v2663 = vld [vmem:[#allocation4 + $0x3c8] sm:$0xff]
        %v2664 = vld [vmem:[#allocation4 + $0x3d0] sm:$0xff]
        %v2665 = vld [vmem:[#allocation4 + $0x3d8] sm:$0xff]
        %v2666 = vld [vmem:[#allocation4 + $0x3e0] sm:$0xff]
        %v2667 = vld [vmem:[#allocation4 + $0x3e8] sm:$0xff]
        %v2668 = vld [vmem:[#allocation8] sm:$0xf]
        %v2669 = vld [vmem:[#allocation8 + $0x4] sm:$0xf]
        %v2670 = vld [vmem:[#allocation8 + $0x8] sm:$0xf]
        %v2671 = vld [vmem:[#allocation8 + $0xc] sm:$0xf]
        %v2672 = vld [vmem:[#allocation8 + $0x10] sm:$0xf]
        %v2673 = vld [vmem:[#allocation8 + $0x14] sm:$0xf]
        %v2674 = vld [vmem:[#allocation8 + $0x18] sm:$0xf]
        %v2675 = vld [vmem:[#allocation8 + $0x1c] sm:$0xf]
        %v2676 = vld [vmem:[#allocation8 + $0x20] sm:$0xf]
        %v2677 = vld [vmem:[#allocation8 + $0x24] sm:$0xf]
        %v2678 = vld [vmem:[#allocation8 + $0x28] sm:$0xf]
        %v2679 = vld [vmem:[#allocation8 + $0x2c] sm:$0xf]
        %v2680 = vld [vmem:[#allocation8 + $0x30] sm:$0xf]
        %v2681 = vld [vmem:[#allocation8 + $0x34] sm:$0xf]
        %v2682 = vld [vmem:[#allocation8 + $0x38] sm:$0xf]
        %v2683 = vld [vmem:[#allocation8 + $0x3c] sm:$0xf]
        %v2684 = vld [vmem:[#allocation8 + $0x40] sm:$0xf]
        %v2685 = vld [vmem:[#allocation8 + $0x44] sm:$0xf]
        %v2686 = vld [vmem:[#allocation8 + $0x48] sm:$0xf]
        %v2687 = vld [vmem:[#allocation8 + $0x4c] sm:$0xf]
        %v2688 = vld [vmem:[#allocation8 + $0x50] sm:$0xf]
        %v2689 = vld [vmem:[#allocation8 + $0x54] sm:$0xf]
        %v2690 = vld [vmem:[#allocation8 + $0x58] sm:$0xf]
        %v2691 = vld [vmem:[#allocation8 + $0x5c] sm:$0xf]
        %v2692 = vld [vmem:[#allocation8 + $0x60] sm:$0xf]
        %v2693 = vld [vmem:[#allocation8 + $0x64] sm:$0xf]
        %v2694 = vld [vmem:[#allocation8 + $0x68] sm:$0xf]
        %v2695 = vld [vmem:[#allocation8 + $0x6c] sm:$0xf]
        %v2696 = vld [vmem:[#allocation8 + $0x70] sm:$0xf]
        %v2697 = vld [vmem:[#allocation8 + $0x74] sm:$0xf]
        %v2698 = vld [vmem:[#allocation8 + $0x78] sm:$0xf]
        %v2699 = vld [vmem:[#allocation8 + $0x7c] sm:$0xf]
        %v2700 = vld [vmem:[#allocation8 + $0x80] sm:$0xf]
        %v2701 = vld [vmem:[#allocation8 + $0x84] sm:$0xf]
        %v2702 = vld [vmem:[#allocation8 + $0x88] sm:$0xf]
        %v2703 = vld [vmem:[#allocation8 + $0x8c] sm:$0xf]
        %v2704 = vld [vmem:[#allocation8 + $0x90] sm:$0xf]
        %v2705 = vld [vmem:[#allocation8 + $0x94] sm:$0xf]
        %v2706 = vld [vmem:[#allocation8 + $0x98] sm:$0xf]
        %v2707 = vld [vmem:[#allocation8 + $0x9c] sm:$0xf]
        %v2708 = vld [vmem:[#allocation8 + $0xa0] sm:$0xf]
        %v2709 = vld [vmem:[#allocation8 + $0xa4] sm:$0xf]
        %v2710 = vld [vmem:[#allocation8 + $0xa8] sm:$0xf]
        %v2711 = vld [vmem:[#allocation8 + $0xac] sm:$0xf]
        %v2712 = vld [vmem:[#allocation8 + $0xb0] sm:$0xf]
        %v2713 = vld [vmem:[#allocation8 + $0xb4] sm:$0xf]
        %v2714 = vld [vmem:[#allocation8 + $0xb8] sm:$0xf]
        %v2715 = vld [vmem:[#allocation8 + $0xbc] sm:$0xf]
        %v2716 = vld [vmem:[#allocation8 + $0xc0] sm:$0xf]
        %v2717 = vld [vmem:[#allocation8 + $0xc4] sm:$0xf]
        %v2718 = vld [vmem:[#allocation8 + $0xc8] sm:$0xf]
        %v2719 = vld [vmem:[#allocation8 + $0xcc] sm:$0xf]
        %v2720 = vld [vmem:[#allocation8 + $0xd0] sm:$0xf]
        %v2721 = vld [vmem:[#allocation8 + $0xd4] sm:$0xf]
        %v2722 = vld [vmem:[#allocation8 + $0xd8] sm:$0xf]
        %v2723 = vld [vmem:[#allocation8 + $0xdc] sm:$0xf]
        %v2724 = vld [vmem:[#allocation8 + $0xe0] sm:$0xf]
        %v2725 = vld [vmem:[#allocation8 + $0xe4] sm:$0xf]
        %v2726 = vld [vmem:[#allocation8 + $0xe8] sm:$0xf]
        %v2727 = vld [vmem:[#allocation8 + $0xec] sm:$0xf]
        %v2728 = vld [vmem:[#allocation8 + $0xf0] sm:$0xf]
        %v2729 = vld [vmem:[#allocation8 + $0xf4] sm:$0xf]
        %v2730 = vld [vmem:[#allocation8 + $0xf8] sm:$0xf]
        %v2731 = vld [vmem:[#allocation8 + $0xfc] sm:$0xf]
        %v2732 = vld [vmem:[#allocation8 + $0x100] sm:$0xf]
        %v2733 = vld [vmem:[#allocation8 + $0x104] sm:$0xf]
        %v2734 = vld [vmem:[#allocation8 + $0x108] sm:$0xf]
        %v2735 = vld [vmem:[#allocation8 + $0x10c] sm:$0xf]
        %v2736 = vld [vmem:[#allocation8 + $0x110] sm:$0xf]
        %v2737 = vld [vmem:[#allocation8 + $0x114] sm:$0xf]
        %v2738 = vld [vmem:[#allocation8 + $0x118] sm:$0xf]
        %v2739 = vld [vmem:[#allocation8 + $0x11c] sm:$0xf]
        %v2740 = vld [vmem:[#allocation8 + $0x120] sm:$0xf]
        %v2741 = vld [vmem:[#allocation8 + $0x124] sm:$0xf]
        %v2742 = vld [vmem:[#allocation8 + $0x128] sm:$0xf]
        %v2743 = vld [vmem:[#allocation8 + $0x12c] sm:$0xf]
        %v2744 = vld [vmem:[#allocation8 + $0x130] sm:$0xf]
        %v2745 = vld [vmem:[#allocation8 + $0x134] sm:$0xf]
        %v2746 = vld [vmem:[#allocation8 + $0x138] sm:$0xf]
        %v2747 = vld [vmem:[#allocation8 + $0x13c] sm:$0xf]
        %v2748 = vld [vmem:[#allocation8 + $0x140] sm:$0xf]
        %v2749 = vld [vmem:[#allocation8 + $0x144] sm:$0xf]
        %v2750 = vld [vmem:[#allocation8 + $0x148] sm:$0xf]
        %v2751 = vld [vmem:[#allocation8 + $0x14c] sm:$0xf]
        %v2752 = vld [vmem:[#allocation8 + $0x150] sm:$0xf]
        %v2753 = vld [vmem:[#allocation8 + $0x154] sm:$0xf]
        %v2754 = vld [vmem:[#allocation8 + $0x158] sm:$0xf]
        %v2755 = vld [vmem:[#allocation8 + $0x15c] sm:$0xf]
        %v2756 = vld [vmem:[#allocation8 + $0x160] sm:$0xf]
        %v2757 = vld [vmem:[#allocation8 + $0x164] sm:$0xf]
        %v2758 = vld [vmem:[#allocation8 + $0x168] sm:$0xf]
        %v2759 = vld [vmem:[#allocation8 + $0x16c] sm:$0xf]
        %v2760 = vld [vmem:[#allocation8 + $0x170] sm:$0xf]
        %v2761 = vld [vmem:[#allocation8 + $0x174] sm:$0xf]
        %v2762 = vld [vmem:[#allocation8 + $0x178] sm:$0xf]
        %v2763 = vld [vmem:[#allocation8 + $0x17c] sm:$0xf]
        %v2764 = vld [vmem:[#allocation8 + $0x180] sm:$0xf]
        %v2765 = vld [vmem:[#allocation8 + $0x184] sm:$0xf]
        %v2766 = vld [vmem:[#allocation8 + $0x188] sm:$0xf]
        %v2767 = vld [vmem:[#allocation8 + $0x18c] sm:$0xf]
        %v2768 = vld [vmem:[#allocation8 + $0x190] sm:$0xf]
        %v2769 = vld [vmem:[#allocation8 + $0x194] sm:$0xf]
        %v2770 = vld [vmem:[#allocation8 + $0x198] sm:$0xf]
        %v2771 = vld [vmem:[#allocation8 + $0x19c] sm:$0xf]
        %v2772 = vld [vmem:[#allocation8 + $0x1a0] sm:$0xf]
        %v2773 = vld [vmem:[#allocation8 + $0x1a4] sm:$0xf]
        %v2774 = vld [vmem:[#allocation8 + $0x1a8] sm:$0xf]
        %v2775 = vld [vmem:[#allocation8 + $0x1ac] sm:$0xf]
        %v2776 = vld [vmem:[#allocation8 + $0x1b0] sm:$0xf]
        %v2777 = vld [vmem:[#allocation8 + $0x1b4] sm:$0xf]
        %v2778 = vld [vmem:[#allocation8 + $0x1b8] sm:$0xf]
        %v2779 = vld [vmem:[#allocation8 + $0x1bc] sm:$0xf]
        %v2780 = vld [vmem:[#allocation8 + $0x1c0] sm:$0xf]
        %v2781 = vld [vmem:[#allocation8 + $0x1c4] sm:$0xf]
        %v2782 = vld [vmem:[#allocation8 + $0x1c8] sm:$0xf]
        %v2783 = vld [vmem:[#allocation8 + $0x1cc] sm:$0xf]
        %v2784 = vld [vmem:[#allocation8 + $0x1d0] sm:$0xf]
        %v2785 = vld [vmem:[#allocation8 + $0x1d4] sm:$0xf]
        %v2786 = vld [vmem:[#allocation8 + $0x1d8] sm:$0xf]
        %v2787 = vld [vmem:[#allocation8 + $0x1dc] sm:$0xf]
        %v2788 = vld [vmem:[#allocation8 + $0x1e0] sm:$0xf]
        %v2789 = vld [vmem:[#allocation8 + $0x1e4] sm:$0xf]
        %v2790 = vld [vmem:[#allocation8 + $0x1e8] sm:$0xf]
        %v2791 = vld [vmem:[#allocation8 + $0x1ec] sm:$0xf]
        %v2792 = vld [vmem:[#allocation8 + $0x1f0] sm:$0xf]
        %v2793 = vld [vmem:[#allocation8 + $0x1f4] sm:$0xf]
        %v2794 = vld [vmem:[#allocation8 + $0x1f8] sm:$0xf]
        %v2795 = vld [vmem:[#allocation8 + $0x1fc] sm:$0xf]
        %v2796 = vld [vmem:[#allocation8 + $0x200] sm:$0xf]
        %v2797 = vld [vmem:[#allocation8 + $0x204] sm:$0xf]
        %v2798 = vld [vmem:[#allocation8 + $0x208] sm:$0xf]
        %v2799 = vld [vmem:[#allocation8 + $0x20c] sm:$0xf]
        %v2800 = vld [vmem:[#allocation8 + $0x210] sm:$0xf]
        %v2801 = vld [vmem:[#allocation8 + $0x214] sm:$0xf]
        %v2802 = vld [vmem:[#allocation8 + $0x218] sm:$0xf]
        %v2803 = vld [vmem:[#allocation8 + $0x21c] sm:$0xf]
        %v2804 = vld [vmem:[#allocation8 + $0x220] sm:$0xf]
        %v2805 = vld [vmem:[#allocation8 + $0x224] sm:$0xf]
        %v2806 = vld [vmem:[#allocation8 + $0x228] sm:$0xf]
        %v2807 = vld [vmem:[#allocation8 + $0x22c] sm:$0xf]
        %v2808 = vld [vmem:[#allocation8 + $0x230] sm:$0xf]
        %v2809 = vld [vmem:[#allocation8 + $0x234] sm:$0xf]
        %v2810 = vld [vmem:[#allocation8 + $0x238] sm:$0xf]
        %v2811 = vld [vmem:[#allocation8 + $0x23c] sm:$0xf]
        %v2812 = vld [vmem:[%s4] sm:$0x1]
        %v2814 = vlaneseq
        %v2815 = vshrl.u32 %v2814, 7
        %v2816 = vsub.s32 0, %v2815
        %v2817 = vrot.slane %v2812, %v2816
        %v2963 = vunpack.c.l.b16 %v2668
        %v2964 = vunpack.c.l.b16 %v2669
        %v2965 = vunpack.c.l.b16 %v2670
        %v2966 = vunpack.c.l.b16 %v2671
        %v2967 = vunpack.c.l.b16 %v2672
        %v2968 = vunpack.c.l.b16 %v2673
        %v2969 = vunpack.c.l.b16 %v2674
        %v2970 = vunpack.c.l.b16 %v2675
        %v2971 = vunpack.c.l.b16 %v2676
        %v2972 = vunpack.c.l.b16 %v2677
        %v2973 = vunpack.c.l.b16 %v2678
        %v2974 = vunpack.c.l.b16 %v2679
        %v2975 = vunpack.c.l.b16 %v2680
        %v2976 = vunpack.c.l.b16 %v2681
        %v2977 = vunpack.c.l.b16 %v2682
        %v2978 = vunpack.c.l.b16 %v2683
        %v2979 = vunpack.c.l.b16 %v2684
        %v2980 = vunpack.c.l.b16 %v2685
        %v2981 = vunpack.c.l.b16 %v2686
        %v2982 = vunpack.c.l.b16 %v2687
        %v2983 = vunpack.c.l.b16 %v2688
        %v2984 = vunpack.c.l.b16 %v2689
        %v2985 = vunpack.c.l.b16 %v2690
        %v2986 = vunpack.c.l.b16 %v2691
        %v2987 = vunpack.c.l.b16 %v2692
        %v2988 = vunpack.c.l.b16 %v2693
        %v2989 = vunpack.c.l.b16 %v2694
        %v2990 = vunpack.c.l.b16 %v2695
        %v2991 = vunpack.c.l.b16 %v2696
        %v2992 = vunpack.c.l.b16 %v2697
        %v2993 = vunpack.c.l.b16 %v2698
        %v2994 = vunpack.c.l.b16 %v2699
        %v2995 = vunpack.c.l.b16 %v2700
        %v2996 = vunpack.c.l.b16 %v2701
        %v2997 = vunpack.c.l.b16 %v2702
        %v2998 = vunpack.c.l.b16 %v2703
        %v2999 = vunpack.c.l.b16 %v2704
        %v3000 = vunpack.c.l.b16 %v2705
        %v3001 = vunpack.c.l.b16 %v2706
        %v3002 = vunpack.c.l.b16 %v2707
        %v3003 = vunpack.c.l.b16 %v2708
        %v3004 = vunpack.c.l.b16 %v2709
        %v3005 = vunpack.c.l.b16 %v2710
        %v3006 = vunpack.c.l.b16 %v2711
        %v3007 = vunpack.c.l.b16 %v2712
        %v3008 = vunpack.c.l.b16 %v2713
        %v3009 = vunpack.c.l.b16 %v2714
        %v3010 = vunpack.c.l.b16 %v2715
        %v3011 = vunpack.c.l.b16 %v2716
        %v3012 = vunpack.c.l.b16 %v2717
        %v3013 = vunpack.c.l.b16 %v2718
        %v3014 = vunpack.c.l.b16 %v2719
        %v3015 = vunpack.c.l.b16 %v2720
        %v3016 = vunpack.c.l.b16 %v2721
        %v3017 = vunpack.c.l.b16 %v2722
        %v3018 = vunpack.c.l.b16 %v2723
        %v3019 = vunpack.c.l.b16 %v2724
        %v3020 = vunpack.c.l.b16 %v2725
        %v3021 = vunpack.c.l.b16 %v2726
        %v3022 = vunpack.c.l.b16 %v2727
        %v3023 = vunpack.c.l.b16 %v2728
        %v3024 = vunpack.c.l.b16 %v2729
        %v3025 = vunpack.c.l.b16 %v2730
        %v3026 = vunpack.c.l.b16 %v2731
        %v3027 = vunpack.c.l.b16 %v2732
        %v3028 = vunpack.c.l.b16 %v2733
        %v3029 = vunpack.c.l.b16 %v2734
        %v3030 = vunpack.c.l.b16 %v2735
        %v3031 = vunpack.c.l.b16 %v2736
        %v3032 = vunpack.c.l.b16 %v2737
        %v3033 = vunpack.c.l.b16 %v2738
        %v3034 = vunpack.c.l.b16 %v2739
        %v3035 = vunpack.c.l.b16 %v2740
        %v3036 = vunpack.c.l.b16 %v2741
        %v3037 = vunpack.c.l.b16 %v2742
        %v3038 = vunpack.c.l.b16 %v2743
        %v3039 = vunpack.c.l.b16 %v2744
        %v3040 = vunpack.c.l.b16 %v2745
        %v3041 = vunpack.c.l.b16 %v2746
        %v3042 = vunpack.c.l.b16 %v2747
        %v3043 = vunpack.c.l.b16 %v2748
        %v3044 = vunpack.c.l.b16 %v2749
        %v3045 = vunpack.c.l.b16 %v2750
        %v3046 = vunpack.c.l.b16 %v2751
        %v3047 = vunpack.c.l.b16 %v2752
        %v3048 = vunpack.c.l.b16 %v2753
        %v3049 = vunpack.c.l.b16 %v2754
        %v3050 = vunpack.c.l.b16 %v2755
        %v3051 = vunpack.c.l.b16 %v2756
        %v3052 = vunpack.c.l.b16 %v2757
        %v3053 = vunpack.c.l.b16 %v2758
        %v3054 = vunpack.c.l.b16 %v2759
        %v3055 = vunpack.c.l.b16 %v2760
        %v3056 = vunpack.c.l.b16 %v2761
        %v3057 = vunpack.c.l.b16 %v2762
        %v3058 = vunpack.c.l.b16 %v2763
        %v3059 = vunpack.c.l.b16 %v2764
        %v3060 = vunpack.c.l.b16 %v2765
        %v3061 = vunpack.c.l.b16 %v2766
        %v3062 = vunpack.c.l.b16 %v2767
        %v3063 = vunpack.c.l.b16 %v2768
        %v3064 = vunpack.c.l.b16 %v2769
        %v3065 = vunpack.c.l.b16 %v2770
        %v3066 = vunpack.c.l.b16 %v2771
        %v3067 = vunpack.c.l.b16 %v2772
        %v3068 = vunpack.c.l.b16 %v2773
        %v3069 = vunpack.c.l.b16 %v2774
        %v3070 = vunpack.c.l.b16 %v2775
        %v3071 = vunpack.c.l.b16 %v2776
        %v3072 = vunpack.c.l.b16 %v2777
        %v3073 = vunpack.c.l.b16 %v2778
        %v3074 = vunpack.c.l.b16 %v2779
        %v3075 = vunpack.c.l.b16 %v2780
        %v3076 = vunpack.c.l.b16 %v2781
        %v3077 = vunpack.c.l.b16 %v2782
        %v3078 = vunpack.c.l.b16 %v2783
        %v3079 = vunpack.c.l.b16 %v2784
        %v3080 = vunpack.c.l.b16 %v2785
        %v3081 = vunpack.c.l.b16 %v2786
        %v3082 = vunpack.c.l.b16 %v2787
        %v3083 = vunpack.c.l.b16 %v2788
        %v3084 = vunpack.c.l.b16 %v2789
        %v3085 = vunpack.c.l.b16 %v2790
        %v3086 = vunpack.c.l.b16 %v2791
        %v3087 = vunpack.c.l.b16 %v2792
        %v3088 = vunpack.c.l.b16 %v2793
        %v3089 = vunpack.c.l.b16 %v2794
        %v3090 = vunpack.c.l.b16 %v2795
        %v3091 = vunpack.c.l.b16 %v2796
        %v3092 = vunpack.c.l.b16 %v2797
        %v3093 = vunpack.c.l.b16 %v2798
        %v3094 = vunpack.c.l.b16 %v2799
        %v3095 = vunpack.c.l.b16 %v2800
        %v3096 = vunpack.c.l.b16 %v2801
        %v3097 = vunpack.c.l.b16 %v2802
        %v3098 = vunpack.c.l.b16 %v2803
        %v3099 = vunpack.c.l.b16 %v2804
        %v3100 = vunpack.c.l.b16 %v2805
        %v3101 = vunpack.c.l.b16 %v2806
        %v3102 = vunpack.c.l.b16 %v2807
        %v3103 = vunpack.c.l.b16 %v2808
        %v3104 = vunpack.c.l.b16 %v2809
        %v3105 = vunpack.c.l.b16 %v2810
        %v3106 = vunpack.c.l.b16 %v2811
        %v3107 = vpack.c.b16 %v2964, %v2963
        %v3108 = vpack.c.b16 %v2966, %v2965
        %v3109 = vpack.c.b16 %v2968, %v2967
        %v3110 = vpack.c.b16 %v2970, %v2969
        %v3111 = vpack.c.b16 %v2972, %v2971
        %v3112 = vpack.c.b16 %v2974, %v2973
        %v3113 = vpack.c.b16 %v2976, %v2975
        %v3114 = vpack.c.b16 %v2978, %v2977
        %v3115 = vpack.c.b16 %v2980, %v2979
        %v3116 = vpack.c.b16 %v2982, %v2981
        %v3117 = vpack.c.b16 %v2984, %v2983
        %v3118 = vpack.c.b16 %v2986, %v2985
        %v3119 = vpack.c.b16 %v2988, %v2987
        %v3120 = vpack.c.b16 %v2990, %v2989
        %v3121 = vpack.c.b16 %v2992, %v2991
        %v3122 = vpack.c.b16 %v2994, %v2993
        %v3123 = vpack.c.b16 %v2996, %v2995
        %v3124 = vpack.c.b16 %v2998, %v2997
        %v3125 = vpack.c.b16 %v3000, %v2999
        %v3126 = vpack.c.b16 %v3002, %v3001
        %v3127 = vpack.c.b16 %v3004, %v3003
        %v3128 = vpack.c.b16 %v3006, %v3005
        %v3129 = vpack.c.b16 %v3008, %v3007
        %v3130 = vpack.c.b16 %v3010, %v3009
        %v3131 = vpack.c.b16 %v3012, %v3011
        %v3132 = vpack.c.b16 %v3014, %v3013
        %v3133 = vpack.c.b16 %v3016, %v3015
        %v3134 = vpack.c.b16 %v3018, %v3017
        %v3135 = vpack.c.b16 %v3020, %v3019
        %v3136 = vpack.c.b16 %v3022, %v3021
        %v3137 = vpack.c.b16 %v3024, %v3023
        %v3138 = vpack.c.b16 %v3026, %v3025
        %v3139 = vpack.c.b16 %v3028, %v3027
        %v3140 = vpack.c.b16 %v3030, %v3029
        %v3141 = vpack.c.b16 %v3032, %v3031
        %v3142 = vpack.c.b16 %v3034, %v3033
        %v3143 = vpack.c.b16 %v3036, %v3035
        %v3144 = vpack.c.b16 %v3038, %v3037
        %v3145 = vpack.c.b16 %v3040, %v3039
        %v3146 = vpack.c.b16 %v3042, %v3041
        %v3147 = vpack.c.b16 %v3044, %v3043
        %v3148 = vpack.c.b16 %v3046, %v3045
        %v3149 = vpack.c.b16 %v3048, %v3047
        %v3150 = vpack.c.b16 %v3050, %v3049
        %v3151 = vpack.c.b16 %v3052, %v3051
        %v3152 = vpack.c.b16 %v3054, %v3053
        %v3153 = vpack.c.b16 %v3056, %v3055
        %v3154 = vpack.c.b16 %v3058, %v3057
        %v3155 = vpack.c.b16 %v3060, %v3059
        %v3156 = vpack.c.b16 %v3062, %v3061
        %v3157 = vpack.c.b16 %v3064, %v3063
        %v3158 = vpack.c.b16 %v3066, %v3065
        %v3159 = vpack.c.b16 %v3068, %v3067
        %v3160 = vpack.c.b16 %v3070, %v3069
        %v3161 = vpack.c.b16 %v3072, %v3071
        %v3162 = vpack.c.b16 %v3074, %v3073
        %v3163 = vpack.c.b16 %v3076, %v3075
        %v3164 = vpack.c.b16 %v3078, %v3077
        %v3165 = vpack.c.b16 %v3080, %v3079
        %v3166 = vpack.c.b16 %v3082, %v3081
        %v3167 = vpack.c.b16 %v3084, %v3083
        %v3168 = vpack.c.b16 %v3086, %v3085
        %v3169 = vpack.c.b16 %v3088, %v3087
        %v3170 = vpack.c.b16 %v3090, %v3089
        %v3171 = vpack.c.b16 %v3092, %v3091
        %v3172 = vpack.c.b16 %v3094, %v3093
        %v3173 = vpack.c.b16 %v3096, %v3095
        %v3174 = vpack.c.b16 %v3098, %v3097
        %v3175 = vpack.c.b16 %v3100, %v3099
        %v3176 = vpack.c.b16 %v3102, %v3101
        %v3177 = vpack.c.b16 %v3104, %v3103
        %v3178 = vpack.c.b16 %v3106, %v3105
        %3251 = vmatprep.subr.bf16.mxu0 0
        %3252 = vmatpush1.bf16.msra.mxu0 %v3107
        %3253 = vmatprep.subr.bf16.mxu0 0
        %3254 = vmatpush1.bf16.msra.mxu0 %v3108
        %3255 = vmatprep.subr.bf16.mxu0 0
        %3256 = vmatpush1.bf16.msra.mxu0 %v3109
        %3257 = vmatprep.subr.bf16.mxu0 0
        %3258 = vmatpush1.bf16.msra.mxu0 %v3110
        %3259 = vmatprep.subr.bf16.mxu0 0
        %3260 = vmatpush1.bf16.msra.mxu0 %v3111
        %3261 = vmatprep.subr.bf16.mxu0 0
        %3262 = vmatpush1.bf16.msra.mxu0 %v3112
        %3263 = vmatprep.subr.bf16.mxu0 0
        %3264 = vmatpush1.bf16.msra.mxu0 %v3113
        %3265 = vmatprep.subr.bf16.mxu0 0
        %3266 = vmatpush1.bf16.msra.mxu0 %v3114
        %3267 = vmatprep.subr.bf16.mxu0 0
        %3268 = vmatpush1.bf16.msra.mxu0 %v3115
        %3269 = vmatprep.subr.bf16.mxu0 0
        %3270 = vmatpush1.bf16.msra.mxu0 %v3116
        %3271 = vmatprep.subr.bf16.mxu0 0
        %3272 = vmatpush1.bf16.msra.mxu0 %v3117
        %3273 = vmatprep.subr.bf16.mxu0 0
        %3274 = vmatpush1.bf16.msra.mxu0 %v3118
        %3275 = vmatprep.subr.bf16.mxu0 0
        %3276 = vmatpush1.bf16.msra.mxu0 %v3119
        %3277 = vmatprep.subr.bf16.mxu0 0
        %3278 = vmatpush1.bf16.msra.mxu0 %v3120
        %3279 = vmatprep.subr.bf16.mxu0 0
        %3280 = vmatpush1.bf16.msra.mxu0 %v3121
        %3281 = vmatprep.subr.bf16.mxu0 0
        %3282 = vmatpush1.bf16.msra.mxu0 %v3122
        %3283 = vmatprep.mubr.bf16.mxu0 %v2543
        %3284 = vmatmul.mubr.bf16.gmra.mrb[0].mxu0 %v2542
        %v3285 = vpop.f32.mrb[0].mxu0
        %v3286 = vadd.f32 %v2817, %v3285
        %v3287 = vpop.f32.mrb[0].mxu0
        %v3288 = vpop.f32.mrb[0].mxu0
        %v3289 = vadd.f32 %v2817, %v3288
        %v3290 = vpop.f32.mrb[0].mxu0
        %3291 = vmatprep.mubr.bf16.mxu0 %v2552
        %3292 = vmatmul.mubr.bf16.gmra.mrb[0].mxu0 %v2551
        %v3293 = vpop.f32.mrb[0].mxu0
        %v3294 = vadd.f32 %v2817, %v3293
        %v3295 = vpop.f32.mrb[0].mxu0
        %v3296 = vpop.f32.mrb[0].mxu0
        %v3297 = vadd.f32 %v2817, %v3296
        %v3298 = vpop.f32.mrb[0].mxu0
        %3299 = vmatprep.mubr.bf16.mxu0 %v2561
        %3300 = vmatmul.mubr.bf16.gmra.mrb[0].mxu0 %v2560
        %v3301 = vpop.f32.mrb[0].mxu0
        %v3302 = vadd.f32 %v2817, %v3301
        %v3303 = vpop.f32.mrb[0].mxu0
        %v3304 = vpop.f32.mrb[0].mxu0
        %v3305 = vadd.f32 %v2817, %v3304
        %v3306 = vpop.f32.mrb[0].mxu0
        %3307 = vmatprep.mubr.bf16.mxu0 %v2570
        %3308 = vmatmul.mubr.bf16.gmra.mrb[0].mxu0 %v2569
        %v3309 = vpop.f32.mrb[0].mxu0
        %v3310 = vadd.f32 %v2817, %v3309
        %v3311 = vpop.f32.mrb[0].mxu0
        %v3312 = vpop.f32.mrb[0].mxu0
        %v3313 = vadd.f32 %v2817, %v3312
        %v3314 = vpop.f32.mrb[0].mxu0
        %3315 = vmatprep.mubr.bf16.mxu0 %v2579
        %3316 = vmatmul.mubr.bf16.gmra.mrb[0].mxu0 %v2578
        %v3317 = vpop.f32.mrb[0].mxu0
        %v3318 = vadd.f32 %v2817, %v3317
        %v3319 = vpop.f32.mrb[0].mxu0
        %v3320 = vpop.f32.mrb[0].mxu0
        %v3321 = vadd.f32 %v2817, %v3320
        %v3322 = vpop.f32.mrb[0].mxu0
        %3323 = vmatprep.mubr.bf16.mxu0 %v2588
        %3324 = vmatmul.mubr.bf16.gmra.mrb[0].mxu0 %v2587
        %v3325 = vpop.f32.mrb[0].mxu0
        %v3326 = vadd.f32 %v2817, %v3325
        %v3327 = vpop.f32.mrb[0].mxu0
        %v3328 = vpop.f32.mrb[0].mxu0
        %v3329 = vadd.f32 %v2817, %v3328
        %v3330 = vpop.f32.mrb[0].mxu0
        %3331 = vmatprep.mubr.bf16.mxu0 %v2597
        %3332 = vmatmul.mubr.bf16.gmra.mrb[0].mxu0 %v2596
        %v3333 = vpop.f32.mrb[0].mxu0
        %v3334 = vadd.f32 %v2817, %v3333
        %v3335 = vpop.f32.mrb[0].mxu0
        %v3336 = vpop.f32.mrb[0].mxu0
        %v3337 = vadd.f32 %v2817, %v3336
        %v3338 = vpop.f32.mrb[0].mxu0
        %3339 = vmatprep.mubr.bf16.mxu0 %v2606
        %3340 = vmatmul.mubr.bf16.gmra.mrb[0].mxu0 %v2605
        %v3341 = vpop.f32.mrb[0].mxu0
        %v3342 = vadd.f32 %v2817, %v3341
        %v3343 = vpop.f32.mrb[0].mxu0
        %v3344 = vpop.f32.mrb[0].mxu0
        %v3345 = vadd.f32 %v2817, %v3344
        %v3346 = vpop.f32.mrb[0].mxu0
        %3347 = vmatprep.mubr.bf16.mxu0 %v2615
        %3348 = vmatmul.mubr.bf16.gmra.mrb[0].mxu0 %v2614
        %v3349 = vpop.f32.mrb[0].mxu0
        %v3350 = vadd.f32 %v2817, %v3349
        %v3351 = vpop.f32.mrb[0].mxu0
        %v3352 = vpop.f32.mrb[0].mxu0
        %v3353 = vadd.f32 %v2817, %v3352
        %v3354 = vpop.f32.mrb[0].mxu0
        %3355 = vmatprep.mubr.bf16.mxu0 %v2624
        %3356 = vmatmul.mubr.bf16.gmra.mrb[0].mxu0 %v2623
        %v3357 = vpop.f32.mrb[0].mxu0
        %v3358 = vadd.f32 %v2817, %v3357
        %v3359 = vpop.f32.mrb[0].mxu0
        %v3360 = vpop.f32.mrb[0].mxu0
        %v3361 = vadd.f32 %v2817, %v3360
        %v3362 = vpop.f32.mrb[0].mxu0
        %3363 = vmatprep.mubr.bf16.mxu0 %v2633
        %3364 = vmatmul.mubr.bf16.gmra.mrb[0].mxu0 %v2632
        %v3365 = vpop.f32.mrb[0].mxu0
        %v3366 = vadd.f32 %v2817, %v3365
        %v3367 = vpop.f32.mrb[0].mxu0
        %v3368 = vpop.f32.mrb[0].mxu0
        %v3369 = vadd.f32 %v2817, %v3368
        %v3370 = vpop.f32.mrb[0].mxu0
        %3371 = vmatprep.mubr.bf16.mxu0 %v2642
        %3372 = vmatmul.mubr.bf16.gmra.mrb[0].mxu0 %v2641
        %v3373 = vpop.f32.mrb[0].mxu0
        %v3374 = vadd.f32 %v2817, %v3373
        %v3375 = vpop.f32.mrb[0].mxu0
        %v3376 = vpop.f32.mrb[0].mxu0
        %v3377 = vadd.f32 %v2817, %v3376
        %v3378 = vpop.f32.mrb[0].mxu0
        %3379 = vmatprep.mubr.bf16.mxu0 %v2651
        %3380 = vmatmul.mubr.bf16.gmra.mrb[0].mxu0 %v2650
        %v3381 = vpop.f32.mrb[0].mxu0
        %v3382 = vadd.f32 %v2817, %v3381
        %v3383 = vpop.f32.mrb[0].mxu0
        %v3384 = vpop.f32.mrb[0].mxu0
        %v3385 = vadd.f32 %v2817, %v3384
        %v3386 = vpop.f32.mrb[0].mxu0
        %3387 = vmatprep.mubr.bf16.mxu0 %v2660
        %3388 = vmatmul.mubr.bf16.gmra.mrb[0].mxu0 %v2659
        %v3389 = vpop.f32.mrb[0].mxu0
        %v3390 = vadd.f32 %v2817, %v3389
        %v3391 = vpop.f32.mrb[0].mxu0
        %v3392 = vpop.f32.mrb[0].mxu0
        %v3393 = vadd.f32 %v2817, %v3392
        %v3394 = vpop.f32.mrb[0].mxu0
        %3395 = vdwg.mxu0
        %3396 = vmatprep.subr.bf16.mxu0 0
        %3397 = vmatpush1.bf16.msra.mxu0 %v3123
        %3398 = vmatprep.subr.bf16.mxu0 0
        %3399 = vmatpush1.bf16.msra.mxu0 %v3124
        %3400 = vmatprep.subr.bf16.mxu0 0
        %3401 = vmatpush1.bf16.msra.mxu0 %v3125
        %3402 = vmatprep.subr.bf16.mxu0 0
        %3403 = vmatpush1.bf16.msra.mxu0 %v3126
        %3404 = vmatprep.subr.bf16.mxu0 0
        %3405 = vmatpush1.bf16.msra.mxu0 %v3127
        %3406 = vmatprep.subr.bf16.mxu0 0
        %3407 = vmatpush1.bf16.msra.mxu0 %v3128
        %3408 = vmatprep.subr.bf16.mxu0 0
        %3409 = vmatpush1.bf16.msra.mxu0 %v3129
        %3410 = vmatprep.subr.bf16.mxu0 0
        %3411 = vmatpush1.bf16.msra.mxu0 %v3130
        %3412 = vmatprep.subr.bf16.mxu0 0
        %3413 = vmatpush1.bf16.msra.mxu0 %v3131
        %3414 = vmatprep.subr.bf16.mxu0 0
        %3415 = vmatpush1.bf16.msra.mxu0 %v3132
        %3416 = vmatprep.subr.bf16.mxu0 0
        %3417 = vmatpush1.bf16.msra.mxu0 %v3133
        %3418 = vmatprep.subr.bf16.mxu0 0
        %3419 = vmatpush1.bf16.msra.mxu0 %v3134
        %3420 = vmatprep.subr.bf16.mxu0 0
        %3421 = vmatpush1.bf16.msra.mxu0 %v3135
        %3422 = vmatprep.subr.bf16.mxu0 0
        %3423 = vmatpush1.bf16.msra.mxu0 %v3136
        %3424 = vmatprep.subr.bf16.mxu0 0
        %3425 = vmatpush1.bf16.msra.mxu0 %v3137
        %3426 = vmatprep.subr.bf16.mxu0 0
        %3427 = vmatpush1.bf16.msra.mxu0 %v3138
        %3428 = vmatprep.mubr.bf16.mxu0 %v2545
        %3429 = vmatmul.mubr.bf16.gmra.mrb[0].mxu0 %v2544
        %v3430 = vpop.f32.mrb[0].mxu0
        %v3431 = vadd.f32 %v3286, %v3430
        %v3432 = vpop.f32.mrb[0].mxu0
        %v3433 = vpop.f32.mrb[0].mxu0
        %v3434 = vadd.f32 %v3289, %v3433
        %v3435 = vpop.f32.mrb[0].mxu0
        %3436 = vmatprep.mubr.bf16.mxu0 %v2554
        %3437 = vmatmul.mubr.bf16.gmra.mrb[0].mxu0 %v2553
        %v3438 = vpop.f32.mrb[0].mxu0
        %v3439 = vadd.f32 %v3294, %v3438
        %v3440 = vpop.f32.mrb[0].mxu0
        %v3441 = vpop.f32.mrb[0].mxu0
        %v3442 = vadd.f32 %v3297, %v3441
        %v3443 = vpop.f32.mrb[0].mxu0
        %3444 = vmatprep.mubr.bf16.mxu0 %v2563
        %3445 = vmatmul.mubr.bf16.gmra.mrb[0].mxu0 %v2562
        %v3446 = vpop.f32.mrb[0].mxu0
        %v3447 = vadd.f32 %v3302, %v3446
        %v3448 = vpop.f32.mrb[0].mxu0
        %v3449 = vpop.f32.mrb[0].mxu0
        %v3450 = vadd.f32 %v3305, %v3449
        %v3451 = vpop.f32.mrb[0].mxu0
        %3452 = vmatprep.mubr.bf16.mxu0 %v2572
        %3453 = vmatmul.mubr.bf16.gmra.mrb[0].mxu0 %v2571
        %v3454 = vpop.f32.mrb[0].mxu0
        %v3455 = vadd.f32 %v3310, %v3454
        %v3456 = vpop.f32.mrb[0].mxu0
        %v3457 = vpop.f32.mrb[0].mxu0
        %v3458 = vadd.f32 %v3313, %v3457
        %v3459 = vpop.f32.mrb[0].mxu0
        %3460 = vmatprep.mubr.bf16.mxu0 %v2581
        %3461 = vmatmul.mubr.bf16.gmra.mrb[0].mxu0 %v2580
        %v3462 = vpop.f32.mrb[0].mxu0
        %v3463 = vadd.f32 %v3318, %v3462
        %v3464 = vpop.f32.mrb[0].mxu0
        %v3465 = vpop.f32.mrb[0].mxu0
        %v3466 = vadd.f32 %v3321, %v3465
        %v3467 = vpop.f32.mrb[0].mxu0
        %3468 = vmatprep.mubr.bf16.mxu0 %v2590
        %3469 = vmatmul.mubr.bf16.gmra.mrb[0].mxu0 %v2589
        %v3470 = vpop.f32.mrb[0].mxu0
        %v3471 = vadd.f32 %v3326, %v3470
        %v3472 = vpop.f32.mrb[0].mxu0
        %v3473 = vpop.f32.mrb[0].mxu0
        %v3474 = vadd.f32 %v3329, %v3473
        %v3475 = vpop.f32.mrb[0].mxu0
        %3476 = vmatprep.mubr.bf16.mxu0 %v2599
        %3477 = vmatmul.mubr.bf16.gmra.mrb[0].mxu0 %v2598
        %v3478 = vpop.f32.mrb[0].mxu0
        %v3479 = vadd.f32 %v3334, %v3478
        %v3480 = vpop.f32.mrb[0].mxu0
        %v3481 = vpop.f32.mrb[0].mxu0
        %v3482 = vadd.f32 %v3337, %v3481
        %v3483 = vpop.f32.mrb[0].mxu0
        %3484 = vmatprep.mubr.bf16.mxu0 %v2608
        %3485 = vmatmul.mubr.bf16.gmra.mrb[0].mxu0 %v2607
        %v3486 = vpop.f32.mrb[0].mxu0
        %v3487 = vadd.f32 %v3342, %v3486
        %v3488 = vpop.f32.mrb[0].mxu0
        %v3489 = vpop.f32.mrb[0].mxu0
        %v3490 = vadd.f32 %v3345, %v3489
        %v3491 = vpop.f32.mrb[0].mxu0
        %3492 = vmatprep.mubr.bf16.mxu0 %v2617
        %3493 = vmatmul.mubr.bf16.gmra.mrb[0].mxu0 %v2616
        %v3494 = vpop.f32.mrb[0].mxu0
        %v3495 = vadd.f32 %v3350, %v3494
        %v3496 = vpop.f32.mrb[0].mxu0
        %v3497 = vpop.f32.mrb[0].mxu0
        %v3498 = vadd.f32 %v3353, %v3497
        %v3499 = vpop.f32.mrb[0].mxu0
        %3500 = vmatprep.mubr.bf16.mxu0 %v2626
        %3501 = vmatmul.mubr.bf16.gmra.mrb[0].mxu0 %v2625
        %v3502 = vpop.f32.mrb[0].mxu0
        %v3503 = vadd.f32 %v3358, %v3502
        %v3504 = vpop.f32.mrb[0].mxu0
        %v3505 = vpop.f32.mrb[0].mxu0
        %v3506 = vadd.f32 %v3361, %v3505
        %v3507 = vpop.f32.mrb[0].mxu0
        %3508 = vmatprep.mubr.bf16.mxu0 %v2635
        %3509 = vmatmul.mubr.bf16.gmra.mrb[0].mxu0 %v2634
        %v3510 = vpop.f32.mrb[0].mxu0
        %v3511 = vadd.f32 %v3366, %v3510
        %v3512 = vpop.f32.mrb[0].mxu0
        %v3513 = vpop.f32.mrb[0].mxu0
        %v3514 = vadd.f32 %v3369, %v3513
        %v3515 = vpop.f32.mrb[0].mxu0
        %3516 = vmatprep.mubr.bf16.mxu0 %v2644
        %3517 = vmatmul.mubr.bf16.gmra.mrb[0].mxu0 %v2643
        %v3518 = vpop.f32.mrb[0].mxu0
        %v3519 = vadd.f32 %v3374, %v3518
        %v3520 = vpop.f32.mrb[0].mxu0
        %v3521 = vpop.f32.mrb[0].mxu0
        %v3522 = vadd.f32 %v3377, %v3521
        %v3523 = vpop.f32.mrb[0].mxu0
        %3524 = vmatprep.mubr.bf16.mxu0 %v2653
        %3525 = vmatmul.mubr.bf16.gmra.mrb[0].mxu0 %v2652
        %v3526 = vpop.f32.mrb[0].mxu0
        %v3527 = vadd.f32 %v3382, %v3526
        %v3528 = vpop.f32.mrb[0].mxu0
        %v3529 = vpop.f32.mrb[0].mxu0
        %v3530 = vadd.f32 %v3385, %v3529
        %v3531 = vpop.f32.mrb[0].mxu0
        %3532 = vmatprep.mubr.bf16.mxu0 %v2662
        %3533 = vmatmul.mubr.bf16.gmra.mrb[0].mxu0 %v2661
        %v3534 = vpop.f32.mrb[0].mxu0
        %v3535 = vadd.f32 %v3390, %v3534
        %v3536 = vpop.f32.mrb[0].mxu0
        %v3537 = vpop.f32.mrb[0].mxu0
        %v3538 = vadd.f32 %v3393, %v3537
        %v3539 = vpop.f32.mrb[0].mxu0
        %3540 = vdwg.mxu0
        %3541 = vmatprep.subr.bf16.mxu0 0
        %3542 = vmatpush1.bf16.msra.mxu0 %v3139
        %3543 = vmatprep.subr.bf16.mxu0 0
        %3544 = vmatpush1.bf16.msra.mxu0 %v3140
        %3545 = vmatprep.subr.bf16.mxu0 0
        %3546 = vmatpush1.bf16.msra.mxu0 %v3141
        %3547 = vmatprep.subr.bf16.mxu0 0
        %3548 = vmatpush1.bf16.msra.mxu0 %v3142
        %3549 = vmatprep.subr.bf16.mxu0 0
        %3550 = vmatpush1.bf16.msra.mxu0 %v3143
        %3551 = vmatprep.subr.bf16.mxu0 0
        %3552 = vmatpush1.bf16.msra.mxu0 %v3144
        %3553 = vmatprep.subr.bf16.mxu0 0
        %3554 = vmatpush1.bf16.msra.mxu0 %v3145
        %3555 = vmatprep.subr.bf16.mxu0 0
        %3556 = vmatpush1.bf16.msra.mxu0 %v3146
        %3557 = vmatprep.subr.bf16.mxu0 0
        %3558 = vmatpush1.bf16.msra.mxu0 %v3147
        %3559 = vmatprep.subr.bf16.mxu0 0
        %3560 = vmatpush1.bf16.msra.mxu0 %v3148
        %3561 = vmatprep.subr.bf16.mxu0 0
        %3562 = vmatpush1.bf16.msra.mxu0 %v3149
        %3563 = vmatprep.subr.bf16.mxu0 0
        %3564 = vmatpush1.bf16.msra.mxu0 %v3150
        %3565 = vmatprep.subr.bf16.mxu0 0
        %3566 = vmatpush1.bf16.msra.mxu0 %v3151
        %3567 = vmatprep.subr.bf16.mxu0 0
        %3568 = vmatpush1.bf16.msra.mxu0 %v3152
        %3569 = vmatprep.subr.bf16.mxu0 0
        %3570 = vmatpush1.bf16.msra.mxu0 %v3153
        %3571 = vmatprep.subr.bf16.mxu0 0
        %3572 = vmatpush1.bf16.msra.mxu0 %v3154
        %3573 = vmatprep.mubr.bf16.mxu0 %v2547
        %3574 = vmatmul.mubr.bf16.gmra.mrb[0].mxu0 %v2546
        %v3575 = vpop.f32.mrb[0].mxu0
        %v3576 = vadd.f32 %v3431, %v3575
        %v3577 = vpop.f32.mrb[0].mxu0
        %v3578 = vpop.f32.mrb[0].mxu0
        %v3579 = vadd.f32 %v3434, %v3578
        %v3580 = vpop.f32.mrb[0].mxu0
        %3581 = vmatprep.mubr.bf16.mxu0 %v2556
        %3582 = vmatmul.mubr.bf16.gmra.mrb[0].mxu0 %v2555
        %v3583 = vpop.f32.mrb[0].mxu0
        %v3584 = vadd.f32 %v3439, %v3583
        %v3585 = vpop.f32.mrb[0].mxu0
        %v3586 = vpop.f32.mrb[0].mxu0
        %v3587 = vadd.f32 %v3442, %v3586
        %v3588 = vpop.f32.mrb[0].mxu0
        %3589 = vmatprep.mubr.bf16.mxu0 %v2565
        %3590 = vmatmul.mubr.bf16.gmra.mrb[0].mxu0 %v2564
        %v3591 = vpop.f32.mrb[0].mxu0
        %v3592 = vadd.f32 %v3447, %v3591
        %v3593 = vpop.f32.mrb[0].mxu0
        %v3594 = vpop.f32.mrb[0].mxu0
        %v3595 = vadd.f32 %v3450, %v3594
        %v3596 = vpop.f32.mrb[0].mxu0
        %3597 = vmatprep.mubr.bf16.mxu0 %v2574
        %3598 = vmatmul.mubr.bf16.gmra.mrb[0].mxu0 %v2573
        %v3599 = vpop.f32.mrb[0].mxu0
        %v3600 = vadd.f32 %v3455, %v3599
        %v3601 = vpop.f32.mrb[0].mxu0
        %v3602 = vpop.f32.mrb[0].mxu0
        %v3603 = vadd.f32 %v3458, %v3602
        %v3604 = vpop.f32.mrb[0].mxu0
        %3605 = vmatprep.mubr.bf16.mxu0 %v2583
        %3606 = vmatmul.mubr.bf16.gmra.mrb[0].mxu0 %v2582
        %v3607 = vpop.f32.mrb[0].mxu0
        %v3608 = vadd.f32 %v3463, %v3607
        %v3609 = vpop.f32.mrb[0].mxu0
        %v3610 = vpop.f32.mrb[0].mxu0
        %v3611 = vadd.f32 %v3466, %v3610
        %v3612 = vpop.f32.mrb[0].mxu0
        %3613 = vmatprep.mubr.bf16.mxu0 %v2592
        %3614 = vmatmul.mubr.bf16.gmra.mrb[0].mxu0 %v2591
        %v3615 = vpop.f32.mrb[0].mxu0
        %v3616 = vadd.f32 %v3471, %v3615
        %v3617 = vpop.f32.mrb[0].mxu0
        %v3618 = vpop.f32.mrb[0].mxu0
        %v3619 = vadd.f32 %v3474, %v3618
        %v3620 = vpop.f32.mrb[0].mxu0
        %3621 = vmatprep.mubr.bf16.mxu0 %v2601
        %3622 = vmatmul.mubr.bf16.gmra.mrb[0].mxu0 %v2600
        %v3623 = vpop.f32.mrb[0].mxu0
        %v3624 = vadd.f32 %v3479, %v3623
        %v3625 = vpop.f32.mrb[0].mxu0
        %v3626 = vpop.f32.mrb[0].mxu0
        %v3627 = vadd.f32 %v3482, %v3626
        %v3628 = vpop.f32.mrb[0].mxu0
        %3629 = vmatprep.mubr.bf16.mxu0 %v2610
        %3630 = vmatmul.mubr.bf16.gmra.mrb[0].mxu0 %v2609
        %v3631 = vpop.f32.mrb[0].mxu0
        %v3632 = vadd.f32 %v3487, %v3631
        %v3633 = vpop.f32.mrb[0].mxu0
        %v3634 = vpop.f32.mrb[0].mxu0
        %v3635 = vadd.f32 %v3490, %v3634
        %v3636 = vpop.f32.mrb[0].mxu0
        %3637 = vmatprep.mubr.bf16.mxu0 %v2619
        %3638 = vmatmul.mubr.bf16.gmra.mrb[0].mxu0 %v2618
        %v3639 = vpop.f32.mrb[0].mxu0
        %v3640 = vadd.f32 %v3495, %v3639
        %v3641 = vpop.f32.mrb[0].mxu0
        %v3642 = vpop.f32.mrb[0].mxu0
        %v3643 = vadd.f32 %v3498, %v3642
        %v3644 = vpop.f32.mrb[0].mxu0
        %3645 = vmatprep.mubr.bf16.mxu0 %v2628
        %3646 = vmatmul.mubr.bf16.gmra.mrb[0].mxu0 %v2627
        %v3647 = vpop.f32.mrb[0].mxu0
        %v3648 = vadd.f32 %v3503, %v3647
        %v3649 = vpop.f32.mrb[0].mxu0
        %v3650 = vpop.f32.mrb[0].mxu0
        %v3651 = vadd.f32 %v3506, %v3650
        %v3652 = vpop.f32.mrb[0].mxu0
        %3653 = vmatprep.mubr.bf16.mxu0 %v2637
        %3654 = vmatmul.mubr.bf16.gmra.mrb[0].mxu0 %v2636
        %v3655 = vpop.f32.mrb[0].mxu0
        %v3656 = vadd.f32 %v3511, %v3655
        %v3657 = vpop.f32.mrb[0].mxu0
        %v3658 = vpop.f32.mrb[0].mxu0
        %v3659 = vadd.f32 %v3514, %v3658
        %v3660 = vpop.f32.mrb[0].mxu0
        %3661 = vmatprep.mubr.bf16.mxu0 %v2646
        %3662 = vmatmul.mubr.bf16.gmra.mrb[0].mxu0 %v2645
        %v3663 = vpop.f32.mrb[0].mxu0
        %v3664 = vadd.f32 %v3519, %v3663
        %v3665 = vpop.f32.mrb[0].mxu0
        %v3666 = vpop.f32.mrb[0].mxu0
        %v3667 = vadd.f32 %v3522, %v3666
        %v3668 = vpop.f32.mrb[0].mxu0
        %3669 = vmatprep.mubr.bf16.mxu0 %v2655
        %3670 = vmatmul.mubr.bf16.gmra.mrb[0].mxu0 %v2654
        %v3671 = vpop.f32.mrb[0].mxu0
        %v3672 = vadd.f32 %v3527, %v3671
        %v3673 = vpop.f32.mrb[0].mxu0
        %v3674 = vpop.f32.mrb[0].mxu0
        %v3675 = vadd.f32 %v3530, %v3674
        %v3676 = vpop.f32.mrb[0].mxu0
        %3677 = vmatprep.mubr.bf16.mxu0 %v2664
        %3678 = vmatmul.mubr.bf16.gmra.mrb[0].mxu0 %v2663
        %v3679 = vpop.f32.mrb[0].mxu0
        %v3680 = vadd.f32 %v3535, %v3679
        %v3681 = vpop.f32.mrb[0].mxu0
        %v3682 = vpop.f32.mrb[0].mxu0
        %v3683 = vadd.f32 %v3538, %v3682
        %v3684 = vpop.f32.mrb[0].mxu0
        %3685 = vdwg.mxu0
        %3686 = vmatprep.subr.bf16.mxu0 0
        %3687 = vmatpush1.bf16.msra.mxu0 %v3155
        %3688 = vmatprep.subr.bf16.mxu0 0
        %3689 = vmatpush1.bf16.msra.mxu0 %v3156
        %3690 = vmatprep.subr.bf16.mxu0 0
        %3691 = vmatpush1.bf16.msra.mxu0 %v3157
        %3692 = vmatprep.subr.bf16.mxu0 0
        %3693 = vmatpush1.bf16.msra.mxu0 %v3158
        %3694 = vmatprep.subr.bf16.mxu0 0
        %3695 = vmatpush1.bf16.msra.mxu0 %v3159
        %3696 = vmatprep.subr.bf16.mxu0 0
        %3697 = vmatpush1.bf16.msra.mxu0 %v3160
        %3698 = vmatprep.subr.bf16.mxu0 0
        %3699 = vmatpush1.bf16.msra.mxu0 %v3161
        %3700 = vmatprep.subr.bf16.mxu0 0
        %3701 = vmatpush1.bf16.msra.mxu0 %v3162
        %3702 = vmatprep.subr.bf16.mxu0 0
        %3703 = vmatpush1.bf16.msra.mxu0 %v3163
        %3704 = vmatprep.subr.bf16.mxu0 0
        %3705 = vmatpush1.bf16.msra.mxu0 %v3164
        %3706 = vmatprep.subr.bf16.mxu0 0
        %3707 = vmatpush1.bf16.msra.mxu0 %v3165
        %3708 = vmatprep.subr.bf16.mxu0 0
        %3709 = vmatpush1.bf16.msra.mxu0 %v3166
        %3710 = vmatprep.subr.bf16.mxu0 0
        %3711 = vmatpush1.bf16.msra.mxu0 %v3167
        %3712 = vmatprep.subr.bf16.mxu0 0
        %3713 = vmatpush1.bf16.msra.mxu0 %v3168
        %3714 = vmatprep.subr.bf16.mxu0 0
        %3715 = vmatpush1.bf16.msra.mxu0 %v3169
        %3716 = vmatprep.subr.bf16.mxu0 0
        %3717 = vmatpush1.bf16.msra.mxu0 %v3170
        %3718 = vmatprep.mubr.bf16.mxu0 %v2549
        %3719 = vmatmul.mubr.bf16.gmra.mrb[0].mxu0 %v2548
        %v3720 = vpop.f32.mrb[0].mxu0
        %v3721 = vadd.f32 %v3576, %v3720
        %v3722 = vpop.f32.mrb[0].mxu0
        %v3723 = vpop.f32.mrb[0].mxu0
        %v3724 = vadd.f32 %v3579, %v3723
        %v3725 = vpop.f32.mrb[0].mxu0
        %3726 = vmatprep.mubr.bf16.mxu0 %v2558
        %3727 = vmatmul.mubr.bf16.gmra.mrb[0].mxu0 %v2557
        %v3728 = vpop.f32.mrb[0].mxu0
        %v3729 = vadd.f32 %v3584, %v3728
        %v3730 = vpop.f32.mrb[0].mxu0
        %v3731 = vpop.f32.mrb[0].mxu0
        %v3732 = vadd.f32 %v3587, %v3731
        %v3733 = vpop.f32.mrb[0].mxu0
        %3734 = vmatprep.mubr.bf16.mxu0 %v2567
        %3735 = vmatmul.mubr.bf16.gmra.mrb[0].mxu0 %v2566
        %v3736 = vpop.f32.mrb[0].mxu0
        %v3737 = vadd.f32 %v3592, %v3736
        %v3738 = vpop.f32.mrb[0].mxu0
        %v3739 = vpop.f32.mrb[0].mxu0
        %v3740 = vadd.f32 %v3595, %v3739
        %v3741 = vpop.f32.mrb[0].mxu0
        %3742 = vmatprep.mubr.bf16.mxu0 %v2576
        %3743 = vmatmul.mubr.bf16.gmra.mrb[0].mxu0 %v2575
        %v3744 = vpop.f32.mrb[0].mxu0
        %v3745 = vadd.f32 %v3600, %v3744
        %v3746 = vpop.f32.mrb[0].mxu0
        %v3747 = vpop.f32.mrb[0].mxu0
        %v3748 = vadd.f32 %v3603, %v3747
        %v3749 = vpop.f32.mrb[0].mxu0
        %3750 = vmatprep.mubr.bf16.mxu0 %v2585
        %3751 = vmatmul.mubr.bf16.gmra.mrb[0].mxu0 %v2584
        %v3752 = vpop.f32.mrb[0].mxu0
        %v3753 = vadd.f32 %v3608, %v3752
        %v3754 = vpop.f32.mrb[0].mxu0
        %v3755 = vpop.f32.mrb[0].mxu0
        %v3756 = vadd.f32 %v3611, %v3755
        %v3757 = vpop.f32.mrb[0].mxu0
        %3758 = vmatprep.mubr.bf16.mxu0 %v2594
        %3759 = vmatmul.mubr.bf16.gmra.mrb[0].mxu0 %v2593
        %v3760 = vpop.f32.mrb[0].mxu0
        %v3761 = vadd.f32 %v3616, %v3760
        %v3762 = vpop.f32.mrb[0].mxu0
        %v3763 = vpop.f32.mrb[0].mxu0
        %v3764 = vadd.f32 %v3619, %v3763
        %v3765 = vpop.f32.mrb[0].mxu0
        %3766 = vmatprep.mubr.bf16.mxu0 %v2603
        %3767 = vmatmul.mubr.bf16.gmra.mrb[0].mxu0 %v2602
        %v3768 = vpop.f32.mrb[0].mxu0
        %v3769 = vadd.f32 %v3624, %v3768
        %v3770 = vpop.f32.mrb[0].mxu0
        %v3771 = vpop.f32.mrb[0].mxu0
        %v3772 = vadd.f32 %v3627, %v3771
        %v3773 = vpop.f32.mrb[0].mxu0
        %3774 = vmatprep.mubr.bf16.mxu0 %v2612
        %3775 = vmatmul.mubr.bf16.gmra.mrb[0].mxu0 %v2611
        %v3776 = vpop.f32.mrb[0].mxu0
        %v3777 = vadd.f32 %v3632, %v3776
        %v3778 = vpop.f32.mrb[0].mxu0
        %v3779 = vpop.f32.mrb[0].mxu0
        %v3780 = vadd.f32 %v3635, %v3779
        %v3781 = vpop.f32.mrb[0].mxu0
        %3782 = vmatprep.mubr.bf16.mxu0 %v2621
        %3783 = vmatmul.mubr.bf16.gmra.mrb[0].mxu0 %v2620
        %v3784 = vpop.f32.mrb[0].mxu0
        %v3785 = vadd.f32 %v3640, %v3784
        %v3786 = vpop.f32.mrb[0].mxu0
        %v3787 = vpop.f32.mrb[0].mxu0
        %v3788 = vadd.f32 %v3643, %v3787
        %v3789 = vpop.f32.mrb[0].mxu0
        %3790 = vmatprep.mubr.bf16.mxu0 %v2630
        %3791 = vmatmul.mubr.bf16.gmra.mrb[0].mxu0 %v2629
        %v3792 = vpop.f32.mrb[0].mxu0
        %v3793 = vadd.f32 %v3648, %v3792
        %v3794 = vpop.f32.mrb[0].mxu0
        %v3795 = vpop.f32.mrb[0].mxu0
        %v3796 = vadd.f32 %v3651, %v3795
        %v3797 = vpop.f32.mrb[0].mxu0
        %3798 = vmatprep.mubr.bf16.mxu0 %v2639
        %3799 = vmatmul.mubr.bf16.gmra.mrb[0].mxu0 %v2638
        %v3800 = vpop.f32.mrb[0].mxu0
        %v3801 = vadd.f32 %v3656, %v3800
        %v3802 = vpop.f32.mrb[0].mxu0
        %v3803 = vpop.f32.mrb[0].mxu0
        %v3804 = vadd.f32 %v3659, %v3803
        %v3805 = vpop.f32.mrb[0].mxu0
        %3806 = vmatprep.mubr.bf16.mxu0 %v2648
        %3807 = vmatmul.mubr.bf16.gmra.mrb[0].mxu0 %v2647
        %v3808 = vpop.f32.mrb[0].mxu0
        %v3809 = vadd.f32 %v3664, %v3808
        %v3810 = vpop.f32.mrb[0].mxu0
        %v3811 = vpop.f32.mrb[0].mxu0
        %v3812 = vadd.f32 %v3667, %v3811
        %v3813 = vpop.f32.mrb[0].mxu0
        %3814 = vmatprep.mubr.bf16.mxu0 %v2657
        %3815 = vmatmul.mubr.bf16.gmra.mrb[0].mxu0 %v2656
        %v3816 = vpop.f32.mrb[0].mxu0
        %v3817 = vadd.f32 %v3672, %v3816
        %v3818 = vpop.f32.mrb[0].mxu0
        %v3819 = vpop.f32.mrb[0].mxu0
        %v3820 = vadd.f32 %v3675, %v3819
        %v3821 = vpop.f32.mrb[0].mxu0
        %3822 = vmatprep.mubr.bf16.mxu0 %v2666
        %3823 = vmatmul.mubr.bf16.gmra.mrb[0].mxu0 %v2665
        %v3824 = vpop.f32.mrb[0].mxu0
        %v3825 = vadd.f32 %v3680, %v3824
        %v3826 = vpop.f32.mrb[0].mxu0
        %v3827 = vpop.f32.mrb[0].mxu0
        %v3828 = vadd.f32 %v3683, %v3827
        %v3829 = vpop.f32.mrb[0].mxu0
        %3830 = vdwg.mxu0
        %3831 = vmatprep.subr.bf16.mxu0 0
        %3832 = vmatpush1.bf16.msra.mxu0 %v3171
        %3833 = vmatprep.subr.bf16.mxu0 0
        %3834 = vmatpush1.bf16.msra.mxu0 %v3172
        %3835 = vmatprep.subr.bf16.mxu0 0
        %3836 = vmatpush1.bf16.msra.mxu0 %v3173
        %3837 = vmatprep.subr.bf16.mxu0 0
        %3838 = vmatpush1.bf16.msra.mxu0 %v3174
        %3839 = vmatprep.subr.bf16.mxu0 0
        %3840 = vmatpush1.bf16.msra.mxu0 %v3175
        %3841 = vmatprep.subr.bf16.mxu0 0
        %3842 = vmatpush1.bf16.msra.mxu0 %v3176
        %3843 = vmatprep.subr.bf16.mxu0 0
        %3844 = vmatpush1.bf16.msra.mxu0 %v3177
        %3845 = vmatprep.subr.bf16.mxu0 0
        %3846 = vmatpush1.bf16.msra.mxu0 %v3178
        %3847 = vmatprep.subr.bf16.mxu0 0
        %3848 = vmatpush1.bf16.msra.mxu0 0
        %3849 = vmatprep.subr.bf16.mxu0 0
        %3850 = vmatpush1.bf16.msra.mxu0 0
        %3851 = vmatprep.subr.bf16.mxu0 0
        %3852 = vmatpush1.bf16.msra.mxu0 0
        %3853 = vmatprep.subr.bf16.mxu0 0
        %3854 = vmatpush1.bf16.msra.mxu0 0
        %3855 = vmatprep.subr.bf16.mxu0 0
        %3856 = vmatpush1.bf16.msra.mxu0 0
        %3857 = vmatprep.subr.bf16.mxu0 0
        %3858 = vmatpush1.bf16.msra.mxu0 0
        %3859 = vmatprep.subr.bf16.mxu0 0
        %3860 = vmatpush1.bf16.msra.mxu0 0
        %3861 = vmatprep.subr.bf16.mxu0 0
        %3862 = vmatpush1.bf16.msra.mxu0 0
        %3863 = vmatprep.mubr.bf16.mxu0 0
        %3864 = vmatmul.mubr.bf16.gmra.mrb[0].mxu0 %v2550
        %v3865 = vpop.f32.mrb[0].mxu0
        %v3866 = vadd.f32 %v3721, %v3865
        %v3867 = vpop.f32.mrb[0].mxu0
        %v3868 = vpop.f32.mrb[0].mxu0
        %v3869 = vadd.f32 %v3724, %v3868
        %v3870 = vpop.f32.mrb[0].mxu0
        %3871 = vmatprep.mubr.bf16.mxu0 0
        %3872 = vmatmul.mubr.bf16.gmra.mrb[0].mxu0 %v2559
        %v3873 = vpop.f32.mrb[0].mxu0
        %v3874 = vadd.f32 %v3729, %v3873
        %v3875 = vpop.f32.mrb[0].mxu0
        %v3876 = vpop.f32.mrb[0].mxu0
        %v3877 = vadd.f32 %v3732, %v3876
        %v3878 = vpop.f32.mrb[0].mxu0
        %3879 = vmatprep.mubr.bf16.mxu0 0
        %3880 = vmatmul.mubr.bf16.gmra.mrb[0].mxu0 %v2568
        %v3881 = vpop.f32.mrb[0].mxu0
        %v3882 = vadd.f32 %v3737, %v3881
        %v3883 = vpop.f32.mrb[0].mxu0
        %v3884 = vpop.f32.mrb[0].mxu0
        %v3885 = vadd.f32 %v3740, %v3884
        %v3886 = vpop.f32.mrb[0].mxu0
        %3887 = vmatprep.mubr.bf16.mxu0 0
        %3888 = vmatmul.mubr.bf16.gmra.mrb[0].mxu0 %v2577
        %v3889 = vpop.f32.mrb[0].mxu0
        %v3890 = vadd.f32 %v3745, %v3889
        %v3891 = vpop.f32.mrb[0].mxu0
        %v3892 = vpop.f32.mrb[0].mxu0
        %v3893 = vadd.f32 %v3748, %v3892
        %v3894 = vpop.f32.mrb[0].mxu0
        %3895 = vmatprep.mubr.bf16.mxu0 0
        %3896 = vmatmul.mubr.bf16.gmra.mrb[0].mxu0 %v2586
        %v3897 = vpop.f32.mrb[0].mxu0
        %v3898 = vadd.f32 %v3753, %v3897
        %v3899 = vpop.f32.mrb[0].mxu0
        %v3900 = vpop.f32.mrb[0].mxu0
        %v3901 = vadd.f32 %v3756, %v3900
        %v3902 = vpop.f32.mrb[0].mxu0
        %3903 = vmatprep.mubr.bf16.mxu0 0
        %3904 = vmatmul.mubr.bf16.gmra.mrb[0].mxu0 %v2595
        %v3905 = vpop.f32.mrb[0].mxu0
        %v3906 = vadd.f32 %v3761, %v3905
        %v3907 = vpop.f32.mrb[0].mxu0
        %v3908 = vpop.f32.mrb[0].mxu0
        %v3909 = vadd.f32 %v3764, %v3908
        %v3910 = vpop.f32.mrb[0].mxu0
        %3911 = vmatprep.mubr.bf16.mxu0 0
        %3912 = vmatmul.mubr.bf16.gmra.mrb[0].mxu0 %v2604
        %v3913 = vpop.f32.mrb[0].mxu0
        %v3914 = vadd.f32 %v3769, %v3913
        %v3915 = vpop.f32.mrb[0].mxu0
        %v3916 = vpop.f32.mrb[0].mxu0
        %v3917 = vadd.f32 %v3772, %v3916
        %v3918 = vpop.f32.mrb[0].mxu0
        %3919 = vmatprep.mubr.bf16.mxu0 0
        %3920 = vmatmul.mubr.bf16.gmra.mrb[0].mxu0 %v2613
        %v3921 = vpop.f32.mrb[0].mxu0
        %v3922 = vadd.f32 %v3777, %v3921
        %v3923 = vpop.f32.mrb[0].mxu0
        %v3924 = vpop.f32.mrb[0].mxu0
        %v3925 = vadd.f32 %v3780, %v3924
        %v3926 = vpop.f32.mrb[0].mxu0
        %3927 = vmatprep.mubr.bf16.mxu0 0
        %3928 = vmatmul.mubr.bf16.gmra.mrb[0].mxu0 %v2622
        %v3929 = vpop.f32.mrb[0].mxu0
        %v3930 = vadd.f32 %v3785, %v3929
        %v3931 = vpop.f32.mrb[0].mxu0
        %v3932 = vpop.f32.mrb[0].mxu0
        %v3933 = vadd.f32 %v3788, %v3932
        %v3934 = vpop.f32.mrb[0].mxu0
        %3935 = vmatprep.mubr.bf16.mxu0 0
        %3936 = vmatmul.mubr.bf16.gmra.mrb[0].mxu0 %v2631
        %v3937 = vpop.f32.mrb[0].mxu0
        %v3938 = vadd.f32 %v3793, %v3937
        %v3939 = vpop.f32.mrb[0].mxu0
        %v3940 = vpop.f32.mrb[0].mxu0
        %v3941 = vadd.f32 %v3796, %v3940
        %v3942 = vpop.f32.mrb[0].mxu0
        %3943 = vmatprep.mubr.bf16.mxu0 0
        %3944 = vmatmul.mubr.bf16.gmra.mrb[0].mxu0 %v2640
        %v3945 = vpop.f32.mrb[0].mxu0
        %v3946 = vadd.f32 %v3801, %v3945
        %v3947 = vpop.f32.mrb[0].mxu0
        %v3948 = vpop.f32.mrb[0].mxu0
        %v3949 = vadd.f32 %v3804, %v3948
        %v3950 = vpop.f32.mrb[0].mxu0
        %3951 = vmatprep.mubr.bf16.mxu0 0
        %3952 = vmatmul.mubr.bf16.gmra.mrb[0].mxu0 %v2649
        %v3953 = vpop.f32.mrb[0].mxu0
        %v3954 = vadd.f32 %v3809, %v3953
        %v3955 = vpop.f32.mrb[0].mxu0
        %v3956 = vpop.f32.mrb[0].mxu0
        %v3957 = vadd.f32 %v3812, %v3956
        %v3958 = vpop.f32.mrb[0].mxu0
        %3959 = vmatprep.mubr.bf16.mxu0 0
        %3960 = vmatmul.mubr.bf16.gmra.mrb[0].mxu0 %v2658
        %v3961 = vpop.f32.mrb[0].mxu0
        %v3962 = vadd.f32 %v3817, %v3961
        %v3963 = vpop.f32.mrb[0].mxu0
        %v3964 = vpop.f32.mrb[0].mxu0
        %v3965 = vadd.f32 %v3820, %v3964
        %v3966 = vpop.f32.mrb[0].mxu0
        %3967 = vmatprep.mubr.bf16.mxu0 0
        %3968 = vmatmul.mubr.bf16.gmra.mrb[0].mxu0 %v2667
        %v3969 = vpop.f32.mrb[0].mxu0
        %v3970 = vadd.f32 %v3825, %v3969
        %v3971 = vpop.f32.mrb[0].mxu0
        %v3972 = vpop.f32.mrb[0].mxu0
        %v3973 = vadd.f32 %v3828, %v3972
        %v3974 = vpop.f32.mrb[0].mxu0
        %3975 = vdwg.mxu0
        %v3976 = vmax.f32 %v3866, 0.0
        %v3977 = vmax.f32 %v3869, 0.0
        %v3978 = vmax.f32 %v3874, 0.0
        %v3979 = vmax.f32 %v3877, 0.0
        %v3980 = vmax.f32 %v3882, 0.0
        %v3981 = vmax.f32 %v3885, 0.0
        %v3982 = vmax.f32 %v3890, 0.0
        %v3983 = vmax.f32 %v3893, 0.0
        %v3984 = vmax.f32 %v3898, 0.0
        %v3985 = vmax.f32 %v3901, 0.0
        %v3986 = vmax.f32 %v3906, 0.0
        %v3987 = vmax.f32 %v3909, 0.0
        %v3988 = vmax.f32 %v3914, 0.0
        %v3989 = vmax.f32 %v3917, 0.0
        %v3990 = vmax.f32 %v3922, 0.0
        %v3991 = vmax.f32 %v3925, 0.0
        %v3992 = vmax.f32 %v3930, 0.0
        %v3993 = vmax.f32 %v3933, 0.0
        %v3994 = vmax.f32 %v3938, 0.0
        %v3995 = vmax.f32 %v3941, 0.0
        %v3996 = vmax.f32 %v3946, 0.0
        %v3997 = vmax.f32 %v3949, 0.0
        %v3998 = vmax.f32 %v3954, 0.0
        %v3999 = vmax.f32 %v3957, 0.0
        %v4000 = vmax.f32 %v3962, 0.0
        %v4001 = vmax.f32 %v3965, 0.0
        %v4002 = vmax.f32 %v3970, 0.0
        %v4003 = vmax.f32 %v3973, 0.0
        %4004 = vst [vmem:[#allocation5] sm:$0xff] %v3976
        %4005 = vst [vmem:[#allocation5 + $0x8] sm:$0xff] %v3977
        %4006 = vst [vmem:[#allocation5 + $0x10] sm:$0xff] %v3978
        %4007 = vst [vmem:[#allocation5 + $0x18] sm:$0xff] %v3979
        %4008 = vst [vmem:[#allocation5 + $0x20] sm:$0xff] %v3980
        %4009 = vst [vmem:[#allocation5 + $0x28] sm:$0xff] %v3981
        %4010 = vst [vmem:[#allocation5 + $0x30] sm:$0xff] %v3982
        %4011 = vst [vmem:[#allocation5 + $0x38] sm:$0xff] %v3983
        %4012 = vst [vmem:[#allocation5 + $0x40] sm:$0xff] %v3984
        %4013 = vst [vmem:[#allocation5 + $0x48] sm:$0xff] %v3985
        %4014 = vst [vmem:[#allocation5 + $0x50] sm:$0xff] %v3986
        %4015 = vst [vmem:[#allocation5 + $0x58] sm:$0xff] %v3987
        %4016 = vst [vmem:[#allocation5 + $0x60] sm:$0xff] %v3988
        %4017 = vst [vmem:[#allocation5 + $0x68] sm:$0xff] %v3989
        %4018 = vst [vmem:[#allocation5 + $0x70] sm:$0xff] %v3990
        %4019 = vst [vmem:[#allocation5 + $0x78] sm:$0xff] %v3991
        %4020 = vst [vmem:[#allocation5 + $0x80] sm:$0xff] %v3992
        %4021 = vst [vmem:[#allocation5 + $0x88] sm:$0xff] %v3993
        %4022 = vst [vmem:[#allocation5 + $0x90] sm:$0xff] %v3994
        %4023 = vst [vmem:[#allocation5 + $0x98] sm:$0xff] %v3995
        %4024 = vst [vmem:[#allocation5 + $0xa0] sm:$0xff] %v3996
        %4025 = vst [vmem:[#allocation5 + $0xa8] sm:$0xff] %v3997
        %4026 = vst [vmem:[#allocation5 + $0xb0] sm:$0xff] %v3998
        %4027 = vst [vmem:[#allocation5 + $0xb8] sm:$0xff] %v3999
        %4028 = vst [vmem:[#allocation5 + $0xc0] sm:$0xff] %v4000
        %4029 = vst [vmem:[#allocation5 + $0xc8] sm:$0xff] %v4001
        %4030 = vst [vmem:[#allocation5 + $0xd0] sm:$0xff] %v4002
        %4031 = vst [vmem:[#allocation5 + $0xd8] sm:$0xff] %v4003
        %v4032 = vld [vmem:[#allocation5] sm:$0xff]
        %v4033 = vld [vmem:[#allocation5 + $0x8] sm:$0xff]
        %v4034 = vld [vmem:[#allocation5 + $0x10] sm:$0xff]
        %v4035 = vld [vmem:[#allocation5 + $0x18] sm:$0xff]
        %v4036 = vmax.f32 %v4032, %v4034
        %v4037 = vmax.f32 %v4033, %v4035
        %4038 = vst [vmem:[#allocation7] sm:$0xff] %v4036
        %4039 = vst [vmem:[#allocation7 + $0x8] sm:$0xff] %v4037
        %v4040 = vld [vmem:[#allocation7] ss:$2 sm:$0x7f]
        %s4041 = scalar_lea.vmem [#allocation7], 1
        %v4042 = vld [vmem:[%s4041] ss:$2 sm:$0x7f]
        %v4043 = vmax.f32 %v4040, %v4042
        %4044 = vst [vmem:[%s239] sm:$0x7f] %v4043
        %v4045 = vld [vmem:[#allocation5 + $0x20] sm:$0xff]
        %v4046 = vld [vmem:[#allocation5 + $0x28] sm:$0xff]
        %v4047 = vld [vmem:[#allocation5 + $0x30] sm:$0xff]
        %v4048 = vld [vmem:[#allocation5 + $0x38] sm:$0xff]
        %v4049 = vmax.f32 %v4045, %v4047
        %v4050 = vmax.f32 %v4046, %v4048
        %4051 = vst [vmem:[#allocation7] sm:$0xff] %v4049
        %4052 = vst [vmem:[#allocation7 + $0x8] sm:$0xff] %v4050
        %v4053 = vld [vmem:[#allocation7] ss:$2 sm:$0x7f]
        %v4054 = vld [vmem:[%s4041] ss:$2 sm:$0x7f]
        %v4055 = vmax.f32 %v4053, %v4054
        %4056 = vst [vmem:[%s239 + $0x7] sm:$0x7f] %v4055
        %v4057 = vld [vmem:[#allocation5 + $0x40] sm:$0xff]
        %v4058 = vld [vmem:[#allocation5 + $0x48] sm:$0xff]
        %v4059 = vld [vmem:[#allocation5 + $0x50] sm:$0xff]
        %v4060 = vld [vmem:[#allocation5 + $0x58] sm:$0xff]
        %v4061 = vmax.f32 %v4057, %v4059
        %v4062 = vmax.f32 %v4058, %v4060
        %4063 = vst [vmem:[#allocation7] sm:$0xff] %v4061
        %4064 = vst [vmem:[#allocation7 + $0x8] sm:$0xff] %v4062
        %v4065 = vld [vmem:[#allocation7] ss:$2 sm:$0x7f]
        %v4066 = vld [vmem:[%s4041] ss:$2 sm:$0x7f]
        %v4067 = vmax.f32 %v4065, %v4066
        %4068 = vst [vmem:[%s239 + $0xe] sm:$0x7f] %v4067
        %v4069 = vld [vmem:[#allocation5 + $0x60] sm:$0xff]
        %v4070 = vld [vmem:[#allocation5 + $0x68] sm:$0xff]
        %v4071 = vld [vmem:[#allocation5 + $0x70] sm:$0xff]
        %v4072 = vld [vmem:[#allocation5 + $0x78] sm:$0xff]
        %v4073 = vmax.f32 %v4069, %v4071
        %v4074 = vmax.f32 %v4070, %v4072
        %4075 = vst [vmem:[#allocation7] sm:$0xff] %v4073
        %4076 = vst [vmem:[#allocation7 + $0x8] sm:$0xff] %v4074
        %v4077 = vld [vmem:[#allocation7] ss:$2 sm:$0x7f]
        %v4078 = vld [vmem:[%s4041] ss:$2 sm:$0x7f]
        %v4079 = vmax.f32 %v4077, %v4078
        %4080 = vst [vmem:[%s239 + $0x15] sm:$0x7f] %v4079
        %v4081 = vld [vmem:[#allocation5 + $0x80] sm:$0xff]
        %v4082 = vld [vmem:[#allocation5 + $0x88] sm:$0xff]
        %v4083 = vld [vmem:[#allocation5 + $0x90] sm:$0xff]
        %v4084 = vld [vmem:[#allocation5 + $0x98] sm:$0xff]
        %v4085 = vmax.f32 %v4081, %v4083
        %v4086 = vmax.f32 %v4082, %v4084
        %4087 = vst [vmem:[#allocation7] sm:$0xff] %v4085
        %4088 = vst [vmem:[#allocation7 + $0x8] sm:$0xff] %v4086
        %v4089 = vld [vmem:[#allocation7] ss:$2 sm:$0x7f]
        %v4090 = vld [vmem:[%s4041] ss:$2 sm:$0x7f]
        %v4091 = vmax.f32 %v4089, %v4090
        %4092 = vst [vmem:[%s239 + $0x1c] sm:$0x7f] %v4091
        %v4093 = vld [vmem:[#allocation5 + $0xa0] sm:$0xff]
        %v4094 = vld [vmem:[#allocation5 + $0xa8] sm:$0xff]
        %v4095 = vld [vmem:[#allocation5 + $0xb0] sm:$0xff]
        %v4096 = vld [vmem:[#allocation5 + $0xb8] sm:$0xff]
        %v4097 = vmax.f32 %v4093, %v4095
        %v4098 = vmax.f32 %v4094, %v4096
        %4099 = vst [vmem:[#allocation7] sm:$0xff] %v4097
        %4100 = vst [vmem:[#allocation7 + $0x8] sm:$0xff] %v4098
        %v4101 = vld [vmem:[#allocation7] ss:$2 sm:$0x7f]
        %v4102 = vld [vmem:[%s4041] ss:$2 sm:$0x7f]
        %v4103 = vmax.f32 %v4101, %v4102
        %4104 = vst [vmem:[%s239 + $0x23] sm:$0x7f] %v4103
        %v4105 = vld [vmem:[#allocation5 + $0xc0] sm:$0xff]
        %v4106 = vld [vmem:[#allocation5 + $0xc8] sm:$0xff]
        %v4107 = vld [vmem:[#allocation5 + $0xd0] sm:$0xff]
        %v4108 = vld [vmem:[#allocation5 + $0xd8] sm:$0xff]
        %v4109 = vmax.f32 %v4105, %v4107
        %v4110 = vmax.f32 %v4106, %v4108
        %4111 = vst [vmem:[#allocation7] sm:$0xff] %v4109
        %4112 = vst [vmem:[#allocation7 + $0x8] sm:$0xff] %v4110
        %v4113 = vld [vmem:[#allocation7] ss:$2 sm:$0x7f]
        %v4114 = vld [vmem:[%s4041] ss:$2 sm:$0x7f]
        %v4115 = vmax.f32 %v4113, %v4114
        %4116 = vst [vmem:[%s239 + $0x2a] sm:$0x7f] %v4115
        %p4117 = scmp.lt.s32.totalorder %s17, 1
        %s4118 = scalar_select %p4117, %s17, 1
        %s4119 = smul.addr %s4118, 7
        %s4120 = smul.addr %s4119, 8
        %s4121 = scalar_lea.vmem %s5, %s4120
        // Predicated region
        $region45: #{model_forward.2} parent=39 // pred_check
          %p4122 = pneg %p145
        $region46: #{model_forward.2} parent=39 // pred_check_branch
          %4124 = sbr.rel (%p4122) target = $region48
        $region47: #{model_forward.2} parent=39 // pred_region
          _
        $region48: #{model_forward.2} parent=39 // pred_fallthru
          _
      $region40: #{model_forward.2} parent=5 // pred_fallthru
        _
      %p4125 = scmp.le.s32.totalorder 2, %s12
      // Predicated region
      $region49: #{model_forward.2} parent=5 // pred_check
        %p4126 = pneg %p4125
      $region50: #{model_forward.2} parent=5 // pred_check_branch
        %4128 = sbr.rel (%p4126) target = $region52
      $region51: #{model_forward.2} parent=5 // pred_region
        %s4129 = ssub.s32 %s12, 2
        // Predicated region
        $region53: #{model_forward.2} parent=51 // pred_check
          %p4130 = pneg %p151
        $region54: #{model_forward.2} parent=51 // pred_check_branch
          %4132 = sbr.rel (%p4130) target = $region56
        $region55: #{model_forward.2} parent=51 // pred_region
          %p4133 = scmp.lt.s32.totalorder %s18, 1
          %s4134 = scalar_select %p4133, %s18, 1
          %s4135 = smul.addr %s4134, 7
          %s4136 = smul.addr %s4135, 8
          %s4137 = scalar_lea.vmem %s5, %s4136
        $region56: #{model_forward.2} parent=51 // pred_fallthru
          _
      $region52: #{model_forward.2} parent=5 // pred_fallthru
        _
    $region6: #{model_forward.2} parent=1 // loop_footer
      %s16 = sadd.s32 1, %s12
    $region7: #{model_forward.2} parent=1 // loop_footer_branch
      %11 = sbr.rel target = $region3
    $region8: #{model_forward.2} parent=1 // loop_exit
      _
    %4138 = vsyncpa [#allocation9], 1
    %s4139 = scalar_lea.sflag [#allocation9], 1
    %4140 = vsyncpa %s4139, 1

// kernel: model_forward.3
$region0: #{model_forward.3}
  #allocation0 [shape = 'u32[]', space=smem, size = 0x4, offset = 0x4, fixed_abs, tag = 'smem constant byte address 0x4 - core index']
  #allocation1 [shape = 'u32[144,128]{1,0:T(1,128)}', space=vmem, size = 0x12000, scoped, tag = 'internal scratch']
  %s0 = inlined_call_operand.vmem [shape: f32[2,6272], index: 0, kind: input, shape index: {}]
  %s1 = inlined_call_operand.vmem [shape: bf16[6272,128], index: 1, kind: input, shape index: {}]
  %s2 = inlined_call_operand.vmem [shape: f32[1,128], index: 2, kind: input, shape index: {}]
  %s3 = inlined_call_operand.vmem [shape: bf16[128,128], index: 3, kind: input, shape index: {}]
  %s4 = inlined_call_operand.vmem [shape: f32[1,128], index: 4, kind: input, shape index: {}]
  %s5 = inlined_call_operand.hbm [shape: f32[2,128], index: 5, kind: output, shape index: {}]
  %s6 = sld [smem:[#allocation0]]
  $region30: #{model_forward.3} parent=0
    _
  %s8 = ssub.s32 1, %s6
  %s9 = scalar_select 0, %s8, %s6
  $region1: #{model_forward.3} parent=0
    #allocation2 [shape = 'u8[1024]{0}', space=vmem, size = 0x400, scoped, tag = 'output window, operand 0, single buffered']
    #allocation3 [shape = 's32[1]{0}', space=sflag, size = 0x4, scoped, tag = 'scoped memory for model_forward.3']
    %10 = vsyncpa [#allocation3], 0
    // Predicated region
    $region2: #{model_forward.3} parent=1 // pred_check
      _
    $region3: #{model_forward.3} parent=1 // pred_check_branch
      %12 = sbr.rel (0) target = $region5
    $region4: #{model_forward.3} parent=1 // pred_region
      _
    $region5: #{model_forward.3} parent=1 // pred_fallthru
      _
    // Predicated region
    $region6: #{model_forward.3} parent=1 // pred_check
      _
    $region7: #{model_forward.3} parent=1 // pred_check_branch
      %14 = sbr.rel (0) target = $region9
    $region8: #{model_forward.3} parent=1 // pred_region
      _
    $region9: #{model_forward.3} parent=1 // pred_fallthru
      _
    // Predicated region
    $region10: #{model_forward.3} parent=1 // pred_check
      _
    $region11: #{model_forward.3} parent=1 // pred_check_branch
      %16 = sbr.rel (0) target = $region13
    $region12: #{model_forward.3} parent=1 // pred_region
      _
    $region13: #{model_forward.3} parent=1 // pred_fallthru
      _
    // Predicated region
    $region14: #{model_forward.3} parent=1 // pred_check
      _
    $region15: #{model_forward.3} parent=1 // pred_check_branch
      %18 = sbr.rel (0) target = $region17
    $region16: #{model_forward.3} parent=1 // pred_region
      _
    $region17: #{model_forward.3} parent=1 // pred_fallthru
      _
    // Predicated region
    $region18: #{model_forward.3} parent=1 // pred_check
      _
    $region19: #{model_forward.3} parent=1 // pred_check_branch
      %20 = sbr.rel (0) target = $region21
    $region20: #{model_forward.3} parent=1 // pred_region
      _
    $region21: #{model_forward.3} parent=1 // pred_fallthru
      _
    %v22 = vld [vmem:[%s0] sm:$0xff]
    %v23 = vld [vmem:[%s0 + $0x8] sm:$0xff]
    %v24 = vld [vmem:[%s0 + $0x10] sm:$0xff]
    %v25 = vld [vmem:[%s0 + $0x18] sm:$0xff]
    %v26 = vld [vmem:[%s0 + $0x20] sm:$0xff]
    %v27 = vld [vmem:[%s0 + $0x28] sm:$0xff]
    %v28 = vld [vmem:[%s0 + $0x30] sm:$0xff]
    %v29 = vld [vmem:[%s0 + $0x38] sm:$0xff]
    %v30 = vld [vmem:[%s0 + $0x40] sm:$0xff]
    %v31 = vld [vmem:[%s0 + $0x48] sm:$0xff]
    %v32 = vld [vmem:[%s0 + $0x50] sm:$0xff]
    %v33 = vld [vmem:[%s0 + $0x58] sm:$0xff]
    %v34 = vld [vmem:[%s0 + $0x60] sm:$0x3]
    %v48 = vcombine.high %v22, %v22
    %v50 = vunpack.c.l.s4 1983009808
    %v51 = vunpack.c.0.s8 %v50
    %v52 = vlaneseq
    %v53 = vshrl.u32 %v52, 7
    %v54 = vsub.s32 %v51, %v53
    %v55 = vrot.slane %v22, %v54
    %v57 = vunpack.c.l.s4 1983009808
    %v58 = vunpack.c.0.s8 %v57
    %v59 = vlaneseq
    %v60 = vshrl.u32 %v59, 7
    %v61 = vsub.s32 %v58, %v60
    %v62 = vrot.slane %v48, %v61
    %v63 = vcombine.high %v55, %v55
    %v64 = vcombine.high %v62, %v62
    %v65 = vcombine.high %v23, %v23
    %v67 = vunpack.c.l.s4 1983009808
    %v68 = vunpack.c.0.s8 %v67
    %v69 = vlaneseq
    %v70 = vshrl.u32 %v69, 7
    %v71 = vsub.s32 %v68, %v70
    %v72 = vrot.slane %v23, %v71
    %v74 = vunpack.c.l.s4 1983009808
    %v75 = vunpack.c.0.s8 %v74
    %v76 = vlaneseq
    %v77 = vshrl.u32 %v76, 7
    %v78 = vsub.s32 %v75, %v77
    %v79 = vrot.slane %v65, %v78
    %v80 = vcombine.high %v72, %v72
    %v81 = vcombine.high %v79, %v79
    %v82 = vcombine.high %v24, %v24
    %v84 = vunpack.c.l.s4 1983009808
    %v85 = vunpack.c.0.s8 %v84
    %v86 = vlaneseq
    %v87 = vshrl.u32 %v86, 7
    %v88 = vsub.s32 %v85, %v87
    %v89 = vrot.slane %v24, %v88
    %v91 = vunpack.c.l.s4 1983009808
    %v92 = vunpack.c.0.s8 %v91
    %v93 = vlaneseq
    %v94 = vshrl.u32 %v93, 7
    %v95 = vsub.s32 %v92, %v94
    %v96 = vrot.slane %v82, %v95
    %v97 = vcombine.high %v89, %v89
    %v98 = vcombine.high %v96, %v96
    %v99 = vcombine.high %v25, %v25
    %v101 = vunpack.c.l.s4 1983009808
    %v102 = vunpack.c.0.s8 %v101
    %v103 = vlaneseq
    %v104 = vshrl.u32 %v103, 7
    %v105 = vsub.s32 %v102, %v104
    %v106 = vrot.slane %v25, %v105
    %v108 = vunpack.c.l.s4 1983009808
    %v109 = vunpack.c.0.s8 %v108
    %v110 = vlaneseq
    %v111 = vshrl.u32 %v110, 7
    %v112 = vsub.s32 %v109, %v111
    %v113 = vrot.slane %v99, %v112
    %v114 = vcombine.high %v106, %v106
    %v115 = vcombine.high %v113, %v113
    %v116 = vcombine.high %v26, %v26
    %v118 = vunpack.c.l.s4 1983009808
    %v119 = vunpack.c.0.s8 %v118
    %v120 = vlaneseq
    %v121 = vshrl.u32 %v120, 7
    %v122 = vsub.s32 %v119, %v121
    %v123 = vrot.slane %v26, %v122
    %v125 = vunpack.c.l.s4 1983009808
    %v126 = vunpack.c.0.s8 %v125
    %v127 = vlaneseq
    %v128 = vshrl.u32 %v127, 7
    %v129 = vsub.s32 %v126, %v128
    %v130 = vrot.slane %v116, %v129
    %v131 = vcombine.high %v123, %v123
    %v132 = vcombine.high %v130, %v130
    %v133 = vcombine.high %v27, %v27
    %v135 = vunpack.c.l.s4 1983009808
    %v136 = vunpack.c.0.s8 %v135
    %v137 = vlaneseq
    %v138 = vshrl.u32 %v137, 7
    %v139 = vsub.s32 %v136, %v138
    %v140 = vrot.slane %v27, %v139
    %v142 = vunpack.c.l.s4 1983009808
    %v143 = vunpack.c.0.s8 %v142
    %v144 = vlaneseq
    %v145 = vshrl.u32 %v144, 7
    %v146 = vsub.s32 %v143, %v145
    %v147 = vrot.slane %v133, %v146
    %v148 = vcombine.high %v140, %v140
    %v149 = vcombine.high %v147, %v147
    %v150 = vcombine.high %v28, %v28
    %v152 = vunpack.c.l.s4 1983009808
    %v153 = vunpack.c.0.s8 %v152
    %v154 = vlaneseq
    %v155 = vshrl.u32 %v154, 7
    %v156 = vsub.s32 %v153, %v155
    %v157 = vrot.slane %v28, %v156
    %v159 = vunpack.c.l.s4 1983009808
    %v160 = vunpack.c.0.s8 %v159
    %v161 = vlaneseq
    %v162 = vshrl.u32 %v161, 7
    %v163 = vsub.s32 %v160, %v162
    %v164 = vrot.slane %v150, %v163
    %v165 = vcombine.high %v157, %v157
    %v166 = vcombine.high %v164, %v164
    %v167 = vcombine.high %v29, %v29
    %v169 = vunpack.c.l.s4 1983009808
    %v170 = vunpack.c.0.s8 %v169
    %v171 = vlaneseq
    %v172 = vshrl.u32 %v171, 7
    %v173 = vsub.s32 %v170, %v172
    %v174 = vrot.slane %v29, %v173
    %v176 = vunpack.c.l.s4 1983009808
    %v177 = vunpack.c.0.s8 %v176
    %v178 = vlaneseq
    %v179 = vshrl.u32 %v178, 7
    %v180 = vsub.s32 %v177, %v179
    %v181 = vrot.slane %v167, %v180
    %v182 = vcombine.high %v174, %v174
    %v183 = vcombine.high %v181, %v181
    %v184 = vcombine.high %v30, %v30
    %v186 = vunpack.c.l.s4 1983009808
    %v187 = vunpack.c.0.s8 %v186
    %v188 = vlaneseq
    %v189 = vshrl.u32 %v188, 7
    %v190 = vsub.s32 %v187, %v189
    %v191 = vrot.slane %v30, %v190
    %v193 = vunpack.c.l.s4 1983009808
    %v194 = vunpack.c.0.s8 %v193
    %v195 = vlaneseq
    %v196 = vshrl.u32 %v195, 7
    %v197 = vsub.s32 %v194, %v196
    %v198 = vrot.slane %v184, %v197
    %v199 = vcombine.high %v191, %v191
    %v200 = vcombine.high %v198, %v198
    %v201 = vcombine.high %v31, %v31
    %v203 = vunpack.c.l.s4 1983009808
    %v204 = vunpack.c.0.s8 %v203
    %v205 = vlaneseq
    %v206 = vshrl.u32 %v205, 7
    %v207 = vsub.s32 %v204, %v206
    %v208 = vrot.slane %v31, %v207
    %v210 = vunpack.c.l.s4 1983009808
    %v211 = vunpack.c.0.s8 %v210
    %v212 = vlaneseq
    %v213 = vshrl.u32 %v212, 7
    %v214 = vsub.s32 %v211, %v213
    %v215 = vrot.slane %v201, %v214
    %v216 = vcombine.high %v208, %v208
    %v217 = vcombine.high %v215, %v215
    %v218 = vcombine.high %v32, %v32
    %v220 = vunpack.c.l.s4 1983009808
    %v221 = vunpack.c.0.s8 %v220
    %v222 = vlaneseq
    %v223 = vshrl.u32 %v222, 7
    %v224 = vsub.s32 %v221, %v223
    %v225 = vrot.slane %v32, %v224
    %v227 = vunpack.c.l.s4 1983009808
    %v228 = vunpack.c.0.s8 %v227
    %v229 = vlaneseq
    %v230 = vshrl.u32 %v229, 7
    %v231 = vsub.s32 %v228, %v230
    %v232 = vrot.slane %v218, %v231
    %v233 = vcombine.high %v225, %v225
    %v234 = vcombine.high %v232, %v232
    %v235 = vcombine.high %v33, %v33
    %v237 = vunpack.c.l.s4 1983009808
    %v238 = vunpack.c.0.s8 %v237
    %v239 = vlaneseq
    %v240 = vshrl.u32 %v239, 7
    %v241 = vsub.s32 %v238, %v240
    %v242 = vrot.slane %v33, %v241
    %v244 = vunpack.c.l.s4 1983009808
    %v245 = vunpack.c.0.s8 %v244
    %v246 = vlaneseq
    %v247 = vshrl.u32 %v246, 7
    %v248 = vsub.s32 %v245, %v247
    %v249 = vrot.slane %v235, %v248
    %v250 = vcombine.high %v242, %v242
    %v251 = vcombine.high %v249, %v249
    %v253 = vunpack.c.l.s4 1983009808
    %v254 = vunpack.c.0.s8 %v253
    %v255 = vlaneseq
    %v256 = vshrl.u32 %v255, 7
    %v257 = vsub.s32 %v254, %v256
    %v258 = vrot.slane %v34, %v257
    %v308 = vpack.c.bf16 %v55, %v55
    %v309 = vpack.c.bf16 %v63, %v63
    %v310 = vpack.c.bf16 %v62, %v62
    %v311 = vpack.c.bf16 %v64, %v64
    %v312 = vpack.c.bf16 %v72, %v72
    %v313 = vpack.c.bf16 %v80, %v80
    %v314 = vpack.c.bf16 %v79, %v79
    %v315 = vpack.c.bf16 %v81, %v81
    %v316 = vpack.c.bf16 %v89, %v89
    %v317 = vpack.c.bf16 %v97, %v97
    %v318 = vpack.c.bf16 %v96, %v96
    %v319 = vpack.c.bf16 %v98, %v98
    %v320 = vpack.c.bf16 %v106, %v106
    %v321 = vpack.c.bf16 %v114, %v114
    %v322 = vpack.c.bf16 %v113, %v113
    %v323 = vpack.c.bf16 %v115, %v115
    %v324 = vpack.c.bf16 %v123, %v123
    %v325 = vpack.c.bf16 %v131, %v131
    %v326 = vpack.c.bf16 %v130, %v130
    %v327 = vpack.c.bf16 %v132, %v132
    %v328 = vpack.c.bf16 %v140, %v140
    %v329 = vpack.c.bf16 %v148, %v148
    %v330 = vpack.c.bf16 %v147, %v147
    %v331 = vpack.c.bf16 %v149, %v149
    %v332 = vpack.c.bf16 %v157, %v157
    %v333 = vpack.c.bf16 %v165, %v165
    %v334 = vpack.c.bf16 %v164, %v164
    %v335 = vpack.c.bf16 %v166, %v166
    %v336 = vpack.c.bf16 %v174, %v174
    %v337 = vpack.c.bf16 %v182, %v182
    %v338 = vpack.c.bf16 %v181, %v181
    %v339 = vpack.c.bf16 %v183, %v183
    %v340 = vpack.c.bf16 %v191, %v191
    %v341 = vpack.c.bf16 %v199, %v199
    %v342 = vpack.c.bf16 %v198, %v198
    %v343 = vpack.c.bf16 %v200, %v200
    %v344 = vpack.c.bf16 %v208, %v208
    %v345 = vpack.c.bf16 %v216, %v216
    %v346 = vpack.c.bf16 %v215, %v215
    %v347 = vpack.c.bf16 %v217, %v217
    %v348 = vpack.c.bf16 %v225, %v225
    %v349 = vpack.c.bf16 %v233, %v233
    %v350 = vpack.c.bf16 %v232, %v232
    %v351 = vpack.c.bf16 %v234, %v234
    %v352 = vpack.c.bf16 %v242, %v242
    %v353 = vpack.c.bf16 %v250, %v250
    %v354 = vpack.c.bf16 %v249, %v249
    %v355 = vpack.c.bf16 %v251, %v251
    %v356 = vpack.c.bf16 %v258, %v258
    %v357 = vld [vmem:[%s1] sm:$0xf]
    %v358 = vld [vmem:[%s1 + $0x4] sm:$0xf]
    %v359 = vld [vmem:[%s1 + $0x8] sm:$0xf]
    %v360 = vld [vmem:[%s1 + $0xc] sm:$0xf]
    %v361 = vld [vmem:[%s1 + $0x10] sm:$0xf]
    %v362 = vld [vmem:[%s1 + $0x14] sm:$0xf]
    %v363 = vld [vmem:[%s1 + $0x18] sm:$0xf]
    %v364 = vld [vmem:[%s1 + $0x1c] sm:$0xf]
    %v365 = vld [vmem:[%s1 + $0x20] sm:$0xf]
    %v366 = vld [vmem:[%s1 + $0x24] sm:$0xf]
    %v367 = vld [vmem:[%s1 + $0x28] sm:$0xf]
    %v368 = vld [vmem:[%s1 + $0x2c] sm:$0xf]
    %v369 = vld [vmem:[%s1 + $0x30] sm:$0xf]
    %v370 = vld [vmem:[%s1 + $0x34] sm:$0xf]
    %v371 = vld [vmem:[%s1 + $0x38] sm:$0xf]
    %v372 = vld [vmem:[%s1 + $0x3c] sm:$0xf]
    %v373 = vld [vmem:[%s1 + $0x40] sm:$0xf]
    %v374 = vld [vmem:[%s1 + $0x44] sm:$0xf]
    %v375 = vld [vmem:[%s1 + $0x48] sm:$0xf]
    %v376 = vld [vmem:[%s1 + $0x4c] sm:$0xf]
    %v377 = vld [vmem:[%s1 + $0x50] sm:$0xf]
    %v378 = vld [vmem:[%s1 + $0x54] sm:$0xf]
    %v379 = vld [vmem:[%s1 + $0x58] sm:$0xf]
    %v380 = vld [vmem:[%s1 + $0x5c] sm:$0xf]
    %v381 = vld [vmem:[%s1 + $0x60] sm:$0xf]
    %v382 = vld [vmem:[%s1 + $0x64] sm:$0xf]
    %v383 = vld [vmem:[%s1 + $0x68] sm:$0xf]
    %v384 = vld [vmem:[%s1 + $0x6c] sm:$0xf]
    %v385 = vld [vmem:[%s1 + $0x70] sm:$0xf]
    %v386 = vld [vmem:[%s1 + $0x74] sm:$0xf]
    %v387 = vld [vmem:[%s1 + $0x78] sm:$0xf]
    %v388 = vld [vmem:[%s1 + $0x7c] sm:$0xf]
    %v389 = vld [vmem:[%s1 + $0x80] sm:$0xf]
    %v390 = vld [vmem:[%s1 + $0x84] sm:$0xf]
    %v391 = vld [vmem:[%s1 + $0x88] sm:$0xf]
    %v392 = vld [vmem:[%s1 + $0x8c] sm:$0xf]
    %v393 = vld [vmem:[%s1 + $0x90] sm:$0xf]
    %v394 = vld [vmem:[%s1 + $0x94] sm:$0xf]
    %v395 = vld [vmem:[%s1 + $0x98] sm:$0xf]
    %v396 = vld [vmem:[%s1 + $0x9c] sm:$0xf]
    %v397 = vld [vmem:[%s1 + $0xa0] sm:$0xf]
    %v398 = vld [vmem:[%s1 + $0xa4] sm:$0xf]
    %v399 = vld [vmem:[%s1 + $0xa8] sm:$0xf]
    %v400 = vld [vmem:[%s1 + $0xac] sm:$0xf]
    %v401 = vld [vmem:[%s1 + $0xb0] sm:$0xf]
    %v402 = vld [vmem:[%s1 + $0xb4] sm:$0xf]
    %v403 = vld [vmem:[%s1 + $0xb8] sm:$0xf]
    %v404 = vld [vmem:[%s1 + $0xbc] sm:$0xf]
    %v405 = vld [vmem:[%s1 + $0xc0] sm:$0xf]
    %v406 = vld [vmem:[%s1 + $0xc4] sm:$0xf]
    %v407 = vld [vmem:[%s1 + $0xc8] sm:$0xf]
    %v408 = vld [vmem:[%s1 + $0xcc] sm:$0xf]
    %v409 = vld [vmem:[%s1 + $0xd0] sm:$0xf]
    %v410 = vld [vmem:[%s1 + $0xd4] sm:$0xf]
    %v411 = vld [vmem:[%s1 + $0xd8] sm:$0xf]
    %v412 = vld [vmem:[%s1 + $0xdc] sm:$0xf]
    %v413 = vld [vmem:[%s1 + $0xe0] sm:$0xf]
    %v414 = vld [vmem:[%s1 + $0xe4] sm:$0xf]
    %v415 = vld [vmem:[%s1 + $0xe8] sm:$0xf]
    %v416 = vld [vmem:[%s1 + $0xec] sm:$0xf]
    %v417 = vld [vmem:[%s1 + $0xf0] sm:$0xf]
    %v418 = vld [vmem:[%s1 + $0xf4] sm:$0xf]
    %v419 = vld [vmem:[%s1 + $0xf8] sm:$0xf]
    %v420 = vld [vmem:[%s1 + $0xfc] sm:$0xf]
    %v421 = vld [vmem:[%s1 + $0x100] sm:$0xf]
    %v422 = vld [vmem:[%s1 + $0x104] sm:$0xf]
    %v423 = vld [vmem:[%s1 + $0x108] sm:$0xf]
    %v424 = vld [vmem:[%s1 + $0x10c] sm:$0xf]
    %v425 = vld [vmem:[%s1 + $0x110] sm:$0xf]
    %v426 = vld [vmem:[%s1 + $0x114] sm:$0xf]
    %v427 = vld [vmem:[%s1 + $0x118] sm:$0xf]
    %v428 = vld [vmem:[%s1 + $0x11c] sm:$0xf]
    %v429 = vld [vmem:[%s1 + $0x120] sm:$0xf]
    %v430 = vld [vmem:[%s1 + $0x124] sm:$0xf]
    %v431 = vld [vmem:[%s1 + $0x128] sm:$0xf]
    %v432 = vld [vmem:[%s1 + $0x12c] sm:$0xf]
    %v433 = vld [vmem:[%s1 + $0x130] sm:$0xf]
    %v434 = vld [vmem:[%s1 + $0x134] sm:$0xf]
    %v435 = vld [vmem:[%s1 + $0x138] sm:$0xf]
    %v436 = vld [vmem:[%s1 + $0x13c] sm:$0xf]
    %v437 = vld [vmem:[%s1 + $0x140] sm:$0xf]
    %v438 = vld [vmem:[%s1 + $0x144] sm:$0xf]
    %v439 = vld [vmem:[%s1 + $0x148] sm:$0xf]
    %v440 = vld [vmem:[%s1 + $0x14c] sm:$0xf]
    %v441 = vld [vmem:[%s1 + $0x150] sm:$0xf]
    %v442 = vld [vmem:[%s1 + $0x154] sm:$0xf]
    %v443 = vld [vmem:[%s1 + $0x158] sm:$0xf]
    %v444 = vld [vmem:[%s1 + $0x15c] sm:$0xf]
    %v445 = vld [vmem:[%s1 + $0x160] sm:$0xf]
    %v446 = vld [vmem:[%s1 + $0x164] sm:$0xf]
    %v447 = vld [vmem:[%s1 + $0x168] sm:$0xf]
    %v448 = vld [vmem:[%s1 + $0x16c] sm:$0xf]
    %v449 = vld [vmem:[%s1 + $0x170] sm:$0xf]
    %v450 = vld [vmem:[%s1 + $0x174] sm:$0xf]
    %v451 = vld [vmem:[%s1 + $0x178] sm:$0xf]
    %v452 = vld [vmem:[%s1 + $0x17c] sm:$0xf]
    %v453 = vld [vmem:[%s1 + $0x180] sm:$0xf]
    %v454 = vld [vmem:[%s1 + $0x184] sm:$0xf]
    %v455 = vld [vmem:[%s1 + $0x188] sm:$0xf]
    %v456 = vld [vmem:[%s1 + $0x18c] sm:$0xf]
    %v457 = vld [vmem:[%s1 + $0x190] sm:$0xf]
    %v458 = vld [vmem:[%s1 + $0x194] sm:$0xf]
    %v459 = vld [vmem:[%s1 + $0x198] sm:$0xf]
    %v460 = vld [vmem:[%s1 + $0x19c] sm:$0xf]
    %v461 = vld [vmem:[%s1 + $0x1a0] sm:$0xf]
    %v462 = vld [vmem:[%s1 + $0x1a4] sm:$0xf]
    %v463 = vld [vmem:[%s1 + $0x1a8] sm:$0xf]
    %v464 = vld [vmem:[%s1 + $0x1ac] sm:$0xf]
    %v465 = vld [vmem:[%s1 + $0x1b0] sm:$0xf]
    %v466 = vld [vmem:[%s1 + $0x1b4] sm:$0xf]
    %v467 = vld [vmem:[%s1 + $0x1b8] sm:$0xf]
    %v468 = vld [vmem:[%s1 + $0x1bc] sm:$0xf]
    %v469 = vld [vmem:[%s1 + $0x1c0] sm:$0xf]
    %v470 = vld [vmem:[%s1 + $0x1c4] sm:$0xf]
    %v471 = vld [vmem:[%s1 + $0x1c8] sm:$0xf]
    %v472 = vld [vmem:[%s1 + $0x1cc] sm:$0xf]
    %v473 = vld [vmem:[%s1 + $0x1d0] sm:$0xf]
    %v474 = vld [vmem:[%s1 + $0x1d4] sm:$0xf]
    %v475 = vld [vmem:[%s1 + $0x1d8] sm:$0xf]
    %v476 = vld [vmem:[%s1 + $0x1dc] sm:$0xf]
    %v477 = vld [vmem:[%s1 + $0x1e0] sm:$0xf]
    %v478 = vld [vmem:[%s1 + $0x1e4] sm:$0xf]
    %v479 = vld [vmem:[%s1 + $0x1e8] sm:$0xf]
    %v480 = vld [vmem:[%s1 + $0x1ec] sm:$0xf]
    %v481 = vld [vmem:[%s1 + $0x1f0] sm:$0xf]
    %v482 = vld [vmem:[%s1 + $0x1f4] sm:$0xf]
    %v483 = vld [vmem:[%s1 + $0x1f8] sm:$0xf]
    %v484 = vld [vmem:[%s1 + $0x1fc] sm:$0xf]
    %v485 = vld [vmem:[%s1 + $0x200] sm:$0xf]
    %v486 = vld [vmem:[%s1 + $0x204] sm:$0xf]
    %v487 = vld [vmem:[%s1 + $0x208] sm:$0xf]
    %v488 = vld [vmem:[%s1 + $0x20c] sm:$0xf]
    %v489 = vld [vmem:[%s1 + $0x210] sm:$0xf]
    %v490 = vld [vmem:[%s1 + $0x214] sm:$0xf]
    %v491 = vld [vmem:[%s1 + $0x218] sm:$0xf]
    %v492 = vld [vmem:[%s1 + $0x21c] sm:$0xf]
    %v493 = vld [vmem:[%s1 + $0x220] sm:$0xf]
    %v494 = vld [vmem:[%s1 + $0x224] sm:$0xf]
    %v495 = vld [vmem:[%s1 + $0x228] sm:$0xf]
    %v496 = vld [vmem:[%s1 + $0x22c] sm:$0xf]
    %v497 = vld [vmem:[%s1 + $0x230] sm:$0xf]
    %v498 = vld [vmem:[%s1 + $0x234] sm:$0xf]
    %v499 = vld [vmem:[%s1 + $0x238] sm:$0xf]
    %v500 = vld [vmem:[%s1 + $0x23c] sm:$0xf]
    %v501 = vld [vmem:[%s1 + $0x240] sm:$0xf]
    %v502 = vld [vmem:[%s1 + $0x244] sm:$0xf]
    %v503 = vld [vmem:[%s1 + $0x248] sm:$0xf]
    %v504 = vld [vmem:[%s1 + $0x24c] sm:$0xf]
    %v505 = vld [vmem:[%s1 + $0x250] sm:$0xf]
    %v506 = vld [vmem:[%s1 + $0x254] sm:$0xf]
    %v507 = vld [vmem:[%s1 + $0x258] sm:$0xf]
    %v508 = vld [vmem:[%s1 + $0x25c] sm:$0xf]
    %v509 = vld [vmem:[%s1 + $0x260] sm:$0xf]
    %v510 = vld [vmem:[%s1 + $0x264] sm:$0xf]
    %v511 = vld [vmem:[%s1 + $0x268] sm:$0xf]
    %v512 = vld [vmem:[%s1 + $0x26c] sm:$0xf]
    %v513 = vld [vmem:[%s1 + $0x270] sm:$0xf]
    %v514 = vld [vmem:[%s1 + $0x274] sm:$0xf]
    %v515 = vld [vmem:[%s1 + $0x278] sm:$0xf]
    %v516 = vld [vmem:[%s1 + $0x27c] sm:$0xf]
    %v517 = vld [vmem:[%s1 + $0x280] sm:$0xf]
    %v518 = vld [vmem:[%s1 + $0x284] sm:$0xf]
    %v519 = vld [vmem:[%s1 + $0x288] sm:$0xf]
    %v520 = vld [vmem:[%s1 + $0x28c] sm:$0xf]
    %v521 = vld [vmem:[%s1 + $0x290] sm:$0xf]
    %v522 = vld [vmem:[%s1 + $0x294] sm:$0xf]
    %v523 = vld [vmem:[%s1 + $0x298] sm:$0xf]
    %v524 = vld [vmem:[%s1 + $0x29c] sm:$0xf]
    %v525 = vld [vmem:[%s1 + $0x2a0] sm:$0xf]
    %v526 = vld [vmem:[%s1 + $0x2a4] sm:$0xf]
    %v527 = vld [vmem:[%s1 + $0x2a8] sm:$0xf]
    %v528 = vld [vmem:[%s1 + $0x2ac] sm:$0xf]
    %v529 = vld [vmem:[%s1 + $0x2b0] sm:$0xf]
    %v530 = vld [vmem:[%s1 + $0x2b4] sm:$0xf]
    %v531 = vld [vmem:[%s1 + $0x2b8] sm:$0xf]
    %v532 = vld [vmem:[%s1 + $0x2bc] sm:$0xf]
    %v533 = vld [vmem:[%s1 + $0x2c0] sm:$0xf]
    %v534 = vld [vmem:[%s1 + $0x2c4] sm:$0xf]
    %v535 = vld [vmem:[%s1 + $0x2c8] sm:$0xf]
    %v536 = vld [vmem:[%s1 + $0x2cc] sm:$0xf]
    %v537 = vld [vmem:[%s1 + $0x2d0] sm:$0xf]
    %v538 = vld [vmem:[%s1 + $0x2d4] sm:$0xf]
    %v539 = vld [vmem:[%s1 + $0x2d8] sm:$0xf]
    %v540 = vld [vmem:[%s1 + $0x2dc] sm:$0xf]
    %v541 = vld [vmem:[%s1 + $0x2e0] sm:$0xf]
    %v542 = vld [vmem:[%s1 + $0x2e4] sm:$0xf]
    %v543 = vld [vmem:[%s1 + $0x2e8] sm:$0xf]
    %v544 = vld [vmem:[%s1 + $0x2ec] sm:$0xf]
    %v545 = vld [vmem:[%s1 + $0x2f0] sm:$0xf]
    %v546 = vld [vmem:[%s1 + $0x2f4] sm:$0xf]
    %v547 = vld [vmem:[%s1 + $0x2f8] sm:$0xf]
    %v548 = vld [vmem:[%s1 + $0x2fc] sm:$0xf]
    %v549 = vld [vmem:[%s1 + $0x300] sm:$0xf]
    %v550 = vld [vmem:[%s1 + $0x304] sm:$0xf]
    %v551 = vld [vmem:[%s1 + $0x308] sm:$0xf]
    %v552 = vld [vmem:[%s1 + $0x30c] sm:$0xf]
    %v553 = vld [vmem:[%s1 + $0x310] sm:$0xf]
    %v554 = vld [vmem:[%s1 + $0x314] sm:$0xf]
    %v555 = vld [vmem:[%s1 + $0x318] sm:$0xf]
    %v556 = vld [vmem:[%s1 + $0x31c] sm:$0xf]
    %v557 = vld [vmem:[%s1 + $0x320] sm:$0xf]
    %v558 = vld [vmem:[%s1 + $0x324] sm:$0xf]
    %v559 = vld [vmem:[%s1 + $0x328] sm:$0xf]
    %v560 = vld [vmem:[%s1 + $0x32c] sm:$0xf]
    %v561 = vld [vmem:[%s1 + $0x330] sm:$0xf]
    %v562 = vld [vmem:[%s1 + $0x334] sm:$0xf]
    %v563 = vld [vmem:[%s1 + $0x338] sm:$0xf]
    %v564 = vld [vmem:[%s1 + $0x33c] sm:$0xf]
    %v565 = vld [vmem:[%s1 + $0x340] sm:$0xf]
    %v566 = vld [vmem:[%s1 + $0x344] sm:$0xf]
    %v567 = vld [vmem:[%s1 + $0x348] sm:$0xf]
    %v568 = vld [vmem:[%s1 + $0x34c] sm:$0xf]
    %v569 = vld [vmem:[%s1 + $0x350] sm:$0xf]
    %v570 = vld [vmem:[%s1 + $0x354] sm:$0xf]
    %v571 = vld [vmem:[%s1 + $0x358] sm:$0xf]
    %v572 = vld [vmem:[%s1 + $0x35c] sm:$0xf]
    %v573 = vld [vmem:[%s1 + $0x360] sm:$0xf]
    %v574 = vld [vmem:[%s1 + $0x364] sm:$0xf]
    %v575 = vld [vmem:[%s1 + $0x368] sm:$0xf]
    %v576 = vld [vmem:[%s1 + $0x36c] sm:$0xf]
    %v577 = vld [vmem:[%s1 + $0x370] sm:$0xf]
    %v578 = vld [vmem:[%s1 + $0x374] sm:$0xf]
    %v579 = vld [vmem:[%s1 + $0x378] sm:$0xf]
    %v580 = vld [vmem:[%s1 + $0x37c] sm:$0xf]
    %v581 = vld [vmem:[%s1 + $0x380] sm:$0xf]
    %v582 = vld [vmem:[%s1 + $0x384] sm:$0xf]
    %v583 = vld [vmem:[%s1 + $0x388] sm:$0xf]
    %v584 = vld [vmem:[%s1 + $0x38c] sm:$0xf]
    %v585 = vld [vmem:[%s1 + $0x390] sm:$0xf]
    %v586 = vld [vmem:[%s1 + $0x394] sm:$0xf]
    %v587 = vld [vmem:[%s1 + $0x398] sm:$0xf]
    %v588 = vld [vmem:[%s1 + $0x39c] sm:$0xf]
    %v589 = vld [vmem:[%s1 + $0x3a0] sm:$0xf]
    %v590 = vld [vmem:[%s1 + $0x3a4] sm:$0xf]
    %v591 = vld [vmem:[%s1 + $0x3a8] sm:$0xf]
    %v592 = vld [vmem:[%s1 + $0x3ac] sm:$0xf]
    %v593 = vld [vmem:[%s1 + $0x3b0] sm:$0xf]
    %v594 = vld [vmem:[%s1 + $0x3b4] sm:$0xf]
    %v595 = vld [vmem:[%s1 + $0x3b8] sm:$0xf]
    %v596 = vld [vmem:[%s1 + $0x3bc] sm:$0xf]
    %v597 = vld [vmem:[%s1 + $0x3c0] sm:$0xf]
    %v598 = vld [vmem:[%s1 + $0x3c4] sm:$0xf]
    %v599 = vld [vmem:[%s1 + $0x3c8] sm:$0xf]
    %v600 = vld [vmem:[%s1 + $0x3cc] sm:$0xf]
    %v601 = vld [vmem:[%s1 + $0x3d0] sm:$0xf]
    %v602 = vld [vmem:[%s1 + $0x3d4] sm:$0xf]
    %v603 = vld [vmem:[%s1 + $0x3d8] sm:$0xf]
    %v604 = vld [vmem:[%s1 + $0x3dc] sm:$0xf]
    %v605 = vld [vmem:[%s1 + $0x3e0] sm:$0xf]
    %v606 = vld [vmem:[%s1 + $0x3e4] sm:$0xf]
    %v607 = vld [vmem:[%s1 + $0x3e8] sm:$0xf]
    %v608 = vld [vmem:[%s1 + $0x3ec] sm:$0xf]
    %v609 = vld [vmem:[%s1 + $0x3f0] sm:$0xf]
    %v610 = vld [vmem:[%s1 + $0x3f4] sm:$0xf]
    %v611 = vld [vmem:[%s1 + $0x3f8] sm:$0xf]
    %v612 = vld [vmem:[%s1 + $0x3fc] sm:$0xf]
    %v613 = vld [vmem:[%s1 + $0x400] sm:$0xf]
    %v614 = vld [vmem:[%s1 + $0x404] sm:$0xf]
    %v615 = vld [vmem:[%s1 + $0x408] sm:$0xf]
    %v616 = vld [vmem:[%s1 + $0x40c] sm:$0xf]
    %v617 = vld [vmem:[%s1 + $0x410] sm:$0xf]
    %v618 = vld [vmem:[%s1 + $0x414] sm:$0xf]
    %v619 = vld [vmem:[%s1 + $0x418] sm:$0xf]
    %v620 = vld [vmem:[%s1 + $0x41c] sm:$0xf]
    %v621 = vld [vmem:[%s1 + $0x420] sm:$0xf]
    %v622 = vld [vmem:[%s1 + $0x424] sm:$0xf]
    %v623 = vld [vmem:[%s1 + $0x428] sm:$0xf]
    %v624 = vld [vmem:[%s1 + $0x42c] sm:$0xf]
    %v625 = vld [vmem:[%s1 + $0x430] sm:$0xf]
    %v626 = vld [vmem:[%s1 + $0x434] sm:$0xf]
    %v627 = vld [vmem:[%s1 + $0x438] sm:$0xf]
    %v628 = vld [vmem:[%s1 + $0x43c] sm:$0xf]
    %v629 = vld [vmem:[%s1 + $0x440] sm:$0xf]
    %v630 = vld [vmem:[%s1 + $0x444] sm:$0xf]
    %v631 = vld [vmem:[%s1 + $0x448] sm:$0xf]
    %v632 = vld [vmem:[%s1 + $0x44c] sm:$0xf]
    %v633 = vld [vmem:[%s1 + $0x450] sm:$0xf]
    %v634 = vld [vmem:[%s1 + $0x454] sm:$0xf]
    %v635 = vld [vmem:[%s1 + $0x458] sm:$0xf]
    %v636 = vld [vmem:[%s1 + $0x45c] sm:$0xf]
    %v637 = vld [vmem:[%s1 + $0x460] sm:$0xf]
    %v638 = vld [vmem:[%s1 + $0x464] sm:$0xf]
    %v639 = vld [vmem:[%s1 + $0x468] sm:$0xf]
    %v640 = vld [vmem:[%s1 + $0x46c] sm:$0xf]
    %v641 = vld [vmem:[%s1 + $0x470] sm:$0xf]
    %v642 = vld [vmem:[%s1 + $0x474] sm:$0xf]
    %v643 = vld [vmem:[%s1 + $0x478] sm:$0xf]
    %v644 = vld [vmem:[%s1 + $0x47c] sm:$0xf]
    %v645 = vld [vmem:[%s1 + $0x480] sm:$0xf]
    %v646 = vld [vmem:[%s1 + $0x484] sm:$0xf]
    %v647 = vld [vmem:[%s1 + $0x488] sm:$0xf]
    %v648 = vld [vmem:[%s1 + $0x48c] sm:$0xf]
    %v649 = vld [vmem:[%s1 + $0x490] sm:$0xf]
    %v650 = vld [vmem:[%s1 + $0x494] sm:$0xf]
    %v651 = vld [vmem:[%s1 + $0x498] sm:$0xf]
    %v652 = vld [vmem:[%s1 + $0x49c] sm:$0xf]
    %v653 = vld [vmem:[%s1 + $0x4a0] sm:$0xf]
    %v654 = vld [vmem:[%s1 + $0x4a4] sm:$0xf]
    %v655 = vld [vmem:[%s1 + $0x4a8] sm:$0xf]
    %v656 = vld [vmem:[%s1 + $0x4ac] sm:$0xf]
    %v657 = vld [vmem:[%s1 + $0x4b0] sm:$0xf]
    %v658 = vld [vmem:[%s1 + $0x4b4] sm:$0xf]
    %v659 = vld [vmem:[%s1 + $0x4b8] sm:$0xf]
    %v660 = vld [vmem:[%s1 + $0x4bc] sm:$0xf]
    %v661 = vld [vmem:[%s1 + $0x4c0] sm:$0xf]
    %v662 = vld [vmem:[%s1 + $0x4c4] sm:$0xf]
    %v663 = vld [vmem:[%s1 + $0x4c8] sm:$0xf]
    %v664 = vld [vmem:[%s1 + $0x4cc] sm:$0xf]
    %v665 = vld [vmem:[%s1 + $0x4d0] sm:$0xf]
    %v666 = vld [vmem:[%s1 + $0x4d4] sm:$0xf]
    %v667 = vld [vmem:[%s1 + $0x4d8] sm:$0xf]
    %v668 = vld [vmem:[%s1 + $0x4dc] sm:$0xf]
    %v669 = vld [vmem:[%s1 + $0x4e0] sm:$0xf]
    %v670 = vld [vmem:[%s1 + $0x4e4] sm:$0xf]
    %v671 = vld [vmem:[%s1 + $0x4e8] sm:$0xf]
    %v672 = vld [vmem:[%s1 + $0x4ec] sm:$0xf]
    %v673 = vld [vmem:[%s1 + $0x4f0] sm:$0xf]
    %v674 = vld [vmem:[%s1 + $0x4f4] sm:$0xf]
    %v675 = vld [vmem:[%s1 + $0x4f8] sm:$0xf]
    %v676 = vld [vmem:[%s1 + $0x4fc] sm:$0xf]
    %v677 = vld [vmem:[%s1 + $0x500] sm:$0xf]
    %v678 = vld [vmem:[%s1 + $0x504] sm:$0xf]
    %v679 = vld [vmem:[%s1 + $0x508] sm:$0xf]
    %v680 = vld [vmem:[%s1 + $0x50c] sm:$0xf]
    %v681 = vld [vmem:[%s1 + $0x510] sm:$0xf]
    %v682 = vld [vmem:[%s1 + $0x514] sm:$0xf]
    %v683 = vld [vmem:[%s1 + $0x518] sm:$0xf]
    %v684 = vld [vmem:[%s1 + $0x51c] sm:$0xf]
    %v685 = vld [vmem:[%s1 + $0x520] sm:$0xf]
    %v686 = vld [vmem:[%s1 + $0x524] sm:$0xf]
    %v687 = vld [vmem:[%s1 + $0x528] sm:$0xf]
    %v688 = vld [vmem:[%s1 + $0x52c] sm:$0xf]
    %v689 = vld [vmem:[%s1 + $0x530] sm:$0xf]
    %v690 = vld [vmem:[%s1 + $0x534] sm:$0xf]
    %v691 = vld [vmem:[%s1 + $0x538] sm:$0xf]
    %v692 = vld [vmem:[%s1 + $0x53c] sm:$0xf]
    %v693 = vld [vmem:[%s1 + $0x540] sm:$0xf]
    %v694 = vld [vmem:[%s1 + $0x544] sm:$0xf]
    %v695 = vld [vmem:[%s1 + $0x548] sm:$0xf]
    %v696 = vld [vmem:[%s1 + $0x54c] sm:$0xf]
    %v697 = vld [vmem:[%s1 + $0x550] sm:$0xf]
    %v698 = vld [vmem:[%s1 + $0x554] sm:$0xf]
    %v699 = vld [vmem:[%s1 + $0x558] sm:$0xf]
    %v700 = vld [vmem:[%s1 + $0x55c] sm:$0xf]
    %v701 = vld [vmem:[%s1 + $0x560] sm:$0xf]
    %v702 = vld [vmem:[%s1 + $0x564] sm:$0xf]
    %v703 = vld [vmem:[%s1 + $0x568] sm:$0xf]
    %v704 = vld [vmem:[%s1 + $0x56c] sm:$0xf]
    %v705 = vld [vmem:[%s1 + $0x570] sm:$0xf]
    %v706 = vld [vmem:[%s1 + $0x574] sm:$0xf]
    %v707 = vld [vmem:[%s1 + $0x578] sm:$0xf]
    %v708 = vld [vmem:[%s1 + $0x57c] sm:$0xf]
    %v709 = vld [vmem:[%s1 + $0x580] sm:$0xf]
    %v710 = vld [vmem:[%s1 + $0x584] sm:$0xf]
    %v711 = vld [vmem:[%s1 + $0x588] sm:$0xf]
    %v712 = vld [vmem:[%s1 + $0x58c] sm:$0xf]
    %v713 = vld [vmem:[%s1 + $0x590] sm:$0xf]
    %v714 = vld [vmem:[%s1 + $0x594] sm:$0xf]
    %v715 = vld [vmem:[%s1 + $0x598] sm:$0xf]
    %v716 = vld [vmem:[%s1 + $0x59c] sm:$0xf]
    %v717 = vld [vmem:[%s1 + $0x5a0] sm:$0xf]
    %v718 = vld [vmem:[%s1 + $0x5a4] sm:$0xf]
    %v719 = vld [vmem:[%s1 + $0x5a8] sm:$0xf]
    %v720 = vld [vmem:[%s1 + $0x5ac] sm:$0xf]
    %v721 = vld [vmem:[%s1 + $0x5b0] sm:$0xf]
    %v722 = vld [vmem:[%s1 + $0x5b4] sm:$0xf]
    %v723 = vld [vmem:[%s1 + $0x5b8] sm:$0xf]
    %v724 = vld [vmem:[%s1 + $0x5bc] sm:$0xf]
    %v725 = vld [vmem:[%s1 + $0x5c0] sm:$0xf]
    %v726 = vld [vmem:[%s1 + $0x5c4] sm:$0xf]
    %v727 = vld [vmem:[%s1 + $0x5c8] sm:$0xf]
    %v728 = vld [vmem:[%s1 + $0x5cc] sm:$0xf]
    %v729 = vld [vmem:[%s1 + $0x5d0] sm:$0xf]
    %v730 = vld [vmem:[%s1 + $0x5d4] sm:$0xf]
    %v731 = vld [vmem:[%s1 + $0x5d8] sm:$0xf]
    %v732 = vld [vmem:[%s1 + $0x5dc] sm:$0xf]
    %v733 = vld [vmem:[%s1 + $0x5e0] sm:$0xf]
    %v734 = vld [vmem:[%s1 + $0x5e4] sm:$0xf]
    %v735 = vld [vmem:[%s1 + $0x5e8] sm:$0xf]
    %v736 = vld [vmem:[%s1 + $0x5ec] sm:$0xf]
    %v737 = vld [vmem:[%s1 + $0x5f0] sm:$0xf]
    %v738 = vld [vmem:[%s1 + $0x5f4] sm:$0xf]
    %v739 = vld [vmem:[%s1 + $0x5f8] sm:$0xf]
    %v740 = vld [vmem:[%s1 + $0x5fc] sm:$0xf]
    %v741 = vld [vmem:[%s1 + $0x600] sm:$0xf]
    %v742 = vld [vmem:[%s1 + $0x604] sm:$0xf]
    %v743 = vld [vmem:[%s1 + $0x608] sm:$0xf]
    %v744 = vld [vmem:[%s1 + $0x60c] sm:$0xf]
    %v745 = vld [vmem:[%s1 + $0x610] sm:$0xf]
    %v746 = vld [vmem:[%s1 + $0x614] sm:$0xf]
    %v747 = vld [vmem:[%s1 + $0x618] sm:$0xf]
    %v748 = vld [vmem:[%s1 + $0x61c] sm:$0xf]
    %v749 = vld [vmem:[%s1 + $0x620] sm:$0xf]
    %v750 = vld [vmem:[%s1 + $0x624] sm:$0xf]
    %v751 = vld [vmem:[%s1 + $0x628] sm:$0xf]
    %v752 = vld [vmem:[%s1 + $0x62c] sm:$0xf]
    %v753 = vld [vmem:[%s1 + $0x630] sm:$0xf]
    %v754 = vld [vmem:[%s1 + $0x634] sm:$0xf]
    %v755 = vld [vmem:[%s1 + $0x638] sm:$0xf]
    %v756 = vld [vmem:[%s1 + $0x63c] sm:$0xf]
    %v757 = vld [vmem:[%s1 + $0x640] sm:$0xf]
    %v758 = vld [vmem:[%s1 + $0x644] sm:$0xf]
    %v759 = vld [vmem:[%s1 + $0x648] sm:$0xf]
    %v760 = vld [vmem:[%s1 + $0x64c] sm:$0xf]
    %v761 = vld [vmem:[%s1 + $0x650] sm:$0xf]
    %v762 = vld [vmem:[%s1 + $0x654] sm:$0xf]
    %v763 = vld [vmem:[%s1 + $0x658] sm:$0xf]
    %v764 = vld [vmem:[%s1 + $0x65c] sm:$0xf]
    %v765 = vld [vmem:[%s1 + $0x660] sm:$0xf]
    %v766 = vld [vmem:[%s1 + $0x664] sm:$0xf]
    %v767 = vld [vmem:[%s1 + $0x668] sm:$0xf]
    %v768 = vld [vmem:[%s1 + $0x66c] sm:$0xf]
    %v769 = vld [vmem:[%s1 + $0x670] sm:$0xf]
    %v770 = vld [vmem:[%s1 + $0x674] sm:$0xf]
    %v771 = vld [vmem:[%s1 + $0x678] sm:$0xf]
    %v772 = vld [vmem:[%s1 + $0x67c] sm:$0xf]
    %v773 = vld [vmem:[%s1 + $0x680] sm:$0xf]
    %v774 = vld [vmem:[%s1 + $0x684] sm:$0xf]
    %v775 = vld [vmem:[%s1 + $0x688] sm:$0xf]
    %v776 = vld [vmem:[%s1 + $0x68c] sm:$0xf]
    %v777 = vld [vmem:[%s1 + $0x690] sm:$0xf]
    %v778 = vld [vmem:[%s1 + $0x694] sm:$0xf]
    %v779 = vld [vmem:[%s1 + $0x698] sm:$0xf]
    %v780 = vld [vmem:[%s1 + $0x69c] sm:$0xf]
    %v781 = vld [vmem:[%s1 + $0x6a0] sm:$0xf]
    %v782 = vld [vmem:[%s1 + $0x6a4] sm:$0xf]
    %v783 = vld [vmem:[%s1 + $0x6a8] sm:$0xf]
    %v784 = vld [vmem:[%s1 + $0x6ac] sm:$0xf]
    %v785 = vld [vmem:[%s1 + $0x6b0] sm:$0xf]
    %v786 = vld [vmem:[%s1 + $0x6b4] sm:$0xf]
    %v787 = vld [vmem:[%s1 + $0x6b8] sm:$0xf]
    %v788 = vld [vmem:[%s1 + $0x6bc] sm:$0xf]
    %v789 = vld [vmem:[%s1 + $0x6c0] sm:$0xf]
    %v790 = vld [vmem:[%s1 + $0x6c4] sm:$0xf]
    %v791 = vld [vmem:[%s1 + $0x6c8] sm:$0xf]
    %v792 = vld [vmem:[%s1 + $0x6cc] sm:$0xf]
    %v793 = vld [vmem:[%s1 + $0x6d0] sm:$0xf]
    %v794 = vld [vmem:[%s1 + $0x6d4] sm:$0xf]
    %v795 = vld [vmem:[%s1 + $0x6d8] sm:$0xf]
    %v796 = vld [vmem:[%s1 + $0x6dc] sm:$0xf]
    %v797 = vld [vmem:[%s1 + $0x6e0] sm:$0xf]
    %v798 = vld [vmem:[%s1 + $0x6e4] sm:$0xf]
    %v799 = vld [vmem:[%s1 + $0x6e8] sm:$0xf]
    %v800 = vld [vmem:[%s1 + $0x6ec] sm:$0xf]
    %v801 = vld [vmem:[%s1 + $0x6f0] sm:$0xf]
    %v802 = vld [vmem:[%s1 + $0x6f4] sm:$0xf]
    %v803 = vld [vmem:[%s1 + $0x6f8] sm:$0xf]
    %v804 = vld [vmem:[%s1 + $0x6fc] sm:$0xf]
    %v805 = vld [vmem:[%s1 + $0x700] sm:$0xf]
    %v806 = vld [vmem:[%s1 + $0x704] sm:$0xf]
    %v807 = vld [vmem:[%s1 + $0x708] sm:$0xf]
    %v808 = vld [vmem:[%s1 + $0x70c] sm:$0xf]
    %v809 = vld [vmem:[%s1 + $0x710] sm:$0xf]
    %v810 = vld [vmem:[%s1 + $0x714] sm:$0xf]
    %v811 = vld [vmem:[%s1 + $0x718] sm:$0xf]
    %v812 = vld [vmem:[%s1 + $0x71c] sm:$0xf]
    %v813 = vld [vmem:[%s1 + $0x720] sm:$0xf]
    %v814 = vld [vmem:[%s1 + $0x724] sm:$0xf]
    %v815 = vld [vmem:[%s1 + $0x728] sm:$0xf]
    %v816 = vld [vmem:[%s1 + $0x72c] sm:$0xf]
    %v817 = vld [vmem:[%s1 + $0x730] sm:$0xf]
    %v818 = vld [vmem:[%s1 + $0x734] sm:$0xf]
    %v819 = vld [vmem:[%s1 + $0x738] sm:$0xf]
    %v820 = vld [vmem:[%s1 + $0x73c] sm:$0xf]
    %v821 = vld [vmem:[%s1 + $0x740] sm:$0xf]
    %v822 = vld [vmem:[%s1 + $0x744] sm:$0xf]
    %v823 = vld [vmem:[%s1 + $0x748] sm:$0xf]
    %v824 = vld [vmem:[%s1 + $0x74c] sm:$0xf]
    %v825 = vld [vmem:[%s1 + $0x750] sm:$0xf]
    %v826 = vld [vmem:[%s1 + $0x754] sm:$0xf]
    %v827 = vld [vmem:[%s1 + $0x758] sm:$0xf]
    %v828 = vld [vmem:[%s1 + $0x75c] sm:$0xf]
    %v829 = vld [vmem:[%s1 + $0x760] sm:$0xf]
    %v830 = vld [vmem:[%s1 + $0x764] sm:$0xf]
    %v831 = vld [vmem:[%s1 + $0x768] sm:$0xf]
    %v832 = vld [vmem:[%s1 + $0x76c] sm:$0xf]
    %v833 = vld [vmem:[%s1 + $0x770] sm:$0xf]
    %v834 = vld [vmem:[%s1 + $0x774] sm:$0xf]
    %v835 = vld [vmem:[%s1 + $0x778] sm:$0xf]
    %v836 = vld [vmem:[%s1 + $0x77c] sm:$0xf]
    %v837 = vld [vmem:[%s1 + $0x780] sm:$0xf]
    %v838 = vld [vmem:[%s1 + $0x784] sm:$0xf]
    %v839 = vld [vmem:[%s1 + $0x788] sm:$0xf]
    %v840 = vld [vmem:[%s1 + $0x78c] sm:$0xf]
    %v841 = vld [vmem:[%s1 + $0x790] sm:$0xf]
    %v842 = vld [vmem:[%s1 + $0x794] sm:$0xf]
    %v843 = vld [vmem:[%s1 + $0x798] sm:$0xf]
    %v844 = vld [vmem:[%s1 + $0x79c] sm:$0xf]
    %v845 = vld [vmem:[%s1 + $0x7a0] sm:$0xf]
    %v846 = vld [vmem:[%s1 + $0x7a4] sm:$0xf]
    %v847 = vld [vmem:[%s1 + $0x7a8] sm:$0xf]
    %v848 = vld [vmem:[%s1 + $0x7ac] sm:$0xf]
    %v849 = vld [vmem:[%s1 + $0x7b0] sm:$0xf]
    %v850 = vld [vmem:[%s1 + $0x7b4] sm:$0xf]
    %v851 = vld [vmem:[%s1 + $0x7b8] sm:$0xf]
    %v852 = vld [vmem:[%s1 + $0x7bc] sm:$0xf]
    %v853 = vld [vmem:[%s1 + $0x7c0] sm:$0xf]
    %v854 = vld [vmem:[%s1 + $0x7c4] sm:$0xf]
    %v855 = vld [vmem:[%s1 + $0x7c8] sm:$0xf]
    %v856 = vld [vmem:[%s1 + $0x7cc] sm:$0xf]
    %v857 = vld [vmem:[%s1 + $0x7d0] sm:$0xf]
    %v858 = vld [vmem:[%s1 + $0x7d4] sm:$0xf]
    %v859 = vld [vmem:[%s1 + $0x7d8] sm:$0xf]
    %v860 = vld [vmem:[%s1 + $0x7dc] sm:$0xf]
    %v861 = vld [vmem:[%s1 + $0x7e0] sm:$0xf]
    %v862 = vld [vmem:[%s1 + $0x7e4] sm:$0xf]
    %v863 = vld [vmem:[%s1 + $0x7e8] sm:$0xf]
    %v864 = vld [vmem:[%s1 + $0x7ec] sm:$0xf]
    %v865 = vld [vmem:[%s1 + $0x7f0] sm:$0xf]
    %v866 = vld [vmem:[%s1 + $0x7f4] sm:$0xf]
    %v867 = vld [vmem:[%s1 + $0x7f8] sm:$0xf]
    %v868 = vld [vmem:[%s1 + $0x7fc] sm:$0xf]
    %v869 = vld [vmem:[%s1 + $0x800] sm:$0xf]
    %v870 = vld [vmem:[%s1 + $0x804] sm:$0xf]
    %v871 = vld [vmem:[%s1 + $0x808] sm:$0xf]
    %v872 = vld [vmem:[%s1 + $0x80c] sm:$0xf]
    %v873 = vld [vmem:[%s1 + $0x810] sm:$0xf]
    %v874 = vld [vmem:[%s1 + $0x814] sm:$0xf]
    %v875 = vld [vmem:[%s1 + $0x818] sm:$0xf]
    %v876 = vld [vmem:[%s1 + $0x81c] sm:$0xf]
    %v877 = vld [vmem:[%s1 + $0x820] sm:$0xf]
    %v878 = vld [vmem:[%s1 + $0x824] sm:$0xf]
    %v879 = vld [vmem:[%s1 + $0x828] sm:$0xf]
    %v880 = vld [vmem:[%s1 + $0x82c] sm:$0xf]
    %v881 = vld [vmem:[%s1 + $0x830] sm:$0xf]
    %v882 = vld [vmem:[%s1 + $0x834] sm:$0xf]
    %v883 = vld [vmem:[%s1 + $0x838] sm:$0xf]
    %v884 = vld [vmem:[%s1 + $0x83c] sm:$0xf]
    %v885 = vld [vmem:[%s1 + $0x840] sm:$0xf]
    %v886 = vld [vmem:[%s1 + $0x844] sm:$0xf]
    %v887 = vld [vmem:[%s1 + $0x848] sm:$0xf]
    %v888 = vld [vmem:[%s1 + $0x84c] sm:$0xf]
    %v889 = vld [vmem:[%s1 + $0x850] sm:$0xf]
    %v890 = vld [vmem:[%s1 + $0x854] sm:$0xf]
    %v891 = vld [vmem:[%s1 + $0x858] sm:$0xf]
    %v892 = vld [vmem:[%s1 + $0x85c] sm:$0xf]
    %v893 = vld [vmem:[%s1 + $0x860] sm:$0xf]
    %v894 = vld [vmem:[%s1 + $0x864] sm:$0xf]
    %v895 = vld [vmem:[%s1 + $0x868] sm:$0xf]
    %v896 = vld [vmem:[%s1 + $0x86c] sm:$0xf]
    %v897 = vld [vmem:[%s1 + $0x870] sm:$0xf]
    %v898 = vld [vmem:[%s1 + $0x874] sm:$0xf]
    %v899 = vld [vmem:[%s1 + $0x878] sm:$0xf]
    %v900 = vld [vmem:[%s1 + $0x87c] sm:$0xf]
    %v901 = vld [vmem:[%s1 + $0x880] sm:$0xf]
    %v902 = vld [vmem:[%s1 + $0x884] sm:$0xf]
    %v903 = vld [vmem:[%s1 + $0x888] sm:$0xf]
    %v904 = vld [vmem:[%s1 + $0x88c] sm:$0xf]
    %v905 = vld [vmem:[%s1 + $0x890] sm:$0xf]
    %v906 = vld [vmem:[%s1 + $0x894] sm:$0xf]
    %v907 = vld [vmem:[%s1 + $0x898] sm:$0xf]
    %v908 = vld [vmem:[%s1 + $0x89c] sm:$0xf]
    %v909 = vld [vmem:[%s1 + $0x8a0] sm:$0xf]
    %v910 = vld [vmem:[%s1 + $0x8a4] sm:$0xf]
    %v911 = vld [vmem:[%s1 + $0x8a8] sm:$0xf]
    %v912 = vld [vmem:[%s1 + $0x8ac] sm:$0xf]
    %v913 = vld [vmem:[%s1 + $0x8b0] sm:$0xf]
    %v914 = vld [vmem:[%s1 + $0x8b4] sm:$0xf]
    %v915 = vld [vmem:[%s1 + $0x8b8] sm:$0xf]
    %v916 = vld [vmem:[%s1 + $0x8bc] sm:$0xf]
    %v917 = vld [vmem:[%s1 + $0x8c0] sm:$0xf]
    %v918 = vld [vmem:[%s1 + $0x8c4] sm:$0xf]
    %v919 = vld [vmem:[%s1 + $0x8c8] sm:$0xf]
    %v920 = vld [vmem:[%s1 + $0x8cc] sm:$0xf]
    %v921 = vld [vmem:[%s1 + $0x8d0] sm:$0xf]
    %v922 = vld [vmem:[%s1 + $0x8d4] sm:$0xf]
    %v923 = vld [vmem:[%s1 + $0x8d8] sm:$0xf]
    %v924 = vld [vmem:[%s1 + $0x8dc] sm:$0xf]
    %v925 = vld [vmem:[%s1 + $0x8e0] sm:$0xf]
    %v926 = vld [vmem:[%s1 + $0x8e4] sm:$0xf]
    %v927 = vld [vmem:[%s1 + $0x8e8] sm:$0xf]
    %v928 = vld [vmem:[%s1 + $0x8ec] sm:$0xf]
    %v929 = vld [vmem:[%s1 + $0x8f0] sm:$0xf]
    %v930 = vld [vmem:[%s1 + $0x8f4] sm:$0xf]
    %v931 = vld [vmem:[%s1 + $0x8f8] sm:$0xf]
    %v932 = vld [vmem:[%s1 + $0x8fc] sm:$0xf]
    %v933 = vld [vmem:[%s1 + $0x900] sm:$0xf]
    %v934 = vld [vmem:[%s1 + $0x904] sm:$0xf]
    %v935 = vld [vmem:[%s1 + $0x908] sm:$0xf]
    %v936 = vld [vmem:[%s1 + $0x90c] sm:$0xf]
    %v937 = vld [vmem:[%s1 + $0x910] sm:$0xf]
    %v938 = vld [vmem:[%s1 + $0x914] sm:$0xf]
    %v939 = vld [vmem:[%s1 + $0x918] sm:$0xf]
    %v940 = vld [vmem:[%s1 + $0x91c] sm:$0xf]
    %v941 = vld [vmem:[%s1 + $0x920] sm:$0xf]
    %v942 = vld [vmem:[%s1 + $0x924] sm:$0xf]
    %v943 = vld [vmem:[%s1 + $0x928] sm:$0xf]
    %v944 = vld [vmem:[%s1 + $0x92c] sm:$0xf]
    %v945 = vld [vmem:[%s1 + $0x930] sm:$0xf]
    %v946 = vld [vmem:[%s1 + $0x934] sm:$0xf]
    %v947 = vld [vmem:[%s1 + $0x938] sm:$0xf]
    %v948 = vld [vmem:[%s1 + $0x93c] sm:$0xf]
    %v949 = vld [vmem:[%s1 + $0x940] sm:$0xf]
    %v950 = vld [vmem:[%s1 + $0x944] sm:$0xf]
    %v951 = vld [vmem:[%s1 + $0x948] sm:$0xf]
    %v952 = vld [vmem:[%s1 + $0x94c] sm:$0xf]
    %v953 = vld [vmem:[%s1 + $0x950] sm:$0xf]
    %v954 = vld [vmem:[%s1 + $0x954] sm:$0xf]
    %v955 = vld [vmem:[%s1 + $0x958] sm:$0xf]
    %v956 = vld [vmem:[%s1 + $0x95c] sm:$0xf]
    %v957 = vld [vmem:[%s1 + $0x960] sm:$0xf]
    %v958 = vld [vmem:[%s1 + $0x964] sm:$0xf]
    %v959 = vld [vmem:[%s1 + $0x968] sm:$0xf]
    %v960 = vld [vmem:[%s1 + $0x96c] sm:$0xf]
    %v961 = vld [vmem:[%s1 + $0x970] sm:$0xf]
    %v962 = vld [vmem:[%s1 + $0x974] sm:$0xf]
    %v963 = vld [vmem:[%s1 + $0x978] sm:$0xf]
    %v964 = vld [vmem:[%s1 + $0x97c] sm:$0xf]
    %v965 = vld [vmem:[%s1 + $0x980] sm:$0xf]
    %v966 = vld [vmem:[%s1 + $0x984] sm:$0xf]
    %v967 = vld [vmem:[%s1 + $0x988] sm:$0xf]
    %v968 = vld [vmem:[%s1 + $0x98c] sm:$0xf]
    %v969 = vld [vmem:[%s1 + $0x990] sm:$0xf]
    %v970 = vld [vmem:[%s1 + $0x994] sm:$0xf]
    %v971 = vld [vmem:[%s1 + $0x998] sm:$0xf]
    %v972 = vld [vmem:[%s1 + $0x99c] sm:$0xf]
    %v973 = vld [vmem:[%s1 + $0x9a0] sm:$0xf]
    %v974 = vld [vmem:[%s1 + $0x9a4] sm:$0xf]
    %v975 = vld [vmem:[%s1 + $0x9a8] sm:$0xf]
    %v976 = vld [vmem:[%s1 + $0x9ac] sm:$0xf]
    %v977 = vld [vmem:[%s1 + $0x9b0] sm:$0xf]
    %v978 = vld [vmem:[%s1 + $0x9b4] sm:$0xf]
    %v979 = vld [vmem:[%s1 + $0x9b8] sm:$0xf]
    %v980 = vld [vmem:[%s1 + $0x9bc] sm:$0xf]
    %v981 = vld [vmem:[%s1 + $0x9c0] sm:$0xf]
    %v982 = vld [vmem:[%s1 + $0x9c4] sm:$0xf]
    %v983 = vld [vmem:[%s1 + $0x9c8] sm:$0xf]
    %v984 = vld [vmem:[%s1 + $0x9cc] sm:$0xf]
    %v985 = vld [vmem:[%s1 + $0x9d0] sm:$0xf]
    %v986 = vld [vmem:[%s1 + $0x9d4] sm:$0xf]
    %v987 = vld [vmem:[%s1 + $0x9d8] sm:$0xf]
    %v988 = vld [vmem:[%s1 + $0x9dc] sm:$0xf]
    %v989 = vld [vmem:[%s1 + $0x9e0] sm:$0xf]
    %v990 = vld [vmem:[%s1 + $0x9e4] sm:$0xf]
    %v991 = vld [vmem:[%s1 + $0x9e8] sm:$0xf]
    %v992 = vld [vmem:[%s1 + $0x9ec] sm:$0xf]
    %v993 = vld [vmem:[%s1 + $0x9f0] sm:$0xf]
    %v994 = vld [vmem:[%s1 + $0x9f4] sm:$0xf]
    %v995 = vld [vmem:[%s1 + $0x9f8] sm:$0xf]
    %v996 = vld [vmem:[%s1 + $0x9fc] sm:$0xf]
    %v997 = vld [vmem:[%s1 + $0xa00] sm:$0xf]
    %v998 = vld [vmem:[%s1 + $0xa04] sm:$0xf]
    %v999 = vld [vmem:[%s1 + $0xa08] sm:$0xf]
    %v1000 = vld [vmem:[%s1 + $0xa0c] sm:$0xf]
    %v1001 = vld [vmem:[%s1 + $0xa10] sm:$0xf]
    %v1002 = vld [vmem:[%s1 + $0xa14] sm:$0xf]
    %v1003 = vld [vmem:[%s1 + $0xa18] sm:$0xf]
    %v1004 = vld [vmem:[%s1 + $0xa1c] sm:$0xf]
    %v1005 = vld [vmem:[%s1 + $0xa20] sm:$0xf]
    %v1006 = vld [vmem:[%s1 + $0xa24] sm:$0xf]
    %v1007 = vld [vmem:[%s1 + $0xa28] sm:$0xf]
    %v1008 = vld [vmem:[%s1 + $0xa2c] sm:$0xf]
    %v1009 = vld [vmem:[%s1 + $0xa30] sm:$0xf]
    %v1010 = vld [vmem:[%s1 + $0xa34] sm:$0xf]
    %v1011 = vld [vmem:[%s1 + $0xa38] sm:$0xf]
    %v1012 = vld [vmem:[%s1 + $0xa3c] sm:$0xf]
    %v1013 = vld [vmem:[%s1 + $0xa40] sm:$0xf]
    %v1014 = vld [vmem:[%s1 + $0xa44] sm:$0xf]
    %v1015 = vld [vmem:[%s1 + $0xa48] sm:$0xf]
    %v1016 = vld [vmem:[%s1 + $0xa4c] sm:$0xf]
    %v1017 = vld [vmem:[%s1 + $0xa50] sm:$0xf]
    %v1018 = vld [vmem:[%s1 + $0xa54] sm:$0xf]
    %v1019 = vld [vmem:[%s1 + $0xa58] sm:$0xf]
    %v1020 = vld [vmem:[%s1 + $0xa5c] sm:$0xf]
    %v1021 = vld [vmem:[%s1 + $0xa60] sm:$0xf]
    %v1022 = vld [vmem:[%s1 + $0xa64] sm:$0xf]
    %v1023 = vld [vmem:[%s1 + $0xa68] sm:$0xf]
    %v1024 = vld [vmem:[%s1 + $0xa6c] sm:$0xf]
    %v1025 = vld [vmem:[%s1 + $0xa70] sm:$0xf]
    %v1026 = vld [vmem:[%s1 + $0xa74] sm:$0xf]
    %v1027 = vld [vmem:[%s1 + $0xa78] sm:$0xf]
    %v1028 = vld [vmem:[%s1 + $0xa7c] sm:$0xf]
    %v1029 = vld [vmem:[%s1 + $0xa80] sm:$0xf]
    %v1030 = vld [vmem:[%s1 + $0xa84] sm:$0xf]
    %v1031 = vld [vmem:[%s1 + $0xa88] sm:$0xf]
    %v1032 = vld [vmem:[%s1 + $0xa8c] sm:$0xf]
    %v1033 = vld [vmem:[%s1 + $0xa90] sm:$0xf]
    %v1034 = vld [vmem:[%s1 + $0xa94] sm:$0xf]
    %v1035 = vld [vmem:[%s1 + $0xa98] sm:$0xf]
    %v1036 = vld [vmem:[%s1 + $0xa9c] sm:$0xf]
    %v1037 = vld [vmem:[%s1 + $0xaa0] sm:$0xf]
    %v1038 = vld [vmem:[%s1 + $0xaa4] sm:$0xf]
    %v1039 = vld [vmem:[%s1 + $0xaa8] sm:$0xf]
    %v1040 = vld [vmem:[%s1 + $0xaac] sm:$0xf]
    %v1041 = vld [vmem:[%s1 + $0xab0] sm:$0xf]
    %v1042 = vld [vmem:[%s1 + $0xab4] sm:$0xf]
    %v1043 = vld [vmem:[%s1 + $0xab8] sm:$0xf]
    %v1044 = vld [vmem:[%s1 + $0xabc] sm:$0xf]
    %v1045 = vld [vmem:[%s1 + $0xac0] sm:$0xf]
    %v1046 = vld [vmem:[%s1 + $0xac4] sm:$0xf]
    %v1047 = vld [vmem:[%s1 + $0xac8] sm:$0xf]
    %v1048 = vld [vmem:[%s1 + $0xacc] sm:$0xf]
    %v1049 = vld [vmem:[%s1 + $0xad0] sm:$0xf]
    %v1050 = vld [vmem:[%s1 + $0xad4] sm:$0xf]
    %v1051 = vld [vmem:[%s1 + $0xad8] sm:$0xf]
    %v1052 = vld [vmem:[%s1 + $0xadc] sm:$0xf]
    %v1053 = vld [vmem:[%s1 + $0xae0] sm:$0xf]
    %v1054 = vld [vmem:[%s1 + $0xae4] sm:$0xf]
    %v1055 = vld [vmem:[%s1 + $0xae8] sm:$0xf]
    %v1056 = vld [vmem:[%s1 + $0xaec] sm:$0xf]
    %v1057 = vld [vmem:[%s1 + $0xaf0] sm:$0xf]
    %v1058 = vld [vmem:[%s1 + $0xaf4] sm:$0xf]
    %v1059 = vld [vmem:[%s1 + $0xaf8] sm:$0xf]
    %v1060 = vld [vmem:[%s1 + $0xafc] sm:$0xf]
    %v1061 = vld [vmem:[%s1 + $0xb00] sm:$0xf]
    %v1062 = vld [vmem:[%s1 + $0xb04] sm:$0xf]
    %v1063 = vld [vmem:[%s1 + $0xb08] sm:$0xf]
    %v1064 = vld [vmem:[%s1 + $0xb0c] sm:$0xf]
    %v1065 = vld [vmem:[%s1 + $0xb10] sm:$0xf]
    %v1066 = vld [vmem:[%s1 + $0xb14] sm:$0xf]
    %v1067 = vld [vmem:[%s1 + $0xb18] sm:$0xf]
    %v1068 = vld [vmem:[%s1 + $0xb1c] sm:$0xf]
    %v1069 = vld [vmem:[%s1 + $0xb20] sm:$0xf]
    %v1070 = vld [vmem:[%s1 + $0xb24] sm:$0xf]
    %v1071 = vld [vmem:[%s1 + $0xb28] sm:$0xf]
    %v1072 = vld [vmem:[%s1 + $0xb2c] sm:$0xf]
    %v1073 = vld [vmem:[%s1 + $0xb30] sm:$0xf]
    %v1074 = vld [vmem:[%s1 + $0xb34] sm:$0xf]
    %v1075 = vld [vmem:[%s1 + $0xb38] sm:$0xf]
    %v1076 = vld [vmem:[%s1 + $0xb3c] sm:$0xf]
    %v1077 = vld [vmem:[%s1 + $0xb40] sm:$0xf]
    %v1078 = vld [vmem:[%s1 + $0xb44] sm:$0xf]
    %v1079 = vld [vmem:[%s1 + $0xb48] sm:$0xf]
    %v1080 = vld [vmem:[%s1 + $0xb4c] sm:$0xf]
    %v1081 = vld [vmem:[%s1 + $0xb50] sm:$0xf]
    %v1082 = vld [vmem:[%s1 + $0xb54] sm:$0xf]
    %v1083 = vld [vmem:[%s1 + $0xb58] sm:$0xf]
    %v1084 = vld [vmem:[%s1 + $0xb5c] sm:$0xf]
    %v1085 = vld [vmem:[%s1 + $0xb60] sm:$0xf]
    %v1086 = vld [vmem:[%s1 + $0xb64] sm:$0xf]
    %v1087 = vld [vmem:[%s1 + $0xb68] sm:$0xf]
    %v1088 = vld [vmem:[%s1 + $0xb6c] sm:$0xf]
    %v1089 = vld [vmem:[%s1 + $0xb70] sm:$0xf]
    %v1090 = vld [vmem:[%s1 + $0xb74] sm:$0xf]
    %v1091 = vld [vmem:[%s1 + $0xb78] sm:$0xf]
    %v1092 = vld [vmem:[%s1 + $0xb7c] sm:$0xf]
    %v1093 = vld [vmem:[%s1 + $0xb80] sm:$0xf]
    %v1094 = vld [vmem:[%s1 + $0xb84] sm:$0xf]
    %v1095 = vld [vmem:[%s1 + $0xb88] sm:$0xf]
    %v1096 = vld [vmem:[%s1 + $0xb8c] sm:$0xf]
    %v1097 = vld [vmem:[%s1 + $0xb90] sm:$0xf]
    %v1098 = vld [vmem:[%s1 + $0xb94] sm:$0xf]
    %v1099 = vld [vmem:[%s1 + $0xb98] sm:$0xf]
    %v1100 = vld [vmem:[%s1 + $0xb9c] sm:$0xf]
    %v1101 = vld [vmem:[%s1 + $0xba0] sm:$0xf]
    %v1102 = vld [vmem:[%s1 + $0xba4] sm:$0xf]
    %v1103 = vld [vmem:[%s1 + $0xba8] sm:$0xf]
    %v1104 = vld [vmem:[%s1 + $0xbac] sm:$0xf]
    %v1105 = vld [vmem:[%s1 + $0xbb0] sm:$0xf]
    %v1106 = vld [vmem:[%s1 + $0xbb4] sm:$0xf]
    %v1107 = vld [vmem:[%s1 + $0xbb8] sm:$0xf]
    %v1108 = vld [vmem:[%s1 + $0xbbc] sm:$0xf]
    %v1109 = vld [vmem:[%s1 + $0xbc0] sm:$0xf]
    %v1110 = vld [vmem:[%s1 + $0xbc4] sm:$0xf]
    %v1111 = vld [vmem:[%s1 + $0xbc8] sm:$0xf]
    %v1112 = vld [vmem:[%s1 + $0xbcc] sm:$0xf]
    %v1113 = vld [vmem:[%s1 + $0xbd0] sm:$0xf]
    %v1114 = vld [vmem:[%s1 + $0xbd4] sm:$0xf]
    %v1115 = vld [vmem:[%s1 + $0xbd8] sm:$0xf]
    %v1116 = vld [vmem:[%s1 + $0xbdc] sm:$0xf]
    %v1117 = vld [vmem:[%s1 + $0xbe0] sm:$0xf]
    %v1118 = vld [vmem:[%s1 + $0xbe4] sm:$0xf]
    %v1119 = vld [vmem:[%s1 + $0xbe8] sm:$0xf]
    %v1120 = vld [vmem:[%s1 + $0xbec] sm:$0xf]
    %v1121 = vld [vmem:[%s1 + $0xbf0] sm:$0xf]
    %v1122 = vld [vmem:[%s1 + $0xbf4] sm:$0xf]
    %v1123 = vld [vmem:[%s1 + $0xbf8] sm:$0xf]
    %v1124 = vld [vmem:[%s1 + $0xbfc] sm:$0xf]
    %v1125 = vld [vmem:[%s1 + $0xc00] sm:$0xf]
    %v1126 = vld [vmem:[%s1 + $0xc04] sm:$0xf]
    %v1127 = vld [vmem:[%s1 + $0xc08] sm:$0xf]
    %v1128 = vld [vmem:[%s1 + $0xc0c] sm:$0xf]
    %v1129 = vld [vmem:[%s1 + $0xc10] sm:$0xf]
    %v1130 = vld [vmem:[%s1 + $0xc14] sm:$0xf]
    %v1131 = vld [vmem:[%s1 + $0xc18] sm:$0xf]
    %v1132 = vld [vmem:[%s1 + $0xc1c] sm:$0xf]
    %v1133 = vld [vmem:[%s1 + $0xc20] sm:$0xf]
    %v1134 = vld [vmem:[%s1 + $0xc24] sm:$0xf]
    %v1135 = vld [vmem:[%s1 + $0xc28] sm:$0xf]
    %v1136 = vld [vmem:[%s1 + $0xc2c] sm:$0xf]
    %v1137 = vld [vmem:[%s1 + $0xc30] sm:$0xf]
    %v1138 = vld [vmem:[%s1 + $0xc34] sm:$0xf]
    %v1139 = vld [vmem:[%s1 + $0xc38] sm:$0xf]
    %v1140 = vld [vmem:[%s1 + $0xc3c] sm:$0xf]
    %v1141 = vld [vmem:[%s2] sm:$0x1]
    %v1143 = vlaneseq
    %v1144 = vshrl.u32 %v1143, 7
    %v1145 = vsub.s32 0, %v1144
    %v1146 = vrot.slane %v1141, %v1145
    %v1932 = vunpack.c.l.b16 %v357
    %v1933 = vunpack.c.l.b16 %v358
    %v1934 = vunpack.c.l.b16 %v359
    %v1935 = vunpack.c.l.b16 %v360
    %v1936 = vunpack.c.l.b16 %v361
    %v1937 = vunpack.c.l.b16 %v362
    %v1938 = vunpack.c.l.b16 %v363
    %v1939 = vunpack.c.l.b16 %v364
    %v1940 = vunpack.c.l.b16 %v365
    %v1941 = vunpack.c.l.b16 %v366
    %v1942 = vunpack.c.l.b16 %v367
    %v1943 = vunpack.c.l.b16 %v368
    %v1944 = vunpack.c.l.b16 %v369
    %v1945 = vunpack.c.l.b16 %v370
    %v1946 = vunpack.c.l.b16 %v371
    %v1947 = vunpack.c.l.b16 %v372
    %v1948 = vunpack.c.l.b16 %v373
    %v1949 = vunpack.c.l.b16 %v374
    %v1950 = vunpack.c.l.b16 %v375
    %v1951 = vunpack.c.l.b16 %v376
    %v1952 = vunpack.c.l.b16 %v377
    %v1953 = vunpack.c.l.b16 %v378
    %v1954 = vunpack.c.l.b16 %v379
    %v1955 = vunpack.c.l.b16 %v380
    %v1956 = vunpack.c.l.b16 %v381
    %v1957 = vunpack.c.l.b16 %v382
    %v1958 = vunpack.c.l.b16 %v383
    %v1959 = vunpack.c.l.b16 %v384
    %v1960 = vunpack.c.l.b16 %v385
    %v1961 = vunpack.c.l.b16 %v386
    %v1962 = vunpack.c.l.b16 %v387
    %v1963 = vunpack.c.l.b16 %v388
    %v1964 = vunpack.c.l.b16 %v389
    %v1965 = vunpack.c.l.b16 %v390
    %v1966 = vunpack.c.l.b16 %v391
    %v1967 = vunpack.c.l.b16 %v392
    %v1968 = vunpack.c.l.b16 %v393
    %v1969 = vunpack.c.l.b16 %v394
    %v1970 = vunpack.c.l.b16 %v395
    %v1971 = vunpack.c.l.b16 %v396
    %v1972 = vunpack.c.l.b16 %v397
    %v1973 = vunpack.c.l.b16 %v398
    %v1974 = vunpack.c.l.b16 %v399
    %v1975 = vunpack.c.l.b16 %v400
    %v1976 = vunpack.c.l.b16 %v401
    %v1977 = vunpack.c.l.b16 %v402
    %v1978 = vunpack.c.l.b16 %v403
    %v1979 = vunpack.c.l.b16 %v404
    %v1980 = vunpack.c.l.b16 %v405
    %v1981 = vunpack.c.l.b16 %v406
    %v1982 = vunpack.c.l.b16 %v407
    %v1983 = vunpack.c.l.b16 %v408
    %v1984 = vunpack.c.l.b16 %v409
    %v1985 = vunpack.c.l.b16 %v410
    %v1986 = vunpack.c.l.b16 %v411
    %v1987 = vunpack.c.l.b16 %v412
    %v1988 = vunpack.c.l.b16 %v413
    %v1989 = vunpack.c.l.b16 %v414
    %v1990 = vunpack.c.l.b16 %v415
    %v1991 = vunpack.c.l.b16 %v416
    %v1992 = vunpack.c.l.b16 %v417
    %v1993 = vunpack.c.l.b16 %v418
    %v1994 = vunpack.c.l.b16 %v419
    %v1995 = vunpack.c.l.b16 %v420
    %v1996 = vunpack.c.l.b16 %v421
    %v1997 = vunpack.c.l.b16 %v422
    %v1998 = vunpack.c.l.b16 %v423
    %v1999 = vunpack.c.l.b16 %v424
    %v2000 = vunpack.c.l.b16 %v425
    %v2001 = vunpack.c.l.b16 %v426
    %v2002 = vunpack.c.l.b16 %v427
    %v2003 = vunpack.c.l.b16 %v428
    %v2004 = vunpack.c.l.b16 %v429
    %v2005 = vunpack.c.l.b16 %v430
    %v2006 = vunpack.c.l.b16 %v431
    %v2007 = vunpack.c.l.b16 %v432
    %v2008 = vunpack.c.l.b16 %v433
    %v2009 = vunpack.c.l.b16 %v434
    %v2010 = vunpack.c.l.b16 %v435
    %v2011 = vunpack.c.l.b16 %v436
    %v2012 = vunpack.c.l.b16 %v437
    %v2013 = vunpack.c.l.b16 %v438
    %v2014 = vunpack.c.l.b16 %v439
    %v2015 = vunpack.c.l.b16 %v440
    %v2016 = vunpack.c.l.b16 %v441
    %v2017 = vunpack.c.l.b16 %v442
    %v2018 = vunpack.c.l.b16 %v443
    %v2019 = vunpack.c.l.b16 %v444
    %v2020 = vunpack.c.l.b16 %v445
    %v2021 = vunpack.c.l.b16 %v446
    %v2022 = vunpack.c.l.b16 %v447
    %v2023 = vunpack.c.l.b16 %v448
    %v2024 = vunpack.c.l.b16 %v449
    %v2025 = vunpack.c.l.b16 %v450
    %v2026 = vunpack.c.l.b16 %v451
    %v2027 = vunpack.c.l.b16 %v452
    %v2028 = vunpack.c.l.b16 %v453
    %v2029 = vunpack.c.l.b16 %v454
    %v2030 = vunpack.c.l.b16 %v455
    %v2031 = vunpack.c.l.b16 %v456
    %v2032 = vunpack.c.l.b16 %v457
    %v2033 = vunpack.c.l.b16 %v458
    %v2034 = vunpack.c.l.b16 %v459
    %v2035 = vunpack.c.l.b16 %v460
    %v2036 = vunpack.c.l.b16 %v461
    %v2037 = vunpack.c.l.b16 %v462
    %v2038 = vunpack.c.l.b16 %v463
    %v2039 = vunpack.c.l.b16 %v464
    %v2040 = vunpack.c.l.b16 %v465
    %v2041 = vunpack.c.l.b16 %v466
    %v2042 = vunpack.c.l.b16 %v467
    %v2043 = vunpack.c.l.b16 %v468
    %v2044 = vunpack.c.l.b16 %v469
    %v2045 = vunpack.c.l.b16 %v470
    %v2046 = vunpack.c.l.b16 %v471
    %v2047 = vunpack.c.l.b16 %v472
    %v2048 = vunpack.c.l.b16 %v473
    %v2049 = vunpack.c.l.b16 %v474
    %v2050 = vunpack.c.l.b16 %v475
    %v2051 = vunpack.c.l.b16 %v476
    %v2052 = vunpack.c.l.b16 %v477
    %v2053 = vunpack.c.l.b16 %v478
    %v2054 = vunpack.c.l.b16 %v479
    %v2055 = vunpack.c.l.b16 %v480
    %v2056 = vunpack.c.l.b16 %v481
    %v2057 = vunpack.c.l.b16 %v482
    %v2058 = vunpack.c.l.b16 %v483
    %v2059 = vunpack.c.l.b16 %v484
    %v2060 = vunpack.c.l.b16 %v485
    %v2061 = vunpack.c.l.b16 %v486
    %v2062 = vunpack.c.l.b16 %v487
    %v2063 = vunpack.c.l.b16 %v488
    %v2064 = vunpack.c.l.b16 %v489
    %v2065 = vunpack.c.l.b16 %v490
    %v2066 = vunpack.c.l.b16 %v491
    %v2067 = vunpack.c.l.b16 %v492
    %v2068 = vunpack.c.l.b16 %v493
    %v2069 = vunpack.c.l.b16 %v494
    %v2070 = vunpack.c.l.b16 %v495
    %v2071 = vunpack.c.l.b16 %v496
    %v2072 = vunpack.c.l.b16 %v497
    %v2073 = vunpack.c.l.b16 %v498
    %v2074 = vunpack.c.l.b16 %v499
    %v2075 = vunpack.c.l.b16 %v500
    %v2076 = vunpack.c.l.b16 %v501
    %v2077 = vunpack.c.l.b16 %v502
    %v2078 = vunpack.c.l.b16 %v503
    %v2079 = vunpack.c.l.b16 %v504
    %v2080 = vunpack.c.l.b16 %v505
    %v2081 = vunpack.c.l.b16 %v506
    %v2082 = vunpack.c.l.b16 %v507
    %v2083 = vunpack.c.l.b16 %v508
    %v2084 = vunpack.c.l.b16 %v509
    %v2085 = vunpack.c.l.b16 %v510
    %v2086 = vunpack.c.l.b16 %v511
    %v2087 = vunpack.c.l.b16 %v512
    %v2088 = vunpack.c.l.b16 %v513
    %v2089 = vunpack.c.l.b16 %v514
    %v2090 = vunpack.c.l.b16 %v515
    %v2091 = vunpack.c.l.b16 %v516
    %v2092 = vunpack.c.l.b16 %v517
    %v2093 = vunpack.c.l.b16 %v518
    %v2094 = vunpack.c.l.b16 %v519
    %v2095 = vunpack.c.l.b16 %v520
    %v2096 = vunpack.c.l.b16 %v521
    %v2097 = vunpack.c.l.b16 %v522
    %v2098 = vunpack.c.l.b16 %v523
    %v2099 = vunpack.c.l.b16 %v524
    %v2100 = vunpack.c.l.b16 %v525
    %v2101 = vunpack.c.l.b16 %v526
    %v2102 = vunpack.c.l.b16 %v527
    %v2103 = vunpack.c.l.b16 %v528
    %v2104 = vunpack.c.l.b16 %v529
    %v2105 = vunpack.c.l.b16 %v530
    %v2106 = vunpack.c.l.b16 %v531
    %v2107 = vunpack.c.l.b16 %v532
    %v2108 = vunpack.c.l.b16 %v533
    %v2109 = vunpack.c.l.b16 %v534
    %v2110 = vunpack.c.l.b16 %v535
    %v2111 = vunpack.c.l.b16 %v536
    %v2112 = vunpack.c.l.b16 %v537
    %v2113 = vunpack.c.l.b16 %v538
    %v2114 = vunpack.c.l.b16 %v539
    %v2115 = vunpack.c.l.b16 %v540
    %v2116 = vunpack.c.l.b16 %v541
    %v2117 = vunpack.c.l.b16 %v542
    %v2118 = vunpack.c.l.b16 %v543
    %v2119 = vunpack.c.l.b16 %v544
    %v2120 = vunpack.c.l.b16 %v545
    %v2121 = vunpack.c.l.b16 %v546
    %v2122 = vunpack.c.l.b16 %v547
    %v2123 = vunpack.c.l.b16 %v548
    %v2124 = vunpack.c.l.b16 %v549
    %v2125 = vunpack.c.l.b16 %v550
    %v2126 = vunpack.c.l.b16 %v551
    %v2127 = vunpack.c.l.b16 %v552
    %v2128 = vunpack.c.l.b16 %v553
    %v2129 = vunpack.c.l.b16 %v554
    %v2130 = vunpack.c.l.b16 %v555
    %v2131 = vunpack.c.l.b16 %v556
    %v2132 = vunpack.c.l.b16 %v557
    %v2133 = vunpack.c.l.b16 %v558
    %v2134 = vunpack.c.l.b16 %v559
    %v2135 = vunpack.c.l.b16 %v560
    %v2136 = vunpack.c.l.b16 %v561
    %v2137 = vunpack.c.l.b16 %v562
    %v2138 = vunpack.c.l.b16 %v563
    %v2139 = vunpack.c.l.b16 %v564
    %v2140 = vunpack.c.l.b16 %v565
    %v2141 = vunpack.c.l.b16 %v566
    %v2142 = vunpack.c.l.b16 %v567
    %v2143 = vunpack.c.l.b16 %v568
    %v2144 = vunpack.c.l.b16 %v569
    %v2145 = vunpack.c.l.b16 %v570
    %v2146 = vunpack.c.l.b16 %v571
    %v2147 = vunpack.c.l.b16 %v572
    %v2148 = vunpack.c.l.b16 %v573
    %v2149 = vunpack.c.l.b16 %v574
    %v2150 = vunpack.c.l.b16 %v575
    %v2151 = vunpack.c.l.b16 %v576
    %v2152 = vunpack.c.l.b16 %v577
    %v2153 = vunpack.c.l.b16 %v578
    %v2154 = vunpack.c.l.b16 %v579
    %v2155 = vunpack.c.l.b16 %v580
    %v2156 = vunpack.c.l.b16 %v581
    %v2157 = vunpack.c.l.b16 %v582
    %v2158 = vunpack.c.l.b16 %v583
    %v2159 = vunpack.c.l.b16 %v584
    %v2160 = vunpack.c.l.b16 %v585
    %v2161 = vunpack.c.l.b16 %v586
    %v2162 = vunpack.c.l.b16 %v587
    %v2163 = vunpack.c.l.b16 %v588
    %v2164 = vunpack.c.l.b16 %v589
    %v2165 = vunpack.c.l.b16 %v590
    %v2166 = vunpack.c.l.b16 %v591
    %v2167 = vunpack.c.l.b16 %v592
    %v2168 = vunpack.c.l.b16 %v593
    %v2169 = vunpack.c.l.b16 %v594
    %v2170 = vunpack.c.l.b16 %v595
    %v2171 = vunpack.c.l.b16 %v596
    %v2172 = vunpack.c.l.b16 %v597
    %v2173 = vunpack.c.l.b16 %v598
    %v2174 = vunpack.c.l.b16 %v599
    %v2175 = vunpack.c.l.b16 %v600
    %v2176 = vunpack.c.l.b16 %v601
    %v2177 = vunpack.c.l.b16 %v602
    %v2178 = vunpack.c.l.b16 %v603
    %v2179 = vunpack.c.l.b16 %v604
    %v2180 = vunpack.c.l.b16 %v605
    %v2181 = vunpack.c.l.b16 %v606
    %v2182 = vunpack.c.l.b16 %v607
    %v2183 = vunpack.c.l.b16 %v608
    %v2184 = vunpack.c.l.b16 %v609
    %v2185 = vunpack.c.l.b16 %v610
    %v2186 = vunpack.c.l.b16 %v611
    %v2187 = vunpack.c.l.b16 %v612
    %v2188 = vunpack.c.l.b16 %v613
    %v2189 = vunpack.c.l.b16 %v614
    %v2190 = vunpack.c.l.b16 %v615
    %v2191 = vunpack.c.l.b16 %v616
    %v2192 = vunpack.c.l.b16 %v617
    %v2193 = vunpack.c.l.b16 %v618
    %v2194 = vunpack.c.l.b16 %v619
    %v2195 = vunpack.c.l.b16 %v620
    %v2196 = vunpack.c.l.b16 %v621
    %v2197 = vunpack.c.l.b16 %v622
    %v2198 = vunpack.c.l.b16 %v623
    %v2199 = vunpack.c.l.b16 %v624
    %v2200 = vunpack.c.l.b16 %v625
    %v2201 = vunpack.c.l.b16 %v626
    %v2202 = vunpack.c.l.b16 %v627
    %v2203 = vunpack.c.l.b16 %v628
    %v2204 = vunpack.c.l.b16 %v629
    %v2205 = vunpack.c.l.b16 %v630
    %v2206 = vunpack.c.l.b16 %v631
    %v2207 = vunpack.c.l.b16 %v632
    %v2208 = vunpack.c.l.b16 %v633
    %v2209 = vunpack.c.l.b16 %v634
    %v2210 = vunpack.c.l.b16 %v635
    %v2211 = vunpack.c.l.b16 %v636
    %v2212 = vunpack.c.l.b16 %v637
    %v2213 = vunpack.c.l.b16 %v638
    %v2214 = vunpack.c.l.b16 %v639
    %v2215 = vunpack.c.l.b16 %v640
    %v2216 = vunpack.c.l.b16 %v641
    %v2217 = vunpack.c.l.b16 %v642
    %v2218 = vunpack.c.l.b16 %v643
    %v2219 = vunpack.c.l.b16 %v644
    %v2220 = vunpack.c.l.b16 %v645
    %v2221 = vunpack.c.l.b16 %v646
    %v2222 = vunpack.c.l.b16 %v647
    %v2223 = vunpack.c.l.b16 %v648
    %v2224 = vunpack.c.l.b16 %v649
    %v2225 = vunpack.c.l.b16 %v650
    %v2226 = vunpack.c.l.b16 %v651
    %v2227 = vunpack.c.l.b16 %v652
    %v2228 = vunpack.c.l.b16 %v653
    %v2229 = vunpack.c.l.b16 %v654
    %v2230 = vunpack.c.l.b16 %v655
    %v2231 = vunpack.c.l.b16 %v656
    %v2232 = vunpack.c.l.b16 %v657
    %v2233 = vunpack.c.l.b16 %v658
    %v2234 = vunpack.c.l.b16 %v659
    %v2235 = vunpack.c.l.b16 %v660
    %v2236 = vunpack.c.l.b16 %v661
    %v2237 = vunpack.c.l.b16 %v662
    %v2238 = vunpack.c.l.b16 %v663
    %v2239 = vunpack.c.l.b16 %v664
    %v2240 = vunpack.c.l.b16 %v665
    %v2241 = vunpack.c.l.b16 %v666
    %v2242 = vunpack.c.l.b16 %v667
    %v2243 = vunpack.c.l.b16 %v668
    %v2244 = vunpack.c.l.b16 %v669
    %v2245 = vunpack.c.l.b16 %v670
    %v2246 = vunpack.c.l.b16 %v671
    %v2247 = vunpack.c.l.b16 %v672
    %v2248 = vunpack.c.l.b16 %v673
    %v2249 = vunpack.c.l.b16 %v674
    %v2250 = vunpack.c.l.b16 %v675
    %v2251 = vunpack.c.l.b16 %v676
    %v2252 = vunpack.c.l.b16 %v677
    %v2253 = vunpack.c.l.b16 %v678
    %v2254 = vunpack.c.l.b16 %v679
    %v2255 = vunpack.c.l.b16 %v680
    %v2256 = vunpack.c.l.b16 %v681
    %v2257 = vunpack.c.l.b16 %v682
    %v2258 = vunpack.c.l.b16 %v683
    %v2259 = vunpack.c.l.b16 %v684
    %v2260 = vunpack.c.l.b16 %v685
    %v2261 = vunpack.c.l.b16 %v686
    %v2262 = vunpack.c.l.b16 %v687
    %v2263 = vunpack.c.l.b16 %v688
    %v2264 = vunpack.c.l.b16 %v689
    %v2265 = vunpack.c.l.b16 %v690
    %v2266 = vunpack.c.l.b16 %v691
    %v2267 = vunpack.c.l.b16 %v692
    %v2268 = vunpack.c.l.b16 %v693
    %v2269 = vunpack.c.l.b16 %v694
    %v2270 = vunpack.c.l.b16 %v695
    %v2271 = vunpack.c.l.b16 %v696
    %v2272 = vunpack.c.l.b16 %v697
    %v2273 = vunpack.c.l.b16 %v698
    %v2274 = vunpack.c.l.b16 %v699
    %v2275 = vunpack.c.l.b16 %v700
    %v2276 = vunpack.c.l.b16 %v701
    %v2277 = vunpack.c.l.b16 %v702
    %v2278 = vunpack.c.l.b16 %v703
    %v2279 = vunpack.c.l.b16 %v704
    %v2280 = vunpack.c.l.b16 %v705
    %v2281 = vunpack.c.l.b16 %v706
    %v2282 = vunpack.c.l.b16 %v707
    %v2283 = vunpack.c.l.b16 %v708
    %v2284 = vunpack.c.l.b16 %v709
    %v2285 = vunpack.c.l.b16 %v710
    %v2286 = vunpack.c.l.b16 %v711
    %v2287 = vunpack.c.l.b16 %v712
    %v2288 = vunpack.c.l.b16 %v713
    %v2289 = vunpack.c.l.b16 %v714
    %v2290 = vunpack.c.l.b16 %v715
    %v2291 = vunpack.c.l.b16 %v716
    %v2292 = vunpack.c.l.b16 %v717
    %v2293 = vunpack.c.l.b16 %v718
    %v2294 = vunpack.c.l.b16 %v719
    %v2295 = vunpack.c.l.b16 %v720
    %v2296 = vunpack.c.l.b16 %v721
    %v2297 = vunpack.c.l.b16 %v722
    %v2298 = vunpack.c.l.b16 %v723
    %v2299 = vunpack.c.l.b16 %v724
    %v2300 = vunpack.c.l.b16 %v725
    %v2301 = vunpack.c.l.b16 %v726
    %v2302 = vunpack.c.l.b16 %v727
    %v2303 = vunpack.c.l.b16 %v728
    %v2304 = vunpack.c.l.b16 %v729
    %v2305 = vunpack.c.l.b16 %v730
    %v2306 = vunpack.c.l.b16 %v731
    %v2307 = vunpack.c.l.b16 %v732
    %v2308 = vunpack.c.l.b16 %v733
    %v2309 = vunpack.c.l.b16 %v734
    %v2310 = vunpack.c.l.b16 %v735
    %v2311 = vunpack.c.l.b16 %v736
    %v2312 = vunpack.c.l.b16 %v737
    %v2313 = vunpack.c.l.b16 %v738
    %v2314 = vunpack.c.l.b16 %v739
    %v2315 = vunpack.c.l.b16 %v740
    %v2316 = vunpack.c.l.b16 %v741
    %v2317 = vunpack.c.l.b16 %v742
    %v2318 = vunpack.c.l.b16 %v743
    %v2319 = vunpack.c.l.b16 %v744
    %v2320 = vunpack.c.l.b16 %v745
    %v2321 = vunpack.c.l.b16 %v746
    %v2322 = vunpack.c.l.b16 %v747
    %v2323 = vunpack.c.l.b16 %v748
    %v2324 = vunpack.c.l.b16 %v749
    %v2325 = vunpack.c.l.b16 %v750
    %v2326 = vunpack.c.l.b16 %v751
    %v2327 = vunpack.c.l.b16 %v752
    %v2328 = vunpack.c.l.b16 %v753
    %v2329 = vunpack.c.l.b16 %v754
    %v2330 = vunpack.c.l.b16 %v755
    %v2331 = vunpack.c.l.b16 %v756
    %v2332 = vunpack.c.l.b16 %v757
    %v2333 = vunpack.c.l.b16 %v758
    %v2334 = vunpack.c.l.b16 %v759
    %v2335 = vunpack.c.l.b16 %v760
    %v2336 = vunpack.c.l.b16 %v761
    %v2337 = vunpack.c.l.b16 %v762
    %v2338 = vunpack.c.l.b16 %v763
    %v2339 = vunpack.c.l.b16 %v764
    %v2340 = vunpack.c.l.b16 %v765
    %v2341 = vunpack.c.l.b16 %v766
    %v2342 = vunpack.c.l.b16 %v767
    %v2343 = vunpack.c.l.b16 %v768
    %v2344 = vunpack.c.l.b16 %v769
    %v2345 = vunpack.c.l.b16 %v770
    %v2346 = vunpack.c.l.b16 %v771
    %v2347 = vunpack.c.l.b16 %v772
    %v2348 = vunpack.c.l.b16 %v773
    %v2349 = vunpack.c.l.b16 %v774
    %v2350 = vunpack.c.l.b16 %v775
    %v2351 = vunpack.c.l.b16 %v776
    %v2352 = vunpack.c.l.b16 %v777
    %v2353 = vunpack.c.l.b16 %v778
    %v2354 = vunpack.c.l.b16 %v779
    %v2355 = vunpack.c.l.b16 %v780
    %v2356 = vunpack.c.l.b16 %v781
    %v2357 = vunpack.c.l.b16 %v782
    %v2358 = vunpack.c.l.b16 %v783
    %v2359 = vunpack.c.l.b16 %v784
    %v2360 = vunpack.c.l.b16 %v785
    %v2361 = vunpack.c.l.b16 %v786
    %v2362 = vunpack.c.l.b16 %v787
    %v2363 = vunpack.c.l.b16 %v788
    %v2364 = vunpack.c.l.b16 %v789
    %v2365 = vunpack.c.l.b16 %v790
    %v2366 = vunpack.c.l.b16 %v791
    %v2367 = vunpack.c.l.b16 %v792
    %v2368 = vunpack.c.l.b16 %v793
    %v2369 = vunpack.c.l.b16 %v794
    %v2370 = vunpack.c.l.b16 %v795
    %v2371 = vunpack.c.l.b16 %v796
    %v2372 = vunpack.c.l.b16 %v797
    %v2373 = vunpack.c.l.b16 %v798
    %v2374 = vunpack.c.l.b16 %v799
    %v2375 = vunpack.c.l.b16 %v800
    %v2376 = vunpack.c.l.b16 %v801
    %v2377 = vunpack.c.l.b16 %v802
    %v2378 = vunpack.c.l.b16 %v803
    %v2379 = vunpack.c.l.b16 %v804
    %v2380 = vunpack.c.l.b16 %v805
    %v2381 = vunpack.c.l.b16 %v806
    %v2382 = vunpack.c.l.b16 %v807
    %v2383 = vunpack.c.l.b16 %v808
    %v2384 = vunpack.c.l.b16 %v809
    %v2385 = vunpack.c.l.b16 %v810
    %v2386 = vunpack.c.l.b16 %v811
    %v2387 = vunpack.c.l.b16 %v812
    %v2388 = vunpack.c.l.b16 %v813
    %v2389 = vunpack.c.l.b16 %v814
    %v2390 = vunpack.c.l.b16 %v815
    %v2391 = vunpack.c.l.b16 %v816
    %v2392 = vunpack.c.l.b16 %v817
    %v2393 = vunpack.c.l.b16 %v818
    %v2394 = vunpack.c.l.b16 %v819
    %v2395 = vunpack.c.l.b16 %v820
    %v2396 = vunpack.c.l.b16 %v821
    %v2397 = vunpack.c.l.b16 %v822
    %v2398 = vunpack.c.l.b16 %v823
    %v2399 = vunpack.c.l.b16 %v824
    %v2400 = vunpack.c.l.b16 %v825
    %v2401 = vunpack.c.l.b16 %v826
    %v2402 = vunpack.c.l.b16 %v827
    %v2403 = vunpack.c.l.b16 %v828
    %v2404 = vunpack.c.l.b16 %v829
    %v2405 = vunpack.c.l.b16 %v830
    %v2406 = vunpack.c.l.b16 %v831
    %v2407 = vunpack.c.l.b16 %v832
    %v2408 = vunpack.c.l.b16 %v833
    %v2409 = vunpack.c.l.b16 %v834
    %v2410 = vunpack.c.l.b16 %v835
    %v2411 = vunpack.c.l.b16 %v836
    %v2412 = vunpack.c.l.b16 %v837
    %v2413 = vunpack.c.l.b16 %v838
    %v2414 = vunpack.c.l.b16 %v839
    %v2415 = vunpack.c.l.b16 %v840
    %v2416 = vunpack.c.l.b16 %v841
    %v2417 = vunpack.c.l.b16 %v842
    %v2418 = vunpack.c.l.b16 %v843
    %v2419 = vunpack.c.l.b16 %v844
    %v2420 = vunpack.c.l.b16 %v845
    %v2421 = vunpack.c.l.b16 %v846
    %v2422 = vunpack.c.l.b16 %v847
    %v2423 = vunpack.c.l.b16 %v848
    %v2424 = vunpack.c.l.b16 %v849
    %v2425 = vunpack.c.l.b16 %v850
    %v2426 = vunpack.c.l.b16 %v851
    %v2427 = vunpack.c.l.b16 %v852
    %v2428 = vunpack.c.l.b16 %v853
    %v2429 = vunpack.c.l.b16 %v854
    %v2430 = vunpack.c.l.b16 %v855
    %v2431 = vunpack.c.l.b16 %v856
    %v2432 = vunpack.c.l.b16 %v857
    %v2433 = vunpack.c.l.b16 %v858
    %v2434 = vunpack.c.l.b16 %v859
    %v2435 = vunpack.c.l.b16 %v860
    %v2436 = vunpack.c.l.b16 %v861
    %v2437 = vunpack.c.l.b16 %v862
    %v2438 = vunpack.c.l.b16 %v863
    %v2439 = vunpack.c.l.b16 %v864
    %v2440 = vunpack.c.l.b16 %v865
    %v2441 = vunpack.c.l.b16 %v866
    %v2442 = vunpack.c.l.b16 %v867
    %v2443 = vunpack.c.l.b16 %v868
    %v2444 = vunpack.c.l.b16 %v869
    %v2445 = vunpack.c.l.b16 %v870
    %v2446 = vunpack.c.l.b16 %v871
    %v2447 = vunpack.c.l.b16 %v872
    %v2448 = vunpack.c.l.b16 %v873
    %v2449 = vunpack.c.l.b16 %v874
    %v2450 = vunpack.c.l.b16 %v875
    %v2451 = vunpack.c.l.b16 %v876
    %v2452 = vunpack.c.l.b16 %v877
    %v2453 = vunpack.c.l.b16 %v878
    %v2454 = vunpack.c.l.b16 %v879
    %v2455 = vunpack.c.l.b16 %v880
    %v2456 = vunpack.c.l.b16 %v881
    %v2457 = vunpack.c.l.b16 %v882
    %v2458 = vunpack.c.l.b16 %v883
    %v2459 = vunpack.c.l.b16 %v884
    %v2460 = vunpack.c.l.b16 %v885
    %v2461 = vunpack.c.l.b16 %v886
    %v2462 = vunpack.c.l.b16 %v887
    %v2463 = vunpack.c.l.b16 %v888
    %v2464 = vunpack.c.l.b16 %v889
    %v2465 = vunpack.c.l.b16 %v890
    %v2466 = vunpack.c.l.b16 %v891
    %v2467 = vunpack.c.l.b16 %v892
    %v2468 = vunpack.c.l.b16 %v893
    %v2469 = vunpack.c.l.b16 %v894
    %v2470 = vunpack.c.l.b16 %v895
    %v2471 = vunpack.c.l.b16 %v896
    %v2472 = vunpack.c.l.b16 %v897
    %v2473 = vunpack.c.l.b16 %v898
    %v2474 = vunpack.c.l.b16 %v899
    %v2475 = vunpack.c.l.b16 %v900
    %v2476 = vunpack.c.l.b16 %v901
    %v2477 = vunpack.c.l.b16 %v902
    %v2478 = vunpack.c.l.b16 %v903
    %v2479 = vunpack.c.l.b16 %v904
    %v2480 = vunpack.c.l.b16 %v905
    %v2481 = vunpack.c.l.b16 %v906
    %v2482 = vunpack.c.l.b16 %v907
    %v2483 = vunpack.c.l.b16 %v908
    %v2484 = vunpack.c.l.b16 %v909
    %v2485 = vunpack.c.l.b16 %v910
    %v2486 = vunpack.c.l.b16 %v911
    %v2487 = vunpack.c.l.b16 %v912
    %v2488 = vunpack.c.l.b16 %v913
    %v2489 = vunpack.c.l.b16 %v914
    %v2490 = vunpack.c.l.b16 %v915
    %v2491 = vunpack.c.l.b16 %v916
    %v2492 = vunpack.c.l.b16 %v917
    %v2493 = vunpack.c.l.b16 %v918
    %v2494 = vunpack.c.l.b16 %v919
    %v2495 = vunpack.c.l.b16 %v920
    %v2496 = vunpack.c.l.b16 %v921
    %v2497 = vunpack.c.l.b16 %v922
    %v2498 = vunpack.c.l.b16 %v923
    %v2499 = vunpack.c.l.b16 %v924
    %v2500 = vunpack.c.l.b16 %v925
    %v2501 = vunpack.c.l.b16 %v926
    %v2502 = vunpack.c.l.b16 %v927
    %v2503 = vunpack.c.l.b16 %v928
    %v2504 = vunpack.c.l.b16 %v929
    %v2505 = vunpack.c.l.b16 %v930
    %v2506 = vunpack.c.l.b16 %v931
    %v2507 = vunpack.c.l.b16 %v932
    %v2508 = vunpack.c.l.b16 %v933
    %v2509 = vunpack.c.l.b16 %v934
    %v2510 = vunpack.c.l.b16 %v935
    %v2511 = vunpack.c.l.b16 %v936
    %v2512 = vunpack.c.l.b16 %v937
    %v2513 = vunpack.c.l.b16 %v938
    %v2514 = vunpack.c.l.b16 %v939
    %v2515 = vunpack.c.l.b16 %v940
    %v2516 = vunpack.c.l.b16 %v941
    %v2517 = vunpack.c.l.b16 %v942
    %v2518 = vunpack.c.l.b16 %v943
    %v2519 = vunpack.c.l.b16 %v944
    %v2520 = vunpack.c.l.b16 %v945
    %v2521 = vunpack.c.l.b16 %v946
    %v2522 = vunpack.c.l.b16 %v947
    %v2523 = vunpack.c.l.b16 %v948
    %v2524 = vunpack.c.l.b16 %v949
    %v2525 = vunpack.c.l.b16 %v950
    %v2526 = vunpack.c.l.b16 %v951
    %v2527 = vunpack.c.l.b16 %v952
    %v2528 = vunpack.c.l.b16 %v953
    %v2529 = vunpack.c.l.b16 %v954
    %v2530 = vunpack.c.l.b16 %v955
    %v2531 = vunpack.c.l.b16 %v956
    %v2532 = vunpack.c.l.b16 %v957
    %v2533 = vunpack.c.l.b16 %v958
    %v2534 = vunpack.c.l.b16 %v959
    %v2535 = vunpack.c.l.b16 %v960
    %v2536 = vunpack.c.l.b16 %v961
    %v2537 = vunpack.c.l.b16 %v962
    %v2538 = vunpack.c.l.b16 %v963
    %v2539 = vunpack.c.l.b16 %v964
    %v2540 = vunpack.c.l.b16 %v965
    %v2541 = vunpack.c.l.b16 %v966
    %v2542 = vunpack.c.l.b16 %v967
    %v2543 = vunpack.c.l.b16 %v968
    %v2544 = vunpack.c.l.b16 %v969
    %v2545 = vunpack.c.l.b16 %v970
    %v2546 = vunpack.c.l.b16 %v971
    %v2547 = vunpack.c.l.b16 %v972
    %v2548 = vunpack.c.l.b16 %v973
    %v2549 = vunpack.c.l.b16 %v974
    %v2550 = vunpack.c.l.b16 %v975
    %v2551 = vunpack.c.l.b16 %v976
    %v2552 = vunpack.c.l.b16 %v977
    %v2553 = vunpack.c.l.b16 %v978
    %v2554 = vunpack.c.l.b16 %v979
    %v2555 = vunpack.c.l.b16 %v980
    %v2556 = vunpack.c.l.b16 %v981
    %v2557 = vunpack.c.l.b16 %v982
    %v2558 = vunpack.c.l.b16 %v983
    %v2559 = vunpack.c.l.b16 %v984
    %v2560 = vunpack.c.l.b16 %v985
    %v2561 = vunpack.c.l.b16 %v986
    %v2562 = vunpack.c.l.b16 %v987
    %v2563 = vunpack.c.l.b16 %v988
    %v2564 = vunpack.c.l.b16 %v989
    %v2565 = vunpack.c.l.b16 %v990
    %v2566 = vunpack.c.l.b16 %v991
    %v2567 = vunpack.c.l.b16 %v992
    %v2568 = vunpack.c.l.b16 %v993
    %v2569 = vunpack.c.l.b16 %v994
    %v2570 = vunpack.c.l.b16 %v995
    %v2571 = vunpack.c.l.b16 %v996
    %v2572 = vunpack.c.l.b16 %v997
    %v2573 = vunpack.c.l.b16 %v998
    %v2574 = vunpack.c.l.b16 %v999
    %v2575 = vunpack.c.l.b16 %v1000
    %v2576 = vunpack.c.l.b16 %v1001
    %v2577 = vunpack.c.l.b16 %v1002
    %v2578 = vunpack.c.l.b16 %v1003
    %v2579 = vunpack.c.l.b16 %v1004
    %v2580 = vunpack.c.l.b16 %v1005
    %v2581 = vunpack.c.l.b16 %v1006
    %v2582 = vunpack.c.l.b16 %v1007
    %v2583 = vunpack.c.l.b16 %v1008
    %v2584 = vunpack.c.l.b16 %v1009
    %v2585 = vunpack.c.l.b16 %v1010
    %v2586 = vunpack.c.l.b16 %v1011
    %v2587 = vunpack.c.l.b16 %v1012
    %v2588 = vunpack.c.l.b16 %v1013
    %v2589 = vunpack.c.l.b16 %v1014
    %v2590 = vunpack.c.l.b16 %v1015
    %v2591 = vunpack.c.l.b16 %v1016
    %v2592 = vunpack.c.l.b16 %v1017
    %v2593 = vunpack.c.l.b16 %v1018
    %v2594 = vunpack.c.l.b16 %v1019
    %v2595 = vunpack.c.l.b16 %v1020
    %v2596 = vunpack.c.l.b16 %v1021
    %v2597 = vunpack.c.l.b16 %v1022
    %v2598 = vunpack.c.l.b16 %v1023
    %v2599 = vunpack.c.l.b16 %v1024
    %v2600 = vunpack.c.l.b16 %v1025
    %v2601 = vunpack.c.l.b16 %v1026
    %v2602 = vunpack.c.l.b16 %v1027
    %v2603 = vunpack.c.l.b16 %v1028
    %v2604 = vunpack.c.l.b16 %v1029
    %v2605 = vunpack.c.l.b16 %v1030
    %v2606 = vunpack.c.l.b16 %v1031
    %v2607 = vunpack.c.l.b16 %v1032
    %v2608 = vunpack.c.l.b16 %v1033
    %v2609 = vunpack.c.l.b16 %v1034
    %v2610 = vunpack.c.l.b16 %v1035
    %v2611 = vunpack.c.l.b16 %v1036
    %v2612 = vunpack.c.l.b16 %v1037
    %v2613 = vunpack.c.l.b16 %v1038
    %v2614 = vunpack.c.l.b16 %v1039
    %v2615 = vunpack.c.l.b16 %v1040
    %v2616 = vunpack.c.l.b16 %v1041
    %v2617 = vunpack.c.l.b16 %v1042
    %v2618 = vunpack.c.l.b16 %v1043
    %v2619 = vunpack.c.l.b16 %v1044
    %v2620 = vunpack.c.l.b16 %v1045
    %v2621 = vunpack.c.l.b16 %v1046
    %v2622 = vunpack.c.l.b16 %v1047
    %v2623 = vunpack.c.l.b16 %v1048
    %v2624 = vunpack.c.l.b16 %v1049
    %v2625 = vunpack.c.l.b16 %v1050
    %v2626 = vunpack.c.l.b16 %v1051
    %v2627 = vunpack.c.l.b16 %v1052
    %v2628 = vunpack.c.l.b16 %v1053
    %v2629 = vunpack.c.l.b16 %v1054
    %v2630 = vunpack.c.l.b16 %v1055
    %v2631 = vunpack.c.l.b16 %v1056
    %v2632 = vunpack.c.l.b16 %v1057
    %v2633 = vunpack.c.l.b16 %v1058
    %v2634 = vunpack.c.l.b16 %v1059
    %v2635 = vunpack.c.l.b16 %v1060
    %v2636 = vunpack.c.l.b16 %v1061
    %v2637 = vunpack.c.l.b16 %v1062
    %v2638 = vunpack.c.l.b16 %v1063
    %v2639 = vunpack.c.l.b16 %v1064
    %v2640 = vunpack.c.l.b16 %v1065
    %v2641 = vunpack.c.l.b16 %v1066
    %v2642 = vunpack.c.l.b16 %v1067
    %v2643 = vunpack.c.l.b16 %v1068
    %v2644 = vunpack.c.l.b16 %v1069
    %v2645 = vunpack.c.l.b16 %v1070
    %v2646 = vunpack.c.l.b16 %v1071
    %v2647 = vunpack.c.l.b16 %v1072
    %v2648 = vunpack.c.l.b16 %v1073
    %v2649 = vunpack.c.l.b16 %v1074
    %v2650 = vunpack.c.l.b16 %v1075
    %v2651 = vunpack.c.l.b16 %v1076
    %v2652 = vunpack.c.l.b16 %v1077
    %v2653 = vunpack.c.l.b16 %v1078
    %v2654 = vunpack.c.l.b16 %v1079
    %v2655 = vunpack.c.l.b16 %v1080
    %v2656 = vunpack.c.l.b16 %v1081
    %v2657 = vunpack.c.l.b16 %v1082
    %v2658 = vunpack.c.l.b16 %v1083
    %v2659 = vunpack.c.l.b16 %v1084
    %v2660 = vunpack.c.l.b16 %v1085
    %v2661 = vunpack.c.l.b16 %v1086
    %v2662 = vunpack.c.l.b16 %v1087
    %v2663 = vunpack.c.l.b16 %v1088
    %v2664 = vunpack.c.l.b16 %v1089
    %v2665 = vunpack.c.l.b16 %v1090
    %v2666 = vunpack.c.l.b16 %v1091
    %v2667 = vunpack.c.l.b16 %v1092
    %v2668 = vunpack.c.l.b16 %v1093
    %v2669 = vunpack.c.l.b16 %v1094
    %v2670 = vunpack.c.l.b16 %v1095
    %v2671 = vunpack.c.l.b16 %v1096
    %v2672 = vunpack.c.l.b16 %v1097
    %v2673 = vunpack.c.l.b16 %v1098
    %v2674 = vunpack.c.l.b16 %v1099
    %v2675 = vunpack.c.l.b16 %v1100
    %v2676 = vunpack.c.l.b16 %v1101
    %v2677 = vunpack.c.l.b16 %v1102
    %v2678 = vunpack.c.l.b16 %v1103
    %v2679 = vunpack.c.l.b16 %v1104
    %v2680 = vunpack.c.l.b16 %v1105
    %v2681 = vunpack.c.l.b16 %v1106
    %v2682 = vunpack.c.l.b16 %v1107
    %v2683 = vunpack.c.l.b16 %v1108
    %v2684 = vunpack.c.l.b16 %v1109
    %v2685 = vunpack.c.l.b16 %v1110
    %v2686 = vunpack.c.l.b16 %v1111
    %v2687 = vunpack.c.l.b16 %v1112
    %v2688 = vunpack.c.l.b16 %v1113
    %v2689 = vunpack.c.l.b16 %v1114
    %v2690 = vunpack.c.l.b16 %v1115
    %v2691 = vunpack.c.l.b16 %v1116
    %v2692 = vunpack.c.l.b16 %v1117
    %v2693 = vunpack.c.l.b16 %v1118
    %v2694 = vunpack.c.l.b16 %v1119
    %v2695 = vunpack.c.l.b16 %v1120
    %v2696 = vunpack.c.l.b16 %v1121
    %v2697 = vunpack.c.l.b16 %v1122
    %v2698 = vunpack.c.l.b16 %v1123
    %v2699 = vunpack.c.l.b16 %v1124
    %v2700 = vunpack.c.l.b16 %v1125
    %v2701 = vunpack.c.l.b16 %v1126
    %v2702 = vunpack.c.l.b16 %v1127
    %v2703 = vunpack.c.l.b16 %v1128
    %v2704 = vunpack.c.l.b16 %v1129
    %v2705 = vunpack.c.l.b16 %v1130
    %v2706 = vunpack.c.l.b16 %v1131
    %v2707 = vunpack.c.l.b16 %v1132
    %v2708 = vunpack.c.l.b16 %v1133
    %v2709 = vunpack.c.l.b16 %v1134
    %v2710 = vunpack.c.l.b16 %v1135
    %v2711 = vunpack.c.l.b16 %v1136
    %v2712 = vunpack.c.l.b16 %v1137
    %v2713 = vunpack.c.l.b16 %v1138
    %v2714 = vunpack.c.l.b16 %v1139
    %v2715 = vunpack.c.l.b16 %v1140
    %v2716 = vpack.c.b16 %v1933, %v1932
    %v2717 = vpack.c.b16 %v1935, %v1934
    %v2718 = vpack.c.b16 %v1937, %v1936
    %v2719 = vpack.c.b16 %v1939, %v1938
    %v2720 = vpack.c.b16 %v1941, %v1940
    %v2721 = vpack.c.b16 %v1943, %v1942
    %v2722 = vpack.c.b16 %v1945, %v1944
    %v2723 = vpack.c.b16 %v1947, %v1946
    %v2724 = vpack.c.b16 %v1949, %v1948
    %v2725 = vpack.c.b16 %v1951, %v1950
    %v2726 = vpack.c.b16 %v1953, %v1952
    %v2727 = vpack.c.b16 %v1955, %v1954
    %v2728 = vpack.c.b16 %v1957, %v1956
    %v2729 = vpack.c.b16 %v1959, %v1958
    %v2730 = vpack.c.b16 %v1961, %v1960
    %v2731 = vpack.c.b16 %v1963, %v1962
    %v2732 = vpack.c.b16 %v1965, %v1964
    %v2733 = vpack.c.b16 %v1967, %v1966
    %v2734 = vpack.c.b16 %v1969, %v1968
    %v2735 = vpack.c.b16 %v1971, %v1970
    %v2736 = vpack.c.b16 %v1973, %v1972
    %v2737 = vpack.c.b16 %v1975, %v1974
    %v2738 = vpack.c.b16 %v1977, %v1976
    %v2739 = vpack.c.b16 %v1979, %v1978
    %v2740 = vpack.c.b16 %v1981, %v1980
    %v2741 = vpack.c.b16 %v1983, %v1982
    %v2742 = vpack.c.b16 %v1985, %v1984
    %v2743 = vpack.c.b16 %v1987, %v1986
    %v2744 = vpack.c.b16 %v1989, %v1988
    %v2745 = vpack.c.b16 %v1991, %v1990
    %v2746 = vpack.c.b16 %v1993, %v1992
    %v2747 = vpack.c.b16 %v1995, %v1994
    %v2748 = vpack.c.b16 %v1997, %v1996
    %v2749 = vpack.c.b16 %v1999, %v1998
    %v2750 = vpack.c.b16 %v2001, %v2000
    %v2751 = vpack.c.b16 %v2003, %v2002
    %v2752 = vpack.c.b16 %v2005, %v2004
    %v2753 = vpack.c.b16 %v2007, %v2006
    %v2754 = vpack.c.b16 %v2009, %v2008
    %v2755 = vpack.c.b16 %v2011, %v2010
    %v2756 = vpack.c.b16 %v2013, %v2012
    %v2757 = vpack.c.b16 %v2015, %v2014
    %v2758 = vpack.c.b16 %v2017, %v2016
    %v2759 = vpack.c.b16 %v2019, %v2018
    %v2760 = vpack.c.b16 %v2021, %v2020
    %v2761 = vpack.c.b16 %v2023, %v2022
    %v2762 = vpack.c.b16 %v2025, %v2024
    %v2763 = vpack.c.b16 %v2027, %v2026
    %v2764 = vpack.c.b16 %v2029, %v2028
    %v2765 = vpack.c.b16 %v2031, %v2030
    %v2766 = vpack.c.b16 %v2033, %v2032
    %v2767 = vpack.c.b16 %v2035, %v2034
    %v2768 = vpack.c.b16 %v2037, %v2036
    %v2769 = vpack.c.b16 %v2039, %v2038
    %v2770 = vpack.c.b16 %v2041, %v2040
    %v2771 = vpack.c.b16 %v2043, %v2042
    %v2772 = vpack.c.b16 %v2045, %v2044
    %v2773 = vpack.c.b16 %v2047, %v2046
    %v2774 = vpack.c.b16 %v2049, %v2048
    %v2775 = vpack.c.b16 %v2051, %v2050
    %v2776 = vpack.c.b16 %v2053, %v2052
    %v2777 = vpack.c.b16 %v2055, %v2054
    %v2778 = vpack.c.b16 %v2057, %v2056
    %v2779 = vpack.c.b16 %v2059, %v2058
    %v2780 = vpack.c.b16 %v2061, %v2060
    %v2781 = vpack.c.b16 %v2063, %v2062
    %v2782 = vpack.c.b16 %v2065, %v2064
    %v2783 = vpack.c.b16 %v2067, %v2066
    %v2784 = vpack.c.b16 %v2069, %v2068
    %v2785 = vpack.c.b16 %v2071, %v2070
    %v2786 = vpack.c.b16 %v2073, %v2072
    %v2787 = vpack.c.b16 %v2075, %v2074
    %v2788 = vpack.c.b16 %v2077, %v2076
    %v2789 = vpack.c.b16 %v2079, %v2078
    %v2790 = vpack.c.b16 %v2081, %v2080
    %v2791 = vpack.c.b16 %v2083, %v2082
    %v2792 = vpack.c.b16 %v2085, %v2084
    %v2793 = vpack.c.b16 %v2087, %v2086
    %v2794 = vpack.c.b16 %v2089, %v2088
    %v2795 = vpack.c.b16 %v2091, %v2090
    %v2796 = vpack.c.b16 %v2093, %v2092
    %v2797 = vpack.c.b16 %v2095, %v2094
    %v2798 = vpack.c.b16 %v2097, %v2096
    %v2799 = vpack.c.b16 %v2099, %v2098
    %v2800 = vpack.c.b16 %v2101, %v2100
    %v2801 = vpack.c.b16 %v2103, %v2102
    %v2802 = vpack.c.b16 %v2105, %v2104
    %v2803 = vpack.c.b16 %v2107, %v2106
    %v2804 = vpack.c.b16 %v2109, %v2108
    %v2805 = vpack.c.b16 %v2111, %v2110
    %v2806 = vpack.c.b16 %v2113, %v2112
    %v2807 = vpack.c.b16 %v2115, %v2114
    %v2808 = vpack.c.b16 %v2117, %v2116
    %v2809 = vpack.c.b16 %v2119, %v2118
    %v2810 = vpack.c.b16 %v2121, %v2120
    %v2811 = vpack.c.b16 %v2123, %v2122
    %v2812 = vpack.c.b16 %v2125, %v2124
    %v2813 = vpack.c.b16 %v2127, %v2126
    %v2814 = vpack.c.b16 %v2129, %v2128
    %v2815 = vpack.c.b16 %v2131, %v2130
    %v2816 = vpack.c.b16 %v2133, %v2132
    %v2817 = vpack.c.b16 %v2135, %v2134
    %v2818 = vpack.c.b16 %v2137, %v2136
    %v2819 = vpack.c.b16 %v2139, %v2138
    %v2820 = vpack.c.b16 %v2141, %v2140
    %v2821 = vpack.c.b16 %v2143, %v2142
    %v2822 = vpack.c.b16 %v2145, %v2144
    %v2823 = vpack.c.b16 %v2147, %v2146
    %v2824 = vpack.c.b16 %v2149, %v2148
    %v2825 = vpack.c.b16 %v2151, %v2150
    %v2826 = vpack.c.b16 %v2153, %v2152
    %v2827 = vpack.c.b16 %v2155, %v2154
    %v2828 = vpack.c.b16 %v2157, %v2156
    %v2829 = vpack.c.b16 %v2159, %v2158
    %v2830 = vpack.c.b16 %v2161, %v2160
    %v2831 = vpack.c.b16 %v2163, %v2162
    %v2832 = vpack.c.b16 %v2165, %v2164
    %v2833 = vpack.c.b16 %v2167, %v2166
    %v2834 = vpack.c.b16 %v2169, %v2168
    %v2835 = vpack.c.b16 %v2171, %v2170
    %v2836 = vpack.c.b16 %v2173, %v2172
    %v2837 = vpack.c.b16 %v2175, %v2174
    %v2838 = vpack.c.b16 %v2177, %v2176
    %v2839 = vpack.c.b16 %v2179, %v2178
    %v2840 = vpack.c.b16 %v2181, %v2180
    %v2841 = vpack.c.b16 %v2183, %v2182
    %v2842 = vpack.c.b16 %v2185, %v2184
    %v2843 = vpack.c.b16 %v2187, %v2186
    %v2844 = vpack.c.b16 %v2189, %v2188
    %v2845 = vpack.c.b16 %v2191, %v2190
    %v2846 = vpack.c.b16 %v2193, %v2192
    %v2847 = vpack.c.b16 %v2195, %v2194
    %v2848 = vpack.c.b16 %v2197, %v2196
    %v2849 = vpack.c.b16 %v2199, %v2198
    %v2850 = vpack.c.b16 %v2201, %v2200
    %v2851 = vpack.c.b16 %v2203, %v2202
    %v2852 = vpack.c.b16 %v2205, %v2204
    %v2853 = vpack.c.b16 %v2207, %v2206
    %v2854 = vpack.c.b16 %v2209, %v2208
    %v2855 = vpack.c.b16 %v2211, %v2210
    %v2856 = vpack.c.b16 %v2213, %v2212
    %v2857 = vpack.c.b16 %v2215, %v2214
    %v2858 = vpack.c.b16 %v2217, %v2216
    %v2859 = vpack.c.b16 %v2219, %v2218
    %v2860 = vpack.c.b16 %v2221, %v2220
    %v2861 = vpack.c.b16 %v2223, %v2222
    %v2862 = vpack.c.b16 %v2225, %v2224
    %v2863 = vpack.c.b16 %v2227, %v2226
    %v2864 = vpack.c.b16 %v2229, %v2228
    %v2865 = vpack.c.b16 %v2231, %v2230
    %v2866 = vpack.c.b16 %v2233, %v2232
    %v2867 = vpack.c.b16 %v2235, %v2234
    %v2868 = vpack.c.b16 %v2237, %v2236
    %v2869 = vpack.c.b16 %v2239, %v2238
    %v2870 = vpack.c.b16 %v2241, %v2240
    %v2871 = vpack.c.b16 %v2243, %v2242
    %v2872 = vpack.c.b16 %v2245, %v2244
    %v2873 = vpack.c.b16 %v2247, %v2246
    %v2874 = vpack.c.b16 %v2249, %v2248
    %v2875 = vpack.c.b16 %v2251, %v2250
    %v2876 = vpack.c.b16 %v2253, %v2252
    %v2877 = vpack.c.b16 %v2255, %v2254
    %v2878 = vpack.c.b16 %v2257, %v2256
    %v2879 = vpack.c.b16 %v2259, %v2258
    %v2880 = vpack.c.b16 %v2261, %v2260
    %v2881 = vpack.c.b16 %v2263, %v2262
    %v2882 = vpack.c.b16 %v2265, %v2264
    %v2883 = vpack.c.b16 %v2267, %v2266
    %v2884 = vpack.c.b16 %v2269, %v2268
    %v2885 = vpack.c.b16 %v2271, %v2270
    %v2886 = vpack.c.b16 %v2273, %v2272
    %v2887 = vpack.c.b16 %v2275, %v2274
    %v2888 = vpack.c.b16 %v2277, %v2276
    %v2889 = vpack.c.b16 %v2279, %v2278
    %v2890 = vpack.c.b16 %v2281, %v2280
    %v2891 = vpack.c.b16 %v2283, %v2282
    %v2892 = vpack.c.b16 %v2285, %v2284
    %v2893 = vpack.c.b16 %v2287, %v2286
    %v2894 = vpack.c.b16 %v2289, %v2288
    %v2895 = vpack.c.b16 %v2291, %v2290
    %v2896 = vpack.c.b16 %v2293, %v2292
    %v2897 = vpack.c.b16 %v2295, %v2294
    %v2898 = vpack.c.b16 %v2297, %v2296
    %v2899 = vpack.c.b16 %v2299, %v2298
    %v2900 = vpack.c.b16 %v2301, %v2300
    %v2901 = vpack.c.b16 %v2303, %v2302
    %v2902 = vpack.c.b16 %v2305, %v2304
    %v2903 = vpack.c.b16 %v2307, %v2306
    %v2904 = vpack.c.b16 %v2309, %v2308
    %v2905 = vpack.c.b16 %v2311, %v2310
    %v2906 = vpack.c.b16 %v2313, %v2312
    %v2907 = vpack.c.b16 %v2315, %v2314
    %v2908 = vpack.c.b16 %v2317, %v2316
    %v2909 = vpack.c.b16 %v2319, %v2318
    %v2910 = vpack.c.b16 %v2321, %v2320
    %v2911 = vpack.c.b16 %v2323, %v2322
    %v2912 = vpack.c.b16 %v2325, %v2324
    %v2913 = vpack.c.b16 %v2327, %v2326
    %v2914 = vpack.c.b16 %v2329, %v2328
    %v2915 = vpack.c.b16 %v2331, %v2330
    %v2916 = vpack.c.b16 %v2333, %v2332
    %v2917 = vpack.c.b16 %v2335, %v2334
    %v2918 = vpack.c.b16 %v2337, %v2336
    %v2919 = vpack.c.b16 %v2339, %v2338
    %v2920 = vpack.c.b16 %v2341, %v2340
    %v2921 = vpack.c.b16 %v2343, %v2342
    %v2922 = vpack.c.b16 %v2345, %v2344
    %v2923 = vpack.c.b16 %v2347, %v2346
    %v2924 = vpack.c.b16 %v2349, %v2348
    %v2925 = vpack.c.b16 %v2351, %v2350
    %v2926 = vpack.c.b16 %v2353, %v2352
    %v2927 = vpack.c.b16 %v2355, %v2354
    %v2928 = vpack.c.b16 %v2357, %v2356
    %v2929 = vpack.c.b16 %v2359, %v2358
    %v2930 = vpack.c.b16 %v2361, %v2360
    %v2931 = vpack.c.b16 %v2363, %v2362
    %v2932 = vpack.c.b16 %v2365, %v2364
    %v2933 = vpack.c.b16 %v2367, %v2366
    %v2934 = vpack.c.b16 %v2369, %v2368
    %v2935 = vpack.c.b16 %v2371, %v2370
    %v2936 = vpack.c.b16 %v2373, %v2372
    %v2937 = vpack.c.b16 %v2375, %v2374
    %v2938 = vpack.c.b16 %v2377, %v2376
    %v2939 = vpack.c.b16 %v2379, %v2378
    %v2940 = vpack.c.b16 %v2381, %v2380
    %v2941 = vpack.c.b16 %v2383, %v2382
    %v2942 = vpack.c.b16 %v2385, %v2384
    %v2943 = vpack.c.b16 %v2387, %v2386
    %v2944 = vpack.c.b16 %v2389, %v2388
    %v2945 = vpack.c.b16 %v2391, %v2390
    %v2946 = vpack.c.b16 %v2393, %v2392
    %v2947 = vpack.c.b16 %v2395, %v2394
    %v2948 = vpack.c.b16 %v2397, %v2396
    %v2949 = vpack.c.b16 %v2399, %v2398
    %v2950 = vpack.c.b16 %v2401, %v2400
    %v2951 = vpack.c.b16 %v2403, %v2402
    %v2952 = vpack.c.b16 %v2405, %v2404
    %v2953 = vpack.c.b16 %v2407, %v2406
    %v2954 = vpack.c.b16 %v2409, %v2408
    %v2955 = vpack.c.b16 %v2411, %v2410
    %v2956 = vpack.c.b16 %v2413, %v2412
    %v2957 = vpack.c.b16 %v2415, %v2414
    %v2958 = vpack.c.b16 %v2417, %v2416
    %v2959 = vpack.c.b16 %v2419, %v2418
    %v2960 = vpack.c.b16 %v2421, %v2420
    %v2961 = vpack.c.b16 %v2423, %v2422
    %v2962 = vpack.c.b16 %v2425, %v2424
    %v2963 = vpack.c.b16 %v2427, %v2426
    %v2964 = vpack.c.b16 %v2429, %v2428
    %v2965 = vpack.c.b16 %v2431, %v2430
    %v2966 = vpack.c.b16 %v2433, %v2432
    %v2967 = vpack.c.b16 %v2435, %v2434
    %v2968 = vpack.c.b16 %v2437, %v2436
    %v2969 = vpack.c.b16 %v2439, %v2438
    %v2970 = vpack.c.b16 %v2441, %v2440
    %v2971 = vpack.c.b16 %v2443, %v2442
    %v2972 = vpack.c.b16 %v2445, %v2444
    %v2973 = vpack.c.b16 %v2447, %v2446
    %v2974 = vpack.c.b16 %v2449, %v2448
    %v2975 = vpack.c.b16 %v2451, %v2450
    %v2976 = vpack.c.b16 %v2453, %v2452
    %v2977 = vpack.c.b16 %v2455, %v2454
    %v2978 = vpack.c.b16 %v2457, %v2456
    %v2979 = vpack.c.b16 %v2459, %v2458
    %v2980 = vpack.c.b16 %v2461, %v2460
    %v2981 = vpack.c.b16 %v2463, %v2462
    %v2982 = vpack.c.b16 %v2465, %v2464
    %v2983 = vpack.c.b16 %v2467, %v2466
    %v2984 = vpack.c.b16 %v2469, %v2468
    %v2985 = vpack.c.b16 %v2471, %v2470
    %v2986 = vpack.c.b16 %v2473, %v2472
    %v2987 = vpack.c.b16 %v2475, %v2474
    %v2988 = vpack.c.b16 %v2477, %v2476
    %v2989 = vpack.c.b16 %v2479, %v2478
    %v2990 = vpack.c.b16 %v2481, %v2480
    %v2991 = vpack.c.b16 %v2483, %v2482
    %v2992 = vpack.c.b16 %v2485, %v2484
    %v2993 = vpack.c.b16 %v2487, %v2486
    %v2994 = vpack.c.b16 %v2489, %v2488
    %v2995 = vpack.c.b16 %v2491, %v2490
    %v2996 = vpack.c.b16 %v2493, %v2492
    %v2997 = vpack.c.b16 %v2495, %v2494
    %v2998 = vpack.c.b16 %v2497, %v2496
    %v2999 = vpack.c.b16 %v2499, %v2498
    %v3000 = vpack.c.b16 %v2501, %v2500
    %v3001 = vpack.c.b16 %v2503, %v2502
    %v3002 = vpack.c.b16 %v2505, %v2504
    %v3003 = vpack.c.b16 %v2507, %v2506
    %v3004 = vpack.c.b16 %v2509, %v2508
    %v3005 = vpack.c.b16 %v2511, %v2510
    %v3006 = vpack.c.b16 %v2513, %v2512
    %v3007 = vpack.c.b16 %v2515, %v2514
    %v3008 = vpack.c.b16 %v2517, %v2516
    %v3009 = vpack.c.b16 %v2519, %v2518
    %v3010 = vpack.c.b16 %v2521, %v2520
    %v3011 = vpack.c.b16 %v2523, %v2522
    %v3012 = vpack.c.b16 %v2525, %v2524
    %v3013 = vpack.c.b16 %v2527, %v2526
    %v3014 = vpack.c.b16 %v2529, %v2528
    %v3015 = vpack.c.b16 %v2531, %v2530
    %v3016 = vpack.c.b16 %v2533, %v2532
    %v3017 = vpack.c.b16 %v2535, %v2534
    %v3018 = vpack.c.b16 %v2537, %v2536
    %v3019 = vpack.c.b16 %v2539, %v2538
    %v3020 = vpack.c.b16 %v2541, %v2540
    %v3021 = vpack.c.b16 %v2543, %v2542
    %v3022 = vpack.c.b16 %v2545, %v2544
    %v3023 = vpack.c.b16 %v2547, %v2546
    %v3024 = vpack.c.b16 %v2549, %v2548
    %v3025 = vpack.c.b16 %v2551, %v2550
    %v3026 = vpack.c.b16 %v2553, %v2552
    %v3027 = vpack.c.b16 %v2555, %v2554
    %v3028 = vpack.c.b16 %v2557, %v2556
    %v3029 = vpack.c.b16 %v2559, %v2558
    %v3030 = vpack.c.b16 %v2561, %v2560
    %v3031 = vpack.c.b16 %v2563, %v2562
    %v3032 = vpack.c.b16 %v2565, %v2564
    %v3033 = vpack.c.b16 %v2567, %v2566
    %v3034 = vpack.c.b16 %v2569, %v2568
    %v3035 = vpack.c.b16 %v2571, %v2570
    %v3036 = vpack.c.b16 %v2573, %v2572
    %v3037 = vpack.c.b16 %v2575, %v2574
    %v3038 = vpack.c.b16 %v2577, %v2576
    %v3039 = vpack.c.b16 %v2579, %v2578
    %v3040 = vpack.c.b16 %v2581, %v2580
    %v3041 = vpack.c.b16 %v2583, %v2582
    %v3042 = vpack.c.b16 %v2585, %v2584
    %v3043 = vpack.c.b16 %v2587, %v2586
    %v3044 = vpack.c.b16 %v2589, %v2588
    %v3045 = vpack.c.b16 %v2591, %v2590
    %v3046 = vpack.c.b16 %v2593, %v2592
    %v3047 = vpack.c.b16 %v2595, %v2594
    %v3048 = vpack.c.b16 %v2597, %v2596
    %v3049 = vpack.c.b16 %v2599, %v2598
    %v3050 = vpack.c.b16 %v2601, %v2600
    %v3051 = vpack.c.b16 %v2603, %v2602
    %v3052 = vpack.c.b16 %v2605, %v2604
    %v3053 = vpack.c.b16 %v2607, %v2606
    %v3054 = vpack.c.b16 %v2609, %v2608
    %v3055 = vpack.c.b16 %v2611, %v2610
    %v3056 = vpack.c.b16 %v2613, %v2612
    %v3057 = vpack.c.b16 %v2615, %v2614
    %v3058 = vpack.c.b16 %v2617, %v2616
    %v3059 = vpack.c.b16 %v2619, %v2618
    %v3060 = vpack.c.b16 %v2621, %v2620
    %v3061 = vpack.c.b16 %v2623, %v2622
    %v3062 = vpack.c.b16 %v2625, %v2624
    %v3063 = vpack.c.b16 %v2627, %v2626
    %v3064 = vpack.c.b16 %v2629, %v2628
    %v3065 = vpack.c.b16 %v2631, %v2630
    %v3066 = vpack.c.b16 %v2633, %v2632
    %v3067 = vpack.c.b16 %v2635, %v2634
    %v3068 = vpack.c.b16 %v2637, %v2636
    %v3069 = vpack.c.b16 %v2639, %v2638
    %v3070 = vpack.c.b16 %v2641, %v2640
    %v3071 = vpack.c.b16 %v2643, %v2642
    %v3072 = vpack.c.b16 %v2645, %v2644
    %v3073 = vpack.c.b16 %v2647, %v2646
    %v3074 = vpack.c.b16 %v2649, %v2648
    %v3075 = vpack.c.b16 %v2651, %v2650
    %v3076 = vpack.c.b16 %v2653, %v2652
    %v3077 = vpack.c.b16 %v2655, %v2654
    %v3078 = vpack.c.b16 %v2657, %v2656
    %v3079 = vpack.c.b16 %v2659, %v2658
    %v3080 = vpack.c.b16 %v2661, %v2660
    %v3081 = vpack.c.b16 %v2663, %v2662
    %v3082 = vpack.c.b16 %v2665, %v2664
    %v3083 = vpack.c.b16 %v2667, %v2666
    %v3084 = vpack.c.b16 %v2669, %v2668
    %v3085 = vpack.c.b16 %v2671, %v2670
    %v3086 = vpack.c.b16 %v2673, %v2672
    %v3087 = vpack.c.b16 %v2675, %v2674
    %v3088 = vpack.c.b16 %v2677, %v2676
    %v3089 = vpack.c.b16 %v2679, %v2678
    %v3090 = vpack.c.b16 %v2681, %v2680
    %v3091 = vpack.c.b16 %v2683, %v2682
    %v3092 = vpack.c.b16 %v2685, %v2684
    %v3093 = vpack.c.b16 %v2687, %v2686
    %v3094 = vpack.c.b16 %v2689, %v2688
    %v3095 = vpack.c.b16 %v2691, %v2690
    %v3096 = vpack.c.b16 %v2693, %v2692
    %v3097 = vpack.c.b16 %v2695, %v2694
    %v3098 = vpack.c.b16 %v2697, %v2696
    %v3099 = vpack.c.b16 %v2699, %v2698
    %v3100 = vpack.c.b16 %v2701, %v2700
    %v3101 = vpack.c.b16 %v2703, %v2702
    %v3102 = vpack.c.b16 %v2705, %v2704
    %v3103 = vpack.c.b16 %v2707, %v2706
    %v3104 = vpack.c.b16 %v2709, %v2708
    %v3105 = vpack.c.b16 %v2711, %v2710
    %v3106 = vpack.c.b16 %v2713, %v2712
    %v3107 = vpack.c.b16 %v2715, %v2714
    %3500 = vmatprep.subr.bf16.mxu0 0
    %3501 = vmatpush1.bf16.msra.mxu0 %v2716
    %3502 = vmatprep.subr.bf16.mxu0 0
    %3503 = vmatpush1.bf16.msra.mxu0 %v2717
    %3504 = vmatprep.subr.bf16.mxu0 0
    %3505 = vmatpush1.bf16.msra.mxu0 %v2718
    %3506 = vmatprep.subr.bf16.mxu0 0
    %3507 = vmatpush1.bf16.msra.mxu0 %v2719
    %3508 = vmatprep.subr.bf16.mxu0 0
    %3509 = vmatpush1.bf16.msra.mxu0 %v2720
    %3510 = vmatprep.subr.bf16.mxu0 0
    %3511 = vmatpush1.bf16.msra.mxu0 %v2721
    %3512 = vmatprep.subr.bf16.mxu0 0
    %3513 = vmatpush1.bf16.msra.mxu0 %v2722
    %3514 = vmatprep.subr.bf16.mxu0 0
    %3515 = vmatpush1.bf16.msra.mxu0 %v2723
    %3516 = vmatprep.subr.bf16.mxu0 0
    %3517 = vmatpush1.bf16.msra.mxu0 %v2724
    %3518 = vmatprep.subr.bf16.mxu0 0
    %3519 = vmatpush1.bf16.msra.mxu0 %v2725
    %3520 = vmatprep.subr.bf16.mxu0 0
    %3521 = vmatpush1.bf16.msra.mxu0 %v2726
    %3522 = vmatprep.subr.bf16.mxu0 0
    %3523 = vmatpush1.bf16.msra.mxu0 %v2727
    %3524 = vmatprep.subr.bf16.mxu0 0
    %3525 = vmatpush1.bf16.msra.mxu0 %v2728
    %3526 = vmatprep.subr.bf16.mxu0 0
    %3527 = vmatpush1.bf16.msra.mxu0 %v2729
    %3528 = vmatprep.subr.bf16.mxu0 0
    %3529 = vmatpush1.bf16.msra.mxu0 %v2730
    %3530 = vmatprep.subr.bf16.mxu0 0
    %3531 = vmatpush1.bf16.msra.mxu0 %v2731
    %3532 = vmatprep.mubr.bf16.mxu0 %v309
    %3533 = vmatmul.mubr.bf16.gmra.mrb[0].mxu0 %v308
    %v3534 = vpop.f32.mrb[0].mxu0
    %v3535 = vadd.f32 %v1146, %v3534
    %v3536 = vpop.f32.mrb[0].mxu0
    %v3537 = vpop.f32.mrb[0].mxu0
    %v3538 = vpop.f32.mrb[0].mxu0
    %3539 = vdwg.mxu0
    %3540 = vmatprep.subr.bf16.mxu0 0
    %3541 = vmatpush1.bf16.msra.mxu0 %v2732
    %3542 = vmatprep.subr.bf16.mxu0 0
    %3543 = vmatpush1.bf16.msra.mxu0 %v2733
    %3544 = vmatprep.subr.bf16.mxu0 0
    %3545 = vmatpush1.bf16.msra.mxu0 %v2734
    %3546 = vmatprep.subr.bf16.mxu0 0
    %3547 = vmatpush1.bf16.msra.mxu0 %v2735
    %3548 = vmatprep.subr.bf16.mxu0 0
    %3549 = vmatpush1.bf16.msra.mxu0 %v2736
    %3550 = vmatprep.subr.bf16.mxu0 0
    %3551 = vmatpush1.bf16.msra.mxu0 %v2737
    %3552 = vmatprep.subr.bf16.mxu0 0
    %3553 = vmatpush1.bf16.msra.mxu0 %v2738
    %3554 = vmatprep.subr.bf16.mxu0 0
    %3555 = vmatpush1.bf16.msra.mxu0 %v2739
    %3556 = vmatprep.subr.bf16.mxu0 0
    %3557 = vmatpush1.bf16.msra.mxu0 %v2740
    %3558 = vmatprep.subr.bf16.mxu0 0
    %3559 = vmatpush1.bf16.msra.mxu0 %v2741
    %3560 = vmatprep.subr.bf16.mxu0 0
    %3561 = vmatpush1.bf16.msra.mxu0 %v2742
    %3562 = vmatprep.subr.bf16.mxu0 0
    %3563 = vmatpush1.bf16.msra.mxu0 %v2743
    %3564 = vmatprep.subr.bf16.mxu0 0
    %3565 = vmatpush1.bf16.msra.mxu0 %v2744
    %3566 = vmatprep.subr.bf16.mxu0 0
    %3567 = vmatpush1.bf16.msra.mxu0 %v2745
    %3568 = vmatprep.subr.bf16.mxu0 0
    %3569 = vmatpush1.bf16.msra.mxu0 %v2746
    %3570 = vmatprep.subr.bf16.mxu0 0
    %3571 = vmatpush1.bf16.msra.mxu0 %v2747
    %3572 = vmatprep.mubr.bf16.mxu0 %v311
    %3573 = vmatmul.mubr.bf16.gmra.mrb[0].mxu0 %v310
    %v3574 = vpop.f32.mrb[0].mxu0
    %v3575 = vadd.f32 %v3535, %v3574
    %v3576 = vpop.f32.mrb[0].mxu0
    %v3577 = vpop.f32.mrb[0].mxu0
    %v3578 = vpop.f32.mrb[0].mxu0
    %3579 = vdwg.mxu0
    %3580 = vmatprep.subr.bf16.mxu0 0
    %3581 = vmatpush1.bf16.msra.mxu0 %v2748
    %3582 = vmatprep.subr.bf16.mxu0 0
    %3583 = vmatpush1.bf16.msra.mxu0 %v2749
    %3584 = vmatprep.subr.bf16.mxu0 0
    %3585 = vmatpush1.bf16.msra.mxu0 %v2750
    %3586 = vmatprep.subr.bf16.mxu0 0
    %3587 = vmatpush1.bf16.msra.mxu0 %v2751
    %3588 = vmatprep.subr.bf16.mxu0 0
    %3589 = vmatpush1.bf16.msra.mxu0 %v2752
    %3590 = vmatprep.subr.bf16.mxu0 0
    %3591 = vmatpush1.bf16.msra.mxu0 %v2753
    %3592 = vmatprep.subr.bf16.mxu0 0
    %3593 = vmatpush1.bf16.msra.mxu0 %v2754
    %3594 = vmatprep.subr.bf16.mxu0 0
    %3595 = vmatpush1.bf16.msra.mxu0 %v2755
    %3596 = vmatprep.subr.bf16.mxu0 0
    %3597 = vmatpush1.bf16.msra.mxu0 %v2756
    %3598 = vmatprep.subr.bf16.mxu0 0
    %3599 = vmatpush1.bf16.msra.mxu0 %v2757
    %3600 = vmatprep.subr.bf16.mxu0 0
    %3601 = vmatpush1.bf16.msra.mxu0 %v2758
    %3602 = vmatprep.subr.bf16.mxu0 0
    %3603 = vmatpush1.bf16.msra.mxu0 %v2759
    %3604 = vmatprep.subr.bf16.mxu0 0
    %3605 = vmatpush1.bf16.msra.mxu0 %v2760
    %3606 = vmatprep.subr.bf16.mxu0 0
    %3607 = vmatpush1.bf16.msra.mxu0 %v2761
    %3608 = vmatprep.subr.bf16.mxu0 0
    %3609 = vmatpush1.bf16.msra.mxu0 %v2762
    %3610 = vmatprep.subr.bf16.mxu0 0
    %3611 = vmatpush1.bf16.msra.mxu0 %v2763
    %3612 = vmatprep.mubr.bf16.mxu0 %v313
    %3613 = vmatmul.mubr.bf16.gmra.mrb[0].mxu0 %v312
    %v3614 = vpop.f32.mrb[0].mxu0
    %v3615 = vadd.f32 %v3575, %v3614
    %v3616 = vpop.f32.mrb[0].mxu0
    %v3617 = vpop.f32.mrb[0].mxu0
    %v3618 = vpop.f32.mrb[0].mxu0
    %3619 = vdwg.mxu0
    %3620 = vmatprep.subr.bf16.mxu0 0
    %3621 = vmatpush1.bf16.msra.mxu0 %v2764
    %3622 = vmatprep.subr.bf16.mxu0 0
    %3623 = vmatpush1.bf16.msra.mxu0 %v2765
    %3624 = vmatprep.subr.bf16.mxu0 0
    %3625 = vmatpush1.bf16.msra.mxu0 %v2766
    %3626 = vmatprep.subr.bf16.mxu0 0
    %3627 = vmatpush1.bf16.msra.mxu0 %v2767
    %3628 = vmatprep.subr.bf16.mxu0 0
    %3629 = vmatpush1.bf16.msra.mxu0 %v2768
    %3630 = vmatprep.subr.bf16.mxu0 0
    %3631 = vmatpush1.bf16.msra.mxu0 %v2769
    %3632 = vmatprep.subr.bf16.mxu0 0
    %3633 = vmatpush1.bf16.msra.mxu0 %v2770
    %3634 = vmatprep.subr.bf16.mxu0 0
    %3635 = vmatpush1.bf16.msra.mxu0 %v2771
    %3636 = vmatprep.subr.bf16.mxu0 0
    %3637 = vmatpush1.bf16.msra.mxu0 %v2772
    %3638 = vmatprep.subr.bf16.mxu0 0
    %3639 = vmatpush1.bf16.msra.mxu0 %v2773
    %3640 = vmatprep.subr.bf16.mxu0 0
    %3641 = vmatpush1.bf16.msra.mxu0 %v2774
    %3642 = vmatprep.subr.bf16.mxu0 0
    %3643 = vmatpush1.bf16.msra.mxu0 %v2775
    %3644 = vmatprep.subr.bf16.mxu0 0
    %3645 = vmatpush1.bf16.msra.mxu0 %v2776
    %3646 = vmatprep.subr.bf16.mxu0 0
    %3647 = vmatpush1.bf16.msra.mxu0 %v2777
    %3648 = vmatprep.subr.bf16.mxu0 0
    %3649 = vmatpush1.bf16.msra.mxu0 %v2778
    %3650 = vmatprep.subr.bf16.mxu0 0
    %3651 = vmatpush1.bf16.msra.mxu0 %v2779
    %3652 = vmatprep.mubr.bf16.mxu0 %v315
    %3653 = vmatmul.mubr.bf16.gmra.mrb[0].mxu0 %v314
    %v3654 = vpop.f32.mrb[0].mxu0
    %v3655 = vadd.f32 %v3615, %v3654
    %v3656 = vpop.f32.mrb[0].mxu0
    %v3657 = vpop.f32.mrb[0].mxu0
    %v3658 = vpop.f32.mrb[0].mxu0
    %3659 = vdwg.mxu0
    %3660 = vmatprep.subr.bf16.mxu0 0
    %3661 = vmatpush1.bf16.msra.mxu0 %v2780
    %3662 = vmatprep.subr.bf16.mxu0 0
    %3663 = vmatpush1.bf16.msra.mxu0 %v2781
    %3664 = vmatprep.subr.bf16.mxu0 0
    %3665 = vmatpush1.bf16.msra.mxu0 %v2782
    %3666 = vmatprep.subr.bf16.mxu0 0
    %3667 = vmatpush1.bf16.msra.mxu0 %v2783
    %3668 = vmatprep.subr.bf16.mxu0 0
    %3669 = vmatpush1.bf16.msra.mxu0 %v2784
    %3670 = vmatprep.subr.bf16.mxu0 0
    %3671 = vmatpush1.bf16.msra.mxu0 %v2785
    %3672 = vmatprep.subr.bf16.mxu0 0
    %3673 = vmatpush1.bf16.msra.mxu0 %v2786
    %3674 = vmatprep.subr.bf16.mxu0 0
    %3675 = vmatpush1.bf16.msra.mxu0 %v2787
    %3676 = vmatprep.subr.bf16.mxu0 0
    %3677 = vmatpush1.bf16.msra.mxu0 %v2788
    %3678 = vmatprep.subr.bf16.mxu0 0
    %3679 = vmatpush1.bf16.msra.mxu0 %v2789
    %3680 = vmatprep.subr.bf16.mxu0 0
    %3681 = vmatpush1.bf16.msra.mxu0 %v2790
    %3682 = vmatprep.subr.bf16.mxu0 0
    %3683 = vmatpush1.bf16.msra.mxu0 %v2791
    %3684 = vmatprep.subr.bf16.mxu0 0
    %3685 = vmatpush1.bf16.msra.mxu0 %v2792
    %3686 = vmatprep.subr.bf16.mxu0 0
    %3687 = vmatpush1.bf16.msra.mxu0 %v2793
    %3688 = vmatprep.subr.bf16.mxu0 0
    %3689 = vmatpush1.bf16.msra.mxu0 %v2794
    %3690 = vmatprep.subr.bf16.mxu0 0
    %3691 = vmatpush1.bf16.msra.mxu0 %v2795
    %3692 = vmatprep.mubr.bf16.mxu0 %v317
    %3693 = vmatmul.mubr.bf16.gmra.mrb[0].mxu0 %v316
    %v3694 = vpop.f32.mrb[0].mxu0
    %v3695 = vadd.f32 %v3655, %v3694
    %v3696 = vpop.f32.mrb[0].mxu0
    %v3697 = vpop.f32.mrb[0].mxu0
    %v3698 = vpop.f32.mrb[0].mxu0
    %3699 = vdwg.mxu0
    %3700 = vmatprep.subr.bf16.mxu0 0
    %3701 = vmatpush1.bf16.msra.mxu0 %v2796
    %3702 = vmatprep.subr.bf16.mxu0 0
    %3703 = vmatpush1.bf16.msra.mxu0 %v2797
    %3704 = vmatprep.subr.bf16.mxu0 0
    %3705 = vmatpush1.bf16.msra.mxu0 %v2798
    %3706 = vmatprep.subr.bf16.mxu0 0
    %3707 = vmatpush1.bf16.msra.mxu0 %v2799
    %3708 = vmatprep.subr.bf16.mxu0 0
    %3709 = vmatpush1.bf16.msra.mxu0 %v2800
    %3710 = vmatprep.subr.bf16.mxu0 0
    %3711 = vmatpush1.bf16.msra.mxu0 %v2801
    %3712 = vmatprep.subr.bf16.mxu0 0
    %3713 = vmatpush1.bf16.msra.mxu0 %v2802
    %3714 = vmatprep.subr.bf16.mxu0 0
    %3715 = vmatpush1.bf16.msra.mxu0 %v2803
    %3716 = vmatprep.subr.bf16.mxu0 0
    %3717 = vmatpush1.bf16.msra.mxu0 %v2804
    %3718 = vmatprep.subr.bf16.mxu0 0
    %3719 = vmatpush1.bf16.msra.mxu0 %v2805
    %3720 = vmatprep.subr.bf16.mxu0 0
    %3721 = vmatpush1.bf16.msra.mxu0 %v2806
    %3722 = vmatprep.subr.bf16.mxu0 0
    %3723 = vmatpush1.bf16.msra.mxu0 %v2807
    %3724 = vmatprep.subr.bf16.mxu0 0
    %3725 = vmatpush1.bf16.msra.mxu0 %v2808
    %3726 = vmatprep.subr.bf16.mxu0 0
    %3727 = vmatpush1.bf16.msra.mxu0 %v2809
    %3728 = vmatprep.subr.bf16.mxu0 0
    %3729 = vmatpush1.bf16.msra.mxu0 %v2810
    %3730 = vmatprep.subr.bf16.mxu0 0
    %3731 = vmatpush1.bf16.msra.mxu0 %v2811
    %3732 = vmatprep.mubr.bf16.mxu0 %v319
    %3733 = vmatmul.mubr.bf16.gmra.mrb[0].mxu0 %v318
    %v3734 = vpop.f32.mrb[0].mxu0
    %v3735 = vadd.f32 %v3695, %v3734
    %v3736 = vpop.f32.mrb[0].mxu0
    %v3737 = vpop.f32.mrb[0].mxu0
    %v3738 = vpop.f32.mrb[0].mxu0
    %3739 = vdwg.mxu0
    %3740 = vmatprep.subr.bf16.mxu0 0
    %3741 = vmatpush1.bf16.msra.mxu0 %v2812
    %3742 = vmatprep.subr.bf16.mxu0 0
    %3743 = vmatpush1.bf16.msra.mxu0 %v2813
    %3744 = vmatprep.subr.bf16.mxu0 0
    %3745 = vmatpush1.bf16.msra.mxu0 %v2814
    %3746 = vmatprep.subr.bf16.mxu0 0
    %3747 = vmatpush1.bf16.msra.mxu0 %v2815
    %3748 = vmatprep.subr.bf16.mxu0 0
    %3749 = vmatpush1.bf16.msra.mxu0 %v2816
    %3750 = vmatprep.subr.bf16.mxu0 0
    %3751 = vmatpush1.bf16.msra.mxu0 %v2817
    %3752 = vmatprep.subr.bf16.mxu0 0
    %3753 = vmatpush1.bf16.msra.mxu0 %v2818
    %3754 = vmatprep.subr.bf16.mxu0 0
    %3755 = vmatpush1.bf16.msra.mxu0 %v2819
    %3756 = vmatprep.subr.bf16.mxu0 0
    %3757 = vmatpush1.bf16.msra.mxu0 %v2820
    %3758 = vmatprep.subr.bf16.mxu0 0
    %3759 = vmatpush1.bf16.msra.mxu0 %v2821
    %3760 = vmatprep.subr.bf16.mxu0 0
    %3761 = vmatpush1.bf16.msra.mxu0 %v2822
    %3762 = vmatprep.subr.bf16.mxu0 0
    %3763 = vmatpush1.bf16.msra.mxu0 %v2823
    %3764 = vmatprep.subr.bf16.mxu0 0
    %3765 = vmatpush1.bf16.msra.mxu0 %v2824
    %3766 = vmatprep.subr.bf16.mxu0 0
    %3767 = vmatpush1.bf16.msra.mxu0 %v2825
    %3768 = vmatprep.subr.bf16.mxu0 0
    %3769 = vmatpush1.bf16.msra.mxu0 %v2826
    %3770 = vmatprep.subr.bf16.mxu0 0
    %3771 = vmatpush1.bf16.msra.mxu0 %v2827
    %3772 = vmatprep.mubr.bf16.mxu0 %v321
    %3773 = vmatmul.mubr.bf16.gmra.mrb[0].mxu0 %v320
    %v3774 = vpop.f32.mrb[0].mxu0
    %v3775 = vadd.f32 %v3735, %v3774
    %v3776 = vpop.f32.mrb[0].mxu0
    %v3777 = vpop.f32.mrb[0].mxu0
    %v3778 = vpop.f32.mrb[0].mxu0
    %3779 = vdwg.mxu0
    %3780 = vmatprep.subr.bf16.mxu0 0
    %3781 = vmatpush1.bf16.msra.mxu0 %v2828
    %3782 = vmatprep.subr.bf16.mxu0 0
    %3783 = vmatpush1.bf16.msra.mxu0 %v2829
    %3784 = vmatprep.subr.bf16.mxu0 0
    %3785 = vmatpush1.bf16.msra.mxu0 %v2830
    %3786 = vmatprep.subr.bf16.mxu0 0
    %3787 = vmatpush1.bf16.msra.mxu0 %v2831
    %3788 = vmatprep.subr.bf16.mxu0 0
    %3789 = vmatpush1.bf16.msra.mxu0 %v2832
    %3790 = vmatprep.subr.bf16.mxu0 0
    %3791 = vmatpush1.bf16.msra.mxu0 %v2833
    %3792 = vmatprep.subr.bf16.mxu0 0
    %3793 = vmatpush1.bf16.msra.mxu0 %v2834
    %3794 = vmatprep.subr.bf16.mxu0 0
    %3795 = vmatpush1.bf16.msra.mxu0 %v2835
    %3796 = vmatprep.subr.bf16.mxu0 0
    %3797 = vmatpush1.bf16.msra.mxu0 %v2836
    %3798 = vmatprep.subr.bf16.mxu0 0
    %3799 = vmatpush1.bf16.msra.mxu0 %v2837
    %3800 = vmatprep.subr.bf16.mxu0 0
    %3801 = vmatpush1.bf16.msra.mxu0 %v2838
    %3802 = vmatprep.subr.bf16.mxu0 0
    %3803 = vmatpush1.bf16.msra.mxu0 %v2839
    %3804 = vmatprep.subr.bf16.mxu0 0
    %3805 = vmatpush1.bf16.msra.mxu0 %v2840
    %3806 = vmatprep.subr.bf16.mxu0 0
    %3807 = vmatpush1.bf16.msra.mxu0 %v2841
    %3808 = vmatprep.subr.bf16.mxu0 0
    %3809 = vmatpush1.bf16.msra.mxu0 %v2842
    %3810 = vmatprep.subr.bf16.mxu0 0
    %3811 = vmatpush1.bf16.msra.mxu0 %v2843
    %3812 = vmatprep.mubr.bf16.mxu0 %v323
    %3813 = vmatmul.mubr.bf16.gmra.mrb[0].mxu0 %v322
    %v3814 = vpop.f32.mrb[0].mxu0
    %v3815 = vadd.f32 %v3775, %v3814
    %v3816 = vpop.f32.mrb[0].mxu0
    %v3817 = vpop.f32.mrb[0].mxu0
    %v3818 = vpop.f32.mrb[0].mxu0
    %3819 = vdwg.mxu0
    %3820 = vmatprep.subr.bf16.mxu0 0
    %3821 = vmatpush1.bf16.msra.mxu0 %v2844
    %3822 = vmatprep.subr.bf16.mxu0 0
    %3823 = vmatpush1.bf16.msra.mxu0 %v2845
    %3824 = vmatprep.subr.bf16.mxu0 0
    %3825 = vmatpush1.bf16.msra.mxu0 %v2846
    %3826 = vmatprep.subr.bf16.mxu0 0
    %3827 = vmatpush1.bf16.msra.mxu0 %v2847
    %3828 = vmatprep.subr.bf16.mxu0 0
    %3829 = vmatpush1.bf16.msra.mxu0 %v2848
    %3830 = vmatprep.subr.bf16.mxu0 0
    %3831 = vmatpush1.bf16.msra.mxu0 %v2849
    %3832 = vmatprep.subr.bf16.mxu0 0
    %3833 = vmatpush1.bf16.msra.mxu0 %v2850
    %3834 = vmatprep.subr.bf16.mxu0 0
    %3835 = vmatpush1.bf16.msra.mxu0 %v2851
    %3836 = vmatprep.subr.bf16.mxu0 0
    %3837 = vmatpush1.bf16.msra.mxu0 %v2852
    %3838 = vmatprep.subr.bf16.mxu0 0
    %3839 = vmatpush1.bf16.msra.mxu0 %v2853
    %3840 = vmatprep.subr.bf16.mxu0 0
    %3841 = vmatpush1.bf16.msra.mxu0 %v2854
    %3842 = vmatprep.subr.bf16.mxu0 0
    %3843 = vmatpush1.bf16.msra.mxu0 %v2855
    %3844 = vmatprep.subr.bf16.mxu0 0
    %3845 = vmatpush1.bf16.msra.mxu0 %v2856
    %3846 = vmatprep.subr.bf16.mxu0 0
    %3847 = vmatpush1.bf16.msra.mxu0 %v2857
    %3848 = vmatprep.subr.bf16.mxu0 0
    %3849 = vmatpush1.bf16.msra.mxu0 %v2858
    %3850 = vmatprep.subr.bf16.mxu0 0
    %3851 = vmatpush1.bf16.msra.mxu0 %v2859
    %3852 = vmatprep.mubr.bf16.mxu0 %v325
    %3853 = vmatmul.mubr.bf16.gmra.mrb[0].mxu0 %v324
    %v3854 = vpop.f32.mrb[0].mxu0
    %v3855 = vadd.f32 %v3815, %v3854
    %v3856 = vpop.f32.mrb[0].mxu0
    %v3857 = vpop.f32.mrb[0].mxu0
    %v3858 = vpop.f32.mrb[0].mxu0
    %3859 = vdwg.mxu0
    %3860 = vmatprep.subr.bf16.mxu0 0
    %3861 = vmatpush1.bf16.msra.mxu0 %v2860
    %3862 = vmatprep.subr.bf16.mxu0 0
    %3863 = vmatpush1.bf16.msra.mxu0 %v2861
    %3864 = vmatprep.subr.bf16.mxu0 0
    %3865 = vmatpush1.bf16.msra.mxu0 %v2862
    %3866 = vmatprep.subr.bf16.mxu0 0
    %3867 = vmatpush1.bf16.msra.mxu0 %v2863
    %3868 = vmatprep.subr.bf16.mxu0 0
    %3869 = vmatpush1.bf16.msra.mxu0 %v2864
    %3870 = vmatprep.subr.bf16.mxu0 0
    %3871 = vmatpush1.bf16.msra.mxu0 %v2865
    %3872 = vmatprep.subr.bf16.mxu0 0
    %3873 = vmatpush1.bf16.msra.mxu0 %v2866
    %3874 = vmatprep.subr.bf16.mxu0 0
    %3875 = vmatpush1.bf16.msra.mxu0 %v2867
    %3876 = vmatprep.subr.bf16.mxu0 0
    %3877 = vmatpush1.bf16.msra.mxu0 %v2868
    %3878 = vmatprep.subr.bf16.mxu0 0
    %3879 = vmatpush1.bf16.msra.mxu0 %v2869
    %3880 = vmatprep.subr.bf16.mxu0 0
    %3881 = vmatpush1.bf16.msra.mxu0 %v2870
    %3882 = vmatprep.subr.bf16.mxu0 0
    %3883 = vmatpush1.bf16.msra.mxu0 %v2871
    %3884 = vmatprep.subr.bf16.mxu0 0
    %3885 = vmatpush1.bf16.msra.mxu0 %v2872
    %3886 = vmatprep.subr.bf16.mxu0 0
    %3887 = vmatpush1.bf16.msra.mxu0 %v2873
    %3888 = vmatprep.subr.bf16.mxu0 0
    %3889 = vmatpush1.bf16.msra.mxu0 %v2874
    %3890 = vmatprep.subr.bf16.mxu0 0
    %3891 = vmatpush1.bf16.msra.mxu0 %v2875
    %3892 = vmatprep.mubr.bf16.mxu0 %v327
    %3893 = vmatmul.mubr.bf16.gmra.mrb[0].mxu0 %v326
    %v3894 = vpop.f32.mrb[0].mxu0
    %v3895 = vadd.f32 %v3855, %v3894
    %v3896 = vpop.f32.mrb[0].mxu0
    %v3897 = vpop.f32.mrb[0].mxu0
    %v3898 = vpop.f32.mrb[0].mxu0
    %3899 = vdwg.mxu0
    %3900 = vmatprep.subr.bf16.mxu0 0
    %3901 = vmatpush1.bf16.msra.mxu0 %v2876
    %3902 = vmatprep.subr.bf16.mxu0 0
    %3903 = vmatpush1.bf16.msra.mxu0 %v2877
    %3904 = vmatprep.subr.bf16.mxu0 0
    %3905 = vmatpush1.bf16.msra.mxu0 %v2878
    %3906 = vmatprep.subr.bf16.mxu0 0
    %3907 = vmatpush1.bf16.msra.mxu0 %v2879
    %3908 = vmatprep.subr.bf16.mxu0 0
    %3909 = vmatpush1.bf16.msra.mxu0 %v2880
    %3910 = vmatprep.subr.bf16.mxu0 0
    %3911 = vmatpush1.bf16.msra.mxu0 %v2881
    %3912 = vmatprep.subr.bf16.mxu0 0
    %3913 = vmatpush1.bf16.msra.mxu0 %v2882
    %3914 = vmatprep.subr.bf16.mxu0 0
    %3915 = vmatpush1.bf16.msra.mxu0 %v2883
    %3916 = vmatprep.subr.bf16.mxu0 0
    %3917 = vmatpush1.bf16.msra.mxu0 %v2884
    %3918 = vmatprep.subr.bf16.mxu0 0
    %3919 = vmatpush1.bf16.msra.mxu0 %v2885
    %3920 = vmatprep.subr.bf16.mxu0 0
    %3921 = vmatpush1.bf16.msra.mxu0 %v2886
    %3922 = vmatprep.subr.bf16.mxu0 0
    %3923 = vmatpush1.bf16.msra.mxu0 %v2887
    %3924 = vmatprep.subr.bf16.mxu0 0
    %3925 = vmatpush1.bf16.msra.mxu0 %v2888
    %3926 = vmatprep.subr.bf16.mxu0 0
    %3927 = vmatpush1.bf16.msra.mxu0 %v2889
    %3928 = vmatprep.subr.bf16.mxu0 0
    %3929 = vmatpush1.bf16.msra.mxu0 %v2890
    %3930 = vmatprep.subr.bf16.mxu0 0
    %3931 = vmatpush1.bf16.msra.mxu0 %v2891
    %3932 = vmatprep.mubr.bf16.mxu0 %v329
    %3933 = vmatmul.mubr.bf16.gmra.mrb[0].mxu0 %v328
    %v3934 = vpop.f32.mrb[0].mxu0
    %v3935 = vadd.f32 %v3895, %v3934
    %v3936 = vpop.f32.mrb[0].mxu0
    %v3937 = vpop.f32.mrb[0].mxu0
    %v3938 = vpop.f32.mrb[0].mxu0
    %3939 = vdwg.mxu0
    %3940 = vmatprep.subr.bf16.mxu0 0
    %3941 = vmatpush1.bf16.msra.mxu0 %v2892
    %3942 = vmatprep.subr.bf16.mxu0 0
    %3943 = vmatpush1.bf16.msra.mxu0 %v2893
    %3944 = vmatprep.subr.bf16.mxu0 0
    %3945 = vmatpush1.bf16.msra.mxu0 %v2894
    %3946 = vmatprep.subr.bf16.mxu0 0
    %3947 = vmatpush1.bf16.msra.mxu0 %v2895
    %3948 = vmatprep.subr.bf16.mxu0 0
    %3949 = vmatpush1.bf16.msra.mxu0 %v2896
    %3950 = vmatprep.subr.bf16.mxu0 0
    %3951 = vmatpush1.bf16.msra.mxu0 %v2897
    %3952 = vmatprep.subr.bf16.mxu0 0
    %3953 = vmatpush1.bf16.msra.mxu0 %v2898
    %3954 = vmatprep.subr.bf16.mxu0 0
    %3955 = vmatpush1.bf16.msra.mxu0 %v2899
    %3956 = vmatprep.subr.bf16.mxu0 0
    %3957 = vmatpush1.bf16.msra.mxu0 %v2900
    %3958 = vmatprep.subr.bf16.mxu0 0
    %3959 = vmatpush1.bf16.msra.mxu0 %v2901
    %3960 = vmatprep.subr.bf16.mxu0 0
    %3961 = vmatpush1.bf16.msra.mxu0 %v2902
    %3962 = vmatprep.subr.bf16.mxu0 0
    %3963 = vmatpush1.bf16.msra.mxu0 %v2903
    %3964 = vmatprep.subr.bf16.mxu0 0
    %3965 = vmatpush1.bf16.msra.mxu0 %v2904
    %3966 = vmatprep.subr.bf16.mxu0 0
    %3967 = vmatpush1.bf16.msra.mxu0 %v2905
    %3968 = vmatprep.subr.bf16.mxu0 0
    %3969 = vmatpush1.bf16.msra.mxu0 %v2906
    %3970 = vmatprep.subr.bf16.mxu0 0
    %3971 = vmatpush1.bf16.msra.mxu0 %v2907
    %3972 = vmatprep.mubr.bf16.mxu0 %v331
    %3973 = vmatmul.mubr.bf16.gmra.mrb[0].mxu0 %v330
    %v3974 = vpop.f32.mrb[0].mxu0
    %v3975 = vadd.f32 %v3935, %v3974
    %v3976 = vpop.f32.mrb[0].mxu0
    %v3977 = vpop.f32.mrb[0].mxu0
    %v3978 = vpop.f32.mrb[0].mxu0
    %3979 = vdwg.mxu0
    %3980 = vmatprep.subr.bf16.mxu0 0
    %3981 = vmatpush1.bf16.msra.mxu0 %v2908
    %3982 = vmatprep.subr.bf16.mxu0 0
    %3983 = vmatpush1.bf16.msra.mxu0 %v2909
    %3984 = vmatprep.subr.bf16.mxu0 0
    %3985 = vmatpush1.bf16.msra.mxu0 %v2910
    %3986 = vmatprep.subr.bf16.mxu0 0
    %3987 = vmatpush1.bf16.msra.mxu0 %v2911
    %3988 = vmatprep.subr.bf16.mxu0 0
    %3989 = vmatpush1.bf16.msra.mxu0 %v2912
    %3990 = vmatprep.subr.bf16.mxu0 0
    %3991 = vmatpush1.bf16.msra.mxu0 %v2913
    %3992 = vmatprep.subr.bf16.mxu0 0
    %3993 = vmatpush1.bf16.msra.mxu0 %v2914
    %3994 = vmatprep.subr.bf16.mxu0 0
    %3995 = vmatpush1.bf16.msra.mxu0 %v2915
    %3996 = vmatprep.subr.bf16.mxu0 0
    %3997 = vmatpush1.bf16.msra.mxu0 %v2916
    %3998 = vmatprep.subr.bf16.mxu0 0
    %3999 = vmatpush1.bf16.msra.mxu0 %v2917
    %4000 = vmatprep.subr.bf16.mxu0 0
    %4001 = vmatpush1.bf16.msra.mxu0 %v2918
    %4002 = vmatprep.subr.bf16.mxu0 0
    %4003 = vmatpush1.bf16.msra.mxu0 %v2919
    %4004 = vmatprep.subr.bf16.mxu0 0
    %4005 = vmatpush1.bf16.msra.mxu0 %v2920
    %4006 = vmatprep.subr.bf16.mxu0 0
    %4007 = vmatpush1.bf16.msra.mxu0 %v2921
    %4008 = vmatprep.subr.bf16.mxu0 0
    %4009 = vmatpush1.bf16.msra.mxu0 %v2922
    %4010 = vmatprep.subr.bf16.mxu0 0
    %4011 = vmatpush1.bf16.msra.mxu0 %v2923
    %4012 = vmatprep.mubr.bf16.mxu0 %v333
    %4013 = vmatmul.mubr.bf16.gmra.mrb[0].mxu0 %v332
    %v4014 = vpop.f32.mrb[0].mxu0
    %v4015 = vadd.f32 %v3975, %v4014
    %v4016 = vpop.f32.mrb[0].mxu0
    %v4017 = vpop.f32.mrb[0].mxu0
    %v4018 = vpop.f32.mrb[0].mxu0
    %4019 = vdwg.mxu0
    %4020 = vmatprep.subr.bf16.mxu0 0
    %4021 = vmatpush1.bf16.msra.mxu0 %v2924
    %4022 = vmatprep.subr.bf16.mxu0 0
    %4023 = vmatpush1.bf16.msra.mxu0 %v2925
    %4024 = vmatprep.subr.bf16.mxu0 0
    %4025 = vmatpush1.bf16.msra.mxu0 %v2926
    %4026 = vmatprep.subr.bf16.mxu0 0
    %4027 = vmatpush1.bf16.msra.mxu0 %v2927
    %4028 = vmatprep.subr.bf16.mxu0 0
    %4029 = vmatpush1.bf16.msra.mxu0 %v2928
    %4030 = vmatprep.subr.bf16.mxu0 0
    %4031 = vmatpush1.bf16.msra.mxu0 %v2929
    %4032 = vmatprep.subr.bf16.mxu0 0
    %4033 = vmatpush1.bf16.msra.mxu0 %v2930
    %4034 = vmatprep.subr.bf16.mxu0 0
    %4035 = vmatpush1.bf16.msra.mxu0 %v2931
    %4036 = vmatprep.subr.bf16.mxu0 0
    %4037 = vmatpush1.bf16.msra.mxu0 %v2932
    %4038 = vmatprep.subr.bf16.mxu0 0
    %4039 = vmatpush1.bf16.msra.mxu0 %v2933
    %4040 = vmatprep.subr.bf16.mxu0 0
    %4041 = vmatpush1.bf16.msra.mxu0 %v2934
    %4042 = vmatprep.subr.bf16.mxu0 0
    %4043 = vmatpush1.bf16.msra.mxu0 %v2935
    %4044 = vmatprep.subr.bf16.mxu0 0
    %4045 = vmatpush1.bf16.msra.mxu0 %v2936
    %4046 = vmatprep.subr.bf16.mxu0 0
    %4047 = vmatpush1.bf16.msra.mxu0 %v2937
    %4048 = vmatprep.subr.bf16.mxu0 0
    %4049 = vmatpush1.bf16.msra.mxu0 %v2938
    %4050 = vmatprep.subr.bf16.mxu0 0
    %4051 = vmatpush1.bf16.msra.mxu0 %v2939
    %4052 = vmatprep.mubr.bf16.mxu0 %v335
    %4053 = vmatmul.mubr.bf16.gmra.mrb[0].mxu0 %v334
    %v4054 = vpop.f32.mrb[0].mxu0
    %v4055 = vadd.f32 %v4015, %v4054
    %v4056 = vpop.f32.mrb[0].mxu0
    %v4057 = vpop.f32.mrb[0].mxu0
    %v4058 = vpop.f32.mrb[0].mxu0
    %4059 = vdwg.mxu0
    %4060 = vmatprep.subr.bf16.mxu0 0
    %4061 = vmatpush1.bf16.msra.mxu0 %v2940
    %4062 = vmatprep.subr.bf16.mxu0 0
    %4063 = vmatpush1.bf16.msra.mxu0 %v2941
    %4064 = vmatprep.subr.bf16.mxu0 0
    %4065 = vmatpush1.bf16.msra.mxu0 %v2942
    %4066 = vmatprep.subr.bf16.mxu0 0
    %4067 = vmatpush1.bf16.msra.mxu0 %v2943
    %4068 = vmatprep.subr.bf16.mxu0 0
    %4069 = vmatpush1.bf16.msra.mxu0 %v2944
    %4070 = vmatprep.subr.bf16.mxu0 0
    %4071 = vmatpush1.bf16.msra.mxu0 %v2945
    %4072 = vmatprep.subr.bf16.mxu0 0
    %4073 = vmatpush1.bf16.msra.mxu0 %v2946
    %4074 = vmatprep.subr.bf16.mxu0 0
    %4075 = vmatpush1.bf16.msra.mxu0 %v2947
    %4076 = vmatprep.subr.bf16.mxu0 0
    %4077 = vmatpush1.bf16.msra.mxu0 %v2948
    %4078 = vmatprep.subr.bf16.mxu0 0
    %4079 = vmatpush1.bf16.msra.mxu0 %v2949
    %4080 = vmatprep.subr.bf16.mxu0 0
    %4081 = vmatpush1.bf16.msra.mxu0 %v2950
    %4082 = vmatprep.subr.bf16.mxu0 0
    %4083 = vmatpush1.bf16.msra.mxu0 %v2951
    %4084 = vmatprep.subr.bf16.mxu0 0
    %4085 = vmatpush1.bf16.msra.mxu0 %v2952
    %4086 = vmatprep.subr.bf16.mxu0 0
    %4087 = vmatpush1.bf16.msra.mxu0 %v2953
    %4088 = vmatprep.subr.bf16.mxu0 0
    %4089 = vmatpush1.bf16.msra.mxu0 %v2954
    %4090 = vmatprep.subr.bf16.mxu0 0
    %4091 = vmatpush1.bf16.msra.mxu0 %v2955
    %4092 = vmatprep.mubr.bf16.mxu0 %v337
    %4093 = vmatmul.mubr.bf16.gmra.mrb[0].mxu0 %v336
    %v4094 = vpop.f32.mrb[0].mxu0
    %v4095 = vadd.f32 %v4055, %v4094
    %v4096 = vpop.f32.mrb[0].mxu0
    %v4097 = vpop.f32.mrb[0].mxu0
    %v4098 = vpop.f32.mrb[0].mxu0
    %4099 = vdwg.mxu0
    %4100 = vmatprep.subr.bf16.mxu0 0
    %4101 = vmatpush1.bf16.msra.mxu0 %v2956
    %4102 = vmatprep.subr.bf16.mxu0 0
    %4103 = vmatpush1.bf16.msra.mxu0 %v2957
    %4104 = vmatprep.subr.bf16.mxu0 0
    %4105 = vmatpush1.bf16.msra.mxu0 %v2958
    %4106 = vmatprep.subr.bf16.mxu0 0
    %4107 = vmatpush1.bf16.msra.mxu0 %v2959
    %4108 = vmatprep.subr.bf16.mxu0 0
    %4109 = vmatpush1.bf16.msra.mxu0 %v2960
    %4110 = vmatprep.subr.bf16.mxu0 0
    %4111 = vmatpush1.bf16.msra.mxu0 %v2961
    %4112 = vmatprep.subr.bf16.mxu0 0
    %4113 = vmatpush1.bf16.msra.mxu0 %v2962
    %4114 = vmatprep.subr.bf16.mxu0 0
    %4115 = vmatpush1.bf16.msra.mxu0 %v2963
    %4116 = vmatprep.subr.bf16.mxu0 0
    %4117 = vmatpush1.bf16.msra.mxu0 %v2964
    %4118 = vmatprep.subr.bf16.mxu0 0
    %4119 = vmatpush1.bf16.msra.mxu0 %v2965
    %4120 = vmatprep.subr.bf16.mxu0 0
    %4121 = vmatpush1.bf16.msra.mxu0 %v2966
    %4122 = vmatprep.subr.bf16.mxu0 0
    %4123 = vmatpush1.bf16.msra.mxu0 %v2967
    %4124 = vmatprep.subr.bf16.mxu0 0
    %4125 = vmatpush1.bf16.msra.mxu0 %v2968
    %4126 = vmatprep.subr.bf16.mxu0 0
    %4127 = vmatpush1.bf16.msra.mxu0 %v2969
    %4128 = vmatprep.subr.bf16.mxu0 0
    %4129 = vmatpush1.bf16.msra.mxu0 %v2970
    %4130 = vmatprep.subr.bf16.mxu0 0
    %4131 = vmatpush1.bf16.msra.mxu0 %v2971
    %4132 = vmatprep.mubr.bf16.mxu0 %v339
    %4133 = vmatmul.mubr.bf16.gmra.mrb[0].mxu0 %v338
    %v4134 = vpop.f32.mrb[0].mxu0
    %v4135 = vadd.f32 %v4095, %v4134
    %v4136 = vpop.f32.mrb[0].mxu0
    %v4137 = vpop.f32.mrb[0].mxu0
    %v4138 = vpop.f32.mrb[0].mxu0
    %4139 = vdwg.mxu0
    %4140 = vmatprep.subr.bf16.mxu0 0
    %4141 = vmatpush1.bf16.msra.mxu0 %v2972
    %4142 = vmatprep.subr.bf16.mxu0 0
    %4143 = vmatpush1.bf16.msra.mxu0 %v2973
    %4144 = vmatprep.subr.bf16.mxu0 0
    %4145 = vmatpush1.bf16.msra.mxu0 %v2974
    %4146 = vmatprep.subr.bf16.mxu0 0
    %4147 = vmatpush1.bf16.msra.mxu0 %v2975
    %4148 = vmatprep.subr.bf16.mxu0 0
    %4149 = vmatpush1.bf16.msra.mxu0 %v2976
    %4150 = vmatprep.subr.bf16.mxu0 0
    %4151 = vmatpush1.bf16.msra.mxu0 %v2977
    %4152 = vmatprep.subr.bf16.mxu0 0
    %4153 = vmatpush1.bf16.msra.mxu0 %v2978
    %4154 = vmatprep.subr.bf16.mxu0 0
    %4155 = vmatpush1.bf16.msra.mxu0 %v2979
    %4156 = vmatprep.subr.bf16.mxu0 0
    %4157 = vmatpush1.bf16.msra.mxu0 %v2980
    %4158 = vmatprep.subr.bf16.mxu0 0
    %4159 = vmatpush1.bf16.msra.mxu0 %v2981
    %4160 = vmatprep.subr.bf16.mxu0 0
    %4161 = vmatpush1.bf16.msra.mxu0 %v2982
    %4162 = vmatprep.subr.bf16.mxu0 0
    %4163 = vmatpush1.bf16.msra.mxu0 %v2983
    %4164 = vmatprep.subr.bf16.mxu0 0
    %4165 = vmatpush1.bf16.msra.mxu0 %v2984
    %4166 = vmatprep.subr.bf16.mxu0 0
    %4167 = vmatpush1.bf16.msra.mxu0 %v2985
    %4168 = vmatprep.subr.bf16.mxu0 0
    %4169 = vmatpush1.bf16.msra.mxu0 %v2986
    %4170 = vmatprep.subr.bf16.mxu0 0
    %4171 = vmatpush1.bf16.msra.mxu0 %v2987
    %4172 = vmatprep.mubr.bf16.mxu0 %v341
    %4173 = vmatmul.mubr.bf16.gmra.mrb[0].mxu0 %v340
    %v4174 = vpop.f32.mrb[0].mxu0
    %v4175 = vadd.f32 %v4135, %v4174
    %v4176 = vpop.f32.mrb[0].mxu0
    %v4177 = vpop.f32.mrb[0].mxu0
    %v4178 = vpop.f32.mrb[0].mxu0
    %4179 = vdwg.mxu0
    %4180 = vmatprep.subr.bf16.mxu0 0
    %4181 = vmatpush1.bf16.msra.mxu0 %v2988
    %4182 = vmatprep.subr.bf16.mxu0 0
    %4183 = vmatpush1.bf16.msra.mxu0 %v2989
    %4184 = vmatprep.subr.bf16.mxu0 0
    %4185 = vmatpush1.bf16.msra.mxu0 %v2990
    %4186 = vmatprep.subr.bf16.mxu0 0
    %4187 = vmatpush1.bf16.msra.mxu0 %v2991
    %4188 = vmatprep.subr.bf16.mxu0 0
    %4189 = vmatpush1.bf16.msra.mxu0 %v2992
    %4190 = vmatprep.subr.bf16.mxu0 0
    %4191 = vmatpush1.bf16.msra.mxu0 %v2993
    %4192 = vmatprep.subr.bf16.mxu0 0
    %4193 = vmatpush1.bf16.msra.mxu0 %v2994
    %4194 = vmatprep.subr.bf16.mxu0 0
    %4195 = vmatpush1.bf16.msra.mxu0 %v2995
    %4196 = vmatprep.subr.bf16.mxu0 0
    %4197 = vmatpush1.bf16.msra.mxu0 %v2996
    %4198 = vmatprep.subr.bf16.mxu0 0
    %4199 = vmatpush1.bf16.msra.mxu0 %v2997
    %4200 = vmatprep.subr.bf16.mxu0 0
    %4201 = vmatpush1.bf16.msra.mxu0 %v2998
    %4202 = vmatprep.subr.bf16.mxu0 0
    %4203 = vmatpush1.bf16.msra.mxu0 %v2999
    %4204 = vmatprep.subr.bf16.mxu0 0
    %4205 = vmatpush1.bf16.msra.mxu0 %v3000
    %4206 = vmatprep.subr.bf16.mxu0 0
    %4207 = vmatpush1.bf16.msra.mxu0 %v3001
    %4208 = vmatprep.subr.bf16.mxu0 0
    %4209 = vmatpush1.bf16.msra.mxu0 %v3002
    %4210 = vmatprep.subr.bf16.mxu0 0
    %4211 = vmatpush1.bf16.msra.mxu0 %v3003
    %4212 = vmatprep.mubr.bf16.mxu0 %v343
    %4213 = vmatmul.mubr.bf16.gmra.mrb[0].mxu0 %v342
    %v4214 = vpop.f32.mrb[0].mxu0
    %v4215 = vadd.f32 %v4175, %v4214
    %v4216 = vpop.f32.mrb[0].mxu0
    %v4217 = vpop.f32.mrb[0].mxu0
    %v4218 = vpop.f32.mrb[0].mxu0
    %4219 = vdwg.mxu0
    %4220 = vmatprep.subr.bf16.mxu0 0
    %4221 = vmatpush1.bf16.msra.mxu0 %v3004
    %4222 = vmatprep.subr.bf16.mxu0 0
    %4223 = vmatpush1.bf16.msra.mxu0 %v3005
    %4224 = vmatprep.subr.bf16.mxu0 0
    %4225 = vmatpush1.bf16.msra.mxu0 %v3006
    %4226 = vmatprep.subr.bf16.mxu0 0
    %4227 = vmatpush1.bf16.msra.mxu0 %v3007
    %4228 = vmatprep.subr.bf16.mxu0 0
    %4229 = vmatpush1.bf16.msra.mxu0 %v3008
    %4230 = vmatprep.subr.bf16.mxu0 0
    %4231 = vmatpush1.bf16.msra.mxu0 %v3009
    %4232 = vmatprep.subr.bf16.mxu0 0
    %4233 = vmatpush1.bf16.msra.mxu0 %v3010
    %4234 = vmatprep.subr.bf16.mxu0 0
    %4235 = vmatpush1.bf16.msra.mxu0 %v3011
    %4236 = vmatprep.subr.bf16.mxu0 0
    %4237 = vmatpush1.bf16.msra.mxu0 %v3012
    %4238 = vmatprep.subr.bf16.mxu0 0
    %4239 = vmatpush1.bf16.msra.mxu0 %v3013
    %4240 = vmatprep.subr.bf16.mxu0 0
    %4241 = vmatpush1.bf16.msra.mxu0 %v3014
    %4242 = vmatprep.subr.bf16.mxu0 0
    %4243 = vmatpush1.bf16.msra.mxu0 %v3015
    %4244 = vmatprep.subr.bf16.mxu0 0
    %4245 = vmatpush1.bf16.msra.mxu0 %v3016
    %4246 = vmatprep.subr.bf16.mxu0 0
    %4247 = vmatpush1.bf16.msra.mxu0 %v3017
    %4248 = vmatprep.subr.bf16.mxu0 0
    %4249 = vmatpush1.bf16.msra.mxu0 %v3018
    %4250 = vmatprep.subr.bf16.mxu0 0
    %4251 = vmatpush1.bf16.msra.mxu0 %v3019
    %4252 = vmatprep.mubr.bf16.mxu0 %v345
    %4253 = vmatmul.mubr.bf16.gmra.mrb[0].mxu0 %v344
    %v4254 = vpop.f32.mrb[0].mxu0
    %v4255 = vadd.f32 %v4215, %v4254
    %v4256 = vpop.f32.mrb[0].mxu0
    %v4257 = vpop.f32.mrb[0].mxu0
    %v4258 = vpop.f32.mrb[0].mxu0
    %4259 = vdwg.mxu0
    %4260 = vmatprep.subr.bf16.mxu0 0
    %4261 = vmatpush1.bf16.msra.mxu0 %v3020
    %4262 = vmatprep.subr.bf16.mxu0 0
    %4263 = vmatpush1.bf16.msra.mxu0 %v3021
    %4264 = vmatprep.subr.bf16.mxu0 0
    %4265 = vmatpush1.bf16.msra.mxu0 %v3022
    %4266 = vmatprep.subr.bf16.mxu0 0
    %4267 = vmatpush1.bf16.msra.mxu0 %v3023
    %4268 = vmatprep.subr.bf16.mxu0 0
    %4269 = vmatpush1.bf16.msra.mxu0 %v3024
    %4270 = vmatprep.subr.bf16.mxu0 0
    %4271 = vmatpush1.bf16.msra.mxu0 %v3025
    %4272 = vmatprep.subr.bf16.mxu0 0
    %4273 = vmatpush1.bf16.msra.mxu0 %v3026
    %4274 = vmatprep.subr.bf16.mxu0 0
    %4275 = vmatpush1.bf16.msra.mxu0 %v3027
    %4276 = vmatprep.subr.bf16.mxu0 0
    %4277 = vmatpush1.bf16.msra.mxu0 %v3028
    %4278 = vmatprep.subr.bf16.mxu0 0
    %4279 = vmatpush1.bf16.msra.mxu0 %v3029
    %4280 = vmatprep.subr.bf16.mxu0 0
    %4281 = vmatpush1.bf16.msra.mxu0 %v3030
    %4282 = vmatprep.subr.bf16.mxu0 0
    %4283 = vmatpush1.bf16.msra.mxu0 %v3031
    %4284 = vmatprep.subr.bf16.mxu0 0
    %4285 = vmatpush1.bf16.msra.mxu0 %v3032
    %4286 = vmatprep.subr.bf16.mxu0 0
    %4287 = vmatpush1.bf16.msra.mxu0 %v3033
    %4288 = vmatprep.subr.bf16.mxu0 0
    %4289 = vmatpush1.bf16.msra.mxu0 %v3034
    %4290 = vmatprep.subr.bf16.mxu0 0
    %4291 = vmatpush1.bf16.msra.mxu0 %v3035
    %4292 = vmatprep.mubr.bf16.mxu0 %v347
    %4293 = vmatmul.mubr.bf16.gmra.mrb[0].mxu0 %v346
    %v4294 = vpop.f32.mrb[0].mxu0
    %v4295 = vadd.f32 %v4255, %v4294
    %v4296 = vpop.f32.mrb[0].mxu0
    %v4297 = vpop.f32.mrb[0].mxu0
    %v4298 = vpop.f32.mrb[0].mxu0
    %4299 = vdwg.mxu0
    %4300 = vmatprep.subr.bf16.mxu0 0
    %4301 = vmatpush1.bf16.msra.mxu0 %v3036
    %4302 = vmatprep.subr.bf16.mxu0 0
    %4303 = vmatpush1.bf16.msra.mxu0 %v3037
    %4304 = vmatprep.subr.bf16.mxu0 0
    %4305 = vmatpush1.bf16.msra.mxu0 %v3038
    %4306 = vmatprep.subr.bf16.mxu0 0
    %4307 = vmatpush1.bf16.msra.mxu0 %v3039
    %4308 = vmatprep.subr.bf16.mxu0 0
    %4309 = vmatpush1.bf16.msra.mxu0 %v3040
    %4310 = vmatprep.subr.bf16.mxu0 0
    %4311 = vmatpush1.bf16.msra.mxu0 %v3041
    %4312 = vmatprep.subr.bf16.mxu0 0
    %4313 = vmatpush1.bf16.msra.mxu0 %v3042
    %4314 = vmatprep.subr.bf16.mxu0 0
    %4315 = vmatpush1.bf16.msra.mxu0 %v3043
    %4316 = vmatprep.subr.bf16.mxu0 0
    %4317 = vmatpush1.bf16.msra.mxu0 %v3044
    %4318 = vmatprep.subr.bf16.mxu0 0
    %4319 = vmatpush1.bf16.msra.mxu0 %v3045
    %4320 = vmatprep.subr.bf16.mxu0 0
    %4321 = vmatpush1.bf16.msra.mxu0 %v3046
    %4322 = vmatprep.subr.bf16.mxu0 0
    %4323 = vmatpush1.bf16.msra.mxu0 %v3047
    %4324 = vmatprep.subr.bf16.mxu0 0
    %4325 = vmatpush1.bf16.msra.mxu0 %v3048
    %4326 = vmatprep.subr.bf16.mxu0 0
    %4327 = vmatpush1.bf16.msra.mxu0 %v3049
    %4328 = vmatprep.subr.bf16.mxu0 0
    %4329 = vmatpush1.bf16.msra.mxu0 %v3050
    %4330 = vmatprep.subr.bf16.mxu0 0
    %4331 = vmatpush1.bf16.msra.mxu0 %v3051
    %4332 = vmatprep.mubr.bf16.mxu0 %v349
    %4333 = vmatmul.mubr.bf16.gmra.mrb[0].mxu0 %v348
    %v4334 = vpop.f32.mrb[0].mxu0
    %v4335 = vadd.f32 %v4295, %v4334
    %v4336 = vpop.f32.mrb[0].mxu0
    %v4337 = vpop.f32.mrb[0].mxu0
    %v4338 = vpop.f32.mrb[0].mxu0
    %4339 = vdwg.mxu0
    %4340 = vmatprep.subr.bf16.mxu0 0
    %4341 = vmatpush1.bf16.msra.mxu0 %v3052
    %4342 = vmatprep.subr.bf16.mxu0 0
    %4343 = vmatpush1.bf16.msra.mxu0 %v3053
    %4344 = vmatprep.subr.bf16.mxu0 0
    %4345 = vmatpush1.bf16.msra.mxu0 %v3054
    %4346 = vmatprep.subr.bf16.mxu0 0
    %4347 = vmatpush1.bf16.msra.mxu0 %v3055
    %4348 = vmatprep.subr.bf16.mxu0 0
    %4349 = vmatpush1.bf16.msra.mxu0 %v3056
    %4350 = vmatprep.subr.bf16.mxu0 0
    %4351 = vmatpush1.bf16.msra.mxu0 %v3057
    %4352 = vmatprep.subr.bf16.mxu0 0
    %4353 = vmatpush1.bf16.msra.mxu0 %v3058
    %4354 = vmatprep.subr.bf16.mxu0 0
    %4355 = vmatpush1.bf16.msra.mxu0 %v3059
    %4356 = vmatprep.subr.bf16.mxu0 0
    %4357 = vmatpush1.bf16.msra.mxu0 %v3060
    %4358 = vmatprep.subr.bf16.mxu0 0
    %4359 = vmatpush1.bf16.msra.mxu0 %v3061
    %4360 = vmatprep.subr.bf16.mxu0 0
    %4361 = vmatpush1.bf16.msra.mxu0 %v3062
    %4362 = vmatprep.subr.bf16.mxu0 0
    %4363 = vmatpush1.bf16.msra.mxu0 %v3063
    %4364 = vmatprep.subr.bf16.mxu0 0
    %4365 = vmatpush1.bf16.msra.mxu0 %v3064
    %4366 = vmatprep.subr.bf16.mxu0 0
    %4367 = vmatpush1.bf16.msra.mxu0 %v3065
    %4368 = vmatprep.subr.bf16.mxu0 0
    %4369 = vmatpush1.bf16.msra.mxu0 %v3066
    %4370 = vmatprep.subr.bf16.mxu0 0
    %4371 = vmatpush1.bf16.msra.mxu0 %v3067
    %4372 = vmatprep.mubr.bf16.mxu0 %v351
    %4373 = vmatmul.mubr.bf16.gmra.mrb[0].mxu0 %v350
    %v4374 = vpop.f32.mrb[0].mxu0
    %v4375 = vadd.f32 %v4335, %v4374
    %v4376 = vpop.f32.mrb[0].mxu0
    %v4377 = vpop.f32.mrb[0].mxu0
    %v4378 = vpop.f32.mrb[0].mxu0
    %4379 = vdwg.mxu0
    %4380 = vmatprep.subr.bf16.mxu0 0
    %4381 = vmatpush1.bf16.msra.mxu0 %v3068
    %4382 = vmatprep.subr.bf16.mxu0 0
    %4383 = vmatpush1.bf16.msra.mxu0 %v3069
    %4384 = vmatprep.subr.bf16.mxu0 0
    %4385 = vmatpush1.bf16.msra.mxu0 %v3070
    %4386 = vmatprep.subr.bf16.mxu0 0
    %4387 = vmatpush1.bf16.msra.mxu0 %v3071
    %4388 = vmatprep.subr.bf16.mxu0 0
    %4389 = vmatpush1.bf16.msra.mxu0 %v3072
    %4390 = vmatprep.subr.bf16.mxu0 0
    %4391 = vmatpush1.bf16.msra.mxu0 %v3073
    %4392 = vmatprep.subr.bf16.mxu0 0
    %4393 = vmatpush1.bf16.msra.mxu0 %v3074
    %4394 = vmatprep.subr.bf16.mxu0 0
    %4395 = vmatpush1.bf16.msra.mxu0 %v3075
    %4396 = vmatprep.subr.bf16.mxu0 0
    %4397 = vmatpush1.bf16.msra.mxu0 %v3076
    %4398 = vmatprep.subr.bf16.mxu0 0
    %4399 = vmatpush1.bf16.msra.mxu0 %v3077
    %4400 = vmatprep.subr.bf16.mxu0 0
    %4401 = vmatpush1.bf16.msra.mxu0 %v3078
    %4402 = vmatprep.subr.bf16.mxu0 0
    %4403 = vmatpush1.bf16.msra.mxu0 %v3079
    %4404 = vmatprep.subr.bf16.mxu0 0
    %4405 = vmatpush1.bf16.msra.mxu0 %v3080
    %4406 = vmatprep.subr.bf16.mxu0 0
    %4407 = vmatpush1.bf16.msra.mxu0 %v3081
    %4408 = vmatprep.subr.bf16.mxu0 0
    %4409 = vmatpush1.bf16.msra.mxu0 %v3082
    %4410 = vmatprep.subr.bf16.mxu0 0
    %4411 = vmatpush1.bf16.msra.mxu0 %v3083
    %4412 = vmatprep.mubr.bf16.mxu0 %v353
    %4413 = vmatmul.mubr.bf16.gmra.mrb[0].mxu0 %v352
    %v4414 = vpop.f32.mrb[0].mxu0
    %v4415 = vadd.f32 %v4375, %v4414
    %v4416 = vpop.f32.mrb[0].mxu0
    %v4417 = vpop.f32.mrb[0].mxu0
    %v4418 = vpop.f32.mrb[0].mxu0
    %4419 = vdwg.mxu0
    %4420 = vmatprep.subr.bf16.mxu0 0
    %4421 = vmatpush1.bf16.msra.mxu0 %v3084
    %4422 = vmatprep.subr.bf16.mxu0 0
    %4423 = vmatpush1.bf16.msra.mxu0 %v3085
    %4424 = vmatprep.subr.bf16.mxu0 0
    %4425 = vmatpush1.bf16.msra.mxu0 %v3086
    %4426 = vmatprep.subr.bf16.mxu0 0
    %4427 = vmatpush1.bf16.msra.mxu0 %v3087
    %4428 = vmatprep.subr.bf16.mxu0 0
    %4429 = vmatpush1.bf16.msra.mxu0 %v3088
    %4430 = vmatprep.subr.bf16.mxu0 0
    %4431 = vmatpush1.bf16.msra.mxu0 %v3089
    %4432 = vmatprep.subr.bf16.mxu0 0
    %4433 = vmatpush1.bf16.msra.mxu0 %v3090
    %4434 = vmatprep.subr.bf16.mxu0 0
    %4435 = vmatpush1.bf16.msra.mxu0 %v3091
    %4436 = vmatprep.subr.bf16.mxu0 0
    %4437 = vmatpush1.bf16.msra.mxu0 %v3092
    %4438 = vmatprep.subr.bf16.mxu0 0
    %4439 = vmatpush1.bf16.msra.mxu0 %v3093
    %4440 = vmatprep.subr.bf16.mxu0 0
    %4441 = vmatpush1.bf16.msra.mxu0 %v3094
    %4442 = vmatprep.subr.bf16.mxu0 0
    %4443 = vmatpush1.bf16.msra.mxu0 %v3095
    %4444 = vmatprep.subr.bf16.mxu0 0
    %4445 = vmatpush1.bf16.msra.mxu0 %v3096
    %4446 = vmatprep.subr.bf16.mxu0 0
    %4447 = vmatpush1.bf16.msra.mxu0 %v3097
    %4448 = vmatprep.subr.bf16.mxu0 0
    %4449 = vmatpush1.bf16.msra.mxu0 %v3098
    %4450 = vmatprep.subr.bf16.mxu0 0
    %4451 = vmatpush1.bf16.msra.mxu0 %v3099
    %4452 = vmatprep.mubr.bf16.mxu0 %v355
    %4453 = vmatmul.mubr.bf16.gmra.mrb[0].mxu0 %v354
    %v4454 = vpop.f32.mrb[0].mxu0
    %v4455 = vadd.f32 %v4415, %v4454
    %v4456 = vpop.f32.mrb[0].mxu0
    %v4457 = vpop.f32.mrb[0].mxu0
    %v4458 = vpop.f32.mrb[0].mxu0
    %4459 = vdwg.mxu0
    %4460 = vmatprep.subr.bf16.mxu0 0
    %4461 = vmatpush1.bf16.msra.mxu0 %v3100
    %4462 = vmatprep.subr.bf16.mxu0 0
    %4463 = vmatpush1.bf16.msra.mxu0 %v3101
    %4464 = vmatprep.subr.bf16.mxu0 0
    %4465 = vmatpush1.bf16.msra.mxu0 %v3102
    %4466 = vmatprep.subr.bf16.mxu0 0
    %4467 = vmatpush1.bf16.msra.mxu0 %v3103
    %4468 = vmatprep.subr.bf16.mxu0 0
    %4469 = vmatpush1.bf16.msra.mxu0 %v3104
    %4470 = vmatprep.subr.bf16.mxu0 0
    %4471 = vmatpush1.bf16.msra.mxu0 %v3105
    %4472 = vmatprep.subr.bf16.mxu0 0
    %4473 = vmatpush1.bf16.msra.mxu0 %v3106
    %4474 = vmatprep.subr.bf16.mxu0 0
    %4475 = vmatpush1.bf16.msra.mxu0 %v3107
    %4476 = vmatprep.subr.bf16.mxu0 0
    %4477 = vmatpush1.bf16.msra.mxu0 0
    %4478 = vmatprep.subr.bf16.mxu0 0
    %4479 = vmatpush1.bf16.msra.mxu0 0
    %4480 = vmatprep.subr.bf16.mxu0 0
    %4481 = vmatpush1.bf16.msra.mxu0 0
    %4482 = vmatprep.subr.bf16.mxu0 0
    %4483 = vmatpush1.bf16.msra.mxu0 0
    %4484 = vmatprep.subr.bf16.mxu0 0
    %4485 = vmatpush1.bf16.msra.mxu0 0
    %4486 = vmatprep.subr.bf16.mxu0 0
    %4487 = vmatpush1.bf16.msra.mxu0 0
    %4488 = vmatprep.subr.bf16.mxu0 0
    %4489 = vmatpush1.bf16.msra.mxu0 0
    %4490 = vmatprep.subr.bf16.mxu0 0
    %4491 = vmatpush1.bf16.msra.mxu0 0
    %4492 = vmatprep.mubr.bf16.mxu0 0
    %4493 = vmatmul.mubr.bf16.gmra.mrb[0].mxu0 %v356
    %v4494 = vpop.f32.mrb[0].mxu0
    %v4495 = vadd.f32 %v4455, %v4494
    %v4496 = vpop.f32.mrb[0].mxu0
    %v4497 = vpop.f32.mrb[0].mxu0
    %v4498 = vpop.f32.mrb[0].mxu0
    %4499 = vdwg.mxu0
    %v4500 = vmax.f32 %v4495, 0.0
    %v4501 = vpack.c.bf16 %v4500, %v4500
    %v4502 = vld [vmem:[%s3] sm:$0xf]
    %v4503 = vld [vmem:[%s3 + $0x4] sm:$0xf]
    %v4504 = vld [vmem:[%s3 + $0x8] sm:$0xf]
    %v4505 = vld [vmem:[%s3 + $0xc] sm:$0xf]
    %v4506 = vld [vmem:[%s3 + $0x10] sm:$0xf]
    %v4507 = vld [vmem:[%s3 + $0x14] sm:$0xf]
    %v4508 = vld [vmem:[%s3 + $0x18] sm:$0xf]
    %v4509 = vld [vmem:[%s3 + $0x1c] sm:$0xf]
    %v4510 = vld [vmem:[%s3 + $0x20] sm:$0xf]
    %v4511 = vld [vmem:[%s3 + $0x24] sm:$0xf]
    %v4512 = vld [vmem:[%s3 + $0x28] sm:$0xf]
    %v4513 = vld [vmem:[%s3 + $0x2c] sm:$0xf]
    %v4514 = vld [vmem:[%s3 + $0x30] sm:$0xf]
    %v4515 = vld [vmem:[%s3 + $0x34] sm:$0xf]
    %v4516 = vld [vmem:[%s3 + $0x38] sm:$0xf]
    %v4517 = vld [vmem:[%s3 + $0x3c] sm:$0xf]
    %v4518 = vld [vmem:[%s4] sm:$0x1]
    %v4520 = vlaneseq
    %v4521 = vshrl.u32 %v4520, 7
    %v4522 = vsub.s32 0, %v4521
    %v4523 = vrot.slane %v4518, %v4522
    %v4541 = vunpack.c.l.b16 %v4502
    %v4542 = vunpack.c.l.b16 %v4503
    %v4543 = vunpack.c.l.b16 %v4504
    %v4544 = vunpack.c.l.b16 %v4505
    %v4545 = vunpack.c.l.b16 %v4506
    %v4546 = vunpack.c.l.b16 %v4507
    %v4547 = vunpack.c.l.b16 %v4508
    %v4548 = vunpack.c.l.b16 %v4509
    %v4549 = vunpack.c.l.b16 %v4510
    %v4550 = vunpack.c.l.b16 %v4511
    %v4551 = vunpack.c.l.b16 %v4512
    %v4552 = vunpack.c.l.b16 %v4513
    %v4553 = vunpack.c.l.b16 %v4514
    %v4554 = vunpack.c.l.b16 %v4515
    %v4555 = vunpack.c.l.b16 %v4516
    %v4556 = vunpack.c.l.b16 %v4517
    %v4557 = vpack.c.b16 %v4542, %v4541
    %v4558 = vpack.c.b16 %v4544, %v4543
    %v4559 = vpack.c.b16 %v4546, %v4545
    %v4560 = vpack.c.b16 %v4548, %v4547
    %v4561 = vpack.c.b16 %v4550, %v4549
    %v4562 = vpack.c.b16 %v4552, %v4551
    %v4563 = vpack.c.b16 %v4554, %v4553
    %v4564 = vpack.c.b16 %v4556, %v4555
    %4573 = vmatprep.subr.bf16.mxu0 0
    %4574 = vmatpush1.bf16.msra.mxu0 %v4557
    %4575 = vmatprep.subr.bf16.mxu0 0
    %4576 = vmatpush1.bf16.msra.mxu0 %v4558
    %4577 = vmatprep.subr.bf16.mxu0 0
    %4578 = vmatpush1.bf16.msra.mxu0 %v4559
    %4579 = vmatprep.subr.bf16.mxu0 0
    %4580 = vmatpush1.bf16.msra.mxu0 %v4560
    %4581 = vmatprep.subr.bf16.mxu0 0
    %4582 = vmatpush1.bf16.msra.mxu0 %v4561
    %4583 = vmatprep.subr.bf16.mxu0 0
    %4584 = vmatpush1.bf16.msra.mxu0 %v4562
    %4585 = vmatprep.subr.bf16.mxu0 0
    %4586 = vmatpush1.bf16.msra.mxu0 %v4563
    %4587 = vmatprep.subr.bf16.mxu0 0
    %4588 = vmatpush1.bf16.msra.mxu0 %v4564
    %4589 = vmatprep.subr.bf16.mxu0 0
    %4590 = vmatpush1.bf16.msra.mxu0 0
    %4591 = vmatprep.subr.bf16.mxu0 0
    %4592 = vmatpush1.bf16.msra.mxu0 0
    %4593 = vmatprep.subr.bf16.mxu0 0
    %4594 = vmatpush1.bf16.msra.mxu0 0
    %4595 = vmatprep.subr.bf16.mxu0 0
    %4596 = vmatpush1.bf16.msra.mxu0 0
    %4597 = vmatprep.subr.bf16.mxu0 0
    %4598 = vmatpush1.bf16.msra.mxu0 0
    %4599 = vmatprep.subr.bf16.mxu0 0
    %4600 = vmatpush1.bf16.msra.mxu0 0
    %4601 = vmatprep.subr.bf16.mxu0 0
    %4602 = vmatpush1.bf16.msra.mxu0 0
    %4603 = vmatprep.subr.bf16.mxu0 0
    %4604 = vmatpush1.bf16.msra.mxu0 0
    %4605 = vmatprep.mubr.bf16.mxu0 0
    %4606 = vmatmul.mubr.bf16.gmra.mrb[0].mxu0 %v4501
    %v4607 = vpop.f32.mrb[0].mxu0
    %v4608 = vadd.f32 %v4523, %v4607
    %v4609 = vpop.f32.mrb[0].mxu0
    %v4610 = vpop.f32.mrb[0].mxu0
    %v4611 = vpop.f32.mrb[0].mxu0
    %4612 = vdwg.mxu0
    %4613 = vst [vmem:[#allocation2] sm:$0x3] %v4608
    // Predicated region
    $region22: #{model_forward.3} parent=1 // pred_check
      _
    $region23: #{model_forward.3} parent=1 // pred_check_branch
      %4615 = sbr.rel (0) target = $region25
    $region24: #{model_forward.3} parent=1 // pred_region
      %s4617 = ssub.s32 32, 32
      %4618 = vsyncadd [#allocation3], %s4617
      %s4620 = sshll.u32 [#allocation2], 4
      %s4621 = int_to_ptr.vmem [resolvable:$true] %s4620
      %4623 = dma.vmem_to_hbm [thread:$0]  %s4621, 32, %s5, [#allocation3]
    $region25: #{model_forward.3} parent=1 // pred_fallthru
      _
    // Predicated region
    $region26: #{model_forward.3} parent=1 // pred_check
      _
    $region27: #{model_forward.3} parent=1 // pred_check_branch
      %4625 = sbr.rel (0) target = $region29
    $region28: #{model_forward.3} parent=1 // pred_region
      %4626 = dma.done [#allocation3], 32
    $region29: #{model_forward.3} parent=1 // pred_fallthru
      _
    %4627 = vsyncpa [#allocation3], 1

</llo_original>
